<compile_context>
chip_gen: v7x
topology: tpu7x:2x2x1
jax: 0.10.0
libtpu: 0.0.40
codegen_flags: <defaults>
</compile_context>

<pallas_src>
import jax
import jax.numpy as jnp
import numpy as np
from jax.experimental import pallas as pl
from jax.experimental.pallas import tpu as pltpu


def _preact_lf_block_kernel(scales_ref, x_ref,
                            w1_ref, b1_ref, w2_ref, b2_ref,
                            w3_ref, b3_ref, w4_ref, b4_ref,
                            out_ref, strip_ref):
    H, W, C = x_ref.shape
    C3 = 3 * C

    # Zero only the strip cells that the per-conv stores never touch (the
    # conv's zero-padding border): top/bottom rows plus one column in the
    # dw=0 / dw=2 channel blocks.  Done every grid step (cheap) so correctness
    # holds when the batch axis is sharded across TensorCores ("parallel").
    zrow = jnp.zeros((1, W, C3), jnp.float32)
    strip_ref[0:1, :, :] = zrow
    strip_ref[H + 1:H + 2, :, :] = zrow
    zcol = jnp.zeros((H, 1, C), jnp.float32)
    strip_ref[1:H + 1, 0:1, 0:C] = zcol
    strip_ref[1:H + 1, W - 1:W, 2 * C:C3] = zcol

    def relu_conv3x3(act, w_ref, b_ref):
        # act: (H, W, C) pre-activation.  relu -> 3x3 SAME conv (zero pad),
        # f32 MXU accumulation.  w_ref: (3, 3C, C) with K ordered (dw, c_in).
        g = jnp.maximum(act, 0.0)
        # Build the dw-im2col strip: strip[r, j, dw*C:(dw+1)*C] holds the
        # relu'd, zero-padded activation at (r-1, j+dw-1).
        strip_ref[1:H + 1, :, C:2 * C] = g                        # dw = 1
        strip_ref[1:H + 1, 1:W, 0:C] = g[:, 0:W - 1, :]           # dw = 0
        strip_ref[1:H + 1, 0:W - 1, 2 * C:C3] = g[:, 1:W, :]      # dw = 2
        # dh shift = free leading-dim slice; 3 wide-K matmuls (K = 3C).
        lhs0 = strip_ref[0:H, :, :].reshape(H * W, C3)
        acc = jnp.dot(lhs0, w_ref[0], preferred_element_type=jnp.float32)
        lhs1 = strip_ref[1:H + 1, :, :].reshape(H * W, C3)
        acc = acc + jnp.dot(lhs1, w_ref[1], preferred_element_type=jnp.float32)
        lhs2 = strip_ref[2:H + 2, :, :].reshape(H * W, C3)
        acc = acc + jnp.dot(lhs2, w_ref[2], preferred_element_type=jnp.float32)
        # bias added once in the epilogue
        return (acc + b_ref[...]).reshape(H, W, C)

    s1 = scales_ref[0]
    s2 = scales_ref[1]
    s3 = scales_ref[2]
    s4 = scales_ref[3]

    x = x_ref[...]
    yn_1 = relu_conv3x3(x, w1_ref, b1_ref) * s1
    yn_2 = relu_conv3x3(yn_1, w2_ref, b2_ref) * s2 + x
    yn_3 = relu_conv3x3(yn_2, w3_ref, b3_ref) * s3 + yn_1
    yn_4 = relu_conv3x3(yn_3, w4_ref, b4_ref) * s4
    out_ref[...] = (yn_4 + yn_2).astype(out_ref.dtype)


def preact_lf_block_nhwc(x_nhwc, params):
    """x_nhwc: (N, H, W, C) float32 -> (N, H, W, C) float32."""
    ws = params["weights"]     # 4 x (3, 3, C, C)  (HWIO)
    bs = params["biases"]      # 4 x (1, C)
    scales = params["scales"]  # (4,)

    x = x_nhwc.astype(jnp.float32)
    N, H, W, C = x.shape
    C3 = 3 * C

    # Pre-flatten each conv weight to (3, 3C, C): K axis ordered (dw, c_in),
    # matching the dw-im2col strip channel layout.
    ws_flat = [jnp.reshape(w.astype(jnp.float32), (3, C3, C)) for w in ws]
    bs_f = [b.astype(jnp.float32) for b in bs]

    in_specs = [
        pl.BlockSpec(memory_space=pltpu.MemorySpace.SMEM),          # scales
        pl.BlockSpec((None, H, W, C), lambda n: (n, 0, 0, 0)),      # x (per image)
    ]
    for _ in range(4):
        in_specs.append(pl.BlockSpec((3, C3, C), lambda n: (0, 0, 0)))  # weight
        in_specs.append(pl.BlockSpec((1, C), lambda n: (0, 0)))         # bias

    return pl.pallas_call(
        _preact_lf_block_kernel,
        out_shape=jax.ShapeDtypeStruct((N, H, W, C), jnp.float32),
        grid=(N,),
        in_specs=in_specs,
        out_specs=pl.BlockSpec((None, H, W, C), lambda n: (n, 0, 0, 0)),
        scratch_shapes=[pltpu.VMEM((H + 2, W, C3), jnp.float32)],
        compiler_params=pltpu.CompilerParams(
            dimension_semantics=("parallel",),
            vmem_limit_bytes=32 * 1024 * 1024),
    )(scales.astype(jnp.float32), x,
      ws_flat[0], bs_f[0], ws_flat[1], bs_f[1],
      ws_flat[2], bs_f[2], ws_flat[3], bs_f[3])


def preact_lf_block(x_nchw, params):
    """PyTorch-style entry: (N, C, H, W) -> (N, C, H, W).

    TODO(synk): if the surrounding model can stay NHWC, call
    preact_lf_block_nhwc directly and drop these two HBM transposes.
    """
    x = jnp.transpose(x_nchw, (0, 2, 3, 1)).astype(jnp.float32)
    y = preact_lf_block_nhwc(x, params)
    return jnp.transpose(y, (0, 3, 1, 2))


def init_params(key, num_feat, kernel_size=3):
    """Deterministic synthetic init mirroring default_init_weights(scale=0.1):
    kaiming_normal (fan_in, gain sqrt(2)) * 0.1, bias=0, scales=0.5."""
    fan_in = num_feat * kernel_size * kernel_size
    std = float(np.sqrt(2.0 / fan_in)) * 0.1
    ws, bs = [], []
    for _ in range(4):
        key, sub = jax.random.split(key)
        w = jax.random.normal(
            sub, (kernel_size, kernel_size, num_feat, num_feat), jnp.float32) * std
        ws.append(w)
        bs.append(jnp.zeros((1, num_feat), jnp.float32))
    scales = jnp.full((4,), 0.5, jnp.float32)
    return {"weights": ws, "biases": bs, "scales": scales}


def reference_forward(x_nchw, params):
    """Pure-JAX (XLA conv) reference reproducing the PyTorch forward."""
    ws, bs, scales = params["weights"], params["biases"], params["scales"]

    def conv(x, w, b):
        y = jax.lax.conv_general_dilated(
            x, w, window_strides=(1, 1), padding="SAME",
            dimension_numbers=("NCHW", "HWIO", "NCHW"))
        return y + b.reshape(1, -1, 1, 1)

    relu = lambda t: jnp.maximum(t, 0.0)
    yn = x_nchw
    yn_1 = conv(relu(x_nchw), ws[0], bs[0]) * scales[0]
    yn_2 = conv(relu(yn_1), ws[1], bs[1]) * scales[1] + yn
    yn_3 = conv(relu(yn_2), ws[2], bs[2]) * scales[2] + yn_1
    yn_4 = conv(relu(yn_3), ws[3], bs[3]) * scales[3]
    return yn_4 + yn_2


if __name__ == "__main__":
    key = jax.random.PRNGKey(0)
    k_x, k_p = jax.random.split(key)

    # Small shapes; C matches the module default num_feat=64.
    N, C, H, W = 2, 64, 16, 16
    x = jax.random.normal(k_x, (N, C, H, W), jnp.float32)
    params = init_params(k_p, C)

    out = preact_lf_block(x, params)
    out = jax.block_until_ready(out)

    ref = reference_forward(x, params)
    assert out.shape == (N, C, H, W)
    np.testing.assert_allclose(np.asarray(out), np.asarray(ref),
                               rtol=2e-4, atol=1e-5)
    print("KERNEL_OK")
</pallas_src>

<mosaic_0001>
module attributes {stable_mosaic.version = 11 : i64} {
  func.func @_preact_lf_block_kernel(%arg0: i32, %arg1: memref<4xf32, #tpu.memory_space<smem>>, %arg2: memref<1x16x16x64xf32, #tpu.memory_space<vmem>>, %arg3: memref<3x192x64xf32, #tpu.memory_space<vmem>>, %arg4: memref<1x64xf32, #tpu.memory_space<vmem>>, %arg5: memref<3x192x64xf32, #tpu.memory_space<vmem>>, %arg6: memref<1x64xf32, #tpu.memory_space<vmem>>, %arg7: memref<3x192x64xf32, #tpu.memory_space<vmem>>, %arg8: memref<1x64xf32, #tpu.memory_space<vmem>>, %arg9: memref<3x192x64xf32, #tpu.memory_space<vmem>>, %arg10: memref<1x64xf32, #tpu.memory_space<vmem>>, %arg11: memref<1x16x16x64xf32, #tpu.memory_space<vmem>>, %arg12: memref<18x16x192xf32, #tpu.memory_space<vmem>>) attributes {dimension_semantics = [#tpu.dimension_semantics<parallel>], iteration_bounds = array<i64: 2>, scalar_prefetch = 0 : i64, scratch_operands = 1 : i64, tpu.core_type = #tpu.core_type<tc>, window_params = [{transform_indices = @transform_0, window_bounds = array<i64: 4>}, {transform_indices = @transform_1, window_bounds = array<i64: 1, 16, 16, 64>}, {pipeline_mode = #tpu.pipeline_mode<synchronous>, transform_indices = @transform_2, window_bounds = array<i64: 3, 192, 64>}, {pipeline_mode = #tpu.pipeline_mode<synchronous>, transform_indices = @transform_3, window_bounds = array<i64: 1, 64>}, {pipeline_mode = #tpu.pipeline_mode<synchronous>, transform_indices = @transform_4, window_bounds = array<i64: 3, 192, 64>}, {pipeline_mode = #tpu.pipeline_mode<synchronous>, transform_indices = @transform_5, window_bounds = array<i64: 1, 64>}, {pipeline_mode = #tpu.pipeline_mode<synchronous>, transform_indices = @transform_6, window_bounds = array<i64: 3, 192, 64>}, {pipeline_mode = #tpu.pipeline_mode<synchronous>, transform_indices = @transform_7, window_bounds = array<i64: 1, 64>}, {pipeline_mode = #tpu.pipeline_mode<synchronous>, transform_indices = @transform_8, window_bounds = array<i64: 3, 192, 64>}, {pipeline_mode = #tpu.pipeline_mode<synchronous>, transform_indices = @transform_9, window_bounds = array<i64: 1, 64>}, {transform_indices = @transform_10, window_bounds = array<i64: 1, 16, 16, 64>}]} {
    %cst = arith.constant 0.000000e+00 : f32
    %0 = vector.broadcast %cst : f32 to vector<1x16x192xf32>
    %c0 = arith.constant 0 : index
    %c0_0 = arith.constant 0 : index
    %c0_1 = arith.constant 0 : index
    %1 = vector.load %arg12[%c0, %c0_0, %c0_1] : memref<18x16x192xf32, #tpu.memory_space<vmem>>, vector<1x16x192xf32>
    tpu.vector_store %arg12[%c0, %c0_0, %c0_1], %0 {strides = array<i32>} : memref<18x16x192xf32, #tpu.memory_space<vmem>>, vector<1x16x192xf32>,
    %c17 = arith.constant 17 : index
    %c0_2 = arith.constant 0 : index
    %c0_3 = arith.constant 0 : index
    %2 = vector.load %arg12[%c17, %c0_2, %c0_3] : memref<18x16x192xf32, #tpu.memory_space<vmem>>, vector<1x16x192xf32>
    tpu.vector_store %arg12[%c17, %c0_2, %c0_3], %0 {strides = array<i32>} : memref<18x16x192xf32, #tpu.memory_space<vmem>>, vector<1x16x192xf32>,
    %cst_4 = arith.constant 0.000000e+00 : f32
    %3 = vector.broadcast %cst_4 : f32 to vector<16x1x64xf32>
    %c1 = arith.constant 1 : index
    %c0_5 = arith.constant 0 : index
    %c0_6 = arith.constant 0 : index
    %4 = vector.load %arg12[%c1, %c0_5, %c0_6] : memref<18x16x192xf32, #tpu.memory_space<vmem>>, vector<16x1x64xf32>
    tpu.vector_store %arg12[%c1, %c0_5, %c0_6], %3 {strides = array<i32>} : memref<18x16x192xf32, #tpu.memory_space<vmem>>, vector<16x1x64xf32>,
    %c1_7 = arith.constant 1 : index
    %c15 = arith.constant 15 : index
    %c128 = arith.constant 128 : index
    %5 = vector.load %arg12[%c1_7, %c15, %c128] : memref<18x16x192xf32, #tpu.memory_space<vmem>>, vector<16x1x64xf32>
    tpu.vector_store %arg12[%c1_7, %c15, %c128], %3 {strides = array<i32>} : memref<18x16x192xf32, #tpu.memory_space<vmem>>, vector<16x1x64xf32>,
    %c0_8 = arith.constant 0 : index
    %6 = memref.load %arg1[%c0_8] : memref<4xf32, #tpu.memory_space<smem>>
    %c1_9 = arith.constant 1 : index
    %7 = memref.load %arg1[%c1_9] : memref<4xf32, #tpu.memory_space<smem>>
    %c2 = arith.constant 2 : index
    %8 = memref.load %arg1[%c2] : memref<4xf32, #tpu.memory_space<smem>>
    %c3 = arith.constant 3 : index
    %9 = memref.load %arg1[%c3] : memref<4xf32, #tpu.memory_space<smem>>
    %c0_10 = arith.constant 0 : index
    %c0_11 = arith.constant 0 : index
    %c0_12 = arith.constant 0 : index
    %c0_13 = arith.constant 0 : index
    %10 = vector.load %arg2[%c0_10, %c0_11, %c0_12, %c0_13] : memref<1x16x16x64xf32, #tpu.memory_space<vmem>>, vector<1x16x16x64xf32>
    %11 = vector.shape_cast %10 : vector<1x16x16x64xf32> to vector<16x16x64xf32>
    %cst_14 = arith.constant 0.000000e+00 : f32
    %12 = vector.broadcast %cst_14 : f32 to vector<16x16x64xf32>
    %13 = arith.maximumf %11, %12 : vector<16x16x64xf32>
    %c1_15 = arith.constant 1 : index
    %c0_16 = arith.constant 0 : index
    %c64 = arith.constant 64 : index
    %14 = vector.load %arg12[%c1_15, %c0_16, %c64] : memref<18x16x192xf32, #tpu.memory_space<vmem>>, vector<16x16x64xf32>
    tpu.vector_store %arg12[%c1_15, %c0_16, %c64], %13 {strides = array<i32>} : memref<18x16x192xf32, #tpu.memory_space<vmem>>, vector<16x16x64xf32>,
    %15 = vector.extract_strided_slice %13 {offsets = [0, 0, 0], sizes = [16, 15, 64], strides = [1, 1, 1]} : vector<16x16x64xf32> to vector<16x15x64xf32>
    %c1_17 = arith.constant 1 : index
    %c1_18 = arith.constant 1 : index
    %c0_19 = arith.constant 0 : index
    %16 = vector.load %arg12[%c1_17, %c1_18, %c0_19] : memref<18x16x192xf32, #tpu.memory_space<vmem>>, vector<16x15x64xf32>
    tpu.vector_store %arg12[%c1_17, %c1_18, %c0_19], %15 {strides = array<i32>} : memref<18x16x192xf32, #tpu.memory_space<vmem>>, vector<16x15x64xf32>,
    %17 = vector.extract_strided_slice %13 {offsets = [0, 1, 0], sizes = [16, 15, 64], strides = [1, 1, 1]} : vector<16x16x64xf32> to vector<16x15x64xf32>
    %c1_20 = arith.constant 1 : index
    %c0_21 = arith.constant 0 : index
    %c128_22 = arith.constant 128 : index
    %18 = vector.load %arg12[%c1_20, %c0_21, %c128_22] : memref<18x16x192xf32, #tpu.memory_space<vmem>>, vector<16x15x64xf32>
    tpu.vector_store %arg12[%c1_20, %c0_21, %c128_22], %17 {strides = array<i32>} : memref<18x16x192xf32, #tpu.memory_space<vmem>>, vector<16x15x64xf32>,
    %c0_23 = arith.constant 0 : index
    %c0_24 = arith.constant 0 : index
    %c0_25 = arith.constant 0 : index
    %19 = vector.load %arg12[%c0_23, %c0_24, %c0_25] : memref<18x16x192xf32, #tpu.memory_space<vmem>>, vector<16x16x192xf32>
    %20 = vector.shape_cast %19 : vector<16x16x192xf32> to vector<256x192xf32>
    %c0_26 = arith.constant 0 : index
    %c0_27 = arith.constant 0 : index
    %c0_28 = arith.constant 0 : index
    %21 = vector.load %arg3[%c0_26, %c0_27, %c0_28] : memref<3x192x64xf32, #tpu.memory_space<vmem>>, vector<1x192x64xf32>
    %22 = vector.shape_cast %21 : vector<1x192x64xf32> to vector<192x64xf32>
    %cst_29 = arith.constant dense<0.000000e+00> : vector<256x64xf32>
    %23 = tpu.matmul %20, %22, %cst_29 {dimension_numbers = #tpu.dot_dimension_numbers<[1], [0], [0], [1], [0, 0, 1, 1], [], []>} : vector<256x192xf32>, vector<192x64xf32>, vector<256x64xf32> -> vector<256x64xf32>
    %c1_30 = arith.constant 1 : index
    %c0_31 = arith.constant 0 : index
    %c0_32 = arith.constant 0 : index
    %24 = vector.load %arg12[%c1_30, %c0_31, %c0_32] : memref<18x16x192xf32, #tpu.memory_space<vmem>>, vector<16x16x192xf32>
    %25 = vector.shape_cast %24 : vector<16x16x192xf32> to vector<256x192xf32>
    %c1_33 = arith.constant 1 : index
    %c0_34 = arith.constant 0 : index
    %c0_35 = arith.constant 0 : index
    %26 = vector.load %arg3[%c1_33, %c0_34, %c0_35] : memref<3x192x64xf32, #tpu.memory_space<vmem>>, vector<1x192x64xf32>
    %27 = vector.shape_cast %26 : vector<1x192x64xf32> to vector<192x64xf32>
    %cst_36 = arith.constant dense<0.000000e+00> : vector<256x64xf32>
    %28 = tpu.matmul %25, %27, %cst_36 {dimension_numbers = #tpu.dot_dimension_numbers<[1], [0], [0], [1], [0, 0, 1, 1], [], []>} : vector<256x192xf32>, vector<192x64xf32>, vector<256x64xf32> -> vector<256x64xf32>
    %29 = arith.addf %23, %28 : vector<256x64xf32>
    %c2_37 = arith.constant 2 : index
    %c0_38 = arith.constant 0 : index
    %c0_39 = arith.constant 0 : index
    %30 = vector.load %arg12[%c2_37, %c0_38, %c0_39] : memref<18x16x192xf32, #tpu.memory_space<vmem>>, vector<16x16x192xf32>
    %31 = vector.shape_cast %30 : vector<16x16x192xf32> to vector<256x192xf32>
    %c2_40 = arith.constant 2 : index
    %c0_41 = arith.constant 0 : index
    %c0_42 = arith.constant 0 : index
    %32 = vector.load %arg3[%c2_40, %c0_41, %c0_42] : memref<3x192x64xf32, #tpu.memory_space<vmem>>, vector<1x192x64xf32>
    %33 = vector.shape_cast %32 : vector<1x192x64xf32> to vector<192x64xf32>
    %cst_43 = arith.constant dense<0.000000e+00> : vector<256x64xf32>
    %34 = tpu.matmul %31, %33, %cst_43 {dimension_numbers = #tpu.dot_dimension_numbers<[1], [0], [0], [1], [0, 0, 1, 1], [], []>} : vector<256x192xf32>, vector<192x64xf32>, vector<256x64xf32> -> vector<256x64xf32>
    %35 = arith.addf %29, %34 : vector<256x64xf32>
    %c0_44 = arith.constant 0 : index
    %c0_45 = arith.constant 0 : index
    %36 = vector.load %arg4[%c0_44, %c0_45] : memref<1x64xf32, #tpu.memory_space<vmem>>, vector<1x64xf32>
    %37 = vector.broadcast %36 : vector<1x64xf32> to vector<256x64xf32>
    %38 = arith.addf %35, %37 : vector<256x64xf32>
    %39 = vector.shape_cast %38 : vector<256x64xf32> to vector<16x16x64xf32>
    %40 = vector.broadcast %6 : f32 to vector<16x16x64xf32>
    %41 = arith.mulf %39, %40 : vector<16x16x64xf32>
    %cst_46 = arith.constant 0.000000e+00 : f32
    %42 = vector.broadcast %cst_46 : f32 to vector<16x16x64xf32>
    %43 = arith.maximumf %41, %42 : vector<16x16x64xf32>
    %c1_47 = arith.constant 1 : index
    %c0_48 = arith.constant 0 : index
    %c64_49 = arith.constant 64 : index
    %44 = vector.load %arg12[%c1_47, %c0_48, %c64_49] : memref<18x16x192xf32, #tpu.memory_space<vmem>>, vector<16x16x64xf32>
    tpu.vector_store %arg12[%c1_47, %c0_48, %c64_49], %43 {strides = array<i32>} : memref<18x16x192xf32, #tpu.memory_space<vmem>>, vector<16x16x64xf32>,
    %45 = vector.extract_strided_slice %43 {offsets = [0, 0, 0], sizes = [16, 15, 64], strides = [1, 1, 1]} : vector<16x16x64xf32> to vector<16x15x64xf32>
    %c1_50 = arith.constant 1 : index
    %c1_51 = arith.constant 1 : index
    %c0_52 = arith.constant 0 : index
    %46 = vector.load %arg12[%c1_50, %c1_51, %c0_52] : memref<18x16x192xf32, #tpu.memory_space<vmem>>, vector<16x15x64xf32>
    tpu.vector_store %arg12[%c1_50, %c1_51, %c0_52], %45 {strides = array<i32>} : memref<18x16x192xf32, #tpu.memory_space<vmem>>, vector<16x15x64xf32>,
    %47 = vector.extract_strided_slice %43 {offsets = [0, 1, 0], sizes = [16, 15, 64], strides = [1, 1, 1]} : vector<16x16x64xf32> to vector<16x15x64xf32>
    %c1_53 = arith.constant 1 : index
    %c0_54 = arith.constant 0 : index
    %c128_55 = arith.constant 128 : index
    %48 = vector.load %arg12[%c1_53, %c0_54, %c128_55] : memref<18x16x192xf32, #tpu.memory_space<vmem>>, vector<16x15x64xf32>
    tpu.vector_store %arg12[%c1_53, %c0_54, %c128_55], %47 {strides = array<i32>} : memref<18x16x192xf32, #tpu.memory_space<vmem>>, vector<16x15x64xf32>,
    %c0_56 = arith.constant 0 : index
    %c0_57 = arith.constant 0 : index
    %c0_58 = arith.constant 0 : index
    %49 = vector.load %arg12[%c0_56, %c0_57, %c0_58] : memref<18x16x192xf32, #tpu.memory_space<vmem>>, vector<16x16x192xf32>
    %50 = vector.shape_cast %49 : vector<16x16x192xf32> to vector<256x192xf32>
    %c0_59 = arith.constant 0 : index
    %c0_60 = arith.constant 0 : index
    %c0_61 = arith.constant 0 : index
    %51 = vector.load %arg5[%c0_59, %c0_60, %c0_61] : memref<3x192x64xf32, #tpu.memory_space<vmem>>, vector<1x192x64xf32>
    %52 = vector.shape_cast %51 : vector<1x192x64xf32> to vector<192x64xf32>
    %cst_62 = arith.constant dense<0.000000e+00> : vector<256x64xf32>
    %53 = tpu.matmul %50, %52, %cst_62 {dimension_numbers = #tpu.dot_dimension_numbers<[1], [0], [0], [1], [0, 0, 1, 1], [], []>} : vector<256x192xf32>, vector<192x64xf32>, vector<256x64xf32> -> vector<256x64xf32>
    %c1_63 = arith.constant 1 : index
    %c0_64 = arith.constant 0 : index
    %c0_65 = arith.constant 0 : index
    %54 = vector.load %arg12[%c1_63, %c0_64, %c0_65] : memref<18x16x192xf32, #tpu.memory_space<vmem>>, vector<16x16x192xf32>
    %55 = vector.shape_cast %54 : vector<16x16x192xf32> to vector<256x192xf32>
    %c1_66 = arith.constant 1 : index
    %c0_67 = arith.constant 0 : index
    %c0_68 = arith.constant 0 : index
    %56 = vector.load %arg5[%c1_66, %c0_67, %c0_68] : memref<3x192x64xf32, #tpu.memory_space<vmem>>, vector<1x192x64xf32>
    %57 = vector.shape_cast %56 : vector<1x192x64xf32> to vector<192x64xf32>
    %cst_69 = arith.constant dense<0.000000e+00> : vector<256x64xf32>
    %58 = tpu.matmul %55, %57, %cst_69 {dimension_numbers = #tpu.dot_dimension_numbers<[1], [0], [0], [1], [0, 0, 1, 1], [], []>} : vector<256x192xf32>, vector<192x64xf32>, vector<256x64xf32> -> vector<256x64xf32>
    %59 = arith.addf %53, %58 : vector<256x64xf32>
    %c2_70 = arith.constant 2 : index
    %c0_71 = arith.constant 0 : index
    %c0_72 = arith.constant 0 : index
    %60 = vector.load %arg12[%c2_70, %c0_71, %c0_72] : memref<18x16x192xf32, #tpu.memory_space<vmem>>, vector<16x16x192xf32>
    %61 = vector.shape_cast %60 : vector<16x16x192xf32> to vector<256x192xf32>
    %c2_73 = arith.constant 2 : index
    %c0_74 = arith.constant 0 : index
    %c0_75 = arith.constant 0 : index
    %62 = vector.load %arg5[%c2_73, %c0_74, %c0_75] : memref<3x192x64xf32, #tpu.memory_space<vmem>>, vector<1x192x64xf32>
    %63 = vector.shape_cast %62 : vector<1x192x64xf32> to vector<192x64xf32>
    %cst_76 = arith.constant dense<0.000000e+00> : vector<256x64xf32>
    %64 = tpu.matmul %61, %63, %cst_76 {dimension_numbers = #tpu.dot_dimension_numbers<[1], [0], [0], [1], [0, 0, 1, 1], [], []>} : vector<256x192xf32>, vector<192x64xf32>, vector<256x64xf32> -> vector<256x64xf32>
    %65 = arith.addf %59, %64 : vector<256x64xf32>
    %c0_77 = arith.constant 0 : index
    %c0_78 = arith.constant 0 : index
    %66 = vector.load %arg6[%c0_77, %c0_78] : memref<1x64xf32, #tpu.memory_space<vmem>>, vector<1x64xf32>
    %67 = vector.broadcast %66 : vector<1x64xf32> to vector<256x64xf32>
    %68 = arith.addf %65, %67 : vector<256x64xf32>
    %69 = vector.shape_cast %68 : vector<256x64xf32> to vector<16x16x64xf32>
    %70 = vector.broadcast %7 : f32 to vector<16x16x64xf32>
    %71 = arith.mulf %69, %70 : vector<16x16x64xf32>
    %72 = arith.addf %71, %11 : vector<16x16x64xf32>
    %cst_79 = arith.constant 0.000000e+00 : f32
    %73 = vector.broadcast %cst_79 : f32 to vector<16x16x64xf32>
    %74 = arith.maximumf %72, %73 : vector<16x16x64xf32>
    %c1_80 = arith.constant 1 : index
    %c0_81 = arith.constant 0 : index
    %c64_82 = arith.constant 64 : index
    %75 = vector.load %arg12[%c1_80, %c0_81, %c64_82] : memref<18x16x192xf32, #tpu.memory_space<vmem>>, vector<16x16x64xf32>
    tpu.vector_store %arg12[%c1_80, %c0_81, %c64_82], %74 {strides = array<i32>} : memref<18x16x192xf32, #tpu.memory_space<vmem>>, vector<16x16x64xf32>,
    %76 = vector.extract_strided_slice %74 {offsets = [0, 0, 0], sizes = [16, 15, 64], strides = [1, 1, 1]} : vector<16x16x64xf32> to vector<16x15x64xf32>
    %c1_83 = arith.constant 1 : index
    %c1_84 = arith.constant 1 : index
    %c0_85 = arith.constant 0 : index
    %77 = vector.load %arg12[%c1_83, %c1_84, %c0_85] : memref<18x16x192xf32, #tpu.memory_space<vmem>>, vector<16x15x64xf32>
    tpu.vector_store %arg12[%c1_83, %c1_84, %c0_85], %76 {strides = array<i32>} : memref<18x16x192xf32, #tpu.memory_space<vmem>>, vector<16x15x64xf32>,
    %78 = vector.extract_strided_slice %74 {offsets = [0, 1, 0], sizes = [16, 15, 64], strides = [1, 1, 1]} : vector<16x16x64xf32> to vector<16x15x64xf32>
    %c1_86 = arith.constant 1 : index
    %c0_87 = arith.constant 0 : index
    %c128_88 = arith.constant 128 : index
    %79 = vector.load %arg12[%c1_86, %c0_87, %c128_88] : memref<18x16x192xf32, #tpu.memory_space<vmem>>, vector<16x15x64xf32>
    tpu.vector_store %arg12[%c1_86, %c0_87, %c128_88], %78 {strides = array<i32>} : memref<18x16x192xf32, #tpu.memory_space<vmem>>, vector<16x15x64xf32>,
    %c0_89 = arith.constant 0 : index
    %c0_90 = arith.constant 0 : index
    %c0_91 = arith.constant 0 : index
    %80 = vector.load %arg12[%c0_89, %c0_90, %c0_91] : memref<18x16x192xf32, #tpu.memory_space<vmem>>, vector<16x16x192xf32>
    %81 = vector.shape_cast %80 : vector<16x16x192xf32> to vector<256x192xf32>
    %c0_92 = arith.constant 0 : index
    %c0_93 = arith.constant 0 : index
    %c0_94 = arith.constant 0 : index
    %82 = vector.load %arg7[%c0_92, %c0_93, %c0_94] : memref<3x192x64xf32, #tpu.memory_space<vmem>>, vector<1x192x64xf32>
    %83 = vector.shape_cast %82 : vector<1x192x64xf32> to vector<192x64xf32>
    %cst_95 = arith.constant dense<0.000000e+00> : vector<256x64xf32>
    %84 = tpu.matmul %81, %83, %cst_95 {dimension_numbers = #tpu.dot_dimension_numbers<[1], [0], [0], [1], [0, 0, 1, 1], [], []>} : vector<256x192xf32>, vector<192x64xf32>, vector<256x64xf32> -> vector<256x64xf32>
    %c1_96 = arith.constant 1 : index
    %c0_97 = arith.constant 0 : index
    %c0_98 = arith.constant 0 : index
    %85 = vector.load %arg12[%c1_96, %c0_97, %c0_98] : memref<18x16x192xf32, #tpu.memory_space<vmem>>, vector<16x16x192xf32>
    %86 = vector.shape_cast %85 : vector<16x16x192xf32> to vector<256x192xf32>
    %c1_99 = arith.constant 1 : index
    %c0_100 = arith.constant 0 : index
    %c0_101 = arith.constant 0 : index
    %87 = vector.load %arg7[%c1_99, %c0_100, %c0_101] : memref<3x192x64xf32, #tpu.memory_space<vmem>>, vector<1x192x64xf32>
    %88 = vector.shape_cast %87 : vector<1x192x64xf32> to vector<192x64xf32>
    %cst_102 = arith.constant dense<0.000000e+00> : vector<256x64xf32>
    %89 = tpu.matmul %86, %88, %cst_102 {dimension_numbers = #tpu.dot_dimension_numbers<[1], [0], [0], [1], [0, 0, 1, 1], [], []>} : vector<256x192xf32>, vector<192x64xf32>, vector<256x64xf32> -> vector<256x64xf32>
    %90 = arith.addf %84, %89 : vector<256x64xf32>
    %c2_103 = arith.constant 2 : index
    %c0_104 = arith.constant 0 : index
    %c0_105 = arith.constant 0 : index
    %91 = vector.load %arg12[%c2_103, %c0_104, %c0_105] : memref<18x16x192xf32, #tpu.memory_space<vmem>>, vector<16x16x192xf32>
    %92 = vector.shape_cast %91 : vector<16x16x192xf32> to vector<256x192xf32>
    %c2_106 = arith.constant 2 : index
    %c0_107 = arith.constant 0 : index
    %c0_108 = arith.constant 0 : index
    %93 = vector.load %arg7[%c2_106, %c0_107, %c0_108] : memref<3x192x64xf32, #tpu.memory_space<vmem>>, vector<1x192x64xf32>
    %94 = vector.shape_cast %93 : vector<1x192x64xf32> to vector<192x64xf32>
    %cst_109 = arith.constant dense<0.000000e+00> : vector<256x64xf32>
    %95 = tpu.matmul %92, %94, %cst_109 {dimension_numbers = #tpu.dot_dimension_numbers<[1], [0], [0], [1], [0, 0, 1, 1], [], []>} : vector<256x192xf32>, vector<192x64xf32>, vector<256x64xf32> -> vector<256x64xf32>
    %96 = arith.addf %90, %95 : vector<256x64xf32>
    %c0_110 = arith.constant 0 : index
    %c0_111 = arith.constant 0 : index
    %97 = vector.load %arg8[%c0_110, %c0_111] : memref<1x64xf32, #tpu.memory_space<vmem>>, vector<1x64xf32>
    %98 = vector.broadcast %97 : vector<1x64xf32> to vector<256x64xf32>
    %99 = arith.addf %96, %98 : vector<256x64xf32>
    %100 = vector.shape_cast %99 : vector<256x64xf32> to vector<16x16x64xf32>
    %101 = vector.broadcast %8 : f32 to vector<16x16x64xf32>
    %102 = arith.mulf %100, %101 : vector<16x16x64xf32>
    %103 = arith.addf %102, %41 : vector<16x16x64xf32>
    %cst_112 = arith.constant 0.000000e+00 : f32
    %104 = vector.broadcast %cst_112 : f32 to vector<16x16x64xf32>
    %105 = arith.maximumf %103, %104 : vector<16x16x64xf32>
    %c1_113 = arith.constant 1 : index
    %c0_114 = arith.constant 0 : index
    %c64_115 = arith.constant 64 : index
    %106 = vector.load %arg12[%c1_113, %c0_114, %c64_115] : memref<18x16x192xf32, #tpu.memory_space<vmem>>, vector<16x16x64xf32>
    tpu.vector_store %arg12[%c1_113, %c0_114, %c64_115], %105 {strides = array<i32>} : memref<18x16x192xf32, #tpu.memory_space<vmem>>, vector<16x16x64xf32>,
    %107 = vector.extract_strided_slice %105 {offsets = [0, 0, 0], sizes = [16, 15, 64], strides = [1, 1, 1]} : vector<16x16x64xf32> to vector<16x15x64xf32>
    %c1_116 = arith.constant 1 : index
    %c1_117 = arith.constant 1 : index
    %c0_118 = arith.constant 0 : index
    %108 = vector.load %arg12[%c1_116, %c1_117, %c0_118] : memref<18x16x192xf32, #tpu.memory_space<vmem>>, vector<16x15x64xf32>
    tpu.vector_store %arg12[%c1_116, %c1_117, %c0_118], %107 {strides = array<i32>} : memref<18x16x192xf32, #tpu.memory_space<vmem>>, vector<16x15x64xf32>,
    %109 = vector.extract_strided_slice %105 {offsets = [0, 1, 0], sizes = [16, 15, 64], strides = [1, 1, 1]} : vector<16x16x64xf32> to vector<16x15x64xf32>
    %c1_119 = arith.constant 1 : index
    %c0_120 = arith.constant 0 : index
    %c128_121 = arith.constant 128 : index
    %110 = vector.load %arg12[%c1_119, %c0_120, %c128_121] : memref<18x16x192xf32, #tpu.memory_space<vmem>>, vector<16x15x64xf32>
    tpu.vector_store %arg12[%c1_119, %c0_120, %c128_121], %109 {strides = array<i32>} : memref<18x16x192xf32, #tpu.memory_space<vmem>>, vector<16x15x64xf32>,
    %c0_122 = arith.constant 0 : index
    %c0_123 = arith.constant 0 : index
    %c0_124 = arith.constant 0 : index
    %111 = vector.load %arg12[%c0_122, %c0_123, %c0_124] : memref<18x16x192xf32, #tpu.memory_space<vmem>>, vector<16x16x192xf32>
    %112 = vector.shape_cast %111 : vector<16x16x192xf32> to vector<256x192xf32>
    %c0_125 = arith.constant 0 : index
    %c0_126 = arith.constant 0 : index
    %c0_127 = arith.constant 0 : index
    %113 = vector.load %arg9[%c0_125, %c0_126, %c0_127] : memref<3x192x64xf32, #tpu.memory_space<vmem>>, vector<1x192x64xf32>
    %114 = vector.shape_cast %113 : vector<1x192x64xf32> to vector<192x64xf32>
    %cst_128 = arith.constant dense<0.000000e+00> : vector<256x64xf32>
    %115 = tpu.matmul %112, %114, %cst_128 {dimension_numbers = #tpu.dot_dimension_numbers<[1], [0], [0], [1], [0, 0, 1, 1], [], []>} : vector<256x192xf32>, vector<192x64xf32>, vector<256x64xf32> -> vector<256x64xf32>
    %c1_129 = arith.constant 1 : index
    %c0_130 = arith.constant 0 : index
    %c0_131 = arith.constant 0 : index
    %116 = vector.load %arg12[%c1_129, %c0_130, %c0_131] : memref<18x16x192xf32, #tpu.memory_space<vmem>>, vector<16x16x192xf32>
    %117 = vector.shape_cast %116 : vector<16x16x192xf32> to vector<256x192xf32>
    %c1_132 = arith.constant 1 : index
    %c0_133 = arith.constant 0 : index
    %c0_134 = arith.constant 0 : index
    %118 = vector.load %arg9[%c1_132, %c0_133, %c0_134] : memref<3x192x64xf32, #tpu.memory_space<vmem>>, vector<1x192x64xf32>
    %119 = vector.shape_cast %118 : vector<1x192x64xf32> to vector<192x64xf32>
    %cst_135 = arith.constant dense<0.000000e+00> : vector<256x64xf32>
    %120 = tpu.matmul %117, %119, %cst_135 {dimension_numbers = #tpu.dot_dimension_numbers<[1], [0], [0], [1], [0, 0, 1, 1], [], []>} : vector<256x192xf32>, vector<192x64xf32>, vector<256x64xf32> -> vector<256x64xf32>
    %121 = arith.addf %115, %120 : vector<256x64xf32>
    %c2_136 = arith.constant 2 : index
    %c0_137 = arith.constant 0 : index
    %c0_138 = arith.constant 0 : index
    %122 = vector.load %arg12[%c2_136, %c0_137, %c0_138] : memref<18x16x192xf32, #tpu.memory_space<vmem>>, vector<16x16x192xf32>
    %123 = vector.shape_cast %122 : vector<16x16x192xf32> to vector<256x192xf32>
    %c2_139 = arith.constant 2 : index
    %c0_140 = arith.constant 0 : index
    %c0_141 = arith.constant 0 : index
    %124 = vector.load %arg9[%c2_139, %c0_140, %c0_141] : memref<3x192x64xf32, #tpu.memory_space<vmem>>, vector<1x192x64xf32>
    %125 = vector.shape_cast %124 : vector<1x192x64xf32> to vector<192x64xf32>
    %cst_142 = arith.constant dense<0.000000e+00> : vector<256x64xf32>
    %126 = tpu.matmul %123, %125, %cst_142 {dimension_numbers = #tpu.dot_dimension_numbers<[1], [0], [0], [1], [0, 0, 1, 1], [], []>} : vector<256x192xf32>, vector<192x64xf32>, vector<256x64xf32> -> vector<256x64xf32>
    %127 = arith.addf %121, %126 : vector<256x64xf32>
    %c0_143 = arith.constant 0 : index
    %c0_144 = arith.constant 0 : index
    %128 = vector.load %arg10[%c0_143, %c0_144] : memref<1x64xf32, #tpu.memory_space<vmem>>, vector<1x64xf32>
    %129 = vector.broadcast %128 : vector<1x64xf32> to vector<256x64xf32>
    %130 = arith.addf %127, %129 : vector<256x64xf32>
    %131 = vector.shape_cast %130 : vector<256x64xf32> to vector<16x16x64xf32>
    %132 = vector.broadcast %9 : f32 to vector<16x16x64xf32>
    %133 = arith.mulf %131, %132 : vector<16x16x64xf32>
    %134 = arith.addf %133, %72 : vector<16x16x64xf32>
    %c0_145 = arith.constant 0 : index
    %c0_146 = arith.constant 0 : index
    %c0_147 = arith.constant 0 : index
    %c0_148 = arith.constant 0 : index
    %135 = vector.load %arg11[%c0_145, %c0_146, %c0_147, %c0_148] : memref<1x16x16x64xf32, #tpu.memory_space<vmem>>, vector<1x16x16x64xf32>
    %136 = vector.shape_cast %135 : vector<1x16x16x64xf32> to vector<16x16x64xf32>
    %137 = vector.shape_cast %134 : vector<16x16x64xf32> to vector<1x16x16x64xf32>
    tpu.vector_store %arg11[%c0_145, %c0_146, %c0_147, %c0_148], %137 {strides = array<i32>} : memref<1x16x16x64xf32, #tpu.memory_space<vmem>>, vector<1x16x16x64xf32>,
    return
  }
  func.func @transform_0(%arg0: i32) -> i32 {
    %c0_i32 = arith.constant 0 : i32
    %c0_i32_0 = arith.constant 0 : i32
    return %c0_i32 : i32
  }
  func.func @transform_1(%arg0: i32) -> (i32, i32, i32, i32) {
    %c0_i32 = arith.constant 0 : i32
    %c0_i32_0 = arith.constant 0 : i32
    %c0_i32_1 = arith.constant 0 : i32
    %c0_i32_2 = arith.constant 0 : i32
    return %arg0, %c0_i32, %c0_i32_0, %c0_i32_1 : i32, i32, i32, i32
  }
  func.func @transform_2(%arg0: i32) -> (i32, i32, i32) {
    %c0_i32 = arith.constant 0 : i32
    %c0_i32_0 = arith.constant 0 : i32
    %c0_i32_1 = arith.constant 0 : i32
    %c0_i32_2 = arith.constant 0 : i32
    return %c0_i32, %c0_i32_0, %c0_i32_1 : i32, i32, i32
  }
  func.func @transform_3(%arg0: i32) -> (i32, i32) {
    %c0_i32 = arith.constant 0 : i32
    %c0_i32_0 = arith.constant 0 : i32
    %c0_i32_1 = arith.constant 0 : i32
    return %c0_i32, %c0_i32_0 : i32, i32
  }
  func.func @transform_4(%arg0: i32) -> (i32, i32, i32) {
    %c0_i32 = arith.constant 0 : i32
    %c0_i32_0 = arith.constant 0 : i32
    %c0_i32_1 = arith.constant 0 : i32
    %c0_i32_2 = arith.constant 0 : i32
    return %c0_i32, %c0_i32_0, %c0_i32_1 : i32, i32, i32
  }
  func.func @transform_5(%arg0: i32) -> (i32, i32) {
    %c0_i32 = arith.constant 0 : i32
    %c0_i32_0 = arith.constant 0 : i32
    %c0_i32_1 = arith.constant 0 : i32
    return %c0_i32, %c0_i32_0 : i32, i32
  }
  func.func @transform_6(%arg0: i32) -> (i32, i32, i32) {
    %c0_i32 = arith.constant 0 : i32
    %c0_i32_0 = arith.constant 0 : i32
    %c0_i32_1 = arith.constant 0 : i32
    %c0_i32_2 = arith.constant 0 : i32
    return %c0_i32, %c0_i32_0, %c0_i32_1 : i32, i32, i32
  }
  func.func @transform_7(%arg0: i32) -> (i32, i32) {
    %c0_i32 = arith.constant 0 : i32
    %c0_i32_0 = arith.constant 0 : i32
    %c0_i32_1 = arith.constant 0 : i32
    return %c0_i32, %c0_i32_0 : i32, i32
  }
  func.func @transform_8(%arg0: i32) -> (i32, i32, i32) {
    %c0_i32 = arith.constant 0 : i32
    %c0_i32_0 = arith.constant 0 : i32
    %c0_i32_1 = arith.constant 0 : i32
    %c0_i32_2 = arith.constant 0 : i32
    return %c0_i32, %c0_i32_0, %c0_i32_1 : i32, i32, i32
  }
  func.func @transform_9(%arg0: i32) -> (i32, i32) {
    %c0_i32 = arith.constant 0 : i32
    %c0_i32_0 = arith.constant 0 : i32
    %c0_i32_1 = arith.constant 0 : i32
    return %c0_i32, %c0_i32_0 : i32, i32
  }
  func.func @transform_10(%arg0: i32) -> (i32, i32, i32, i32) {
    %c0_i32 = arith.constant 0 : i32
    %c0_i32_0 = arith.constant 0 : i32
    %c0_i32_1 = arith.constant 0 : i32
    %c0_i32_2 = arith.constant 0 : i32
    return %arg0, %c0_i32, %c0_i32_0, %c0_i32_1 : i32, i32, i32, i32
  }
}

</mosaic_0001>

<llo_original>
// kernel: tpu_custom_call.1
$region0: #{tpu_custom_call.1}
  #allocation0 [shape = 'u32[]', space=smem, size = 0x4, offset = 0x4, fixed_abs, tag = 'smem constant byte address 0x4 - core index']
  #allocation1 [shape = 'u32[144,128]{1,0:T(1,128)}', space=vmem, size = 0x12000, scoped, tag = 'internal scratch']
  #allocation2 [shape = 'f32[18,16,192]{2,1,0:T(8,128)}', space=vmem, size = 0x48000, scoped, tag = 'scratch operand']
  %s0 = inlined_call_operand.vmem [shape: f32[4], index: 0, kind: input, shape index: {}]
  %s1 = inlined_call_operand.vmem [shape: f32[2,16,16,64], index: 1, kind: input, shape index: {}]
  %s2 = inlined_call_operand.vmem [shape: f32[3,192,64], index: 2, kind: input, shape index: {}]
  %s3 = inlined_call_operand.vmem [shape: f32[1,64], index: 3, kind: input, shape index: {}]
  %s4 = inlined_call_operand.vmem [shape: f32[3,192,64], index: 4, kind: input, shape index: {}]
  %s5 = inlined_call_operand.vmem [shape: f32[1,64], index: 5, kind: input, shape index: {}]
  %s6 = inlined_call_operand.vmem [shape: f32[3,192,64], index: 6, kind: input, shape index: {}]
  %s7 = inlined_call_operand.vmem [shape: f32[1,64], index: 7, kind: input, shape index: {}]
  %s8 = inlined_call_operand.vmem [shape: f32[3,192,64], index: 8, kind: input, shape index: {}]
  %s9 = inlined_call_operand.vmem [shape: f32[1,64], index: 9, kind: input, shape index: {}]
  %s10 = inlined_call_operand.hbm [shape: f32[2,16,16,64], index: 10, kind: output, shape index: {}]
  %s11 = sld [smem:[#allocation0]]
  $region77: #{tpu_custom_call.1} parent=0
    _
  %s13 = ssub.s32 1, %s11
  %s14 = scalar_select 0, %s13, %s11
  $region1: #{tpu_custom_call.1} parent=0
    #allocation3 [shape = 'u8[512]{0}', space=smem, size = 0x200, scoped, tag = 'input window, operand 0, single buffered']
    #allocation4 [shape = 's32[2]{0}', space=sflag, size = 0x8, scoped, tag = 'scoped memory for tpu_custom_call.1']
    #allocation5 [shape = 's32[2]{0}', space=sflag, size = 0x8, scoped, tag = 'scoped memory for tpu_custom_call.1']
    #allocation6 [shape = 'u8[262144]{0}', space=vmem, size = 0x40000, scoped, tag = 'output window, operand 0']
    %15 = vsyncpa [#allocation5], 0
    %16 = vsyncpa [#allocation4], 0
    %s17 = scalar_lea.sflag [#allocation4], 1
    %18 = vsyncpa %s17, 0
    loop: start=0, step=1, limit=4
    $region2: #{tpu_custom_call.1} parent=1 // loop_pre_header
      _
    $region3: #{tpu_custom_call.1} parent=1 // loop_header
      %s20 = sphi 0, %s24
      %p21 = scmp.ge.s32.totalorder %s20, 4
      %s28 = sphi 0, %s28
      %s30 = sphi 0, %s28
      %s31 = sphi 0, %s30
      %s45 = sphi 0, %s31
      %s51 = sphi 0, %s53
      %s54 = sphi 0, %s51
      %s55 = sphi 0, %s54
      %s71 = sphi 0, %s55
      %s75 = sphi 0, %s75
      %s77 = sphi 0, %s75
      %s78 = sphi 0, %s77
      %s92 = sphi 0, %s78
      %s96 = sphi 0, %s96
      %s98 = sphi 0, %s96
      %s99 = sphi 0, %s98
      %s113 = sphi 0, %s99
      %s117 = sphi 0, %s117
      %s119 = sphi 0, %s117
      %s120 = sphi 0, %s119
      %s134 = sphi 0, %s120
      %s138 = sphi 0, %s138
      %s140 = sphi 0, %s138
      %s141 = sphi 0, %s140
      %s155 = sphi 0, %s141
      %s159 = sphi 0, %s159
      %s161 = sphi 0, %s159
      %s162 = sphi 0, %s161
      %s176 = sphi 0, %s162
      %s180 = sphi 0, %s180
      %s182 = sphi 0, %s180
      %s183 = sphi 0, %s182
      %s197 = sphi 0, %s183
      %s201 = sphi 0, %s201
      %s203 = sphi 0, %s201
      %s204 = sphi 0, %s203
      %s218 = sphi 0, %s204
      %s222 = sphi 0, %s222
      %s224 = sphi 0, %s222
      %s225 = sphi 0, %s224
      %s239 = sphi 0, %s225
      %s245 = sphi 0, %s247
      %s248 = sphi 0, %s245
      %s249 = sphi 0, %s248
      %s265 = sphi 0, %s249
    $region4: #{tpu_custom_call.1} parent=1 // loop_header_branch
      %23 = sbr.rel (%p21) target = $region8
    $region5: #{tpu_custom_call.1} parent=1 // loop_body
      %s25 = ssub.s32 %s20, 1
      %s26 = ssub.s32 %s20, 2
      %s27 = sadd.s32 %s20, 1
      %s29 = sadd.s32 %s28, 1
      %p32 = scmp.eq.s32.totalorder %s20, 1
      %p33 = scmp.ne.s32.totalorder %s28, %s30
      %p34 = scmp.eq.s32.totalorder %s20, 0
      %p35 = por %p33, %p34
      %p36 = scmp.ne.s32.totalorder %s28, %s30
      %p37 = scmp.eq.s32.totalorder %s25, 1
      %p38 = por %p36, %p37
      %p39 = scmp.ne.s32.totalorder %s30, %s31
      %p40 = scmp.eq.s32.totalorder %s25, 0
      %p41 = por %p39, %p40
      %p42 = scmp.ne.s32.totalorder %s30, %s31
      %p43 = scmp.eq.s32.totalorder %s26, 1
      %p44 = por %p42, %p43
      %p46 = scmp.ne.s32.totalorder %s31, %s45
      %p47 = scmp.eq.s32.totalorder %s26, 0
      %p48 = por %p46, %p47
      %s49 = ssub.s32 %s20, %s27
      %p50 = scmp.eq.s32.totalorder %s49, 0
      %s52 = sadd.s32 %s51, 1
      %s53 = scalar_select %p50, %s51, %s52
      %p56 = pneg %p50
      %p57 = scmp.eq.s32.totalorder %s20, 1
      %p58 = por %p56, %p57
      %p59 = scmp.ne.s32.totalorder %s51, %s54
      %p60 = scmp.eq.s32.totalorder %s20, 0
      %p61 = por %p59, %p60
      %p62 = scmp.ne.s32.totalorder %s51, %s54
      %p63 = scmp.eq.s32.totalorder %s25, 1
      %p64 = por %p62, %p63
      %p65 = scmp.ne.s32.totalorder %s54, %s55
      %p66 = scmp.eq.s32.totalorder %s25, 0
      %p67 = por %p65, %p66
      %p68 = scmp.ne.s32.totalorder %s54, %s55
      %p69 = scmp.eq.s32.totalorder %s26, 1
      %p70 = por %p68, %p69
      %p72 = scmp.ne.s32.totalorder %s55, %s71
      %p73 = scmp.eq.s32.totalorder %s26, 0
      %p74 = por %p72, %p73
      %s76 = sadd.s32 %s75, 1
      %p79 = scmp.eq.s32.totalorder %s20, 1
      %p80 = scmp.ne.s32.totalorder %s75, %s77
      %p81 = scmp.eq.s32.totalorder %s20, 0
      %p82 = por %p80, %p81
      %p83 = scmp.ne.s32.totalorder %s75, %s77
      %p84 = scmp.eq.s32.totalorder %s25, 1
      %p85 = por %p83, %p84
      %p86 = scmp.ne.s32.totalorder %s77, %s78
      %p87 = scmp.eq.s32.totalorder %s25, 0
      %p88 = por %p86, %p87
      %p89 = scmp.ne.s32.totalorder %s77, %s78
      %p90 = scmp.eq.s32.totalorder %s26, 1
      %p91 = por %p89, %p90
      %p93 = scmp.ne.s32.totalorder %s78, %s92
      %p94 = scmp.eq.s32.totalorder %s26, 0
      %p95 = por %p93, %p94
      %s97 = sadd.s32 %s96, 1
      %p100 = scmp.eq.s32.totalorder %s20, 1
      %p101 = scmp.ne.s32.totalorder %s96, %s98
      %p102 = scmp.eq.s32.totalorder %s20, 0
      %p103 = por %p101, %p102
      %p104 = scmp.ne.s32.totalorder %s96, %s98
      %p105 = scmp.eq.s32.totalorder %s25, 1
      %p106 = por %p104, %p105
      %p107 = scmp.ne.s32.totalorder %s98, %s99
      %p108 = scmp.eq.s32.totalorder %s25, 0
      %p109 = por %p107, %p108
      %p110 = scmp.ne.s32.totalorder %s98, %s99
      %p111 = scmp.eq.s32.totalorder %s26, 1
      %p112 = por %p110, %p111
      %p114 = scmp.ne.s32.totalorder %s99, %s113
      %p115 = scmp.eq.s32.totalorder %s26, 0
      %p116 = por %p114, %p115
      %s118 = sadd.s32 %s117, 1
      %p121 = scmp.eq.s32.totalorder %s20, 1
      %p122 = scmp.ne.s32.totalorder %s117, %s119
      %p123 = scmp.eq.s32.totalorder %s20, 0
      %p124 = por %p122, %p123
      %p125 = scmp.ne.s32.totalorder %s117, %s119
      %p126 = scmp.eq.s32.totalorder %s25, 1
      %p127 = por %p125, %p126
      %p128 = scmp.ne.s32.totalorder %s119, %s120
      %p129 = scmp.eq.s32.totalorder %s25, 0
      %p130 = por %p128, %p129
      %p131 = scmp.ne.s32.totalorder %s119, %s120
      %p132 = scmp.eq.s32.totalorder %s26, 1
      %p133 = por %p131, %p132
      %p135 = scmp.ne.s32.totalorder %s120, %s134
      %p136 = scmp.eq.s32.totalorder %s26, 0
      %p137 = por %p135, %p136
      %s139 = sadd.s32 %s138, 1
      %p142 = scmp.eq.s32.totalorder %s20, 1
      %p143 = scmp.ne.s32.totalorder %s138, %s140
      %p144 = scmp.eq.s32.totalorder %s20, 0
      %p145 = por %p143, %p144
      %p146 = scmp.ne.s32.totalorder %s138, %s140
      %p147 = scmp.eq.s32.totalorder %s25, 1
      %p148 = por %p146, %p147
      %p149 = scmp.ne.s32.totalorder %s140, %s141
      %p150 = scmp.eq.s32.totalorder %s25, 0
      %p151 = por %p149, %p150
      %p152 = scmp.ne.s32.totalorder %s140, %s141
      %p153 = scmp.eq.s32.totalorder %s26, 1
      %p154 = por %p152, %p153
      %p156 = scmp.ne.s32.totalorder %s141, %s155
      %p157 = scmp.eq.s32.totalorder %s26, 0
      %p158 = por %p156, %p157
      %s160 = sadd.s32 %s159, 1
      %p163 = scmp.eq.s32.totalorder %s20, 1
      %p164 = scmp.ne.s32.totalorder %s159, %s161
      %p165 = scmp.eq.s32.totalorder %s20, 0
      %p166 = por %p164, %p165
      %p167 = scmp.ne.s32.totalorder %s159, %s161
      %p168 = scmp.eq.s32.totalorder %s25, 1
      %p169 = por %p167, %p168
      %p170 = scmp.ne.s32.totalorder %s161, %s162
      %p171 = scmp.eq.s32.totalorder %s25, 0
      %p172 = por %p170, %p171
      %p173 = scmp.ne.s32.totalorder %s161, %s162
      %p174 = scmp.eq.s32.totalorder %s26, 1
      %p175 = por %p173, %p174
      %p177 = scmp.ne.s32.totalorder %s162, %s176
      %p178 = scmp.eq.s32.totalorder %s26, 0
      %p179 = por %p177, %p178
      %s181 = sadd.s32 %s180, 1
      %p184 = scmp.eq.s32.totalorder %s20, 1
      %p185 = scmp.ne.s32.totalorder %s180, %s182
      %p186 = scmp.eq.s32.totalorder %s20, 0
      %p187 = por %p185, %p186
      %p188 = scmp.ne.s32.totalorder %s180, %s182
      %p189 = scmp.eq.s32.totalorder %s25, 1
      %p190 = por %p188, %p189
      %p191 = scmp.ne.s32.totalorder %s182, %s183
      %p192 = scmp.eq.s32.totalorder %s25, 0
      %p193 = por %p191, %p192
      %p194 = scmp.ne.s32.totalorder %s182, %s183
      %p195 = scmp.eq.s32.totalorder %s26, 1
      %p196 = por %p194, %p195
      %p198 = scmp.ne.s32.totalorder %s183, %s197
      %p199 = scmp.eq.s32.totalorder %s26, 0
      %p200 = por %p198, %p199
      %s202 = sadd.s32 %s201, 1
      %p205 = scmp.eq.s32.totalorder %s20, 1
      %p206 = scmp.ne.s32.totalorder %s201, %s203
      %p207 = scmp.eq.s32.totalorder %s20, 0
      %p208 = por %p206, %p207
      %p209 = scmp.ne.s32.totalorder %s201, %s203
      %p210 = scmp.eq.s32.totalorder %s25, 1
      %p211 = por %p209, %p210
      %p212 = scmp.ne.s32.totalorder %s203, %s204
      %p213 = scmp.eq.s32.totalorder %s25, 0
      %p214 = por %p212, %p213
      %p215 = scmp.ne.s32.totalorder %s203, %s204
      %p216 = scmp.eq.s32.totalorder %s26, 1
      %p217 = por %p215, %p216
      %p219 = scmp.ne.s32.totalorder %s204, %s218
      %p220 = scmp.eq.s32.totalorder %s26, 0
      %p221 = por %p219, %p220
      %s223 = sadd.s32 %s222, 1
      %p226 = scmp.eq.s32.totalorder %s20, 1
      %p227 = scmp.ne.s32.totalorder %s222, %s224
      %p228 = scmp.eq.s32.totalorder %s20, 0
      %p229 = por %p227, %p228
      %p230 = scmp.ne.s32.totalorder %s222, %s224
      %p231 = scmp.eq.s32.totalorder %s25, 1
      %p232 = por %p230, %p231
      %p233 = scmp.ne.s32.totalorder %s224, %s225
      %p234 = scmp.eq.s32.totalorder %s25, 0
      %p235 = por %p233, %p234
      %p236 = scmp.ne.s32.totalorder %s224, %s225
      %p237 = scmp.eq.s32.totalorder %s26, 1
      %p238 = por %p236, %p237
      %p240 = scmp.ne.s32.totalorder %s225, %s239
      %p241 = scmp.eq.s32.totalorder %s26, 0
      %p242 = por %p240, %p241
      %s243 = ssub.s32 %s20, %s27
      %p244 = scmp.eq.s32.totalorder %s243, 0
      %s246 = sadd.s32 %s245, 1
      %s247 = scalar_select %p244, %s245, %s246
      %p250 = pneg %p244
      %p251 = scmp.eq.s32.totalorder %s20, 1
      %p252 = por %p250, %p251
      %p253 = scmp.ne.s32.totalorder %s245, %s248
      %p254 = scmp.eq.s32.totalorder %s20, 0
      %p255 = por %p253, %p254
      %p256 = scmp.ne.s32.totalorder %s245, %s248
      %p257 = scmp.eq.s32.totalorder %s25, 1
      %p258 = por %p256, %p257
      %p259 = scmp.ne.s32.totalorder %s248, %s249
      %p260 = scmp.eq.s32.totalorder %s25, 0
      %p261 = por %p259, %p260
      %p262 = scmp.ne.s32.totalorder %s248, %s249
      %p263 = scmp.eq.s32.totalorder %s26, 1
      %p264 = por %p262, %p263
      %p266 = scmp.ne.s32.totalorder %s249, %s265
      %p267 = scmp.eq.s32.totalorder %s26, 0
      %p268 = por %p266, %p267
      %p269 = scmp.le.s32.totalorder 1, %s20
      %p270 = scmp.lt.s32.totalorder %s20, 3
      %p271 = pnand %p269, %p270
      %p272 = pneg %p271
      // Predicated region
      $region9: #{tpu_custom_call.1} parent=5 // pred_check
        _
      $region10: #{tpu_custom_call.1} parent=5 // pred_check_branch
        %274 = sbr.rel (%p271) target = $region12
      $region11: #{tpu_custom_call.1} parent=5 // pred_region
        %s275 = ssub.s32 %s20, 1
        // Predicated region
        $region13: #{tpu_custom_call.1} parent=11 // pred_check
          %p276 = pneg %p41
        $region14: #{tpu_custom_call.1} parent=11 // pred_check_branch
          %278 = sbr.rel (%p276) target = $region16
        $region15: #{tpu_custom_call.1} parent=11 // pred_region
          %s280 = ssub.s32 16, 16
          %281 = vsyncadd [#allocation5], %s280
          %s283 = sshll.u32 %s0, 4
          %s284 = int_to_ptr.vmem [resolvable:$true] %s283
          %286 = dma.vmem_to_smem %s284, 16, [#allocation3], [#allocation5]
        $region16: #{tpu_custom_call.1} parent=11 // pred_fallthru
          _
        // Predicated region
        $region17: #{tpu_custom_call.1} parent=11 // pred_check
          %p287 = pneg %p88
        $region18: #{tpu_custom_call.1} parent=11 // pred_check_branch
          %289 = sbr.rel (%p287) target = $region20
        $region19: #{tpu_custom_call.1} parent=11 // pred_region
          _
        $region20: #{tpu_custom_call.1} parent=11 // pred_fallthru
          _
        // Predicated region
        $region21: #{tpu_custom_call.1} parent=11 // pred_check
          %p290 = pneg %p109
        $region22: #{tpu_custom_call.1} parent=11 // pred_check_branch
          %292 = sbr.rel (%p290) target = $region24
        $region23: #{tpu_custom_call.1} parent=11 // pred_region
          _
        $region24: #{tpu_custom_call.1} parent=11 // pred_fallthru
          _
        // Predicated region
        $region25: #{tpu_custom_call.1} parent=11 // pred_check
          %p293 = pneg %p130
        $region26: #{tpu_custom_call.1} parent=11 // pred_check_branch
          %295 = sbr.rel (%p293) target = $region28
        $region27: #{tpu_custom_call.1} parent=11 // pred_region
          _
        $region28: #{tpu_custom_call.1} parent=11 // pred_fallthru
          _
        // Predicated region
        $region29: #{tpu_custom_call.1} parent=11 // pred_check
          %p296 = pneg %p151
        $region30: #{tpu_custom_call.1} parent=11 // pred_check_branch
          %298 = sbr.rel (%p296) target = $region32
        $region31: #{tpu_custom_call.1} parent=11 // pred_region
          _
        $region32: #{tpu_custom_call.1} parent=11 // pred_fallthru
          _
        // Predicated region
        $region33: #{tpu_custom_call.1} parent=11 // pred_check
          %p299 = pneg %p172
        $region34: #{tpu_custom_call.1} parent=11 // pred_check_branch
          %301 = sbr.rel (%p299) target = $region36
        $region35: #{tpu_custom_call.1} parent=11 // pred_region
          _
        $region36: #{tpu_custom_call.1} parent=11 // pred_fallthru
          _
        // Predicated region
        $region37: #{tpu_custom_call.1} parent=11 // pred_check
          %p302 = pneg %p193
        $region38: #{tpu_custom_call.1} parent=11 // pred_check_branch
          %304 = sbr.rel (%p302) target = $region40
        $region39: #{tpu_custom_call.1} parent=11 // pred_region
          _
        $region40: #{tpu_custom_call.1} parent=11 // pred_fallthru
          _
        // Predicated region
        $region41: #{tpu_custom_call.1} parent=11 // pred_check
          %p305 = pneg %p214
        $region42: #{tpu_custom_call.1} parent=11 // pred_check_branch
          %307 = sbr.rel (%p305) target = $region44
        $region43: #{tpu_custom_call.1} parent=11 // pred_region
          _
        $region44: #{tpu_custom_call.1} parent=11 // pred_fallthru
          _
        // Predicated region
        $region45: #{tpu_custom_call.1} parent=11 // pred_check
          %p308 = pneg %p235
        $region46: #{tpu_custom_call.1} parent=11 // pred_check_branch
          %310 = sbr.rel (%p308) target = $region48
        $region47: #{tpu_custom_call.1} parent=11 // pred_region
          _
        $region48: #{tpu_custom_call.1} parent=11 // pred_fallthru
          _
      $region12: #{tpu_custom_call.1} parent=5 // pred_fallthru
        _
      %p311 = scmp.lt.s32.totalorder %s20, 2
      // Predicated region
      $region49: #{tpu_custom_call.1} parent=5 // pred_check
        %p312 = pneg %p311
      $region50: #{tpu_custom_call.1} parent=5 // pred_check_branch
        %314 = sbr.rel (%p312) target = $region52
      $region51: #{tpu_custom_call.1} parent=5 // pred_region
        // Predicated region
        $region53: #{tpu_custom_call.1} parent=51 // pred_check
          %p315 = pneg %p61
        $region54: #{tpu_custom_call.1} parent=51 // pred_check_branch
          %317 = sbr.rel (%p315) target = $region56
        $region55: #{tpu_custom_call.1} parent=51 // pred_region
          %p318 = scmp.lt.s32.totalorder %s20, 1
          %s319 = scalar_select %p318, %s20, 1
          %s320 = smul.addr %s319, 32
          %s321 = smul.addr %s320, 8
          %s322 = scalar_lea.vmem %s1, %s321
        $region56: #{tpu_custom_call.1} parent=51 // pred_fallthru
          _
      $region52: #{tpu_custom_call.1} parent=5 // pred_fallthru
        _
      %p323 = scmp.le.s32.totalorder 1, %s20
      %p324 = scmp.lt.s32.totalorder %s20, 3
      %p325 = pnand %p323, %p324
      %p326 = pneg %p325
      // Predicated region
      $region57: #{tpu_custom_call.1} parent=5 // pred_check
        _
      $region58: #{tpu_custom_call.1} parent=5 // pred_check_branch
        %328 = sbr.rel (%p325) target = $region60
      $region59: #{tpu_custom_call.1} parent=5 // pred_region
        %s329 = ssub.s32 %s20, 1
        // Predicated region
        $region61: #{tpu_custom_call.1} parent=59 // pred_check
          %p330 = pneg %p41
        $region62: #{tpu_custom_call.1} parent=59 // pred_check_branch
          %332 = sbr.rel (%p330) target = $region64
        $region63: #{tpu_custom_call.1} parent=59 // pred_region
          %333 = dma.done [#allocation5], 16
        $region64: #{tpu_custom_call.1} parent=59 // pred_fallthru
          _
        %334 = sfence
        %p335 = pneg %p41
        %p336 = pneg %p38
        %p337 = scmp.lt.s32.totalorder %s25, 1
        %s338 = scalar_select %p337, %s25, 1
        %s339 = smul.addr %s338, 32
        %s340 = smul.addr %s339, 8
        %s341 = scalar_lea.vmem %s1, %s340
        %p342 = pneg %p67
        %p343 = pneg %p64
        %p344 = pneg %p88
        %p345 = pneg %p85
        %p346 = pneg %p109
        %p347 = pneg %p106
        %p348 = pneg %p130
        %p349 = pneg %p127
        %p350 = pneg %p151
        %p351 = pneg %p148
        %p352 = pneg %p172
        %p353 = pneg %p169
        %p354 = pneg %p193
        %p355 = pneg %p190
        %p356 = pneg %p214
        %p357 = pneg %p211
        %p358 = pneg %p235
        %p359 = pneg %p232
        %p360 = pneg %p261
        %p361 = pneg %p258
        %s362 = sand.u32 %s248, 1
        %s363 = scalar_lea.sflag [#allocation4], %s362
        %s364 = sand.u32 %s248, 1
        %s365 = smul.addr %s364, 256
        %s366 = scalar_lea.vmem [#allocation6], %s365
        %p367 = scmp.lt.s32.totalorder %s25, 1
        %s368 = scalar_select %p367, %s25, 1
        %s369 = smul.addr %s368, 32
        %s370 = smul.addr %s369, 8
        %s371 = scalar_lea.vmem %s1, %s370
        %372 = vst [vmem:[#allocation2] sm:$0xff] 0.0
        %vm373 = vcmask 523264
        %374 = vst.msk [vmem:[#allocation2 + $0x8] sm:$0xff] %vm373, 0.0
        %375 = vst [vmem:[#allocation2 + $0x10] sm:$0xff] 0.0
        %376 = vst.msk [vmem:[#allocation2 + $0x18] sm:$0xff] %vm373, 0.0
        %s377 = scalar_lea.vmem [#allocation2], 544
        %378 = vst [vmem:[%s377] sm:$0xff] 0.0
        %379 = vst.msk [vmem:[%s377 + $0x8] sm:$0xff] %vm373, 0.0
        %380 = vst [vmem:[%s377 + $0x10] sm:$0xff] 0.0
        %381 = vst.msk [vmem:[%s377 + $0x18] sm:$0xff] %vm373, 0.0
        %s382 = scalar_lea.vmem [#allocation2], 32
        %vm383 = vcmask 516096
        %384 = vst.msk [vmem:[%s382] sm:$0x1] %vm383, 0.0
        %385 = vst.msk [vmem:[%s382 + $0x20] sm:$0x1] %vm383, 0.0
        %386 = vst.msk [vmem:[%s382 + $0x40] sm:$0x1] %vm383, 0.0
        %387 = vst.msk [vmem:[%s382 + $0x60] sm:$0x1] %vm383, 0.0
        %388 = vst.msk [vmem:[%s382 + $0x80] sm:$0x1] %vm383, 0.0
        %389 = vst.msk [vmem:[%s382 + $0xa0] sm:$0x1] %vm383, 0.0
        %390 = vst.msk [vmem:[%s382 + $0xc0] sm:$0x1] %vm383, 0.0
        %391 = vst.msk [vmem:[%s382 + $0xe0] sm:$0x1] %vm383, 0.0
        %392 = vst.msk [vmem:[%s382 + $0x100] sm:$0x1] %vm383, 0.0
        %393 = vst.msk [vmem:[%s382 + $0x120] sm:$0x1] %vm383, 0.0
        %394 = vst.msk [vmem:[%s382 + $0x140] sm:$0x1] %vm383, 0.0
        %395 = vst.msk [vmem:[%s382 + $0x160] sm:$0x1] %vm383, 0.0
        %396 = vst.msk [vmem:[%s382 + $0x180] sm:$0x1] %vm383, 0.0
        %397 = vst.msk [vmem:[%s382 + $0x1a0] sm:$0x1] %vm383, 0.0
        %398 = vst.msk [vmem:[%s382 + $0x1c0] sm:$0x1] %vm383, 0.0
        %399 = vst.msk [vmem:[%s382 + $0x1e0] sm:$0x1] %vm383, 0.0
        %400 = vst.msk [vmem:[%s382 + $0x1f] sm:$0x1] %vm383, 0.0
        %401 = vst.msk [vmem:[%s382 + $0x3f] sm:$0x1] %vm383, 0.0
        %402 = vst.msk [vmem:[%s382 + $0x5f] sm:$0x1] %vm383, 0.0
        %403 = vst.msk [vmem:[%s382 + $0x7f] sm:$0x1] %vm383, 0.0
        %404 = vst.msk [vmem:[%s382 + $0x9f] sm:$0x1] %vm383, 0.0
        %405 = vst.msk [vmem:[%s382 + $0xbf] sm:$0x1] %vm383, 0.0
        %406 = vst.msk [vmem:[%s382 + $0xdf] sm:$0x1] %vm383, 0.0
        %407 = vst.msk [vmem:[%s382 + $0xff] sm:$0x1] %vm383, 0.0
        %408 = vst.msk [vmem:[%s382 + $0x11f] sm:$0x1] %vm383, 0.0
        %409 = vst.msk [vmem:[%s382 + $0x13f] sm:$0x1] %vm383, 0.0
        %410 = vst.msk [vmem:[%s382 + $0x15f] sm:$0x1] %vm383, 0.0
        %411 = vst.msk [vmem:[%s382 + $0x17f] sm:$0x1] %vm383, 0.0
        %412 = vst.msk [vmem:[%s382 + $0x19f] sm:$0x1] %vm383, 0.0
        %413 = vst.msk [vmem:[%s382 + $0x1bf] sm:$0x1] %vm383, 0.0
        %414 = vst.msk [vmem:[%s382 + $0x1df] sm:$0x1] %vm383, 0.0
        %415 = vst.msk [vmem:[%s382 + $0x1ff] sm:$0x1] %vm383, 0.0
        %s416 = sld [smem:[#allocation3]]
        %s417 = sld [smem:[#allocation3 + $0x1]]
        %s418 = sld [smem:[#allocation3 + $0x2]]
        %s419 = sld [smem:[#allocation3 + $0x3]]
        %v420 = vld [vmem:[%s371] sm:$0xff]
        %v421 = vld [vmem:[%s371 + $0x8] sm:$0xff]
        %v422 = vld [vmem:[%s371 + $0x10] sm:$0xff]
        %v423 = vld [vmem:[%s371 + $0x18] sm:$0xff]
        %v424 = vld [vmem:[%s371 + $0x20] sm:$0xff]
        %v425 = vld [vmem:[%s371 + $0x28] sm:$0xff]
        %v426 = vld [vmem:[%s371 + $0x30] sm:$0xff]
        %v427 = vld [vmem:[%s371 + $0x38] sm:$0xff]
        %v428 = vld [vmem:[%s371 + $0x40] sm:$0xff]
        %v429 = vld [vmem:[%s371 + $0x48] sm:$0xff]
        %v430 = vld [vmem:[%s371 + $0x50] sm:$0xff]
        %v431 = vld [vmem:[%s371 + $0x58] sm:$0xff]
        %v432 = vld [vmem:[%s371 + $0x60] sm:$0xff]
        %v433 = vld [vmem:[%s371 + $0x68] sm:$0xff]
        %v434 = vld [vmem:[%s371 + $0x70] sm:$0xff]
        %v435 = vld [vmem:[%s371 + $0x78] sm:$0xff]
        %v436 = vld [vmem:[%s371 + $0x80] sm:$0xff]
        %v437 = vld [vmem:[%s371 + $0x88] sm:$0xff]
        %v438 = vld [vmem:[%s371 + $0x90] sm:$0xff]
        %v439 = vld [vmem:[%s371 + $0x98] sm:$0xff]
        %v440 = vld [vmem:[%s371 + $0xa0] sm:$0xff]
        %v441 = vld [vmem:[%s371 + $0xa8] sm:$0xff]
        %v442 = vld [vmem:[%s371 + $0xb0] sm:$0xff]
        %v443 = vld [vmem:[%s371 + $0xb8] sm:$0xff]
        %v444 = vld [vmem:[%s371 + $0xc0] sm:$0xff]
        %v445 = vld [vmem:[%s371 + $0xc8] sm:$0xff]
        %v446 = vld [vmem:[%s371 + $0xd0] sm:$0xff]
        %v447 = vld [vmem:[%s371 + $0xd8] sm:$0xff]
        %v448 = vld [vmem:[%s371 + $0xe0] sm:$0xff]
        %v449 = vld [vmem:[%s371 + $0xe8] sm:$0xff]
        %v450 = vld [vmem:[%s371 + $0xf0] sm:$0xff]
        %v451 = vld [vmem:[%s371 + $0xf8] sm:$0xff]
        %v452 = vmax.f32 %v420, 0.0
        %v453 = vmax.f32 %v421, 0.0
        %v454 = vmax.f32 %v422, 0.0
        %v455 = vmax.f32 %v423, 0.0
        %v456 = vmax.f32 %v424, 0.0
        %v457 = vmax.f32 %v425, 0.0
        %v458 = vmax.f32 %v426, 0.0
        %v459 = vmax.f32 %v427, 0.0
        %v460 = vmax.f32 %v428, 0.0
        %v461 = vmax.f32 %v429, 0.0
        %v462 = vmax.f32 %v430, 0.0
        %v463 = vmax.f32 %v431, 0.0
        %v464 = vmax.f32 %v432, 0.0
        %v465 = vmax.f32 %v433, 0.0
        %v466 = vmax.f32 %v434, 0.0
        %v467 = vmax.f32 %v435, 0.0
        %v468 = vmax.f32 %v436, 0.0
        %v469 = vmax.f32 %v437, 0.0
        %v470 = vmax.f32 %v438, 0.0
        %v471 = vmax.f32 %v439, 0.0
        %v472 = vmax.f32 %v440, 0.0
        %v473 = vmax.f32 %v441, 0.0
        %v474 = vmax.f32 %v442, 0.0
        %v475 = vmax.f32 %v443, 0.0
        %v476 = vmax.f32 %v444, 0.0
        %v477 = vmax.f32 %v445, 0.0
        %v478 = vmax.f32 %v446, 0.0
        %v479 = vmax.f32 %v447, 0.0
        %v480 = vmax.f32 %v448, 0.0
        %v481 = vmax.f32 %v449, 0.0
        %v482 = vmax.f32 %v450, 0.0
        %v483 = vmax.f32 %v451, 0.0
        %516 = vrot.lane.b32.xlu0 %v452, 64
        %v517 = vpop.permute.xlu0 %516
        %518 = vrot.lane.b32.xlu0 %v453, 64
        %v519 = vpop.permute.xlu0 %518
        %520 = vrot.lane.b32.xlu0 %v454, 64
        %v521 = vpop.permute.xlu0 %520
        %522 = vrot.lane.b32.xlu0 %v455, 64
        %v523 = vpop.permute.xlu0 %522
        %524 = vrot.lane.b32.xlu0 %v456, 64
        %v525 = vpop.permute.xlu0 %524
        %526 = vrot.lane.b32.xlu0 %v457, 64
        %v527 = vpop.permute.xlu0 %526
        %528 = vrot.lane.b32.xlu0 %v458, 64
        %v529 = vpop.permute.xlu0 %528
        %530 = vrot.lane.b32.xlu0 %v459, 64
        %v531 = vpop.permute.xlu0 %530
        %532 = vrot.lane.b32.xlu0 %v460, 64
        %v533 = vpop.permute.xlu0 %532
        %534 = vrot.lane.b32.xlu0 %v461, 64
        %v535 = vpop.permute.xlu0 %534
        %536 = vrot.lane.b32.xlu0 %v462, 64
        %v537 = vpop.permute.xlu0 %536
        %538 = vrot.lane.b32.xlu0 %v463, 64
        %v539 = vpop.permute.xlu0 %538
        %540 = vrot.lane.b32.xlu0 %v464, 64
        %v541 = vpop.permute.xlu0 %540
        %542 = vrot.lane.b32.xlu0 %v465, 64
        %v543 = vpop.permute.xlu0 %542
        %544 = vrot.lane.b32.xlu0 %v466, 64
        %v545 = vpop.permute.xlu0 %544
        %546 = vrot.lane.b32.xlu0 %v467, 64
        %v547 = vpop.permute.xlu0 %546
        %548 = vrot.lane.b32.xlu0 %v468, 64
        %v549 = vpop.permute.xlu0 %548
        %550 = vrot.lane.b32.xlu0 %v469, 64
        %v551 = vpop.permute.xlu0 %550
        %552 = vrot.lane.b32.xlu0 %v470, 64
        %v553 = vpop.permute.xlu0 %552
        %554 = vrot.lane.b32.xlu0 %v471, 64
        %v555 = vpop.permute.xlu0 %554
        %556 = vrot.lane.b32.xlu0 %v472, 64
        %v557 = vpop.permute.xlu0 %556
        %558 = vrot.lane.b32.xlu0 %v473, 64
        %v559 = vpop.permute.xlu0 %558
        %560 = vrot.lane.b32.xlu0 %v474, 64
        %v561 = vpop.permute.xlu0 %560
        %562 = vrot.lane.b32.xlu0 %v475, 64
        %v563 = vpop.permute.xlu0 %562
        %564 = vrot.lane.b32.xlu0 %v476, 64
        %v565 = vpop.permute.xlu0 %564
        %566 = vrot.lane.b32.xlu0 %v477, 64
        %v567 = vpop.permute.xlu0 %566
        %568 = vrot.lane.b32.xlu0 %v478, 64
        %v569 = vpop.permute.xlu0 %568
        %570 = vrot.lane.b32.xlu0 %v479, 64
        %v571 = vpop.permute.xlu0 %570
        %572 = vrot.lane.b32.xlu0 %v480, 64
        %v573 = vpop.permute.xlu0 %572
        %574 = vrot.lane.b32.xlu0 %v481, 64
        %v575 = vpop.permute.xlu0 %574
        %576 = vrot.lane.b32.xlu0 %v482, 64
        %v577 = vpop.permute.xlu0 %576
        %578 = vrot.lane.b32.xlu0 %v483, 64
        %v579 = vpop.permute.xlu0 %578
        %vm612 = vcmask 1048064
        %613 = vst.msk [vmem:[%s382] sm:$0xff] %vm612, %v517
        %614 = vst.msk [vmem:[%s382 + $0x10] sm:$0xff] %vm612, %v519
        %615 = vst.msk [vmem:[%s382 + $0x20] sm:$0xff] %vm612, %v521
        %616 = vst.msk [vmem:[%s382 + $0x30] sm:$0xff] %vm612, %v523
        %617 = vst.msk [vmem:[%s382 + $0x40] sm:$0xff] %vm612, %v525
        %618 = vst.msk [vmem:[%s382 + $0x50] sm:$0xff] %vm612, %v527
        %619 = vst.msk [vmem:[%s382 + $0x60] sm:$0xff] %vm612, %v529
        %620 = vst.msk [vmem:[%s382 + $0x70] sm:$0xff] %vm612, %v531
        %621 = vst.msk [vmem:[%s382 + $0x80] sm:$0xff] %vm612, %v533
        %622 = vst.msk [vmem:[%s382 + $0x90] sm:$0xff] %vm612, %v535
        %623 = vst.msk [vmem:[%s382 + $0xa0] sm:$0xff] %vm612, %v537
        %624 = vst.msk [vmem:[%s382 + $0xb0] sm:$0xff] %vm612, %v539
        %625 = vst.msk [vmem:[%s382 + $0xc0] sm:$0xff] %vm612, %v541
        %626 = vst.msk [vmem:[%s382 + $0xd0] sm:$0xff] %vm612, %v543
        %627 = vst.msk [vmem:[%s382 + $0xe0] sm:$0xff] %vm612, %v545
        %628 = vst.msk [vmem:[%s382 + $0xf0] sm:$0xff] %vm612, %v547
        %629 = vst.msk [vmem:[%s382 + $0x100] sm:$0xff] %vm612, %v549
        %630 = vst.msk [vmem:[%s382 + $0x110] sm:$0xff] %vm612, %v551
        %631 = vst.msk [vmem:[%s382 + $0x120] sm:$0xff] %vm612, %v553
        %632 = vst.msk [vmem:[%s382 + $0x130] sm:$0xff] %vm612, %v555
        %633 = vst.msk [vmem:[%s382 + $0x140] sm:$0xff] %vm612, %v557
        %634 = vst.msk [vmem:[%s382 + $0x150] sm:$0xff] %vm612, %v559
        %635 = vst.msk [vmem:[%s382 + $0x160] sm:$0xff] %vm612, %v561
        %636 = vst.msk [vmem:[%s382 + $0x170] sm:$0xff] %vm612, %v563
        %637 = vst.msk [vmem:[%s382 + $0x180] sm:$0xff] %vm612, %v565
        %638 = vst.msk [vmem:[%s382 + $0x190] sm:$0xff] %vm612, %v567
        %639 = vst.msk [vmem:[%s382 + $0x1a0] sm:$0xff] %vm612, %v569
        %640 = vst.msk [vmem:[%s382 + $0x1b0] sm:$0xff] %vm612, %v571
        %641 = vst.msk [vmem:[%s382 + $0x1c0] sm:$0xff] %vm612, %v573
        %642 = vst.msk [vmem:[%s382 + $0x1d0] sm:$0xff] %vm612, %v575
        %643 = vst.msk [vmem:[%s382 + $0x1e0] sm:$0xff] %vm612, %v577
        %644 = vst.msk [vmem:[%s382 + $0x1f0] sm:$0xff] %vm612, %v579
        %vm645 = vcmask 1040384
        %v646 = vrot.slane %v452, 7
        %v647 = vrot.slane %v453, 7
        %v648 = vsel %vm645, %v646, %v647
        %v649 = vrot.slane %v454, 7
        %v650 = vrot.slane %v455, 7
        %v651 = vsel %vm645, %v649, %v650
        %v652 = vrot.slane %v456, 7
        %v653 = vrot.slane %v457, 7
        %v654 = vsel %vm645, %v652, %v653
        %v655 = vrot.slane %v458, 7
        %v656 = vrot.slane %v459, 7
        %v657 = vsel %vm645, %v655, %v656
        %v658 = vrot.slane %v460, 7
        %v659 = vrot.slane %v461, 7
        %v660 = vsel %vm645, %v658, %v659
        %v661 = vrot.slane %v462, 7
        %v662 = vrot.slane %v463, 7
        %v663 = vsel %vm645, %v661, %v662
        %v664 = vrot.slane %v464, 7
        %v665 = vrot.slane %v465, 7
        %v666 = vsel %vm645, %v664, %v665
        %v667 = vrot.slane %v466, 7
        %v668 = vrot.slane %v467, 7
        %v669 = vsel %vm645, %v667, %v668
        %v670 = vrot.slane %v468, 7
        %v671 = vrot.slane %v469, 7
        %v672 = vsel %vm645, %v670, %v671
        %v673 = vrot.slane %v470, 7
        %v674 = vrot.slane %v471, 7
        %v675 = vsel %vm645, %v673, %v674
        %v676 = vrot.slane %v472, 7
        %v677 = vrot.slane %v473, 7
        %v678 = vsel %vm645, %v676, %v677
        %v679 = vrot.slane %v474, 7
        %v680 = vrot.slane %v475, 7
        %v681 = vsel %vm645, %v679, %v680
        %v682 = vrot.slane %v476, 7
        %v683 = vrot.slane %v477, 7
        %v684 = vsel %vm645, %v682, %v683
        %v685 = vrot.slane %v478, 7
        %v686 = vrot.slane %v479, 7
        %v687 = vsel %vm645, %v685, %v686
        %v688 = vrot.slane %v480, 7
        %v689 = vrot.slane %v481, 7
        %v690 = vsel %vm645, %v688, %v689
        %v691 = vrot.slane %v482, 7
        %v692 = vrot.slane %v483, 7
        %v693 = vsel %vm645, %v691, %v692
        %vm726 = vcmask 523265
        %727 = vst.msk [vmem:[%s382] sm:$0xfe] %vm726, %v646
        %728 = vst.msk [vmem:[%s382 + $0x10] sm:$0xff] %vm373, %v648
        %729 = vst.msk [vmem:[%s382 + $0x20] sm:$0xfe] %vm726, %v649
        %730 = vst.msk [vmem:[%s382 + $0x30] sm:$0xff] %vm373, %v651
        %731 = vst.msk [vmem:[%s382 + $0x40] sm:$0xfe] %vm726, %v652
        %732 = vst.msk [vmem:[%s382 + $0x50] sm:$0xff] %vm373, %v654
        %733 = vst.msk [vmem:[%s382 + $0x60] sm:$0xfe] %vm726, %v655
        %734 = vst.msk [vmem:[%s382 + $0x70] sm:$0xff] %vm373, %v657
        %735 = vst.msk [vmem:[%s382 + $0x80] sm:$0xfe] %vm726, %v658
        %736 = vst.msk [vmem:[%s382 + $0x90] sm:$0xff] %vm373, %v660
        %737 = vst.msk [vmem:[%s382 + $0xa0] sm:$0xfe] %vm726, %v661
        %738 = vst.msk [vmem:[%s382 + $0xb0] sm:$0xff] %vm373, %v663
        %739 = vst.msk [vmem:[%s382 + $0xc0] sm:$0xfe] %vm726, %v664
        %740 = vst.msk [vmem:[%s382 + $0xd0] sm:$0xff] %vm373, %v666
        %741 = vst.msk [vmem:[%s382 + $0xe0] sm:$0xfe] %vm726, %v667
        %742 = vst.msk [vmem:[%s382 + $0xf0] sm:$0xff] %vm373, %v669
        %743 = vst.msk [vmem:[%s382 + $0x100] sm:$0xfe] %vm726, %v670
        %744 = vst.msk [vmem:[%s382 + $0x110] sm:$0xff] %vm373, %v672
        %745 = vst.msk [vmem:[%s382 + $0x120] sm:$0xfe] %vm726, %v673
        %746 = vst.msk [vmem:[%s382 + $0x130] sm:$0xff] %vm373, %v675
        %747 = vst.msk [vmem:[%s382 + $0x140] sm:$0xfe] %vm726, %v676
        %748 = vst.msk [vmem:[%s382 + $0x150] sm:$0xff] %vm373, %v678
        %749 = vst.msk [vmem:[%s382 + $0x160] sm:$0xfe] %vm726, %v679
        %750 = vst.msk [vmem:[%s382 + $0x170] sm:$0xff] %vm373, %v681
        %751 = vst.msk [vmem:[%s382 + $0x180] sm:$0xfe] %vm726, %v682
        %752 = vst.msk [vmem:[%s382 + $0x190] sm:$0xff] %vm373, %v684
        %753 = vst.msk [vmem:[%s382 + $0x1a0] sm:$0xfe] %vm726, %v685
        %754 = vst.msk [vmem:[%s382 + $0x1b0] sm:$0xff] %vm373, %v687
        %755 = vst.msk [vmem:[%s382 + $0x1c0] sm:$0xfe] %vm726, %v688
        %756 = vst.msk [vmem:[%s382 + $0x1d0] sm:$0xff] %vm373, %v690
        %757 = vst.msk [vmem:[%s382 + $0x1e0] sm:$0xfe] %vm726, %v691
        %758 = vst.msk [vmem:[%s382 + $0x1f0] sm:$0xff] %vm373, %v693
        %vm759 = vcmask 1046528
        %v760 = vrot.slane %v452, 1
        %v761 = vrot.slane %v453, 1
        %v762 = vsel %vm759, %v760, %v761
        %v763 = vrot.slane %v454, 1
        %v764 = vrot.slane %v455, 1
        %v765 = vsel %vm759, %v763, %v764
        %v766 = vrot.slane %v456, 1
        %v767 = vrot.slane %v457, 1
        %v768 = vsel %vm759, %v766, %v767
        %v769 = vrot.slane %v458, 1
        %v770 = vrot.slane %v459, 1
        %v771 = vsel %vm759, %v769, %v770
        %v772 = vrot.slane %v460, 1
        %v773 = vrot.slane %v461, 1
        %v774 = vsel %vm759, %v772, %v773
        %v775 = vrot.slane %v462, 1
        %v776 = vrot.slane %v463, 1
        %v777 = vsel %vm759, %v775, %v776
        %v778 = vrot.slane %v464, 1
        %v779 = vrot.slane %v465, 1
        %v780 = vsel %vm759, %v778, %v779
        %v781 = vrot.slane %v466, 1
        %v782 = vrot.slane %v467, 1
        %v783 = vsel %vm759, %v781, %v782
        %v784 = vrot.slane %v468, 1
        %v785 = vrot.slane %v469, 1
        %v786 = vsel %vm759, %v784, %v785
        %v787 = vrot.slane %v470, 1
        %v788 = vrot.slane %v471, 1
        %v789 = vsel %vm759, %v787, %v788
        %v790 = vrot.slane %v472, 1
        %v791 = vrot.slane %v473, 1
        %v792 = vsel %vm759, %v790, %v791
        %v793 = vrot.slane %v474, 1
        %v794 = vrot.slane %v475, 1
        %v795 = vsel %vm759, %v793, %v794
        %v796 = vrot.slane %v476, 1
        %v797 = vrot.slane %v477, 1
        %v798 = vsel %vm759, %v796, %v797
        %v799 = vrot.slane %v478, 1
        %v800 = vrot.slane %v479, 1
        %v801 = vsel %vm759, %v799, %v800
        %v802 = vrot.slane %v480, 1
        %v803 = vrot.slane %v481, 1
        %v804 = vsel %vm759, %v802, %v803
        %v805 = vrot.slane %v482, 1
        %v806 = vrot.slane %v483, 1
        %v807 = vsel %vm759, %v805, %v806
        %840 = vst.msk [vmem:[%s382 + $0x8] sm:$0xff] %vm373, %v762
        %vm841 = vcmask 522240
        %842 = vst.msk [vmem:[%s382 + $0x18] sm:$0x7f] %vm841, %v761
        %843 = vst.msk [vmem:[%s382 + $0x28] sm:$0xff] %vm373, %v765
        %844 = vst.msk [vmem:[%s382 + $0x38] sm:$0x7f] %vm841, %v764
        %845 = vst.msk [vmem:[%s382 + $0x48] sm:$0xff] %vm373, %v768
        %846 = vst.msk [vmem:[%s382 + $0x58] sm:$0x7f] %vm841, %v767
        %847 = vst.msk [vmem:[%s382 + $0x68] sm:$0xff] %vm373, %v771
        %848 = vst.msk [vmem:[%s382 + $0x78] sm:$0x7f] %vm841, %v770
        %849 = vst.msk [vmem:[%s382 + $0x88] sm:$0xff] %vm373, %v774
        %850 = vst.msk [vmem:[%s382 + $0x98] sm:$0x7f] %vm841, %v773
        %851 = vst.msk [vmem:[%s382 + $0xa8] sm:$0xff] %vm373, %v777
        %852 = vst.msk [vmem:[%s382 + $0xb8] sm:$0x7f] %vm841, %v776
        %853 = vst.msk [vmem:[%s382 + $0xc8] sm:$0xff] %vm373, %v780
        %854 = vst.msk [vmem:[%s382 + $0xd8] sm:$0x7f] %vm841, %v779
        %855 = vst.msk [vmem:[%s382 + $0xe8] sm:$0xff] %vm373, %v783
        %856 = vst.msk [vmem:[%s382 + $0xf8] sm:$0x7f] %vm841, %v782
        %857 = vst.msk [vmem:[%s382 + $0x108] sm:$0xff] %vm373, %v786
        %858 = vst.msk [vmem:[%s382 + $0x118] sm:$0x7f] %vm841, %v785
        %859 = vst.msk [vmem:[%s382 + $0x128] sm:$0xff] %vm373, %v789
        %860 = vst.msk [vmem:[%s382 + $0x138] sm:$0x7f] %vm841, %v788
        %861 = vst.msk [vmem:[%s382 + $0x148] sm:$0xff] %vm373, %v792
        %862 = vst.msk [vmem:[%s382 + $0x158] sm:$0x7f] %vm841, %v791
        %863 = vst.msk [vmem:[%s382 + $0x168] sm:$0xff] %vm373, %v795
        %864 = vst.msk [vmem:[%s382 + $0x178] sm:$0x7f] %vm841, %v794
        %865 = vst.msk [vmem:[%s382 + $0x188] sm:$0xff] %vm373, %v798
        %866 = vst.msk [vmem:[%s382 + $0x198] sm:$0x7f] %vm841, %v797
        %867 = vst.msk [vmem:[%s382 + $0x1a8] sm:$0xff] %vm373, %v801
        %868 = vst.msk [vmem:[%s382 + $0x1b8] sm:$0x7f] %vm841, %v800
        %869 = vst.msk [vmem:[%s382 + $0x1c8] sm:$0xff] %vm373, %v804
        %870 = vst.msk [vmem:[%s382 + $0x1d8] sm:$0x7f] %vm841, %v803
        %871 = vst.msk [vmem:[%s382 + $0x1e8] sm:$0xff] %vm373, %v807
        %872 = vst.msk [vmem:[%s382 + $0x1f8] sm:$0x7f] %vm841, %v806
        %v873 = vld [vmem:[#allocation2] sm:$0xff]
        %v874 = vld [vmem:[#allocation2 + $0x8] sm:$0xff]
        %v875 = vld [vmem:[#allocation2 + $0x10] sm:$0xff]
        %v876 = vld [vmem:[#allocation2 + $0x18] sm:$0xff]
        %v877 = vld [vmem:[#allocation2 + $0x20] sm:$0xff]
        %v878 = vld [vmem:[#allocation2 + $0x28] sm:$0xff]
        %v879 = vld [vmem:[#allocation2 + $0x30] sm:$0xff]
        %v880 = vld [vmem:[#allocation2 + $0x38] sm:$0xff]
        %v881 = vld [vmem:[#allocation2 + $0x40] sm:$0xff]
        %v882 = vld [vmem:[#allocation2 + $0x48] sm:$0xff]
        %v883 = vld [vmem:[#allocation2 + $0x50] sm:$0xff]
        %v884 = vld [vmem:[#allocation2 + $0x58] sm:$0xff]
        %v885 = vld [vmem:[#allocation2 + $0x60] sm:$0xff]
        %v886 = vld [vmem:[#allocation2 + $0x68] sm:$0xff]
        %v887 = vld [vmem:[#allocation2 + $0x70] sm:$0xff]
        %v888 = vld [vmem:[#allocation2 + $0x78] sm:$0xff]
        %v889 = vld [vmem:[#allocation2 + $0x80] sm:$0xff]
        %v890 = vld [vmem:[#allocation2 + $0x88] sm:$0xff]
        %v891 = vld [vmem:[#allocation2 + $0x90] sm:$0xff]
        %v892 = vld [vmem:[#allocation2 + $0x98] sm:$0xff]
        %v893 = vld [vmem:[#allocation2 + $0xa0] sm:$0xff]
        %v894 = vld [vmem:[#allocation2 + $0xa8] sm:$0xff]
        %v895 = vld [vmem:[#allocation2 + $0xb0] sm:$0xff]
        %v896 = vld [vmem:[#allocation2 + $0xb8] sm:$0xff]
        %v897 = vld [vmem:[#allocation2 + $0xc0] sm:$0xff]
        %v898 = vld [vmem:[#allocation2 + $0xc8] sm:$0xff]
        %v899 = vld [vmem:[#allocation2 + $0xd0] sm:$0xff]
        %v900 = vld [vmem:[#allocation2 + $0xd8] sm:$0xff]
        %v901 = vld [vmem:[#allocation2 + $0xe0] sm:$0xff]
        %v902 = vld [vmem:[#allocation2 + $0xe8] sm:$0xff]
        %v903 = vld [vmem:[#allocation2 + $0xf0] sm:$0xff]
        %v904 = vld [vmem:[#allocation2 + $0xf8] sm:$0xff]
        %v905 = vld [vmem:[#allocation2 + $0x100] sm:$0xff]
        %v906 = vld [vmem:[#allocation2 + $0x108] sm:$0xff]
        %v907 = vld [vmem:[#allocation2 + $0x110] sm:$0xff]
        %v908 = vld [vmem:[#allocation2 + $0x118] sm:$0xff]
        %v909 = vld [vmem:[#allocation2 + $0x120] sm:$0xff]
        %v910 = vld [vmem:[#allocation2 + $0x128] sm:$0xff]
        %v911 = vld [vmem:[#allocation2 + $0x130] sm:$0xff]
        %v912 = vld [vmem:[#allocation2 + $0x138] sm:$0xff]
        %v913 = vld [vmem:[#allocation2 + $0x140] sm:$0xff]
        %v914 = vld [vmem:[#allocation2 + $0x148] sm:$0xff]
        %v915 = vld [vmem:[#allocation2 + $0x150] sm:$0xff]
        %v916 = vld [vmem:[#allocation2 + $0x158] sm:$0xff]
        %v917 = vld [vmem:[#allocation2 + $0x160] sm:$0xff]
        %v918 = vld [vmem:[#allocation2 + $0x168] sm:$0xff]
        %v919 = vld [vmem:[#allocation2 + $0x170] sm:$0xff]
        %v920 = vld [vmem:[#allocation2 + $0x178] sm:$0xff]
        %v921 = vld [vmem:[#allocation2 + $0x180] sm:$0xff]
        %v922 = vld [vmem:[#allocation2 + $0x188] sm:$0xff]
        %v923 = vld [vmem:[#allocation2 + $0x190] sm:$0xff]
        %v924 = vld [vmem:[#allocation2 + $0x198] sm:$0xff]
        %v925 = vld [vmem:[#allocation2 + $0x1a0] sm:$0xff]
        %v926 = vld [vmem:[#allocation2 + $0x1a8] sm:$0xff]
        %v927 = vld [vmem:[#allocation2 + $0x1b0] sm:$0xff]
        %v928 = vld [vmem:[#allocation2 + $0x1b8] sm:$0xff]
        %v929 = vld [vmem:[#allocation2 + $0x1c0] sm:$0xff]
        %v930 = vld [vmem:[#allocation2 + $0x1c8] sm:$0xff]
        %v931 = vld [vmem:[#allocation2 + $0x1d0] sm:$0xff]
        %v932 = vld [vmem:[#allocation2 + $0x1d8] sm:$0xff]
        %v933 = vld [vmem:[#allocation2 + $0x1e0] sm:$0xff]
        %v934 = vld [vmem:[#allocation2 + $0x1e8] sm:$0xff]
        %v935 = vld [vmem:[#allocation2 + $0x1f0] sm:$0xff]
        %v936 = vld [vmem:[#allocation2 + $0x1f8] sm:$0xff]
        %v937 = vld [vmem:[%s2] sm:$0xff]
        %v938 = vld [vmem:[%s2 + $0x8] sm:$0xff]
        %v939 = vld [vmem:[%s2 + $0x10] sm:$0xff]
        %v940 = vld [vmem:[%s2 + $0x18] sm:$0xff]
        %v941 = vld [vmem:[%s2 + $0x20] sm:$0xff]
        %v942 = vld [vmem:[%s2 + $0x28] sm:$0xff]
        %v943 = vld [vmem:[%s2 + $0x30] sm:$0xff]
        %v944 = vld [vmem:[%s2 + $0x38] sm:$0xff]
        %v945 = vld [vmem:[%s2 + $0x40] sm:$0xff]
        %v946 = vld [vmem:[%s2 + $0x48] sm:$0xff]
        %v947 = vld [vmem:[%s2 + $0x50] sm:$0xff]
        %v948 = vld [vmem:[%s2 + $0x58] sm:$0xff]
        %v949 = vld [vmem:[%s2 + $0x60] sm:$0xff]
        %v950 = vld [vmem:[%s2 + $0x68] sm:$0xff]
        %v951 = vld [vmem:[%s2 + $0x70] sm:$0xff]
        %v952 = vld [vmem:[%s2 + $0x78] sm:$0xff]
        %v953 = vld [vmem:[%s2 + $0x80] sm:$0xff]
        %v954 = vld [vmem:[%s2 + $0x88] sm:$0xff]
        %v955 = vld [vmem:[%s2 + $0x90] sm:$0xff]
        %v956 = vld [vmem:[%s2 + $0x98] sm:$0xff]
        %v957 = vld [vmem:[%s2 + $0xa0] sm:$0xff]
        %v958 = vld [vmem:[%s2 + $0xa8] sm:$0xff]
        %v959 = vld [vmem:[%s2 + $0xb0] sm:$0xff]
        %v960 = vld [vmem:[%s2 + $0xb8] sm:$0xff]
        %v961 = vld [vmem:[%s382] sm:$0xff]
        %v962 = vld [vmem:[%s382 + $0x8] sm:$0xff]
        %v963 = vld [vmem:[%s382 + $0x10] sm:$0xff]
        %v964 = vld [vmem:[%s382 + $0x18] sm:$0xff]
        %v965 = vld [vmem:[%s382 + $0x20] sm:$0xff]
        %v966 = vld [vmem:[%s382 + $0x28] sm:$0xff]
        %v967 = vld [vmem:[%s382 + $0x30] sm:$0xff]
        %v968 = vld [vmem:[%s382 + $0x38] sm:$0xff]
        %v969 = vld [vmem:[%s382 + $0x40] sm:$0xff]
        %v970 = vld [vmem:[%s382 + $0x48] sm:$0xff]
        %v971 = vld [vmem:[%s382 + $0x50] sm:$0xff]
        %v972 = vld [vmem:[%s382 + $0x58] sm:$0xff]
        %v973 = vld [vmem:[%s382 + $0x60] sm:$0xff]
        %v974 = vld [vmem:[%s382 + $0x68] sm:$0xff]
        %v975 = vld [vmem:[%s382 + $0x70] sm:$0xff]
        %v976 = vld [vmem:[%s382 + $0x78] sm:$0xff]
        %v977 = vld [vmem:[%s382 + $0x80] sm:$0xff]
        %v978 = vld [vmem:[%s382 + $0x88] sm:$0xff]
        %v979 = vld [vmem:[%s382 + $0x90] sm:$0xff]
        %v980 = vld [vmem:[%s382 + $0x98] sm:$0xff]
        %v981 = vld [vmem:[%s382 + $0xa0] sm:$0xff]
        %v982 = vld [vmem:[%s382 + $0xa8] sm:$0xff]
        %v983 = vld [vmem:[%s382 + $0xb0] sm:$0xff]
        %v984 = vld [vmem:[%s382 + $0xb8] sm:$0xff]
        %v985 = vld [vmem:[%s382 + $0xc0] sm:$0xff]
        %v986 = vld [vmem:[%s382 + $0xc8] sm:$0xff]
        %v987 = vld [vmem:[%s382 + $0xd0] sm:$0xff]
        %v988 = vld [vmem:[%s382 + $0xd8] sm:$0xff]
        %v989 = vld [vmem:[%s382 + $0xe0] sm:$0xff]
        %v990 = vld [vmem:[%s382 + $0xe8] sm:$0xff]
        %v991 = vld [vmem:[%s382 + $0xf0] sm:$0xff]
        %v992 = vld [vmem:[%s382 + $0xf8] sm:$0xff]
        %v993 = vld [vmem:[%s382 + $0x100] sm:$0xff]
        %v994 = vld [vmem:[%s382 + $0x108] sm:$0xff]
        %v995 = vld [vmem:[%s382 + $0x110] sm:$0xff]
        %v996 = vld [vmem:[%s382 + $0x118] sm:$0xff]
        %v997 = vld [vmem:[%s382 + $0x120] sm:$0xff]
        %v998 = vld [vmem:[%s382 + $0x128] sm:$0xff]
        %v999 = vld [vmem:[%s382 + $0x130] sm:$0xff]
        %v1000 = vld [vmem:[%s382 + $0x138] sm:$0xff]
        %v1001 = vld [vmem:[%s382 + $0x140] sm:$0xff]
        %v1002 = vld [vmem:[%s382 + $0x148] sm:$0xff]
        %v1003 = vld [vmem:[%s382 + $0x150] sm:$0xff]
        %v1004 = vld [vmem:[%s382 + $0x158] sm:$0xff]
        %v1005 = vld [vmem:[%s382 + $0x160] sm:$0xff]
        %v1006 = vld [vmem:[%s382 + $0x168] sm:$0xff]
        %v1007 = vld [vmem:[%s382 + $0x170] sm:$0xff]
        %v1008 = vld [vmem:[%s382 + $0x178] sm:$0xff]
        %v1009 = vld [vmem:[%s382 + $0x180] sm:$0xff]
        %v1010 = vld [vmem:[%s382 + $0x188] sm:$0xff]
        %v1011 = vld [vmem:[%s382 + $0x190] sm:$0xff]
        %v1012 = vld [vmem:[%s382 + $0x198] sm:$0xff]
        %v1013 = vld [vmem:[%s382 + $0x1a0] sm:$0xff]
        %v1014 = vld [vmem:[%s382 + $0x1a8] sm:$0xff]
        %v1015 = vld [vmem:[%s382 + $0x1b0] sm:$0xff]
        %v1016 = vld [vmem:[%s382 + $0x1b8] sm:$0xff]
        %v1017 = vld [vmem:[%s382 + $0x1c0] sm:$0xff]
        %v1018 = vld [vmem:[%s382 + $0x1c8] sm:$0xff]
        %v1019 = vld [vmem:[%s382 + $0x1d0] sm:$0xff]
        %v1020 = vld [vmem:[%s382 + $0x1d8] sm:$0xff]
        %v1021 = vld [vmem:[%s382 + $0x1e0] sm:$0xff]
        %v1022 = vld [vmem:[%s382 + $0x1e8] sm:$0xff]
        %v1023 = vld [vmem:[%s382 + $0x1f0] sm:$0xff]
        %v1024 = vld [vmem:[%s382 + $0x1f8] sm:$0xff]
        %s1025 = scalar_lea.vmem %s2, 192
        %v1026 = vld [vmem:[%s1025] sm:$0xff]
        %v1027 = vld [vmem:[%s1025 + $0x8] sm:$0xff]
        %v1028 = vld [vmem:[%s1025 + $0x10] sm:$0xff]
        %v1029 = vld [vmem:[%s1025 + $0x18] sm:$0xff]
        %v1030 = vld [vmem:[%s1025 + $0x20] sm:$0xff]
        %v1031 = vld [vmem:[%s1025 + $0x28] sm:$0xff]
        %v1032 = vld [vmem:[%s1025 + $0x30] sm:$0xff]
        %v1033 = vld [vmem:[%s1025 + $0x38] sm:$0xff]
        %v1034 = vld [vmem:[%s1025 + $0x40] sm:$0xff]
        %v1035 = vld [vmem:[%s1025 + $0x48] sm:$0xff]
        %v1036 = vld [vmem:[%s1025 + $0x50] sm:$0xff]
        %v1037 = vld [vmem:[%s1025 + $0x58] sm:$0xff]
        %v1038 = vld [vmem:[%s1025 + $0x60] sm:$0xff]
        %v1039 = vld [vmem:[%s1025 + $0x68] sm:$0xff]
        %v1040 = vld [vmem:[%s1025 + $0x70] sm:$0xff]
        %v1041 = vld [vmem:[%s1025 + $0x78] sm:$0xff]
        %v1042 = vld [vmem:[%s1025 + $0x80] sm:$0xff]
        %v1043 = vld [vmem:[%s1025 + $0x88] sm:$0xff]
        %v1044 = vld [vmem:[%s1025 + $0x90] sm:$0xff]
        %v1045 = vld [vmem:[%s1025 + $0x98] sm:$0xff]
        %v1046 = vld [vmem:[%s1025 + $0xa0] sm:$0xff]
        %v1047 = vld [vmem:[%s1025 + $0xa8] sm:$0xff]
        %v1048 = vld [vmem:[%s1025 + $0xb0] sm:$0xff]
        %v1049 = vld [vmem:[%s1025 + $0xb8] sm:$0xff]
        %v1051 = vsel %vm373, %v962, 0
        %v1054 = vsel %vm373, %v964, 0
        %v1057 = vsel %vm373, %v966, 0
        %v1060 = vsel %vm373, %v968, 0
        %v1063 = vsel %vm373, %v970, 0
        %v1066 = vsel %vm373, %v972, 0
        %v1069 = vsel %vm373, %v974, 0
        %v1072 = vsel %vm373, %v976, 0
        %v1075 = vsel %vm373, %v978, 0
        %v1078 = vsel %vm373, %v980, 0
        %v1081 = vsel %vm373, %v982, 0
        %v1084 = vsel %vm373, %v984, 0
        %v1087 = vsel %vm373, %v986, 0
        %v1090 = vsel %vm373, %v988, 0
        %v1093 = vsel %vm373, %v990, 0
        %v1096 = vsel %vm373, %v992, 0
        %v1099 = vsel %vm373, %v994, 0
        %v1102 = vsel %vm373, %v996, 0
        %v1105 = vsel %vm373, %v998, 0
        %v1108 = vsel %vm373, %v1000, 0
        %v1111 = vsel %vm373, %v1002, 0
        %v1114 = vsel %vm373, %v1004, 0
        %v1117 = vsel %vm373, %v1006, 0
        %v1120 = vsel %vm373, %v1008, 0
        %v1123 = vsel %vm373, %v1010, 0
        %v1126 = vsel %vm373, %v1012, 0
        %v1129 = vsel %vm373, %v1014, 0
        %v1132 = vsel %vm373, %v1016, 0
        %v1135 = vsel %vm373, %v1018, 0
        %v1138 = vsel %vm373, %v1020, 0
        %v1141 = vsel %vm373, %v1022, 0
        %v1144 = vsel %vm373, %v1024, 0
        %1146 = vmatprep.subr.mxu0 0.0
        %1147 = vmatpush1.msra.mxu0 %v1026
        %1148 = vmatprep.subr.mxu0 0.0
        %1149 = vmatpush1.msra.mxu0 %v1027
        %1150 = vmatprep.subr.mxu0 0.0
        %1151 = vmatpush1.msra.mxu0 %v1028
        %1152 = vmatprep.subr.mxu0 0.0
        %1153 = vmatpush1.msra.mxu0 %v1029
        %1154 = vmatprep.subr.mxu0 0.0
        %1155 = vmatpush1.msra.mxu0 %v1030
        %1156 = vmatprep.subr.mxu0 0.0
        %1157 = vmatpush1.msra.mxu0 %v1031
        %1158 = vmatprep.subr.mxu0 0.0
        %1159 = vmatpush1.msra.mxu0 %v1032
        %1160 = vmatprep.subr.mxu0 0.0
        %1161 = vmatpush1.msra.mxu0 %v1033
        %1162 = vmatprep.subr.mxu0 0.0
        %1163 = vmatpush1.msra.mxu0 %v1034
        %1164 = vmatprep.subr.mxu0 0.0
        %1165 = vmatpush1.msra.mxu0 %v1035
        %1166 = vmatprep.subr.mxu0 0.0
        %1167 = vmatpush1.msra.mxu0 %v1036
        %1168 = vmatprep.subr.mxu0 0.0
        %1169 = vmatpush1.msra.mxu0 %v1037
        %1170 = vmatprep.subr.mxu0 0.0
        %1171 = vmatpush1.msra.mxu0 %v1038
        %1172 = vmatprep.subr.mxu0 0.0
        %1173 = vmatpush1.msra.mxu0 %v1039
        %1174 = vmatprep.subr.mxu0 0.0
        %1175 = vmatpush1.msra.mxu0 %v1040
        %1176 = vmatprep.subr.mxu0 0.0
        %1177 = vmatpush1.msra.mxu0 %v1041
        %1178 = vmatprep.subr.mxu0 0.0
        %1179 = vmatpush1.msra.mxu0 %v1042
        %1180 = vmatprep.subr.mxu0 0.0
        %1181 = vmatpush1.msra.mxu0 %v1043
        %1182 = vmatprep.subr.mxu0 0.0
        %1183 = vmatpush1.msra.mxu0 %v1044
        %1184 = vmatprep.subr.mxu0 0.0
        %1185 = vmatpush1.msra.mxu0 %v1045
        %1186 = vmatprep.subr.mxu0 0.0
        %1187 = vmatpush1.msra.mxu0 %v1046
        %1188 = vmatprep.subr.mxu0 0.0
        %1189 = vmatpush1.msra.mxu0 %v1047
        %1190 = vmatprep.subr.mxu0 0.0
        %1191 = vmatpush1.msra.mxu0 %v1048
        %1192 = vmatprep.subr.mxu0 0.0
        %1193 = vmatpush1.msra.mxu0 %v1049
        %1194 = vmatprep.subr.mxu0 0.0
        %1195 = vmatpush1.msra.mxu0 0.0
        %1196 = vmatprep.subr.mxu0 0.0
        %1197 = vmatpush1.msra.mxu0 0.0
        %1198 = vmatprep.subr.mxu0 0.0
        %1199 = vmatpush1.msra.mxu0 0.0
        %1200 = vmatprep.subr.mxu0 0.0
        %1201 = vmatpush1.msra.mxu0 0.0
        %1202 = vmatprep.subr.mxu0 0.0
        %1203 = vmatpush1.msra.mxu0 0.0
        %1204 = vmatprep.subr.mxu0 0.0
        %1205 = vmatpush1.msra.mxu0 0.0
        %1206 = vmatprep.subr.mxu0 0.0
        %1207 = vmatpush1.msra.mxu0 0.0
        %1208 = vmatprep.subr.mxu0 0.0
        %1209 = vmatpush1.msra.mxu0 0.0
        %1210 = vmatprep.mubr.f32.mxu0 %v1051
        %1211 = vmatmul.mubr.f32.gmra.mrb[0].mxu0 %v961
        %v1212 = vpop.f32.mrb[0].mxu0
        %v1213 = vadd.f32 0.0, %v1212
        %v1214 = vpop.f32.mrb[0].mxu0
        %1215 = vmatprep.mubr.f32.mxu0 %v1054
        %1216 = vmatmul.mubr.f32.gmra.mrb[0].mxu0 %v963
        %v1217 = vpop.f32.mrb[0].mxu0
        %v1218 = vadd.f32 0.0, %v1217
        %v1219 = vpop.f32.mrb[0].mxu0
        %1220 = vmatprep.mubr.f32.mxu0 %v1057
        %1221 = vmatmul.mubr.f32.gmra.mrb[0].mxu0 %v965
        %v1222 = vpop.f32.mrb[0].mxu0
        %v1223 = vadd.f32 0.0, %v1222
        %v1224 = vpop.f32.mrb[0].mxu0
        %1225 = vmatprep.mubr.f32.mxu0 %v1060
        %1226 = vmatmul.mubr.f32.gmra.mrb[0].mxu0 %v967
        %v1227 = vpop.f32.mrb[0].mxu0
        %v1228 = vadd.f32 0.0, %v1227
        %v1229 = vpop.f32.mrb[0].mxu0
        %1230 = vmatprep.mubr.f32.mxu0 %v1063
        %1231 = vmatmul.mubr.f32.gmra.mrb[0].mxu0 %v969
        %v1232 = vpop.f32.mrb[0].mxu0
        %v1233 = vadd.f32 0.0, %v1232
        %v1234 = vpop.f32.mrb[0].mxu0
        %1235 = vmatprep.mubr.f32.mxu0 %v1066
        %1236 = vmatmul.mubr.f32.gmra.mrb[0].mxu0 %v971
        %v1237 = vpop.f32.mrb[0].mxu0
        %v1238 = vadd.f32 0.0, %v1237
        %v1239 = vpop.f32.mrb[0].mxu0
        %1240 = vmatprep.mubr.f32.mxu0 %v1069
        %1241 = vmatmul.mubr.f32.gmra.mrb[0].mxu0 %v973
        %v1242 = vpop.f32.mrb[0].mxu0
        %v1243 = vadd.f32 0.0, %v1242
        %v1244 = vpop.f32.mrb[0].mxu0
        %1245 = vmatprep.mubr.f32.mxu0 %v1072
        %1246 = vmatmul.mubr.f32.gmra.mrb[0].mxu0 %v975
        %v1247 = vpop.f32.mrb[0].mxu0
        %v1248 = vadd.f32 0.0, %v1247
        %v1249 = vpop.f32.mrb[0].mxu0
        %1250 = vmatprep.mubr.f32.mxu0 %v1075
        %1251 = vmatmul.mubr.f32.gmra.mrb[0].mxu0 %v977
        %v1252 = vpop.f32.mrb[0].mxu0
        %v1253 = vadd.f32 0.0, %v1252
        %v1254 = vpop.f32.mrb[0].mxu0
        %1255 = vmatprep.mubr.f32.mxu0 %v1078
        %1256 = vmatmul.mubr.f32.gmra.mrb[0].mxu0 %v979
        %v1257 = vpop.f32.mrb[0].mxu0
        %v1258 = vadd.f32 0.0, %v1257
        %v1259 = vpop.f32.mrb[0].mxu0
        %1260 = vmatprep.mubr.f32.mxu0 %v1081
        %1261 = vmatmul.mubr.f32.gmra.mrb[0].mxu0 %v981
        %v1262 = vpop.f32.mrb[0].mxu0
        %v1263 = vadd.f32 0.0, %v1262
        %v1264 = vpop.f32.mrb[0].mxu0
        %1265 = vmatprep.mubr.f32.mxu0 %v1084
        %1266 = vmatmul.mubr.f32.gmra.mrb[0].mxu0 %v983
        %v1267 = vpop.f32.mrb[0].mxu0
        %v1268 = vadd.f32 0.0, %v1267
        %v1269 = vpop.f32.mrb[0].mxu0
        %1270 = vmatprep.mubr.f32.mxu0 %v1087
        %1271 = vmatmul.mubr.f32.gmra.mrb[0].mxu0 %v985
        %v1272 = vpop.f32.mrb[0].mxu0
        %v1273 = vadd.f32 0.0, %v1272
        %v1274 = vpop.f32.mrb[0].mxu0
        %1275 = vmatprep.mubr.f32.mxu0 %v1090
        %1276 = vmatmul.mubr.f32.gmra.mrb[0].mxu0 %v987
        %v1277 = vpop.f32.mrb[0].mxu0
        %v1278 = vadd.f32 0.0, %v1277
        %v1279 = vpop.f32.mrb[0].mxu0
        %1280 = vmatprep.mubr.f32.mxu0 %v1093
        %1281 = vmatmul.mubr.f32.gmra.mrb[0].mxu0 %v989
        %v1282 = vpop.f32.mrb[0].mxu0
        %v1283 = vadd.f32 0.0, %v1282
        %v1284 = vpop.f32.mrb[0].mxu0
        %1285 = vmatprep.mubr.f32.mxu0 %v1096
        %1286 = vmatmul.mubr.f32.gmra.mrb[0].mxu0 %v991
        %v1287 = vpop.f32.mrb[0].mxu0
        %v1288 = vadd.f32 0.0, %v1287
        %v1289 = vpop.f32.mrb[0].mxu0
        %1290 = vmatprep.mubr.f32.mxu0 %v1099
        %1291 = vmatmul.mubr.f32.gmra.mrb[0].mxu0 %v993
        %v1292 = vpop.f32.mrb[0].mxu0
        %v1293 = vadd.f32 0.0, %v1292
        %v1294 = vpop.f32.mrb[0].mxu0
        %1295 = vmatprep.mubr.f32.mxu0 %v1102
        %1296 = vmatmul.mubr.f32.gmra.mrb[0].mxu0 %v995
        %v1297 = vpop.f32.mrb[0].mxu0
        %v1298 = vadd.f32 0.0, %v1297
        %v1299 = vpop.f32.mrb[0].mxu0
        %1300 = vmatprep.mubr.f32.mxu0 %v1105
        %1301 = vmatmul.mubr.f32.gmra.mrb[0].mxu0 %v997
        %v1302 = vpop.f32.mrb[0].mxu0
        %v1303 = vadd.f32 0.0, %v1302
        %v1304 = vpop.f32.mrb[0].mxu0
        %1305 = vmatprep.mubr.f32.mxu0 %v1108
        %1306 = vmatmul.mubr.f32.gmra.mrb[0].mxu0 %v999
        %v1307 = vpop.f32.mrb[0].mxu0
        %v1308 = vadd.f32 0.0, %v1307
        %v1309 = vpop.f32.mrb[0].mxu0
        %1310 = vmatprep.mubr.f32.mxu0 %v1111
        %1311 = vmatmul.mubr.f32.gmra.mrb[0].mxu0 %v1001
        %v1312 = vpop.f32.mrb[0].mxu0
        %v1313 = vadd.f32 0.0, %v1312
        %v1314 = vpop.f32.mrb[0].mxu0
        %1315 = vmatprep.mubr.f32.mxu0 %v1114
        %1316 = vmatmul.mubr.f32.gmra.mrb[0].mxu0 %v1003
        %v1317 = vpop.f32.mrb[0].mxu0
        %v1318 = vadd.f32 0.0, %v1317
        %v1319 = vpop.f32.mrb[0].mxu0
        %1320 = vmatprep.mubr.f32.mxu0 %v1117
        %1321 = vmatmul.mubr.f32.gmra.mrb[0].mxu0 %v1005
        %v1322 = vpop.f32.mrb[0].mxu0
        %v1323 = vadd.f32 0.0, %v1322
        %v1324 = vpop.f32.mrb[0].mxu0
        %1325 = vmatprep.mubr.f32.mxu0 %v1120
        %1326 = vmatmul.mubr.f32.gmra.mrb[0].mxu0 %v1007
        %v1327 = vpop.f32.mrb[0].mxu0
        %v1328 = vadd.f32 0.0, %v1327
        %v1329 = vpop.f32.mrb[0].mxu0
        %1330 = vmatprep.mubr.f32.mxu0 %v1123
        %1331 = vmatmul.mubr.f32.gmra.mrb[0].mxu0 %v1009
        %v1332 = vpop.f32.mrb[0].mxu0
        %v1333 = vadd.f32 0.0, %v1332
        %v1334 = vpop.f32.mrb[0].mxu0
        %1335 = vmatprep.mubr.f32.mxu0 %v1126
        %1336 = vmatmul.mubr.f32.gmra.mrb[0].mxu0 %v1011
        %v1337 = vpop.f32.mrb[0].mxu0
        %v1338 = vadd.f32 0.0, %v1337
        %v1339 = vpop.f32.mrb[0].mxu0
        %1340 = vmatprep.mubr.f32.mxu0 %v1129
        %1341 = vmatmul.mubr.f32.gmra.mrb[0].mxu0 %v1013
        %v1342 = vpop.f32.mrb[0].mxu0
        %v1343 = vadd.f32 0.0, %v1342
        %v1344 = vpop.f32.mrb[0].mxu0
        %1345 = vmatprep.mubr.f32.mxu0 %v1132
        %1346 = vmatmul.mubr.f32.gmra.mrb[0].mxu0 %v1015
        %v1347 = vpop.f32.mrb[0].mxu0
        %v1348 = vadd.f32 0.0, %v1347
        %v1349 = vpop.f32.mrb[0].mxu0
        %1350 = vmatprep.mubr.f32.mxu0 %v1135
        %1351 = vmatmul.mubr.f32.gmra.mrb[0].mxu0 %v1017
        %v1352 = vpop.f32.mrb[0].mxu0
        %v1353 = vadd.f32 0.0, %v1352
        %v1354 = vpop.f32.mrb[0].mxu0
        %1355 = vmatprep.mubr.f32.mxu0 %v1138
        %1356 = vmatmul.mubr.f32.gmra.mrb[0].mxu0 %v1019
        %v1357 = vpop.f32.mrb[0].mxu0
        %v1358 = vadd.f32 0.0, %v1357
        %v1359 = vpop.f32.mrb[0].mxu0
        %1360 = vmatprep.mubr.f32.mxu0 %v1141
        %1361 = vmatmul.mubr.f32.gmra.mrb[0].mxu0 %v1021
        %v1362 = vpop.f32.mrb[0].mxu0
        %v1363 = vadd.f32 0.0, %v1362
        %v1364 = vpop.f32.mrb[0].mxu0
        %1365 = vmatprep.mubr.f32.mxu0 %v1144
        %1366 = vmatmul.mubr.f32.gmra.mrb[0].mxu0 %v1023
        %v1367 = vpop.f32.mrb[0].mxu0
        %v1368 = vadd.f32 0.0, %v1367
        %v1369 = vpop.f32.mrb[0].mxu0
        %1370 = vdwg.mxu0
        %v1372 = vsel %vm373, %v874, 0
        %v1375 = vsel %vm373, %v876, 0
        %v1378 = vsel %vm373, %v878, 0
        %v1381 = vsel %vm373, %v880, 0
        %v1384 = vsel %vm373, %v882, 0
        %v1387 = vsel %vm373, %v884, 0
        %v1390 = vsel %vm373, %v886, 0
        %v1393 = vsel %vm373, %v888, 0
        %v1396 = vsel %vm373, %v890, 0
        %v1399 = vsel %vm373, %v892, 0
        %v1402 = vsel %vm373, %v894, 0
        %v1405 = vsel %vm373, %v896, 0
        %v1408 = vsel %vm373, %v898, 0
        %v1411 = vsel %vm373, %v900, 0
        %v1414 = vsel %vm373, %v902, 0
        %v1417 = vsel %vm373, %v904, 0
        %v1420 = vsel %vm373, %v906, 0
        %v1423 = vsel %vm373, %v908, 0
        %v1426 = vsel %vm373, %v910, 0
        %v1429 = vsel %vm373, %v912, 0
        %v1432 = vsel %vm373, %v914, 0
        %v1435 = vsel %vm373, %v916, 0
        %v1438 = vsel %vm373, %v918, 0
        %v1441 = vsel %vm373, %v920, 0
        %v1444 = vsel %vm373, %v922, 0
        %v1447 = vsel %vm373, %v924, 0
        %v1450 = vsel %vm373, %v926, 0
        %v1453 = vsel %vm373, %v928, 0
        %v1456 = vsel %vm373, %v930, 0
        %v1459 = vsel %vm373, %v932, 0
        %v1462 = vsel %vm373, %v934, 0
        %v1465 = vsel %vm373, %v936, 0
        %1467 = vmatprep.subr.mxu0 0.0
        %1468 = vmatpush1.msra.mxu0 %v937
        %1469 = vmatprep.subr.mxu0 0.0
        %1470 = vmatpush1.msra.mxu0 %v938
        %1471 = vmatprep.subr.mxu0 0.0
        %1472 = vmatpush1.msra.mxu0 %v939
        %1473 = vmatprep.subr.mxu0 0.0
        %1474 = vmatpush1.msra.mxu0 %v940
        %1475 = vmatprep.subr.mxu0 0.0
        %1476 = vmatpush1.msra.mxu0 %v941
        %1477 = vmatprep.subr.mxu0 0.0
        %1478 = vmatpush1.msra.mxu0 %v942
        %1479 = vmatprep.subr.mxu0 0.0
        %1480 = vmatpush1.msra.mxu0 %v943
        %1481 = vmatprep.subr.mxu0 0.0
        %1482 = vmatpush1.msra.mxu0 %v944
        %1483 = vmatprep.subr.mxu0 0.0
        %1484 = vmatpush1.msra.mxu0 %v945
        %1485 = vmatprep.subr.mxu0 0.0
        %1486 = vmatpush1.msra.mxu0 %v946
        %1487 = vmatprep.subr.mxu0 0.0
        %1488 = vmatpush1.msra.mxu0 %v947
        %1489 = vmatprep.subr.mxu0 0.0
        %1490 = vmatpush1.msra.mxu0 %v948
        %1491 = vmatprep.subr.mxu0 0.0
        %1492 = vmatpush1.msra.mxu0 %v949
        %1493 = vmatprep.subr.mxu0 0.0
        %1494 = vmatpush1.msra.mxu0 %v950
        %1495 = vmatprep.subr.mxu0 0.0
        %1496 = vmatpush1.msra.mxu0 %v951
        %1497 = vmatprep.subr.mxu0 0.0
        %1498 = vmatpush1.msra.mxu0 %v952
        %1499 = vmatprep.subr.mxu0 0.0
        %1500 = vmatpush1.msra.mxu0 %v953
        %1501 = vmatprep.subr.mxu0 0.0
        %1502 = vmatpush1.msra.mxu0 %v954
        %1503 = vmatprep.subr.mxu0 0.0
        %1504 = vmatpush1.msra.mxu0 %v955
        %1505 = vmatprep.subr.mxu0 0.0
        %1506 = vmatpush1.msra.mxu0 %v956
        %1507 = vmatprep.subr.mxu0 0.0
        %1508 = vmatpush1.msra.mxu0 %v957
        %1509 = vmatprep.subr.mxu0 0.0
        %1510 = vmatpush1.msra.mxu0 %v958
        %1511 = vmatprep.subr.mxu0 0.0
        %1512 = vmatpush1.msra.mxu0 %v959
        %1513 = vmatprep.subr.mxu0 0.0
        %1514 = vmatpush1.msra.mxu0 %v960
        %1515 = vmatprep.subr.mxu0 0.0
        %1516 = vmatpush1.msra.mxu0 0.0
        %1517 = vmatprep.subr.mxu0 0.0
        %1518 = vmatpush1.msra.mxu0 0.0
        %1519 = vmatprep.subr.mxu0 0.0
        %1520 = vmatpush1.msra.mxu0 0.0
        %1521 = vmatprep.subr.mxu0 0.0
        %1522 = vmatpush1.msra.mxu0 0.0
        %1523 = vmatprep.subr.mxu0 0.0
        %1524 = vmatpush1.msra.mxu0 0.0
        %1525 = vmatprep.subr.mxu0 0.0
        %1526 = vmatpush1.msra.mxu0 0.0
        %1527 = vmatprep.subr.mxu0 0.0
        %1528 = vmatpush1.msra.mxu0 0.0
        %1529 = vmatprep.subr.mxu0 0.0
        %1530 = vmatpush1.msra.mxu0 0.0
        %1531 = vmatprep.mubr.f32.mxu0 %v1372
        %1532 = vmatmul.mubr.f32.gmra.mrb[0].mxu0 %v873
        %v1533 = vpop.f32.mrb[0].mxu0
        %v1534 = vadd.f32 %v1213, %v1533
        %v1535 = vpop.f32.mrb[0].mxu0
        %1536 = vmatprep.mubr.f32.mxu0 %v1375
        %1537 = vmatmul.mubr.f32.gmra.mrb[0].mxu0 %v875
        %v1538 = vpop.f32.mrb[0].mxu0
        %v1539 = vadd.f32 %v1218, %v1538
        %v1540 = vpop.f32.mrb[0].mxu0
        %1541 = vmatprep.mubr.f32.mxu0 %v1378
        %1542 = vmatmul.mubr.f32.gmra.mrb[0].mxu0 %v877
        %v1543 = vpop.f32.mrb[0].mxu0
        %v1544 = vadd.f32 %v1223, %v1543
        %v1545 = vpop.f32.mrb[0].mxu0
        %1546 = vmatprep.mubr.f32.mxu0 %v1381
        %1547 = vmatmul.mubr.f32.gmra.mrb[0].mxu0 %v879
        %v1548 = vpop.f32.mrb[0].mxu0
        %v1549 = vadd.f32 %v1228, %v1548
        %v1550 = vpop.f32.mrb[0].mxu0
        %1551 = vmatprep.mubr.f32.mxu0 %v1384
        %1552 = vmatmul.mubr.f32.gmra.mrb[0].mxu0 %v881
        %v1553 = vpop.f32.mrb[0].mxu0
        %v1554 = vadd.f32 %v1233, %v1553
        %v1555 = vpop.f32.mrb[0].mxu0
        %1556 = vmatprep.mubr.f32.mxu0 %v1387
        %1557 = vmatmul.mubr.f32.gmra.mrb[0].mxu0 %v883
        %v1558 = vpop.f32.mrb[0].mxu0
        %v1559 = vadd.f32 %v1238, %v1558
        %v1560 = vpop.f32.mrb[0].mxu0
        %1561 = vmatprep.mubr.f32.mxu0 %v1390
        %1562 = vmatmul.mubr.f32.gmra.mrb[0].mxu0 %v885
        %v1563 = vpop.f32.mrb[0].mxu0
        %v1564 = vadd.f32 %v1243, %v1563
        %v1565 = vpop.f32.mrb[0].mxu0
        %1566 = vmatprep.mubr.f32.mxu0 %v1393
        %1567 = vmatmul.mubr.f32.gmra.mrb[0].mxu0 %v887
        %v1568 = vpop.f32.mrb[0].mxu0
        %v1569 = vadd.f32 %v1248, %v1568
        %v1570 = vpop.f32.mrb[0].mxu0
        %1571 = vmatprep.mubr.f32.mxu0 %v1396
        %1572 = vmatmul.mubr.f32.gmra.mrb[0].mxu0 %v889
        %v1573 = vpop.f32.mrb[0].mxu0
        %v1574 = vadd.f32 %v1253, %v1573
        %v1575 = vpop.f32.mrb[0].mxu0
        %1576 = vmatprep.mubr.f32.mxu0 %v1399
        %1577 = vmatmul.mubr.f32.gmra.mrb[0].mxu0 %v891
        %v1578 = vpop.f32.mrb[0].mxu0
        %v1579 = vadd.f32 %v1258, %v1578
        %v1580 = vpop.f32.mrb[0].mxu0
        %1581 = vmatprep.mubr.f32.mxu0 %v1402
        %1582 = vmatmul.mubr.f32.gmra.mrb[0].mxu0 %v893
        %v1583 = vpop.f32.mrb[0].mxu0
        %v1584 = vadd.f32 %v1263, %v1583
        %v1585 = vpop.f32.mrb[0].mxu0
        %1586 = vmatprep.mubr.f32.mxu0 %v1405
        %1587 = vmatmul.mubr.f32.gmra.mrb[0].mxu0 %v895
        %v1588 = vpop.f32.mrb[0].mxu0
        %v1589 = vadd.f32 %v1268, %v1588
        %v1590 = vpop.f32.mrb[0].mxu0
        %1591 = vmatprep.mubr.f32.mxu0 %v1408
        %1592 = vmatmul.mubr.f32.gmra.mrb[0].mxu0 %v897
        %v1593 = vpop.f32.mrb[0].mxu0
        %v1594 = vadd.f32 %v1273, %v1593
        %v1595 = vpop.f32.mrb[0].mxu0
        %1596 = vmatprep.mubr.f32.mxu0 %v1411
        %1597 = vmatmul.mubr.f32.gmra.mrb[0].mxu0 %v899
        %v1598 = vpop.f32.mrb[0].mxu0
        %v1599 = vadd.f32 %v1278, %v1598
        %v1600 = vpop.f32.mrb[0].mxu0
        %1601 = vmatprep.mubr.f32.mxu0 %v1414
        %1602 = vmatmul.mubr.f32.gmra.mrb[0].mxu0 %v901
        %v1603 = vpop.f32.mrb[0].mxu0
        %v1604 = vadd.f32 %v1283, %v1603
        %v1605 = vpop.f32.mrb[0].mxu0
        %1606 = vmatprep.mubr.f32.mxu0 %v1417
        %1607 = vmatmul.mubr.f32.gmra.mrb[0].mxu0 %v903
        %v1608 = vpop.f32.mrb[0].mxu0
        %v1609 = vadd.f32 %v1288, %v1608
        %v1610 = vpop.f32.mrb[0].mxu0
        %1611 = vmatprep.mubr.f32.mxu0 %v1420
        %1612 = vmatmul.mubr.f32.gmra.mrb[0].mxu0 %v905
        %v1613 = vpop.f32.mrb[0].mxu0
        %v1614 = vadd.f32 %v1293, %v1613
        %v1615 = vpop.f32.mrb[0].mxu0
        %1616 = vmatprep.mubr.f32.mxu0 %v1423
        %1617 = vmatmul.mubr.f32.gmra.mrb[0].mxu0 %v907
        %v1618 = vpop.f32.mrb[0].mxu0
        %v1619 = vadd.f32 %v1298, %v1618
        %v1620 = vpop.f32.mrb[0].mxu0
        %1621 = vmatprep.mubr.f32.mxu0 %v1426
        %1622 = vmatmul.mubr.f32.gmra.mrb[0].mxu0 %v909
        %v1623 = vpop.f32.mrb[0].mxu0
        %v1624 = vadd.f32 %v1303, %v1623
        %v1625 = vpop.f32.mrb[0].mxu0
        %1626 = vmatprep.mubr.f32.mxu0 %v1429
        %1627 = vmatmul.mubr.f32.gmra.mrb[0].mxu0 %v911
        %v1628 = vpop.f32.mrb[0].mxu0
        %v1629 = vadd.f32 %v1308, %v1628
        %v1630 = vpop.f32.mrb[0].mxu0
        %1631 = vmatprep.mubr.f32.mxu0 %v1432
        %1632 = vmatmul.mubr.f32.gmra.mrb[0].mxu0 %v913
        %v1633 = vpop.f32.mrb[0].mxu0
        %v1634 = vadd.f32 %v1313, %v1633
        %v1635 = vpop.f32.mrb[0].mxu0
        %1636 = vmatprep.mubr.f32.mxu0 %v1435
        %1637 = vmatmul.mubr.f32.gmra.mrb[0].mxu0 %v915
        %v1638 = vpop.f32.mrb[0].mxu0
        %v1639 = vadd.f32 %v1318, %v1638
        %v1640 = vpop.f32.mrb[0].mxu0
        %1641 = vmatprep.mubr.f32.mxu0 %v1438
        %1642 = vmatmul.mubr.f32.gmra.mrb[0].mxu0 %v917
        %v1643 = vpop.f32.mrb[0].mxu0
        %v1644 = vadd.f32 %v1323, %v1643
        %v1645 = vpop.f32.mrb[0].mxu0
        %1646 = vmatprep.mubr.f32.mxu0 %v1441
        %1647 = vmatmul.mubr.f32.gmra.mrb[0].mxu0 %v919
        %v1648 = vpop.f32.mrb[0].mxu0
        %v1649 = vadd.f32 %v1328, %v1648
        %v1650 = vpop.f32.mrb[0].mxu0
        %1651 = vmatprep.mubr.f32.mxu0 %v1444
        %1652 = vmatmul.mubr.f32.gmra.mrb[0].mxu0 %v921
        %v1653 = vpop.f32.mrb[0].mxu0
        %v1654 = vadd.f32 %v1333, %v1653
        %v1655 = vpop.f32.mrb[0].mxu0
        %1656 = vmatprep.mubr.f32.mxu0 %v1447
        %1657 = vmatmul.mubr.f32.gmra.mrb[0].mxu0 %v923
        %v1658 = vpop.f32.mrb[0].mxu0
        %v1659 = vadd.f32 %v1338, %v1658
        %v1660 = vpop.f32.mrb[0].mxu0
        %1661 = vmatprep.mubr.f32.mxu0 %v1450
        %1662 = vmatmul.mubr.f32.gmra.mrb[0].mxu0 %v925
        %v1663 = vpop.f32.mrb[0].mxu0
        %v1664 = vadd.f32 %v1343, %v1663
        %v1665 = vpop.f32.mrb[0].mxu0
        %1666 = vmatprep.mubr.f32.mxu0 %v1453
        %1667 = vmatmul.mubr.f32.gmra.mrb[0].mxu0 %v927
        %v1668 = vpop.f32.mrb[0].mxu0
        %v1669 = vadd.f32 %v1348, %v1668
        %v1670 = vpop.f32.mrb[0].mxu0
        %1671 = vmatprep.mubr.f32.mxu0 %v1456
        %1672 = vmatmul.mubr.f32.gmra.mrb[0].mxu0 %v929
        %v1673 = vpop.f32.mrb[0].mxu0
        %v1674 = vadd.f32 %v1353, %v1673
        %v1675 = vpop.f32.mrb[0].mxu0
        %1676 = vmatprep.mubr.f32.mxu0 %v1459
        %1677 = vmatmul.mubr.f32.gmra.mrb[0].mxu0 %v931
        %v1678 = vpop.f32.mrb[0].mxu0
        %v1679 = vadd.f32 %v1358, %v1678
        %v1680 = vpop.f32.mrb[0].mxu0
        %1681 = vmatprep.mubr.f32.mxu0 %v1462
        %1682 = vmatmul.mubr.f32.gmra.mrb[0].mxu0 %v933
        %v1683 = vpop.f32.mrb[0].mxu0
        %v1684 = vadd.f32 %v1363, %v1683
        %v1685 = vpop.f32.mrb[0].mxu0
        %1686 = vmatprep.mubr.f32.mxu0 %v1465
        %1687 = vmatmul.mubr.f32.gmra.mrb[0].mxu0 %v935
        %v1688 = vpop.f32.mrb[0].mxu0
        %v1689 = vadd.f32 %v1368, %v1688
        %v1690 = vpop.f32.mrb[0].mxu0
        %1691 = vdwg.mxu0
        %s1692 = scalar_lea.vmem [#allocation2], 64
        %v1693 = vld [vmem:[%s1692] sm:$0xff]
        %v1694 = vld [vmem:[%s1692 + $0x8] sm:$0xff]
        %v1695 = vld [vmem:[%s1692 + $0x10] sm:$0xff]
        %v1696 = vld [vmem:[%s1692 + $0x18] sm:$0xff]
        %v1697 = vld [vmem:[%s1692 + $0x20] sm:$0xff]
        %v1698 = vld [vmem:[%s1692 + $0x28] sm:$0xff]
        %v1699 = vld [vmem:[%s1692 + $0x30] sm:$0xff]
        %v1700 = vld [vmem:[%s1692 + $0x38] sm:$0xff]
        %v1701 = vld [vmem:[%s1692 + $0x40] sm:$0xff]
        %v1702 = vld [vmem:[%s1692 + $0x48] sm:$0xff]
        %v1703 = vld [vmem:[%s1692 + $0x50] sm:$0xff]
        %v1704 = vld [vmem:[%s1692 + $0x58] sm:$0xff]
        %v1705 = vld [vmem:[%s1692 + $0x60] sm:$0xff]
        %v1706 = vld [vmem:[%s1692 + $0x68] sm:$0xff]
        %v1707 = vld [vmem:[%s1692 + $0x70] sm:$0xff]
        %v1708 = vld [vmem:[%s1692 + $0x78] sm:$0xff]
        %v1709 = vld [vmem:[%s1692 + $0x80] sm:$0xff]
        %v1710 = vld [vmem:[%s1692 + $0x88] sm:$0xff]
        %v1711 = vld [vmem:[%s1692 + $0x90] sm:$0xff]
        %v1712 = vld [vmem:[%s1692 + $0x98] sm:$0xff]
        %v1713 = vld [vmem:[%s1692 + $0xa0] sm:$0xff]
        %v1714 = vld [vmem:[%s1692 + $0xa8] sm:$0xff]
        %v1715 = vld [vmem:[%s1692 + $0xb0] sm:$0xff]
        %v1716 = vld [vmem:[%s1692 + $0xb8] sm:$0xff]
        %v1717 = vld [vmem:[%s1692 + $0xc0] sm:$0xff]
        %v1718 = vld [vmem:[%s1692 + $0xc8] sm:$0xff]
        %v1719 = vld [vmem:[%s1692 + $0xd0] sm:$0xff]
        %v1720 = vld [vmem:[%s1692 + $0xd8] sm:$0xff]
        %v1721 = vld [vmem:[%s1692 + $0xe0] sm:$0xff]
        %v1722 = vld [vmem:[%s1692 + $0xe8] sm:$0xff]
        %v1723 = vld [vmem:[%s1692 + $0xf0] sm:$0xff]
        %v1724 = vld [vmem:[%s1692 + $0xf8] sm:$0xff]
        %v1725 = vld [vmem:[%s1692 + $0x100] sm:$0xff]
        %v1726 = vld [vmem:[%s1692 + $0x108] sm:$0xff]
        %v1727 = vld [vmem:[%s1692 + $0x110] sm:$0xff]
        %v1728 = vld [vmem:[%s1692 + $0x118] sm:$0xff]
        %v1729 = vld [vmem:[%s1692 + $0x120] sm:$0xff]
        %v1730 = vld [vmem:[%s1692 + $0x128] sm:$0xff]
        %v1731 = vld [vmem:[%s1692 + $0x130] sm:$0xff]
        %v1732 = vld [vmem:[%s1692 + $0x138] sm:$0xff]
        %v1733 = vld [vmem:[%s1692 + $0x140] sm:$0xff]
        %v1734 = vld [vmem:[%s1692 + $0x148] sm:$0xff]
        %v1735 = vld [vmem:[%s1692 + $0x150] sm:$0xff]
        %v1736 = vld [vmem:[%s1692 + $0x158] sm:$0xff]
        %v1737 = vld [vmem:[%s1692 + $0x160] sm:$0xff]
        %v1738 = vld [vmem:[%s1692 + $0x168] sm:$0xff]
        %v1739 = vld [vmem:[%s1692 + $0x170] sm:$0xff]
        %v1740 = vld [vmem:[%s1692 + $0x178] sm:$0xff]
        %v1741 = vld [vmem:[%s1692 + $0x180] sm:$0xff]
        %v1742 = vld [vmem:[%s1692 + $0x188] sm:$0xff]
        %v1743 = vld [vmem:[%s1692 + $0x190] sm:$0xff]
        %v1744 = vld [vmem:[%s1692 + $0x198] sm:$0xff]
        %v1745 = vld [vmem:[%s1692 + $0x1a0] sm:$0xff]
        %v1746 = vld [vmem:[%s1692 + $0x1a8] sm:$0xff]
        %v1747 = vld [vmem:[%s1692 + $0x1b0] sm:$0xff]
        %v1748 = vld [vmem:[%s1692 + $0x1b8] sm:$0xff]
        %v1749 = vld [vmem:[%s1692 + $0x1c0] sm:$0xff]
        %v1750 = vld [vmem:[%s1692 + $0x1c8] sm:$0xff]
        %v1751 = vld [vmem:[%s1692 + $0x1d0] sm:$0xff]
        %v1752 = vld [vmem:[%s1692 + $0x1d8] sm:$0xff]
        %v1753 = vld [vmem:[%s1692 + $0x1e0] sm:$0xff]
        %v1754 = vld [vmem:[%s1692 + $0x1e8] sm:$0xff]
        %v1755 = vld [vmem:[%s1692 + $0x1f0] sm:$0xff]
        %v1756 = vld [vmem:[%s1692 + $0x1f8] sm:$0xff]
        %s1757 = scalar_lea.vmem %s2, 384
        %v1758 = vld [vmem:[%s1757] sm:$0xff]
        %v1759 = vld [vmem:[%s1757 + $0x8] sm:$0xff]
        %v1760 = vld [vmem:[%s1757 + $0x10] sm:$0xff]
        %v1761 = vld [vmem:[%s1757 + $0x18] sm:$0xff]
        %v1762 = vld [vmem:[%s1757 + $0x20] sm:$0xff]
        %v1763 = vld [vmem:[%s1757 + $0x28] sm:$0xff]
        %v1764 = vld [vmem:[%s1757 + $0x30] sm:$0xff]
        %v1765 = vld [vmem:[%s1757 + $0x38] sm:$0xff]
        %v1766 = vld [vmem:[%s1757 + $0x40] sm:$0xff]
        %v1767 = vld [vmem:[%s1757 + $0x48] sm:$0xff]
        %v1768 = vld [vmem:[%s1757 + $0x50] sm:$0xff]
        %v1769 = vld [vmem:[%s1757 + $0x58] sm:$0xff]
        %v1770 = vld [vmem:[%s1757 + $0x60] sm:$0xff]
        %v1771 = vld [vmem:[%s1757 + $0x68] sm:$0xff]
        %v1772 = vld [vmem:[%s1757 + $0x70] sm:$0xff]
        %v1773 = vld [vmem:[%s1757 + $0x78] sm:$0xff]
        %v1774 = vld [vmem:[%s1757 + $0x80] sm:$0xff]
        %v1775 = vld [vmem:[%s1757 + $0x88] sm:$0xff]
        %v1776 = vld [vmem:[%s1757 + $0x90] sm:$0xff]
        %v1777 = vld [vmem:[%s1757 + $0x98] sm:$0xff]
        %v1778 = vld [vmem:[%s1757 + $0xa0] sm:$0xff]
        %v1779 = vld [vmem:[%s1757 + $0xa8] sm:$0xff]
        %v1780 = vld [vmem:[%s1757 + $0xb0] sm:$0xff]
        %v1781 = vld [vmem:[%s1757 + $0xb8] sm:$0xff]
        %v1783 = vsel %vm373, %v1694, 0
        %v1786 = vsel %vm373, %v1696, 0
        %v1789 = vsel %vm373, %v1698, 0
        %v1792 = vsel %vm373, %v1700, 0
        %v1795 = vsel %vm373, %v1702, 0
        %v1798 = vsel %vm373, %v1704, 0
        %v1801 = vsel %vm373, %v1706, 0
        %v1804 = vsel %vm373, %v1708, 0
        %v1807 = vsel %vm373, %v1710, 0
        %v1810 = vsel %vm373, %v1712, 0
        %v1813 = vsel %vm373, %v1714, 0
        %v1816 = vsel %vm373, %v1716, 0
        %v1819 = vsel %vm373, %v1718, 0
        %v1822 = vsel %vm373, %v1720, 0
        %v1825 = vsel %vm373, %v1722, 0
        %v1828 = vsel %vm373, %v1724, 0
        %v1831 = vsel %vm373, %v1726, 0
        %v1834 = vsel %vm373, %v1728, 0
        %v1837 = vsel %vm373, %v1730, 0
        %v1840 = vsel %vm373, %v1732, 0
        %v1843 = vsel %vm373, %v1734, 0
        %v1846 = vsel %vm373, %v1736, 0
        %v1849 = vsel %vm373, %v1738, 0
        %v1852 = vsel %vm373, %v1740, 0
        %v1855 = vsel %vm373, %v1742, 0
        %v1858 = vsel %vm373, %v1744, 0
        %v1861 = vsel %vm373, %v1746, 0
        %v1864 = vsel %vm373, %v1748, 0
        %v1867 = vsel %vm373, %v1750, 0
        %v1870 = vsel %vm373, %v1752, 0
        %v1873 = vsel %vm373, %v1754, 0
        %v1876 = vsel %vm373, %v1756, 0
        %1878 = vmatprep.subr.mxu0 0.0
        %1879 = vmatpush1.msra.mxu0 %v1758
        %1880 = vmatprep.subr.mxu0 0.0
        %1881 = vmatpush1.msra.mxu0 %v1759
        %1882 = vmatprep.subr.mxu0 0.0
        %1883 = vmatpush1.msra.mxu0 %v1760
        %1884 = vmatprep.subr.mxu0 0.0
        %1885 = vmatpush1.msra.mxu0 %v1761
        %1886 = vmatprep.subr.mxu0 0.0
        %1887 = vmatpush1.msra.mxu0 %v1762
        %1888 = vmatprep.subr.mxu0 0.0
        %1889 = vmatpush1.msra.mxu0 %v1763
        %1890 = vmatprep.subr.mxu0 0.0
        %1891 = vmatpush1.msra.mxu0 %v1764
        %1892 = vmatprep.subr.mxu0 0.0
        %1893 = vmatpush1.msra.mxu0 %v1765
        %1894 = vmatprep.subr.mxu0 0.0
        %1895 = vmatpush1.msra.mxu0 %v1766
        %1896 = vmatprep.subr.mxu0 0.0
        %1897 = vmatpush1.msra.mxu0 %v1767
        %1898 = vmatprep.subr.mxu0 0.0
        %1899 = vmatpush1.msra.mxu0 %v1768
        %1900 = vmatprep.subr.mxu0 0.0
        %1901 = vmatpush1.msra.mxu0 %v1769
        %1902 = vmatprep.subr.mxu0 0.0
        %1903 = vmatpush1.msra.mxu0 %v1770
        %1904 = vmatprep.subr.mxu0 0.0
        %1905 = vmatpush1.msra.mxu0 %v1771
        %1906 = vmatprep.subr.mxu0 0.0
        %1907 = vmatpush1.msra.mxu0 %v1772
        %1908 = vmatprep.subr.mxu0 0.0
        %1909 = vmatpush1.msra.mxu0 %v1773
        %1910 = vmatprep.subr.mxu0 0.0
        %1911 = vmatpush1.msra.mxu0 %v1774
        %1912 = vmatprep.subr.mxu0 0.0
        %1913 = vmatpush1.msra.mxu0 %v1775
        %1914 = vmatprep.subr.mxu0 0.0
        %1915 = vmatpush1.msra.mxu0 %v1776
        %1916 = vmatprep.subr.mxu0 0.0
        %1917 = vmatpush1.msra.mxu0 %v1777
        %1918 = vmatprep.subr.mxu0 0.0
        %1919 = vmatpush1.msra.mxu0 %v1778
        %1920 = vmatprep.subr.mxu0 0.0
        %1921 = vmatpush1.msra.mxu0 %v1779
        %1922 = vmatprep.subr.mxu0 0.0
        %1923 = vmatpush1.msra.mxu0 %v1780
        %1924 = vmatprep.subr.mxu0 0.0
        %1925 = vmatpush1.msra.mxu0 %v1781
        %1926 = vmatprep.subr.mxu0 0.0
        %1927 = vmatpush1.msra.mxu0 0.0
        %1928 = vmatprep.subr.mxu0 0.0
        %1929 = vmatpush1.msra.mxu0 0.0
        %1930 = vmatprep.subr.mxu0 0.0
        %1931 = vmatpush1.msra.mxu0 0.0
        %1932 = vmatprep.subr.mxu0 0.0
        %1933 = vmatpush1.msra.mxu0 0.0
        %1934 = vmatprep.subr.mxu0 0.0
        %1935 = vmatpush1.msra.mxu0 0.0
        %1936 = vmatprep.subr.mxu0 0.0
        %1937 = vmatpush1.msra.mxu0 0.0
        %1938 = vmatprep.subr.mxu0 0.0
        %1939 = vmatpush1.msra.mxu0 0.0
        %1940 = vmatprep.subr.mxu0 0.0
        %1941 = vmatpush1.msra.mxu0 0.0
        %1942 = vmatprep.mubr.f32.mxu0 %v1783
        %1943 = vmatmul.mubr.f32.gmra.mrb[0].mxu0 %v1693
        %v1944 = vpop.f32.mrb[0].mxu0
        %v1945 = vadd.f32 0.0, %v1944
        %v1946 = vpop.f32.mrb[0].mxu0
        %1947 = vmatprep.mubr.f32.mxu0 %v1786
        %1948 = vmatmul.mubr.f32.gmra.mrb[0].mxu0 %v1695
        %v1949 = vpop.f32.mrb[0].mxu0
        %v1950 = vadd.f32 0.0, %v1949
        %v1951 = vpop.f32.mrb[0].mxu0
        %1952 = vmatprep.mubr.f32.mxu0 %v1789
        %1953 = vmatmul.mubr.f32.gmra.mrb[0].mxu0 %v1697
        %v1954 = vpop.f32.mrb[0].mxu0
        %v1955 = vadd.f32 0.0, %v1954
        %v1956 = vpop.f32.mrb[0].mxu0
        %1957 = vmatprep.mubr.f32.mxu0 %v1792
        %1958 = vmatmul.mubr.f32.gmra.mrb[0].mxu0 %v1699
        %v1959 = vpop.f32.mrb[0].mxu0
        %v1960 = vadd.f32 0.0, %v1959
        %v1961 = vpop.f32.mrb[0].mxu0
        %1962 = vmatprep.mubr.f32.mxu0 %v1795
        %1963 = vmatmul.mubr.f32.gmra.mrb[0].mxu0 %v1701
        %v1964 = vpop.f32.mrb[0].mxu0
        %v1965 = vadd.f32 0.0, %v1964
        %v1966 = vpop.f32.mrb[0].mxu0
        %1967 = vmatprep.mubr.f32.mxu0 %v1798
        %1968 = vmatmul.mubr.f32.gmra.mrb[0].mxu0 %v1703
        %v1969 = vpop.f32.mrb[0].mxu0
        %v1970 = vadd.f32 0.0, %v1969
        %v1971 = vpop.f32.mrb[0].mxu0
        %1972 = vmatprep.mubr.f32.mxu0 %v1801
        %1973 = vmatmul.mubr.f32.gmra.mrb[0].mxu0 %v1705
        %v1974 = vpop.f32.mrb[0].mxu0
        %v1975 = vadd.f32 0.0, %v1974
        %v1976 = vpop.f32.mrb[0].mxu0
        %1977 = vmatprep.mubr.f32.mxu0 %v1804
        %1978 = vmatmul.mubr.f32.gmra.mrb[0].mxu0 %v1707
        %v1979 = vpop.f32.mrb[0].mxu0
        %v1980 = vadd.f32 0.0, %v1979
        %v1981 = vpop.f32.mrb[0].mxu0
        %1982 = vmatprep.mubr.f32.mxu0 %v1807
        %1983 = vmatmul.mubr.f32.gmra.mrb[0].mxu0 %v1709
        %v1984 = vpop.f32.mrb[0].mxu0
        %v1985 = vadd.f32 0.0, %v1984
        %v1986 = vpop.f32.mrb[0].mxu0
        %1987 = vmatprep.mubr.f32.mxu0 %v1810
        %1988 = vmatmul.mubr.f32.gmra.mrb[0].mxu0 %v1711
        %v1989 = vpop.f32.mrb[0].mxu0
        %v1990 = vadd.f32 0.0, %v1989
        %v1991 = vpop.f32.mrb[0].mxu0
        %1992 = vmatprep.mubr.f32.mxu0 %v1813
        %1993 = vmatmul.mubr.f32.gmra.mrb[0].mxu0 %v1713
        %v1994 = vpop.f32.mrb[0].mxu0
        %v1995 = vadd.f32 0.0, %v1994
        %v1996 = vpop.f32.mrb[0].mxu0
        %1997 = vmatprep.mubr.f32.mxu0 %v1816
        %1998 = vmatmul.mubr.f32.gmra.mrb[0].mxu0 %v1715
        %v1999 = vpop.f32.mrb[0].mxu0
        %v2000 = vadd.f32 0.0, %v1999
        %v2001 = vpop.f32.mrb[0].mxu0
        %2002 = vmatprep.mubr.f32.mxu0 %v1819
        %2003 = vmatmul.mubr.f32.gmra.mrb[0].mxu0 %v1717
        %v2004 = vpop.f32.mrb[0].mxu0
        %v2005 = vadd.f32 0.0, %v2004
        %v2006 = vpop.f32.mrb[0].mxu0
        %2007 = vmatprep.mubr.f32.mxu0 %v1822
        %2008 = vmatmul.mubr.f32.gmra.mrb[0].mxu0 %v1719
        %v2009 = vpop.f32.mrb[0].mxu0
        %v2010 = vadd.f32 0.0, %v2009
        %v2011 = vpop.f32.mrb[0].mxu0
        %2012 = vmatprep.mubr.f32.mxu0 %v1825
        %2013 = vmatmul.mubr.f32.gmra.mrb[0].mxu0 %v1721
        %v2014 = vpop.f32.mrb[0].mxu0
        %v2015 = vadd.f32 0.0, %v2014
        %v2016 = vpop.f32.mrb[0].mxu0
        %2017 = vmatprep.mubr.f32.mxu0 %v1828
        %2018 = vmatmul.mubr.f32.gmra.mrb[0].mxu0 %v1723
        %v2019 = vpop.f32.mrb[0].mxu0
        %v2020 = vadd.f32 0.0, %v2019
        %v2021 = vpop.f32.mrb[0].mxu0
        %2022 = vmatprep.mubr.f32.mxu0 %v1831
        %2023 = vmatmul.mubr.f32.gmra.mrb[0].mxu0 %v1725
        %v2024 = vpop.f32.mrb[0].mxu0
        %v2025 = vadd.f32 0.0, %v2024
        %v2026 = vpop.f32.mrb[0].mxu0
        %2027 = vmatprep.mubr.f32.mxu0 %v1834
        %2028 = vmatmul.mubr.f32.gmra.mrb[0].mxu0 %v1727
        %v2029 = vpop.f32.mrb[0].mxu0
        %v2030 = vadd.f32 0.0, %v2029
        %v2031 = vpop.f32.mrb[0].mxu0
        %2032 = vmatprep.mubr.f32.mxu0 %v1837
        %2033 = vmatmul.mubr.f32.gmra.mrb[0].mxu0 %v1729
        %v2034 = vpop.f32.mrb[0].mxu0
        %v2035 = vadd.f32 0.0, %v2034
        %v2036 = vpop.f32.mrb[0].mxu0
        %2037 = vmatprep.mubr.f32.mxu0 %v1840
        %2038 = vmatmul.mubr.f32.gmra.mrb[0].mxu0 %v1731
        %v2039 = vpop.f32.mrb[0].mxu0
        %v2040 = vadd.f32 0.0, %v2039
        %v2041 = vpop.f32.mrb[0].mxu0
        %2042 = vmatprep.mubr.f32.mxu0 %v1843
        %2043 = vmatmul.mubr.f32.gmra.mrb[0].mxu0 %v1733
        %v2044 = vpop.f32.mrb[0].mxu0
        %v2045 = vadd.f32 0.0, %v2044
        %v2046 = vpop.f32.mrb[0].mxu0
        %2047 = vmatprep.mubr.f32.mxu0 %v1846
        %2048 = vmatmul.mubr.f32.gmra.mrb[0].mxu0 %v1735
        %v2049 = vpop.f32.mrb[0].mxu0
        %v2050 = vadd.f32 0.0, %v2049
        %v2051 = vpop.f32.mrb[0].mxu0
        %2052 = vmatprep.mubr.f32.mxu0 %v1849
        %2053 = vmatmul.mubr.f32.gmra.mrb[0].mxu0 %v1737
        %v2054 = vpop.f32.mrb[0].mxu0
        %v2055 = vadd.f32 0.0, %v2054
        %v2056 = vpop.f32.mrb[0].mxu0
        %2057 = vmatprep.mubr.f32.mxu0 %v1852
        %2058 = vmatmul.mubr.f32.gmra.mrb[0].mxu0 %v1739
        %v2059 = vpop.f32.mrb[0].mxu0
        %v2060 = vadd.f32 0.0, %v2059
        %v2061 = vpop.f32.mrb[0].mxu0
        %2062 = vmatprep.mubr.f32.mxu0 %v1855
        %2063 = vmatmul.mubr.f32.gmra.mrb[0].mxu0 %v1741
        %v2064 = vpop.f32.mrb[0].mxu0
        %v2065 = vadd.f32 0.0, %v2064
        %v2066 = vpop.f32.mrb[0].mxu0
        %2067 = vmatprep.mubr.f32.mxu0 %v1858
        %2068 = vmatmul.mubr.f32.gmra.mrb[0].mxu0 %v1743
        %v2069 = vpop.f32.mrb[0].mxu0
        %v2070 = vadd.f32 0.0, %v2069
        %v2071 = vpop.f32.mrb[0].mxu0
        %2072 = vmatprep.mubr.f32.mxu0 %v1861
        %2073 = vmatmul.mubr.f32.gmra.mrb[0].mxu0 %v1745
        %v2074 = vpop.f32.mrb[0].mxu0
        %v2075 = vadd.f32 0.0, %v2074
        %v2076 = vpop.f32.mrb[0].mxu0
        %2077 = vmatprep.mubr.f32.mxu0 %v1864
        %2078 = vmatmul.mubr.f32.gmra.mrb[0].mxu0 %v1747
        %v2079 = vpop.f32.mrb[0].mxu0
        %v2080 = vadd.f32 0.0, %v2079
        %v2081 = vpop.f32.mrb[0].mxu0
        %2082 = vmatprep.mubr.f32.mxu0 %v1867
        %2083 = vmatmul.mubr.f32.gmra.mrb[0].mxu0 %v1749
        %v2084 = vpop.f32.mrb[0].mxu0
        %v2085 = vadd.f32 0.0, %v2084
        %v2086 = vpop.f32.mrb[0].mxu0
        %2087 = vmatprep.mubr.f32.mxu0 %v1870
        %2088 = vmatmul.mubr.f32.gmra.mrb[0].mxu0 %v1751
        %v2089 = vpop.f32.mrb[0].mxu0
        %v2090 = vadd.f32 0.0, %v2089
        %v2091 = vpop.f32.mrb[0].mxu0
        %2092 = vmatprep.mubr.f32.mxu0 %v1873
        %2093 = vmatmul.mubr.f32.gmra.mrb[0].mxu0 %v1753
        %v2094 = vpop.f32.mrb[0].mxu0
        %v2095 = vadd.f32 0.0, %v2094
        %v2096 = vpop.f32.mrb[0].mxu0
        %2097 = vmatprep.mubr.f32.mxu0 %v1876
        %2098 = vmatmul.mubr.f32.gmra.mrb[0].mxu0 %v1755
        %v2099 = vpop.f32.mrb[0].mxu0
        %v2100 = vadd.f32 0.0, %v2099
        %v2101 = vpop.f32.mrb[0].mxu0
        %2102 = vdwg.mxu0
        %v2103 = vadd.f32 %v1534, %v1945
        %v2104 = vadd.f32 %v1539, %v1950
        %v2105 = vadd.f32 %v1544, %v1955
        %v2106 = vadd.f32 %v1549, %v1960
        %v2107 = vadd.f32 %v1554, %v1965
        %v2108 = vadd.f32 %v1559, %v1970
        %v2109 = vadd.f32 %v1564, %v1975
        %v2110 = vadd.f32 %v1569, %v1980
        %v2111 = vadd.f32 %v1574, %v1985
        %v2112 = vadd.f32 %v1579, %v1990
        %v2113 = vadd.f32 %v1584, %v1995
        %v2114 = vadd.f32 %v1589, %v2000
        %v2115 = vadd.f32 %v1594, %v2005
        %v2116 = vadd.f32 %v1599, %v2010
        %v2117 = vadd.f32 %v1604, %v2015
        %v2118 = vadd.f32 %v1609, %v2020
        %v2119 = vadd.f32 %v1614, %v2025
        %v2120 = vadd.f32 %v1619, %v2030
        %v2121 = vadd.f32 %v1624, %v2035
        %v2122 = vadd.f32 %v1629, %v2040
        %v2123 = vadd.f32 %v1634, %v2045
        %v2124 = vadd.f32 %v1639, %v2050
        %v2125 = vadd.f32 %v1644, %v2055
        %v2126 = vadd.f32 %v1649, %v2060
        %v2127 = vadd.f32 %v1654, %v2065
        %v2128 = vadd.f32 %v1659, %v2070
        %v2129 = vadd.f32 %v1664, %v2075
        %v2130 = vadd.f32 %v1669, %v2080
        %v2131 = vadd.f32 %v1674, %v2085
        %v2132 = vadd.f32 %v1679, %v2090
        %v2133 = vadd.f32 %v1684, %v2095
        %v2134 = vadd.f32 %v1689, %v2100
        %v2135 = vld [vmem:[%s3] sm:$0x1]
        %v2137 = vlaneseq
        %v2138 = vshrl.u32 %v2137, 7
        %v2139 = vsub.s32 0, %v2138
        %v2140 = vrot.slane %v2135, %v2139
        %v2142 = vadd.f32 %v2103, %v2140
        %v2143 = vadd.f32 %v2104, %v2140
        %v2144 = vadd.f32 %v2105, %v2140
        %v2145 = vadd.f32 %v2106, %v2140
        %v2146 = vadd.f32 %v2107, %v2140
        %v2147 = vadd.f32 %v2108, %v2140
        %v2148 = vadd.f32 %v2109, %v2140
        %v2149 = vadd.f32 %v2110, %v2140
        %v2150 = vadd.f32 %v2111, %v2140
        %v2151 = vadd.f32 %v2112, %v2140
        %v2152 = vadd.f32 %v2113, %v2140
        %v2153 = vadd.f32 %v2114, %v2140
        %v2154 = vadd.f32 %v2115, %v2140
        %v2155 = vadd.f32 %v2116, %v2140
        %v2156 = vadd.f32 %v2117, %v2140
        %v2157 = vadd.f32 %v2118, %v2140
        %v2158 = vadd.f32 %v2119, %v2140
        %v2159 = vadd.f32 %v2120, %v2140
        %v2160 = vadd.f32 %v2121, %v2140
        %v2161 = vadd.f32 %v2122, %v2140
        %v2162 = vadd.f32 %v2123, %v2140
        %v2163 = vadd.f32 %v2124, %v2140
        %v2164 = vadd.f32 %v2125, %v2140
        %v2165 = vadd.f32 %v2126, %v2140
        %v2166 = vadd.f32 %v2127, %v2140
        %v2167 = vadd.f32 %v2128, %v2140
        %v2168 = vadd.f32 %v2129, %v2140
        %v2169 = vadd.f32 %v2130, %v2140
        %v2170 = vadd.f32 %v2131, %v2140
        %v2171 = vadd.f32 %v2132, %v2140
        %v2172 = vadd.f32 %v2133, %v2140
        %v2173 = vadd.f32 %v2134, %v2140
        %v2174 = vstv %s416
        %v2175 = vmul.f32 %v2142, %v2174
        %v2176 = vmul.f32 %v2143, %v2174
        %v2177 = vmul.f32 %v2144, %v2174
        %v2178 = vmul.f32 %v2145, %v2174
        %v2179 = vmul.f32 %v2146, %v2174
        %v2180 = vmul.f32 %v2147, %v2174
        %v2181 = vmul.f32 %v2148, %v2174
        %v2182 = vmul.f32 %v2149, %v2174
        %v2183 = vmul.f32 %v2150, %v2174
        %v2184 = vmul.f32 %v2151, %v2174
        %v2185 = vmul.f32 %v2152, %v2174
        %v2186 = vmul.f32 %v2153, %v2174
        %v2187 = vmul.f32 %v2154, %v2174
        %v2188 = vmul.f32 %v2155, %v2174
        %v2189 = vmul.f32 %v2156, %v2174
        %v2190 = vmul.f32 %v2157, %v2174
        %v2191 = vmul.f32 %v2158, %v2174
        %v2192 = vmul.f32 %v2159, %v2174
        %v2193 = vmul.f32 %v2160, %v2174
        %v2194 = vmul.f32 %v2161, %v2174
        %v2195 = vmul.f32 %v2162, %v2174
        %v2196 = vmul.f32 %v2163, %v2174
        %v2197 = vmul.f32 %v2164, %v2174
        %v2198 = vmul.f32 %v2165, %v2174
        %v2199 = vmul.f32 %v2166, %v2174
        %v2200 = vmul.f32 %v2167, %v2174
        %v2201 = vmul.f32 %v2168, %v2174
        %v2202 = vmul.f32 %v2169, %v2174
        %v2203 = vmul.f32 %v2170, %v2174
        %v2204 = vmul.f32 %v2171, %v2174
        %v2205 = vmul.f32 %v2172, %v2174
        %v2206 = vmul.f32 %v2173, %v2174
        %v2207 = vmax.f32 %v2175, 0.0
        %v2208 = vmax.f32 %v2176, 0.0
        %v2209 = vmax.f32 %v2177, 0.0
        %v2210 = vmax.f32 %v2178, 0.0
        %v2211 = vmax.f32 %v2179, 0.0
        %v2212 = vmax.f32 %v2180, 0.0
        %v2213 = vmax.f32 %v2181, 0.0
        %v2214 = vmax.f32 %v2182, 0.0
        %v2215 = vmax.f32 %v2183, 0.0
        %v2216 = vmax.f32 %v2184, 0.0
        %v2217 = vmax.f32 %v2185, 0.0
        %v2218 = vmax.f32 %v2186, 0.0
        %v2219 = vmax.f32 %v2187, 0.0
        %v2220 = vmax.f32 %v2188, 0.0
        %v2221 = vmax.f32 %v2189, 0.0
        %v2222 = vmax.f32 %v2190, 0.0
        %v2223 = vmax.f32 %v2191, 0.0
        %v2224 = vmax.f32 %v2192, 0.0
        %v2225 = vmax.f32 %v2193, 0.0
        %v2226 = vmax.f32 %v2194, 0.0
        %v2227 = vmax.f32 %v2195, 0.0
        %v2228 = vmax.f32 %v2196, 0.0
        %v2229 = vmax.f32 %v2197, 0.0
        %v2230 = vmax.f32 %v2198, 0.0
        %v2231 = vmax.f32 %v2199, 0.0
        %v2232 = vmax.f32 %v2200, 0.0
        %v2233 = vmax.f32 %v2201, 0.0
        %v2234 = vmax.f32 %v2202, 0.0
        %v2235 = vmax.f32 %v2203, 0.0
        %v2236 = vmax.f32 %v2204, 0.0
        %v2237 = vmax.f32 %v2205, 0.0
        %v2238 = vmax.f32 %v2206, 0.0
        %2271 = vrot.lane.b32.xlu0 %v2207, 64
        %v2272 = vpop.permute.xlu0 %2271
        %2273 = vrot.lane.b32.xlu0 %v2208, 64
        %v2274 = vpop.permute.xlu0 %2273
        %2275 = vrot.lane.b32.xlu0 %v2209, 64
        %v2276 = vpop.permute.xlu0 %2275
        %2277 = vrot.lane.b32.xlu0 %v2210, 64
        %v2278 = vpop.permute.xlu0 %2277
        %2279 = vrot.lane.b32.xlu0 %v2211, 64
        %v2280 = vpop.permute.xlu0 %2279
        %2281 = vrot.lane.b32.xlu0 %v2212, 64
        %v2282 = vpop.permute.xlu0 %2281
        %2283 = vrot.lane.b32.xlu0 %v2213, 64
        %v2284 = vpop.permute.xlu0 %2283
        %2285 = vrot.lane.b32.xlu0 %v2214, 64
        %v2286 = vpop.permute.xlu0 %2285
        %2287 = vrot.lane.b32.xlu0 %v2215, 64
        %v2288 = vpop.permute.xlu0 %2287
        %2289 = vrot.lane.b32.xlu0 %v2216, 64
        %v2290 = vpop.permute.xlu0 %2289
        %2291 = vrot.lane.b32.xlu0 %v2217, 64
        %v2292 = vpop.permute.xlu0 %2291
        %2293 = vrot.lane.b32.xlu0 %v2218, 64
        %v2294 = vpop.permute.xlu0 %2293
        %2295 = vrot.lane.b32.xlu0 %v2219, 64
        %v2296 = vpop.permute.xlu0 %2295
        %2297 = vrot.lane.b32.xlu0 %v2220, 64
        %v2298 = vpop.permute.xlu0 %2297
        %2299 = vrot.lane.b32.xlu0 %v2221, 64
        %v2300 = vpop.permute.xlu0 %2299
        %2301 = vrot.lane.b32.xlu0 %v2222, 64
        %v2302 = vpop.permute.xlu0 %2301
        %2303 = vrot.lane.b32.xlu0 %v2223, 64
        %v2304 = vpop.permute.xlu0 %2303
        %2305 = vrot.lane.b32.xlu0 %v2224, 64
        %v2306 = vpop.permute.xlu0 %2305
        %2307 = vrot.lane.b32.xlu0 %v2225, 64
        %v2308 = vpop.permute.xlu0 %2307
        %2309 = vrot.lane.b32.xlu0 %v2226, 64
        %v2310 = vpop.permute.xlu0 %2309
        %2311 = vrot.lane.b32.xlu0 %v2227, 64
        %v2312 = vpop.permute.xlu0 %2311
        %2313 = vrot.lane.b32.xlu0 %v2228, 64
        %v2314 = vpop.permute.xlu0 %2313
        %2315 = vrot.lane.b32.xlu0 %v2229, 64
        %v2316 = vpop.permute.xlu0 %2315
        %2317 = vrot.lane.b32.xlu0 %v2230, 64
        %v2318 = vpop.permute.xlu0 %2317
        %2319 = vrot.lane.b32.xlu0 %v2231, 64
        %v2320 = vpop.permute.xlu0 %2319
        %2321 = vrot.lane.b32.xlu0 %v2232, 64
        %v2322 = vpop.permute.xlu0 %2321
        %2323 = vrot.lane.b32.xlu0 %v2233, 64
        %v2324 = vpop.permute.xlu0 %2323
        %2325 = vrot.lane.b32.xlu0 %v2234, 64
        %v2326 = vpop.permute.xlu0 %2325
        %2327 = vrot.lane.b32.xlu0 %v2235, 64
        %v2328 = vpop.permute.xlu0 %2327
        %2329 = vrot.lane.b32.xlu0 %v2236, 64
        %v2330 = vpop.permute.xlu0 %2329
        %2331 = vrot.lane.b32.xlu0 %v2237, 64
        %v2332 = vpop.permute.xlu0 %2331
        %2333 = vrot.lane.b32.xlu0 %v2238, 64
        %v2334 = vpop.permute.xlu0 %2333
        %2367 = vst.msk [vmem:[%s382] sm:$0xff] %vm612, %v2272
        %2368 = vst.msk [vmem:[%s382 + $0x10] sm:$0xff] %vm612, %v2274
        %2369 = vst.msk [vmem:[%s382 + $0x20] sm:$0xff] %vm612, %v2276
        %2370 = vst.msk [vmem:[%s382 + $0x30] sm:$0xff] %vm612, %v2278
        %2371 = vst.msk [vmem:[%s382 + $0x40] sm:$0xff] %vm612, %v2280
        %2372 = vst.msk [vmem:[%s382 + $0x50] sm:$0xff] %vm612, %v2282
        %2373 = vst.msk [vmem:[%s382 + $0x60] sm:$0xff] %vm612, %v2284
        %2374 = vst.msk [vmem:[%s382 + $0x70] sm:$0xff] %vm612, %v2286
        %2375 = vst.msk [vmem:[%s382 + $0x80] sm:$0xff] %vm612, %v2288
        %2376 = vst.msk [vmem:[%s382 + $0x90] sm:$0xff] %vm612, %v2290
        %2377 = vst.msk [vmem:[%s382 + $0xa0] sm:$0xff] %vm612, %v2292
        %2378 = vst.msk [vmem:[%s382 + $0xb0] sm:$0xff] %vm612, %v2294
        %2379 = vst.msk [vmem:[%s382 + $0xc0] sm:$0xff] %vm612, %v2296
        %2380 = vst.msk [vmem:[%s382 + $0xd0] sm:$0xff] %vm612, %v2298
        %2381 = vst.msk [vmem:[%s382 + $0xe0] sm:$0xff] %vm612, %v2300
        %2382 = vst.msk [vmem:[%s382 + $0xf0] sm:$0xff] %vm612, %v2302
        %2383 = vst.msk [vmem:[%s382 + $0x100] sm:$0xff] %vm612, %v2304
        %2384 = vst.msk [vmem:[%s382 + $0x110] sm:$0xff] %vm612, %v2306
        %2385 = vst.msk [vmem:[%s382 + $0x120] sm:$0xff] %vm612, %v2308
        %2386 = vst.msk [vmem:[%s382 + $0x130] sm:$0xff] %vm612, %v2310
        %2387 = vst.msk [vmem:[%s382 + $0x140] sm:$0xff] %vm612, %v2312
        %2388 = vst.msk [vmem:[%s382 + $0x150] sm:$0xff] %vm612, %v2314
        %2389 = vst.msk [vmem:[%s382 + $0x160] sm:$0xff] %vm612, %v2316
        %2390 = vst.msk [vmem:[%s382 + $0x170] sm:$0xff] %vm612, %v2318
        %2391 = vst.msk [vmem:[%s382 + $0x180] sm:$0xff] %vm612, %v2320
        %2392 = vst.msk [vmem:[%s382 + $0x190] sm:$0xff] %vm612, %v2322
        %2393 = vst.msk [vmem:[%s382 + $0x1a0] sm:$0xff] %vm612, %v2324
        %2394 = vst.msk [vmem:[%s382 + $0x1b0] sm:$0xff] %vm612, %v2326
        %2395 = vst.msk [vmem:[%s382 + $0x1c0] sm:$0xff] %vm612, %v2328
        %2396 = vst.msk [vmem:[%s382 + $0x1d0] sm:$0xff] %vm612, %v2330
        %2397 = vst.msk [vmem:[%s382 + $0x1e0] sm:$0xff] %vm612, %v2332
        %2398 = vst.msk [vmem:[%s382 + $0x1f0] sm:$0xff] %vm612, %v2334
        %v2399 = vrot.slane %v2207, 7
        %v2400 = vrot.slane %v2208, 7
        %v2401 = vsel %vm645, %v2399, %v2400
        %v2402 = vrot.slane %v2209, 7
        %v2403 = vrot.slane %v2210, 7
        %v2404 = vsel %vm645, %v2402, %v2403
        %v2405 = vrot.slane %v2211, 7
        %v2406 = vrot.slane %v2212, 7
        %v2407 = vsel %vm645, %v2405, %v2406
        %v2408 = vrot.slane %v2213, 7
        %v2409 = vrot.slane %v2214, 7
        %v2410 = vsel %vm645, %v2408, %v2409
        %v2411 = vrot.slane %v2215, 7
        %v2412 = vrot.slane %v2216, 7
        %v2413 = vsel %vm645, %v2411, %v2412
        %v2414 = vrot.slane %v2217, 7
        %v2415 = vrot.slane %v2218, 7
        %v2416 = vsel %vm645, %v2414, %v2415
        %v2417 = vrot.slane %v2219, 7
        %v2418 = vrot.slane %v2220, 7
        %v2419 = vsel %vm645, %v2417, %v2418
        %v2420 = vrot.slane %v2221, 7
        %v2421 = vrot.slane %v2222, 7
        %v2422 = vsel %vm645, %v2420, %v2421
        %v2423 = vrot.slane %v2223, 7
        %v2424 = vrot.slane %v2224, 7
        %v2425 = vsel %vm645, %v2423, %v2424
        %v2426 = vrot.slane %v2225, 7
        %v2427 = vrot.slane %v2226, 7
        %v2428 = vsel %vm645, %v2426, %v2427
        %v2429 = vrot.slane %v2227, 7
        %v2430 = vrot.slane %v2228, 7
        %v2431 = vsel %vm645, %v2429, %v2430
        %v2432 = vrot.slane %v2229, 7
        %v2433 = vrot.slane %v2230, 7
        %v2434 = vsel %vm645, %v2432, %v2433
        %v2435 = vrot.slane %v2231, 7
        %v2436 = vrot.slane %v2232, 7
        %v2437 = vsel %vm645, %v2435, %v2436
        %v2438 = vrot.slane %v2233, 7
        %v2439 = vrot.slane %v2234, 7
        %v2440 = vsel %vm645, %v2438, %v2439
        %v2441 = vrot.slane %v2235, 7
        %v2442 = vrot.slane %v2236, 7
        %v2443 = vsel %vm645, %v2441, %v2442
        %v2444 = vrot.slane %v2237, 7
        %v2445 = vrot.slane %v2238, 7
        %v2446 = vsel %vm645, %v2444, %v2445
        %2479 = vst.msk [vmem:[%s382] sm:$0xfe] %vm726, %v2399
        %2480 = vst.msk [vmem:[%s382 + $0x10] sm:$0xff] %vm373, %v2401
        %2481 = vst.msk [vmem:[%s382 + $0x20] sm:$0xfe] %vm726, %v2402
        %2482 = vst.msk [vmem:[%s382 + $0x30] sm:$0xff] %vm373, %v2404
        %2483 = vst.msk [vmem:[%s382 + $0x40] sm:$0xfe] %vm726, %v2405
        %2484 = vst.msk [vmem:[%s382 + $0x50] sm:$0xff] %vm373, %v2407
        %2485 = vst.msk [vmem:[%s382 + $0x60] sm:$0xfe] %vm726, %v2408
        %2486 = vst.msk [vmem:[%s382 + $0x70] sm:$0xff] %vm373, %v2410
        %2487 = vst.msk [vmem:[%s382 + $0x80] sm:$0xfe] %vm726, %v2411
        %2488 = vst.msk [vmem:[%s382 + $0x90] sm:$0xff] %vm373, %v2413
        %2489 = vst.msk [vmem:[%s382 + $0xa0] sm:$0xfe] %vm726, %v2414
        %2490 = vst.msk [vmem:[%s382 + $0xb0] sm:$0xff] %vm373, %v2416
        %2491 = vst.msk [vmem:[%s382 + $0xc0] sm:$0xfe] %vm726, %v2417
        %2492 = vst.msk [vmem:[%s382 + $0xd0] sm:$0xff] %vm373, %v2419
        %2493 = vst.msk [vmem:[%s382 + $0xe0] sm:$0xfe] %vm726, %v2420
        %2494 = vst.msk [vmem:[%s382 + $0xf0] sm:$0xff] %vm373, %v2422
        %2495 = vst.msk [vmem:[%s382 + $0x100] sm:$0xfe] %vm726, %v2423
        %2496 = vst.msk [vmem:[%s382 + $0x110] sm:$0xff] %vm373, %v2425
        %2497 = vst.msk [vmem:[%s382 + $0x120] sm:$0xfe] %vm726, %v2426
        %2498 = vst.msk [vmem:[%s382 + $0x130] sm:$0xff] %vm373, %v2428
        %2499 = vst.msk [vmem:[%s382 + $0x140] sm:$0xfe] %vm726, %v2429
        %2500 = vst.msk [vmem:[%s382 + $0x150] sm:$0xff] %vm373, %v2431
        %2501 = vst.msk [vmem:[%s382 + $0x160] sm:$0xfe] %vm726, %v2432
        %2502 = vst.msk [vmem:[%s382 + $0x170] sm:$0xff] %vm373, %v2434
        %2503 = vst.msk [vmem:[%s382 + $0x180] sm:$0xfe] %vm726, %v2435
        %2504 = vst.msk [vmem:[%s382 + $0x190] sm:$0xff] %vm373, %v2437
        %2505 = vst.msk [vmem:[%s382 + $0x1a0] sm:$0xfe] %vm726, %v2438
        %2506 = vst.msk [vmem:[%s382 + $0x1b0] sm:$0xff] %vm373, %v2440
        %2507 = vst.msk [vmem:[%s382 + $0x1c0] sm:$0xfe] %vm726, %v2441
        %2508 = vst.msk [vmem:[%s382 + $0x1d0] sm:$0xff] %vm373, %v2443
        %2509 = vst.msk [vmem:[%s382 + $0x1e0] sm:$0xfe] %vm726, %v2444
        %2510 = vst.msk [vmem:[%s382 + $0x1f0] sm:$0xff] %vm373, %v2446
        %v2511 = vrot.slane %v2207, 1
        %v2512 = vrot.slane %v2208, 1
        %v2513 = vsel %vm759, %v2511, %v2512
        %v2514 = vrot.slane %v2209, 1
        %v2515 = vrot.slane %v2210, 1
        %v2516 = vsel %vm759, %v2514, %v2515
        %v2517 = vrot.slane %v2211, 1
        %v2518 = vrot.slane %v2212, 1
        %v2519 = vsel %vm759, %v2517, %v2518
        %v2520 = vrot.slane %v2213, 1
        %v2521 = vrot.slane %v2214, 1
        %v2522 = vsel %vm759, %v2520, %v2521
        %v2523 = vrot.slane %v2215, 1
        %v2524 = vrot.slane %v2216, 1
        %v2525 = vsel %vm759, %v2523, %v2524
        %v2526 = vrot.slane %v2217, 1
        %v2527 = vrot.slane %v2218, 1
        %v2528 = vsel %vm759, %v2526, %v2527
        %v2529 = vrot.slane %v2219, 1
        %v2530 = vrot.slane %v2220, 1
        %v2531 = vsel %vm759, %v2529, %v2530
        %v2532 = vrot.slane %v2221, 1
        %v2533 = vrot.slane %v2222, 1
        %v2534 = vsel %vm759, %v2532, %v2533
        %v2535 = vrot.slane %v2223, 1
        %v2536 = vrot.slane %v2224, 1
        %v2537 = vsel %vm759, %v2535, %v2536
        %v2538 = vrot.slane %v2225, 1
        %v2539 = vrot.slane %v2226, 1
        %v2540 = vsel %vm759, %v2538, %v2539
        %v2541 = vrot.slane %v2227, 1
        %v2542 = vrot.slane %v2228, 1
        %v2543 = vsel %vm759, %v2541, %v2542
        %v2544 = vrot.slane %v2229, 1
        %v2545 = vrot.slane %v2230, 1
        %v2546 = vsel %vm759, %v2544, %v2545
        %v2547 = vrot.slane %v2231, 1
        %v2548 = vrot.slane %v2232, 1
        %v2549 = vsel %vm759, %v2547, %v2548
        %v2550 = vrot.slane %v2233, 1
        %v2551 = vrot.slane %v2234, 1
        %v2552 = vsel %vm759, %v2550, %v2551
        %v2553 = vrot.slane %v2235, 1
        %v2554 = vrot.slane %v2236, 1
        %v2555 = vsel %vm759, %v2553, %v2554
        %v2556 = vrot.slane %v2237, 1
        %v2557 = vrot.slane %v2238, 1
        %v2558 = vsel %vm759, %v2556, %v2557
        %2591 = vst.msk [vmem:[%s382 + $0x8] sm:$0xff] %vm373, %v2513
        %2592 = vst.msk [vmem:[%s382 + $0x18] sm:$0x7f] %vm841, %v2512
        %2593 = vst.msk [vmem:[%s382 + $0x28] sm:$0xff] %vm373, %v2516
        %2594 = vst.msk [vmem:[%s382 + $0x38] sm:$0x7f] %vm841, %v2515
        %2595 = vst.msk [vmem:[%s382 + $0x48] sm:$0xff] %vm373, %v2519
        %2596 = vst.msk [vmem:[%s382 + $0x58] sm:$0x7f] %vm841, %v2518
        %2597 = vst.msk [vmem:[%s382 + $0x68] sm:$0xff] %vm373, %v2522
        %2598 = vst.msk [vmem:[%s382 + $0x78] sm:$0x7f] %vm841, %v2521
        %2599 = vst.msk [vmem:[%s382 + $0x88] sm:$0xff] %vm373, %v2525
        %2600 = vst.msk [vmem:[%s382 + $0x98] sm:$0x7f] %vm841, %v2524
        %2601 = vst.msk [vmem:[%s382 + $0xa8] sm:$0xff] %vm373, %v2528
        %2602 = vst.msk [vmem:[%s382 + $0xb8] sm:$0x7f] %vm841, %v2527
        %2603 = vst.msk [vmem:[%s382 + $0xc8] sm:$0xff] %vm373, %v2531
        %2604 = vst.msk [vmem:[%s382 + $0xd8] sm:$0x7f] %vm841, %v2530
        %2605 = vst.msk [vmem:[%s382 + $0xe8] sm:$0xff] %vm373, %v2534
        %2606 = vst.msk [vmem:[%s382 + $0xf8] sm:$0x7f] %vm841, %v2533
        %2607 = vst.msk [vmem:[%s382 + $0x108] sm:$0xff] %vm373, %v2537
        %2608 = vst.msk [vmem:[%s382 + $0x118] sm:$0x7f] %vm841, %v2536
        %2609 = vst.msk [vmem:[%s382 + $0x128] sm:$0xff] %vm373, %v2540
        %2610 = vst.msk [vmem:[%s382 + $0x138] sm:$0x7f] %vm841, %v2539
        %2611 = vst.msk [vmem:[%s382 + $0x148] sm:$0xff] %vm373, %v2543
        %2612 = vst.msk [vmem:[%s382 + $0x158] sm:$0x7f] %vm841, %v2542
        %2613 = vst.msk [vmem:[%s382 + $0x168] sm:$0xff] %vm373, %v2546
        %2614 = vst.msk [vmem:[%s382 + $0x178] sm:$0x7f] %vm841, %v2545
        %2615 = vst.msk [vmem:[%s382 + $0x188] sm:$0xff] %vm373, %v2549
        %2616 = vst.msk [vmem:[%s382 + $0x198] sm:$0x7f] %vm841, %v2548
        %2617 = vst.msk [vmem:[%s382 + $0x1a8] sm:$0xff] %vm373, %v2552
        %2618 = vst.msk [vmem:[%s382 + $0x1b8] sm:$0x7f] %vm841, %v2551
        %2619 = vst.msk [vmem:[%s382 + $0x1c8] sm:$0xff] %vm373, %v2555
        %2620 = vst.msk [vmem:[%s382 + $0x1d8] sm:$0x7f] %vm841, %v2554
        %2621 = vst.msk [vmem:[%s382 + $0x1e8] sm:$0xff] %vm373, %v2558
        %2622 = vst.msk [vmem:[%s382 + $0x1f8] sm:$0x7f] %vm841, %v2557
        %v2623 = vld [vmem:[#allocation2] sm:$0xff]
        %v2624 = vld [vmem:[#allocation2 + $0x8] sm:$0xff]
        %v2625 = vld [vmem:[#allocation2 + $0x10] sm:$0xff]
        %v2626 = vld [vmem:[#allocation2 + $0x18] sm:$0xff]
        %v2627 = vld [vmem:[#allocation2 + $0x20] sm:$0xff]
        %v2628 = vld [vmem:[#allocation2 + $0x28] sm:$0xff]
        %v2629 = vld [vmem:[#allocation2 + $0x30] sm:$0xff]
        %v2630 = vld [vmem:[#allocation2 + $0x38] sm:$0xff]
        %v2631 = vld [vmem:[#allocation2 + $0x40] sm:$0xff]
        %v2632 = vld [vmem:[#allocation2 + $0x48] sm:$0xff]
        %v2633 = vld [vmem:[#allocation2 + $0x50] sm:$0xff]
        %v2634 = vld [vmem:[#allocation2 + $0x58] sm:$0xff]
        %v2635 = vld [vmem:[#allocation2 + $0x60] sm:$0xff]
        %v2636 = vld [vmem:[#allocation2 + $0x68] sm:$0xff]
        %v2637 = vld [vmem:[#allocation2 + $0x70] sm:$0xff]
        %v2638 = vld [vmem:[#allocation2 + $0x78] sm:$0xff]
        %v2639 = vld [vmem:[#allocation2 + $0x80] sm:$0xff]
        %v2640 = vld [vmem:[#allocation2 + $0x88] sm:$0xff]
        %v2641 = vld [vmem:[#allocation2 + $0x90] sm:$0xff]
        %v2642 = vld [vmem:[#allocation2 + $0x98] sm:$0xff]
        %v2643 = vld [vmem:[#allocation2 + $0xa0] sm:$0xff]
        %v2644 = vld [vmem:[#allocation2 + $0xa8] sm:$0xff]
        %v2645 = vld [vmem:[#allocation2 + $0xb0] sm:$0xff]
        %v2646 = vld [vmem:[#allocation2 + $0xb8] sm:$0xff]
        %v2647 = vld [vmem:[#allocation2 + $0xc0] sm:$0xff]
        %v2648 = vld [vmem:[#allocation2 + $0xc8] sm:$0xff]
        %v2649 = vld [vmem:[#allocation2 + $0xd0] sm:$0xff]
        %v2650 = vld [vmem:[#allocation2 + $0xd8] sm:$0xff]
        %v2651 = vld [vmem:[#allocation2 + $0xe0] sm:$0xff]
        %v2652 = vld [vmem:[#allocation2 + $0xe8] sm:$0xff]
        %v2653 = vld [vmem:[#allocation2 + $0xf0] sm:$0xff]
        %v2654 = vld [vmem:[#allocation2 + $0xf8] sm:$0xff]
        %v2655 = vld [vmem:[#allocation2 + $0x100] sm:$0xff]
        %v2656 = vld [vmem:[#allocation2 + $0x108] sm:$0xff]
        %v2657 = vld [vmem:[#allocation2 + $0x110] sm:$0xff]
        %v2658 = vld [vmem:[#allocation2 + $0x118] sm:$0xff]
        %v2659 = vld [vmem:[#allocation2 + $0x120] sm:$0xff]
        %v2660 = vld [vmem:[#allocation2 + $0x128] sm:$0xff]
        %v2661 = vld [vmem:[#allocation2 + $0x130] sm:$0xff]
        %v2662 = vld [vmem:[#allocation2 + $0x138] sm:$0xff]
        %v2663 = vld [vmem:[#allocation2 + $0x140] sm:$0xff]
        %v2664 = vld [vmem:[#allocation2 + $0x148] sm:$0xff]
        %v2665 = vld [vmem:[#allocation2 + $0x150] sm:$0xff]
        %v2666 = vld [vmem:[#allocation2 + $0x158] sm:$0xff]
        %v2667 = vld [vmem:[#allocation2 + $0x160] sm:$0xff]
        %v2668 = vld [vmem:[#allocation2 + $0x168] sm:$0xff]
        %v2669 = vld [vmem:[#allocation2 + $0x170] sm:$0xff]
        %v2670 = vld [vmem:[#allocation2 + $0x178] sm:$0xff]
        %v2671 = vld [vmem:[#allocation2 + $0x180] sm:$0xff]
        %v2672 = vld [vmem:[#allocation2 + $0x188] sm:$0xff]
        %v2673 = vld [vmem:[#allocation2 + $0x190] sm:$0xff]
        %v2674 = vld [vmem:[#allocation2 + $0x198] sm:$0xff]
        %v2675 = vld [vmem:[#allocation2 + $0x1a0] sm:$0xff]
        %v2676 = vld [vmem:[#allocation2 + $0x1a8] sm:$0xff]
        %v2677 = vld [vmem:[#allocation2 + $0x1b0] sm:$0xff]
        %v2678 = vld [vmem:[#allocation2 + $0x1b8] sm:$0xff]
        %v2679 = vld [vmem:[#allocation2 + $0x1c0] sm:$0xff]
        %v2680 = vld [vmem:[#allocation2 + $0x1c8] sm:$0xff]
        %v2681 = vld [vmem:[#allocation2 + $0x1d0] sm:$0xff]
        %v2682 = vld [vmem:[#allocation2 + $0x1d8] sm:$0xff]
        %v2683 = vld [vmem:[#allocation2 + $0x1e0] sm:$0xff]
        %v2684 = vld [vmem:[#allocation2 + $0x1e8] sm:$0xff]
        %v2685 = vld [vmem:[#allocation2 + $0x1f0] sm:$0xff]
        %v2686 = vld [vmem:[#allocation2 + $0x1f8] sm:$0xff]
        %v2687 = vld [vmem:[%s4] sm:$0xff]
        %v2688 = vld [vmem:[%s4 + $0x8] sm:$0xff]
        %v2689 = vld [vmem:[%s4 + $0x10] sm:$0xff]
        %v2690 = vld [vmem:[%s4 + $0x18] sm:$0xff]
        %v2691 = vld [vmem:[%s4 + $0x20] sm:$0xff]
        %v2692 = vld [vmem:[%s4 + $0x28] sm:$0xff]
        %v2693 = vld [vmem:[%s4 + $0x30] sm:$0xff]
        %v2694 = vld [vmem:[%s4 + $0x38] sm:$0xff]
        %v2695 = vld [vmem:[%s4 + $0x40] sm:$0xff]
        %v2696 = vld [vmem:[%s4 + $0x48] sm:$0xff]
        %v2697 = vld [vmem:[%s4 + $0x50] sm:$0xff]
        %v2698 = vld [vmem:[%s4 + $0x58] sm:$0xff]
        %v2699 = vld [vmem:[%s4 + $0x60] sm:$0xff]
        %v2700 = vld [vmem:[%s4 + $0x68] sm:$0xff]
        %v2701 = vld [vmem:[%s4 + $0x70] sm:$0xff]
        %v2702 = vld [vmem:[%s4 + $0x78] sm:$0xff]
        %v2703 = vld [vmem:[%s4 + $0x80] sm:$0xff]
        %v2704 = vld [vmem:[%s4 + $0x88] sm:$0xff]
        %v2705 = vld [vmem:[%s4 + $0x90] sm:$0xff]
        %v2706 = vld [vmem:[%s4 + $0x98] sm:$0xff]
        %v2707 = vld [vmem:[%s4 + $0xa0] sm:$0xff]
        %v2708 = vld [vmem:[%s4 + $0xa8] sm:$0xff]
        %v2709 = vld [vmem:[%s4 + $0xb0] sm:$0xff]
        %v2710 = vld [vmem:[%s4 + $0xb8] sm:$0xff]
        %v2711 = vld [vmem:[%s382] sm:$0xff]
        %v2712 = vld [vmem:[%s382 + $0x8] sm:$0xff]
        %v2713 = vld [vmem:[%s382 + $0x10] sm:$0xff]
        %v2714 = vld [vmem:[%s382 + $0x18] sm:$0xff]
        %v2715 = vld [vmem:[%s382 + $0x20] sm:$0xff]
        %v2716 = vld [vmem:[%s382 + $0x28] sm:$0xff]
        %v2717 = vld [vmem:[%s382 + $0x30] sm:$0xff]
        %v2718 = vld [vmem:[%s382 + $0x38] sm:$0xff]
        %v2719 = vld [vmem:[%s382 + $0x40] sm:$0xff]
        %v2720 = vld [vmem:[%s382 + $0x48] sm:$0xff]
        %v2721 = vld [vmem:[%s382 + $0x50] sm:$0xff]
        %v2722 = vld [vmem:[%s382 + $0x58] sm:$0xff]
        %v2723 = vld [vmem:[%s382 + $0x60] sm:$0xff]
        %v2724 = vld [vmem:[%s382 + $0x68] sm:$0xff]
        %v2725 = vld [vmem:[%s382 + $0x70] sm:$0xff]
        %v2726 = vld [vmem:[%s382 + $0x78] sm:$0xff]
        %v2727 = vld [vmem:[%s382 + $0x80] sm:$0xff]
        %v2728 = vld [vmem:[%s382 + $0x88] sm:$0xff]
        %v2729 = vld [vmem:[%s382 + $0x90] sm:$0xff]
        %v2730 = vld [vmem:[%s382 + $0x98] sm:$0xff]
        %v2731 = vld [vmem:[%s382 + $0xa0] sm:$0xff]
        %v2732 = vld [vmem:[%s382 + $0xa8] sm:$0xff]
        %v2733 = vld [vmem:[%s382 + $0xb0] sm:$0xff]
        %v2734 = vld [vmem:[%s382 + $0xb8] sm:$0xff]
        %v2735 = vld [vmem:[%s382 + $0xc0] sm:$0xff]
        %v2736 = vld [vmem:[%s382 + $0xc8] sm:$0xff]
        %v2737 = vld [vmem:[%s382 + $0xd0] sm:$0xff]
        %v2738 = vld [vmem:[%s382 + $0xd8] sm:$0xff]
        %v2739 = vld [vmem:[%s382 + $0xe0] sm:$0xff]
        %v2740 = vld [vmem:[%s382 + $0xe8] sm:$0xff]
        %v2741 = vld [vmem:[%s382 + $0xf0] sm:$0xff]
        %v2742 = vld [vmem:[%s382 + $0xf8] sm:$0xff]
        %v2743 = vld [vmem:[%s382 + $0x100] sm:$0xff]
        %v2744 = vld [vmem:[%s382 + $0x108] sm:$0xff]
        %v2745 = vld [vmem:[%s382 + $0x110] sm:$0xff]
        %v2746 = vld [vmem:[%s382 + $0x118] sm:$0xff]
        %v2747 = vld [vmem:[%s382 + $0x120] sm:$0xff]
        %v2748 = vld [vmem:[%s382 + $0x128] sm:$0xff]
        %v2749 = vld [vmem:[%s382 + $0x130] sm:$0xff]
        %v2750 = vld [vmem:[%s382 + $0x138] sm:$0xff]
        %v2751 = vld [vmem:[%s382 + $0x140] sm:$0xff]
        %v2752 = vld [vmem:[%s382 + $0x148] sm:$0xff]
        %v2753 = vld [vmem:[%s382 + $0x150] sm:$0xff]
        %v2754 = vld [vmem:[%s382 + $0x158] sm:$0xff]
        %v2755 = vld [vmem:[%s382 + $0x160] sm:$0xff]
        %v2756 = vld [vmem:[%s382 + $0x168] sm:$0xff]
        %v2757 = vld [vmem:[%s382 + $0x170] sm:$0xff]
        %v2758 = vld [vmem:[%s382 + $0x178] sm:$0xff]
        %v2759 = vld [vmem:[%s382 + $0x180] sm:$0xff]
        %v2760 = vld [vmem:[%s382 + $0x188] sm:$0xff]
        %v2761 = vld [vmem:[%s382 + $0x190] sm:$0xff]
        %v2762 = vld [vmem:[%s382 + $0x198] sm:$0xff]
        %v2763 = vld [vmem:[%s382 + $0x1a0] sm:$0xff]
        %v2764 = vld [vmem:[%s382 + $0x1a8] sm:$0xff]
        %v2765 = vld [vmem:[%s382 + $0x1b0] sm:$0xff]
        %v2766 = vld [vmem:[%s382 + $0x1b8] sm:$0xff]
        %v2767 = vld [vmem:[%s382 + $0x1c0] sm:$0xff]
        %v2768 = vld [vmem:[%s382 + $0x1c8] sm:$0xff]
        %v2769 = vld [vmem:[%s382 + $0x1d0] sm:$0xff]
        %v2770 = vld [vmem:[%s382 + $0x1d8] sm:$0xff]
        %v2771 = vld [vmem:[%s382 + $0x1e0] sm:$0xff]
        %v2772 = vld [vmem:[%s382 + $0x1e8] sm:$0xff]
        %v2773 = vld [vmem:[%s382 + $0x1f0] sm:$0xff]
        %v2774 = vld [vmem:[%s382 + $0x1f8] sm:$0xff]
        %s2775 = scalar_lea.vmem %s4, 192
        %v2776 = vld [vmem:[%s2775] sm:$0xff]
        %v2777 = vld [vmem:[%s2775 + $0x8] sm:$0xff]
        %v2778 = vld [vmem:[%s2775 + $0x10] sm:$0xff]
        %v2779 = vld [vmem:[%s2775 + $0x18] sm:$0xff]
        %v2780 = vld [vmem:[%s2775 + $0x20] sm:$0xff]
        %v2781 = vld [vmem:[%s2775 + $0x28] sm:$0xff]
        %v2782 = vld [vmem:[%s2775 + $0x30] sm:$0xff]
        %v2783 = vld [vmem:[%s2775 + $0x38] sm:$0xff]
        %v2784 = vld [vmem:[%s2775 + $0x40] sm:$0xff]
        %v2785 = vld [vmem:[%s2775 + $0x48] sm:$0xff]
        %v2786 = vld [vmem:[%s2775 + $0x50] sm:$0xff]
        %v2787 = vld [vmem:[%s2775 + $0x58] sm:$0xff]
        %v2788 = vld [vmem:[%s2775 + $0x60] sm:$0xff]
        %v2789 = vld [vmem:[%s2775 + $0x68] sm:$0xff]
        %v2790 = vld [vmem:[%s2775 + $0x70] sm:$0xff]
        %v2791 = vld [vmem:[%s2775 + $0x78] sm:$0xff]
        %v2792 = vld [vmem:[%s2775 + $0x80] sm:$0xff]
        %v2793 = vld [vmem:[%s2775 + $0x88] sm:$0xff]
        %v2794 = vld [vmem:[%s2775 + $0x90] sm:$0xff]
        %v2795 = vld [vmem:[%s2775 + $0x98] sm:$0xff]
        %v2796 = vld [vmem:[%s2775 + $0xa0] sm:$0xff]
        %v2797 = vld [vmem:[%s2775 + $0xa8] sm:$0xff]
        %v2798 = vld [vmem:[%s2775 + $0xb0] sm:$0xff]
        %v2799 = vld [vmem:[%s2775 + $0xb8] sm:$0xff]
        %v2801 = vsel %vm373, %v2712, 0
        %v2804 = vsel %vm373, %v2714, 0
        %v2807 = vsel %vm373, %v2716, 0
        %v2810 = vsel %vm373, %v2718, 0
        %v2813 = vsel %vm373, %v2720, 0
        %v2816 = vsel %vm373, %v2722, 0
        %v2819 = vsel %vm373, %v2724, 0
        %v2822 = vsel %vm373, %v2726, 0
        %v2825 = vsel %vm373, %v2728, 0
        %v2828 = vsel %vm373, %v2730, 0
        %v2831 = vsel %vm373, %v2732, 0
        %v2834 = vsel %vm373, %v2734, 0
        %v2837 = vsel %vm373, %v2736, 0
        %v2840 = vsel %vm373, %v2738, 0
        %v2843 = vsel %vm373, %v2740, 0
        %v2846 = vsel %vm373, %v2742, 0
        %v2849 = vsel %vm373, %v2744, 0
        %v2852 = vsel %vm373, %v2746, 0
        %v2855 = vsel %vm373, %v2748, 0
        %v2858 = vsel %vm373, %v2750, 0
        %v2861 = vsel %vm373, %v2752, 0
        %v2864 = vsel %vm373, %v2754, 0
        %v2867 = vsel %vm373, %v2756, 0
        %v2870 = vsel %vm373, %v2758, 0
        %v2873 = vsel %vm373, %v2760, 0
        %v2876 = vsel %vm373, %v2762, 0
        %v2879 = vsel %vm373, %v2764, 0
        %v2882 = vsel %vm373, %v2766, 0
        %v2885 = vsel %vm373, %v2768, 0
        %v2888 = vsel %vm373, %v2770, 0
        %v2891 = vsel %vm373, %v2772, 0
        %v2894 = vsel %vm373, %v2774, 0
        %2896 = vmatprep.subr.mxu0 0.0
        %2897 = vmatpush1.msra.mxu0 %v2776
        %2898 = vmatprep.subr.mxu0 0.0
        %2899 = vmatpush1.msra.mxu0 %v2777
        %2900 = vmatprep.subr.mxu0 0.0
        %2901 = vmatpush1.msra.mxu0 %v2778
        %2902 = vmatprep.subr.mxu0 0.0
        %2903 = vmatpush1.msra.mxu0 %v2779
        %2904 = vmatprep.subr.mxu0 0.0
        %2905 = vmatpush1.msra.mxu0 %v2780
        %2906 = vmatprep.subr.mxu0 0.0
        %2907 = vmatpush1.msra.mxu0 %v2781
        %2908 = vmatprep.subr.mxu0 0.0
        %2909 = vmatpush1.msra.mxu0 %v2782
        %2910 = vmatprep.subr.mxu0 0.0
        %2911 = vmatpush1.msra.mxu0 %v2783
        %2912 = vmatprep.subr.mxu0 0.0
        %2913 = vmatpush1.msra.mxu0 %v2784
        %2914 = vmatprep.subr.mxu0 0.0
        %2915 = vmatpush1.msra.mxu0 %v2785
        %2916 = vmatprep.subr.mxu0 0.0
        %2917 = vmatpush1.msra.mxu0 %v2786
        %2918 = vmatprep.subr.mxu0 0.0
        %2919 = vmatpush1.msra.mxu0 %v2787
        %2920 = vmatprep.subr.mxu0 0.0
        %2921 = vmatpush1.msra.mxu0 %v2788
        %2922 = vmatprep.subr.mxu0 0.0
        %2923 = vmatpush1.msra.mxu0 %v2789
        %2924 = vmatprep.subr.mxu0 0.0
        %2925 = vmatpush1.msra.mxu0 %v2790
        %2926 = vmatprep.subr.mxu0 0.0
        %2927 = vmatpush1.msra.mxu0 %v2791
        %2928 = vmatprep.subr.mxu0 0.0
        %2929 = vmatpush1.msra.mxu0 %v2792
        %2930 = vmatprep.subr.mxu0 0.0
        %2931 = vmatpush1.msra.mxu0 %v2793
        %2932 = vmatprep.subr.mxu0 0.0
        %2933 = vmatpush1.msra.mxu0 %v2794
        %2934 = vmatprep.subr.mxu0 0.0
        %2935 = vmatpush1.msra.mxu0 %v2795
        %2936 = vmatprep.subr.mxu0 0.0
        %2937 = vmatpush1.msra.mxu0 %v2796
        %2938 = vmatprep.subr.mxu0 0.0
        %2939 = vmatpush1.msra.mxu0 %v2797
        %2940 = vmatprep.subr.mxu0 0.0
        %2941 = vmatpush1.msra.mxu0 %v2798
        %2942 = vmatprep.subr.mxu0 0.0
        %2943 = vmatpush1.msra.mxu0 %v2799
        %2944 = vmatprep.subr.mxu0 0.0
        %2945 = vmatpush1.msra.mxu0 0.0
        %2946 = vmatprep.subr.mxu0 0.0
        %2947 = vmatpush1.msra.mxu0 0.0
        %2948 = vmatprep.subr.mxu0 0.0
        %2949 = vmatpush1.msra.mxu0 0.0
        %2950 = vmatprep.subr.mxu0 0.0
        %2951 = vmatpush1.msra.mxu0 0.0
        %2952 = vmatprep.subr.mxu0 0.0
        %2953 = vmatpush1.msra.mxu0 0.0
        %2954 = vmatprep.subr.mxu0 0.0
        %2955 = vmatpush1.msra.mxu0 0.0
        %2956 = vmatprep.subr.mxu0 0.0
        %2957 = vmatpush1.msra.mxu0 0.0
        %2958 = vmatprep.subr.mxu0 0.0
        %2959 = vmatpush1.msra.mxu0 0.0
        %2960 = vmatprep.mubr.f32.mxu0 %v2801
        %2961 = vmatmul.mubr.f32.gmra.mrb[0].mxu0 %v2711
        %v2962 = vpop.f32.mrb[0].mxu0
        %v2963 = vadd.f32 0.0, %v2962
        %v2964 = vpop.f32.mrb[0].mxu0
        %2965 = vmatprep.mubr.f32.mxu0 %v2804
        %2966 = vmatmul.mubr.f32.gmra.mrb[0].mxu0 %v2713
        %v2967 = vpop.f32.mrb[0].mxu0
        %v2968 = vadd.f32 0.0, %v2967
        %v2969 = vpop.f32.mrb[0].mxu0
        %2970 = vmatprep.mubr.f32.mxu0 %v2807
        %2971 = vmatmul.mubr.f32.gmra.mrb[0].mxu0 %v2715
        %v2972 = vpop.f32.mrb[0].mxu0
        %v2973 = vadd.f32 0.0, %v2972
        %v2974 = vpop.f32.mrb[0].mxu0
        %2975 = vmatprep.mubr.f32.mxu0 %v2810
        %2976 = vmatmul.mubr.f32.gmra.mrb[0].mxu0 %v2717
        %v2977 = vpop.f32.mrb[0].mxu0
        %v2978 = vadd.f32 0.0, %v2977
        %v2979 = vpop.f32.mrb[0].mxu0
        %2980 = vmatprep.mubr.f32.mxu0 %v2813
        %2981 = vmatmul.mubr.f32.gmra.mrb[0].mxu0 %v2719
        %v2982 = vpop.f32.mrb[0].mxu0
        %v2983 = vadd.f32 0.0, %v2982
        %v2984 = vpop.f32.mrb[0].mxu0
        %2985 = vmatprep.mubr.f32.mxu0 %v2816
        %2986 = vmatmul.mubr.f32.gmra.mrb[0].mxu0 %v2721
        %v2987 = vpop.f32.mrb[0].mxu0
        %v2988 = vadd.f32 0.0, %v2987
        %v2989 = vpop.f32.mrb[0].mxu0
        %2990 = vmatprep.mubr.f32.mxu0 %v2819
        %2991 = vmatmul.mubr.f32.gmra.mrb[0].mxu0 %v2723
        %v2992 = vpop.f32.mrb[0].mxu0
        %v2993 = vadd.f32 0.0, %v2992
        %v2994 = vpop.f32.mrb[0].mxu0
        %2995 = vmatprep.mubr.f32.mxu0 %v2822
        %2996 = vmatmul.mubr.f32.gmra.mrb[0].mxu0 %v2725
        %v2997 = vpop.f32.mrb[0].mxu0
        %v2998 = vadd.f32 0.0, %v2997
        %v2999 = vpop.f32.mrb[0].mxu0
        %3000 = vmatprep.mubr.f32.mxu0 %v2825
        %3001 = vmatmul.mubr.f32.gmra.mrb[0].mxu0 %v2727
        %v3002 = vpop.f32.mrb[0].mxu0
        %v3003 = vadd.f32 0.0, %v3002
        %v3004 = vpop.f32.mrb[0].mxu0
        %3005 = vmatprep.mubr.f32.mxu0 %v2828
        %3006 = vmatmul.mubr.f32.gmra.mrb[0].mxu0 %v2729
        %v3007 = vpop.f32.mrb[0].mxu0
        %v3008 = vadd.f32 0.0, %v3007
        %v3009 = vpop.f32.mrb[0].mxu0
        %3010 = vmatprep.mubr.f32.mxu0 %v2831
        %3011 = vmatmul.mubr.f32.gmra.mrb[0].mxu0 %v2731
        %v3012 = vpop.f32.mrb[0].mxu0
        %v3013 = vadd.f32 0.0, %v3012
        %v3014 = vpop.f32.mrb[0].mxu0
        %3015 = vmatprep.mubr.f32.mxu0 %v2834
        %3016 = vmatmul.mubr.f32.gmra.mrb[0].mxu0 %v2733
        %v3017 = vpop.f32.mrb[0].mxu0
        %v3018 = vadd.f32 0.0, %v3017
        %v3019 = vpop.f32.mrb[0].mxu0
        %3020 = vmatprep.mubr.f32.mxu0 %v2837
        %3021 = vmatmul.mubr.f32.gmra.mrb[0].mxu0 %v2735
        %v3022 = vpop.f32.mrb[0].mxu0
        %v3023 = vadd.f32 0.0, %v3022
        %v3024 = vpop.f32.mrb[0].mxu0
        %3025 = vmatprep.mubr.f32.mxu0 %v2840
        %3026 = vmatmul.mubr.f32.gmra.mrb[0].mxu0 %v2737
        %v3027 = vpop.f32.mrb[0].mxu0
        %v3028 = vadd.f32 0.0, %v3027
        %v3029 = vpop.f32.mrb[0].mxu0
        %3030 = vmatprep.mubr.f32.mxu0 %v2843
        %3031 = vmatmul.mubr.f32.gmra.mrb[0].mxu0 %v2739
        %v3032 = vpop.f32.mrb[0].mxu0
        %v3033 = vadd.f32 0.0, %v3032
        %v3034 = vpop.f32.mrb[0].mxu0
        %3035 = vmatprep.mubr.f32.mxu0 %v2846
        %3036 = vmatmul.mubr.f32.gmra.mrb[0].mxu0 %v2741
        %v3037 = vpop.f32.mrb[0].mxu0
        %v3038 = vadd.f32 0.0, %v3037
        %v3039 = vpop.f32.mrb[0].mxu0
        %3040 = vmatprep.mubr.f32.mxu0 %v2849
        %3041 = vmatmul.mubr.f32.gmra.mrb[0].mxu0 %v2743
        %v3042 = vpop.f32.mrb[0].mxu0
        %v3043 = vadd.f32 0.0, %v3042
        %v3044 = vpop.f32.mrb[0].mxu0
        %3045 = vmatprep.mubr.f32.mxu0 %v2852
        %3046 = vmatmul.mubr.f32.gmra.mrb[0].mxu0 %v2745
        %v3047 = vpop.f32.mrb[0].mxu0
        %v3048 = vadd.f32 0.0, %v3047
        %v3049 = vpop.f32.mrb[0].mxu0
        %3050 = vmatprep.mubr.f32.mxu0 %v2855
        %3051 = vmatmul.mubr.f32.gmra.mrb[0].mxu0 %v2747
        %v3052 = vpop.f32.mrb[0].mxu0
        %v3053 = vadd.f32 0.0, %v3052
        %v3054 = vpop.f32.mrb[0].mxu0
        %3055 = vmatprep.mubr.f32.mxu0 %v2858
        %3056 = vmatmul.mubr.f32.gmra.mrb[0].mxu0 %v2749
        %v3057 = vpop.f32.mrb[0].mxu0
        %v3058 = vadd.f32 0.0, %v3057
        %v3059 = vpop.f32.mrb[0].mxu0
        %3060 = vmatprep.mubr.f32.mxu0 %v2861
        %3061 = vmatmul.mubr.f32.gmra.mrb[0].mxu0 %v2751
        %v3062 = vpop.f32.mrb[0].mxu0
        %v3063 = vadd.f32 0.0, %v3062
        %v3064 = vpop.f32.mrb[0].mxu0
        %3065 = vmatprep.mubr.f32.mxu0 %v2864
        %3066 = vmatmul.mubr.f32.gmra.mrb[0].mxu0 %v2753
        %v3067 = vpop.f32.mrb[0].mxu0
        %v3068 = vadd.f32 0.0, %v3067
        %v3069 = vpop.f32.mrb[0].mxu0
        %3070 = vmatprep.mubr.f32.mxu0 %v2867
        %3071 = vmatmul.mubr.f32.gmra.mrb[0].mxu0 %v2755
        %v3072 = vpop.f32.mrb[0].mxu0
        %v3073 = vadd.f32 0.0, %v3072
        %v3074 = vpop.f32.mrb[0].mxu0
        %3075 = vmatprep.mubr.f32.mxu0 %v2870
        %3076 = vmatmul.mubr.f32.gmra.mrb[0].mxu0 %v2757
        %v3077 = vpop.f32.mrb[0].mxu0
        %v3078 = vadd.f32 0.0, %v3077
        %v3079 = vpop.f32.mrb[0].mxu0
        %3080 = vmatprep.mubr.f32.mxu0 %v2873
        %3081 = vmatmul.mubr.f32.gmra.mrb[0].mxu0 %v2759
        %v3082 = vpop.f32.mrb[0].mxu0
        %v3083 = vadd.f32 0.0, %v3082
        %v3084 = vpop.f32.mrb[0].mxu0
        %3085 = vmatprep.mubr.f32.mxu0 %v2876
        %3086 = vmatmul.mubr.f32.gmra.mrb[0].mxu0 %v2761
        %v3087 = vpop.f32.mrb[0].mxu0
        %v3088 = vadd.f32 0.0, %v3087
        %v3089 = vpop.f32.mrb[0].mxu0
        %3090 = vmatprep.mubr.f32.mxu0 %v2879
        %3091 = vmatmul.mubr.f32.gmra.mrb[0].mxu0 %v2763
        %v3092 = vpop.f32.mrb[0].mxu0
        %v3093 = vadd.f32 0.0, %v3092
        %v3094 = vpop.f32.mrb[0].mxu0
        %3095 = vmatprep.mubr.f32.mxu0 %v2882
        %3096 = vmatmul.mubr.f32.gmra.mrb[0].mxu0 %v2765
        %v3097 = vpop.f32.mrb[0].mxu0
        %v3098 = vadd.f32 0.0, %v3097
        %v3099 = vpop.f32.mrb[0].mxu0
        %3100 = vmatprep.mubr.f32.mxu0 %v2885
        %3101 = vmatmul.mubr.f32.gmra.mrb[0].mxu0 %v2767
        %v3102 = vpop.f32.mrb[0].mxu0
        %v3103 = vadd.f32 0.0, %v3102
        %v3104 = vpop.f32.mrb[0].mxu0
        %3105 = vmatprep.mubr.f32.mxu0 %v2888
        %3106 = vmatmul.mubr.f32.gmra.mrb[0].mxu0 %v2769
        %v3107 = vpop.f32.mrb[0].mxu0
        %v3108 = vadd.f32 0.0, %v3107
        %v3109 = vpop.f32.mrb[0].mxu0
        %3110 = vmatprep.mubr.f32.mxu0 %v2891
        %3111 = vmatmul.mubr.f32.gmra.mrb[0].mxu0 %v2771
        %v3112 = vpop.f32.mrb[0].mxu0
        %v3113 = vadd.f32 0.0, %v3112
        %v3114 = vpop.f32.mrb[0].mxu0
        %3115 = vmatprep.mubr.f32.mxu0 %v2894
        %3116 = vmatmul.mubr.f32.gmra.mrb[0].mxu0 %v2773
        %v3117 = vpop.f32.mrb[0].mxu0
        %v3118 = vadd.f32 0.0, %v3117
        %v3119 = vpop.f32.mrb[0].mxu0
        %3120 = vdwg.mxu0
        %v3122 = vsel %vm373, %v2624, 0
        %v3125 = vsel %vm373, %v2626, 0
        %v3128 = vsel %vm373, %v2628, 0
        %v3131 = vsel %vm373, %v2630, 0
        %v3134 = vsel %vm373, %v2632, 0
        %v3137 = vsel %vm373, %v2634, 0
        %v3140 = vsel %vm373, %v2636, 0
        %v3143 = vsel %vm373, %v2638, 0
        %v3146 = vsel %vm373, %v2640, 0
        %v3149 = vsel %vm373, %v2642, 0
        %v3152 = vsel %vm373, %v2644, 0
        %v3155 = vsel %vm373, %v2646, 0
        %v3158 = vsel %vm373, %v2648, 0
        %v3161 = vsel %vm373, %v2650, 0
        %v3164 = vsel %vm373, %v2652, 0
        %v3167 = vsel %vm373, %v2654, 0
        %v3170 = vsel %vm373, %v2656, 0
        %v3173 = vsel %vm373, %v2658, 0
        %v3176 = vsel %vm373, %v2660, 0
        %v3179 = vsel %vm373, %v2662, 0
        %v3182 = vsel %vm373, %v2664, 0
        %v3185 = vsel %vm373, %v2666, 0
        %v3188 = vsel %vm373, %v2668, 0
        %v3191 = vsel %vm373, %v2670, 0
        %v3194 = vsel %vm373, %v2672, 0
        %v3197 = vsel %vm373, %v2674, 0
        %v3200 = vsel %vm373, %v2676, 0
        %v3203 = vsel %vm373, %v2678, 0
        %v3206 = vsel %vm373, %v2680, 0
        %v3209 = vsel %vm373, %v2682, 0
        %v3212 = vsel %vm373, %v2684, 0
        %v3215 = vsel %vm373, %v2686, 0
        %3217 = vmatprep.subr.mxu0 0.0
        %3218 = vmatpush1.msra.mxu0 %v2687
        %3219 = vmatprep.subr.mxu0 0.0
        %3220 = vmatpush1.msra.mxu0 %v2688
        %3221 = vmatprep.subr.mxu0 0.0
        %3222 = vmatpush1.msra.mxu0 %v2689
        %3223 = vmatprep.subr.mxu0 0.0
        %3224 = vmatpush1.msra.mxu0 %v2690
        %3225 = vmatprep.subr.mxu0 0.0
        %3226 = vmatpush1.msra.mxu0 %v2691
        %3227 = vmatprep.subr.mxu0 0.0
        %3228 = vmatpush1.msra.mxu0 %v2692
        %3229 = vmatprep.subr.mxu0 0.0
        %3230 = vmatpush1.msra.mxu0 %v2693
        %3231 = vmatprep.subr.mxu0 0.0
        %3232 = vmatpush1.msra.mxu0 %v2694
        %3233 = vmatprep.subr.mxu0 0.0
        %3234 = vmatpush1.msra.mxu0 %v2695
        %3235 = vmatprep.subr.mxu0 0.0
        %3236 = vmatpush1.msra.mxu0 %v2696
        %3237 = vmatprep.subr.mxu0 0.0
        %3238 = vmatpush1.msra.mxu0 %v2697
        %3239 = vmatprep.subr.mxu0 0.0
        %3240 = vmatpush1.msra.mxu0 %v2698
        %3241 = vmatprep.subr.mxu0 0.0
        %3242 = vmatpush1.msra.mxu0 %v2699
        %3243 = vmatprep.subr.mxu0 0.0
        %3244 = vmatpush1.msra.mxu0 %v2700
        %3245 = vmatprep.subr.mxu0 0.0
        %3246 = vmatpush1.msra.mxu0 %v2701
        %3247 = vmatprep.subr.mxu0 0.0
        %3248 = vmatpush1.msra.mxu0 %v2702
        %3249 = vmatprep.subr.mxu0 0.0
        %3250 = vmatpush1.msra.mxu0 %v2703
        %3251 = vmatprep.subr.mxu0 0.0
        %3252 = vmatpush1.msra.mxu0 %v2704
        %3253 = vmatprep.subr.mxu0 0.0
        %3254 = vmatpush1.msra.mxu0 %v2705
        %3255 = vmatprep.subr.mxu0 0.0
        %3256 = vmatpush1.msra.mxu0 %v2706
        %3257 = vmatprep.subr.mxu0 0.0
        %3258 = vmatpush1.msra.mxu0 %v2707
        %3259 = vmatprep.subr.mxu0 0.0
        %3260 = vmatpush1.msra.mxu0 %v2708
        %3261 = vmatprep.subr.mxu0 0.0
        %3262 = vmatpush1.msra.mxu0 %v2709
        %3263 = vmatprep.subr.mxu0 0.0
        %3264 = vmatpush1.msra.mxu0 %v2710
        %3265 = vmatprep.subr.mxu0 0.0
        %3266 = vmatpush1.msra.mxu0 0.0
        %3267 = vmatprep.subr.mxu0 0.0
        %3268 = vmatpush1.msra.mxu0 0.0
        %3269 = vmatprep.subr.mxu0 0.0
        %3270 = vmatpush1.msra.mxu0 0.0
        %3271 = vmatprep.subr.mxu0 0.0
        %3272 = vmatpush1.msra.mxu0 0.0
        %3273 = vmatprep.subr.mxu0 0.0
        %3274 = vmatpush1.msra.mxu0 0.0
        %3275 = vmatprep.subr.mxu0 0.0
        %3276 = vmatpush1.msra.mxu0 0.0
        %3277 = vmatprep.subr.mxu0 0.0
        %3278 = vmatpush1.msra.mxu0 0.0
        %3279 = vmatprep.subr.mxu0 0.0
        %3280 = vmatpush1.msra.mxu0 0.0
        %3281 = vmatprep.mubr.f32.mxu0 %v3122
        %3282 = vmatmul.mubr.f32.gmra.mrb[0].mxu0 %v2623
        %v3283 = vpop.f32.mrb[0].mxu0
        %v3284 = vadd.f32 %v2963, %v3283
        %v3285 = vpop.f32.mrb[0].mxu0
        %3286 = vmatprep.mubr.f32.mxu0 %v3125
        %3287 = vmatmul.mubr.f32.gmra.mrb[0].mxu0 %v2625
        %v3288 = vpop.f32.mrb[0].mxu0
        %v3289 = vadd.f32 %v2968, %v3288
        %v3290 = vpop.f32.mrb[0].mxu0
        %3291 = vmatprep.mubr.f32.mxu0 %v3128
        %3292 = vmatmul.mubr.f32.gmra.mrb[0].mxu0 %v2627
        %v3293 = vpop.f32.mrb[0].mxu0
        %v3294 = vadd.f32 %v2973, %v3293
        %v3295 = vpop.f32.mrb[0].mxu0
        %3296 = vmatprep.mubr.f32.mxu0 %v3131
        %3297 = vmatmul.mubr.f32.gmra.mrb[0].mxu0 %v2629
        %v3298 = vpop.f32.mrb[0].mxu0
        %v3299 = vadd.f32 %v2978, %v3298
        %v3300 = vpop.f32.mrb[0].mxu0
        %3301 = vmatprep.mubr.f32.mxu0 %v3134
        %3302 = vmatmul.mubr.f32.gmra.mrb[0].mxu0 %v2631
        %v3303 = vpop.f32.mrb[0].mxu0
        %v3304 = vadd.f32 %v2983, %v3303
        %v3305 = vpop.f32.mrb[0].mxu0
        %3306 = vmatprep.mubr.f32.mxu0 %v3137
        %3307 = vmatmul.mubr.f32.gmra.mrb[0].mxu0 %v2633
        %v3308 = vpop.f32.mrb[0].mxu0
        %v3309 = vadd.f32 %v2988, %v3308
        %v3310 = vpop.f32.mrb[0].mxu0
        %3311 = vmatprep.mubr.f32.mxu0 %v3140
        %3312 = vmatmul.mubr.f32.gmra.mrb[0].mxu0 %v2635
        %v3313 = vpop.f32.mrb[0].mxu0
        %v3314 = vadd.f32 %v2993, %v3313
        %v3315 = vpop.f32.mrb[0].mxu0
        %3316 = vmatprep.mubr.f32.mxu0 %v3143
        %3317 = vmatmul.mubr.f32.gmra.mrb[0].mxu0 %v2637
        %v3318 = vpop.f32.mrb[0].mxu0
        %v3319 = vadd.f32 %v2998, %v3318
        %v3320 = vpop.f32.mrb[0].mxu0
        %3321 = vmatprep.mubr.f32.mxu0 %v3146
        %3322 = vmatmul.mubr.f32.gmra.mrb[0].mxu0 %v2639
        %v3323 = vpop.f32.mrb[0].mxu0
        %v3324 = vadd.f32 %v3003, %v3323
        %v3325 = vpop.f32.mrb[0].mxu0
        %3326 = vmatprep.mubr.f32.mxu0 %v3149
        %3327 = vmatmul.mubr.f32.gmra.mrb[0].mxu0 %v2641
        %v3328 = vpop.f32.mrb[0].mxu0
        %v3329 = vadd.f32 %v3008, %v3328
        %v3330 = vpop.f32.mrb[0].mxu0
        %3331 = vmatprep.mubr.f32.mxu0 %v3152
        %3332 = vmatmul.mubr.f32.gmra.mrb[0].mxu0 %v2643
        %v3333 = vpop.f32.mrb[0].mxu0
        %v3334 = vadd.f32 %v3013, %v3333
        %v3335 = vpop.f32.mrb[0].mxu0
        %3336 = vmatprep.mubr.f32.mxu0 %v3155
        %3337 = vmatmul.mubr.f32.gmra.mrb[0].mxu0 %v2645
        %v3338 = vpop.f32.mrb[0].mxu0
        %v3339 = vadd.f32 %v3018, %v3338
        %v3340 = vpop.f32.mrb[0].mxu0
        %3341 = vmatprep.mubr.f32.mxu0 %v3158
        %3342 = vmatmul.mubr.f32.gmra.mrb[0].mxu0 %v2647
        %v3343 = vpop.f32.mrb[0].mxu0
        %v3344 = vadd.f32 %v3023, %v3343
        %v3345 = vpop.f32.mrb[0].mxu0
        %3346 = vmatprep.mubr.f32.mxu0 %v3161
        %3347 = vmatmul.mubr.f32.gmra.mrb[0].mxu0 %v2649
        %v3348 = vpop.f32.mrb[0].mxu0
        %v3349 = vadd.f32 %v3028, %v3348
        %v3350 = vpop.f32.mrb[0].mxu0
        %3351 = vmatprep.mubr.f32.mxu0 %v3164
        %3352 = vmatmul.mubr.f32.gmra.mrb[0].mxu0 %v2651
        %v3353 = vpop.f32.mrb[0].mxu0
        %v3354 = vadd.f32 %v3033, %v3353
        %v3355 = vpop.f32.mrb[0].mxu0
        %3356 = vmatprep.mubr.f32.mxu0 %v3167
        %3357 = vmatmul.mubr.f32.gmra.mrb[0].mxu0 %v2653
        %v3358 = vpop.f32.mrb[0].mxu0
        %v3359 = vadd.f32 %v3038, %v3358
        %v3360 = vpop.f32.mrb[0].mxu0
        %3361 = vmatprep.mubr.f32.mxu0 %v3170
        %3362 = vmatmul.mubr.f32.gmra.mrb[0].mxu0 %v2655
        %v3363 = vpop.f32.mrb[0].mxu0
        %v3364 = vadd.f32 %v3043, %v3363
        %v3365 = vpop.f32.mrb[0].mxu0
        %3366 = vmatprep.mubr.f32.mxu0 %v3173
        %3367 = vmatmul.mubr.f32.gmra.mrb[0].mxu0 %v2657
        %v3368 = vpop.f32.mrb[0].mxu0
        %v3369 = vadd.f32 %v3048, %v3368
        %v3370 = vpop.f32.mrb[0].mxu0
        %3371 = vmatprep.mubr.f32.mxu0 %v3176
        %3372 = vmatmul.mubr.f32.gmra.mrb[0].mxu0 %v2659
        %v3373 = vpop.f32.mrb[0].mxu0
        %v3374 = vadd.f32 %v3053, %v3373
        %v3375 = vpop.f32.mrb[0].mxu0
        %3376 = vmatprep.mubr.f32.mxu0 %v3179
        %3377 = vmatmul.mubr.f32.gmra.mrb[0].mxu0 %v2661
        %v3378 = vpop.f32.mrb[0].mxu0
        %v3379 = vadd.f32 %v3058, %v3378
        %v3380 = vpop.f32.mrb[0].mxu0
        %3381 = vmatprep.mubr.f32.mxu0 %v3182
        %3382 = vmatmul.mubr.f32.gmra.mrb[0].mxu0 %v2663
        %v3383 = vpop.f32.mrb[0].mxu0
        %v3384 = vadd.f32 %v3063, %v3383
        %v3385 = vpop.f32.mrb[0].mxu0
        %3386 = vmatprep.mubr.f32.mxu0 %v3185
        %3387 = vmatmul.mubr.f32.gmra.mrb[0].mxu0 %v2665
        %v3388 = vpop.f32.mrb[0].mxu0
        %v3389 = vadd.f32 %v3068, %v3388
        %v3390 = vpop.f32.mrb[0].mxu0
        %3391 = vmatprep.mubr.f32.mxu0 %v3188
        %3392 = vmatmul.mubr.f32.gmra.mrb[0].mxu0 %v2667
        %v3393 = vpop.f32.mrb[0].mxu0
        %v3394 = vadd.f32 %v3073, %v3393
        %v3395 = vpop.f32.mrb[0].mxu0
        %3396 = vmatprep.mubr.f32.mxu0 %v3191
        %3397 = vmatmul.mubr.f32.gmra.mrb[0].mxu0 %v2669
        %v3398 = vpop.f32.mrb[0].mxu0
        %v3399 = vadd.f32 %v3078, %v3398
        %v3400 = vpop.f32.mrb[0].mxu0
        %3401 = vmatprep.mubr.f32.mxu0 %v3194
        %3402 = vmatmul.mubr.f32.gmra.mrb[0].mxu0 %v2671
        %v3403 = vpop.f32.mrb[0].mxu0
        %v3404 = vadd.f32 %v3083, %v3403
        %v3405 = vpop.f32.mrb[0].mxu0
        %3406 = vmatprep.mubr.f32.mxu0 %v3197
        %3407 = vmatmul.mubr.f32.gmra.mrb[0].mxu0 %v2673
        %v3408 = vpop.f32.mrb[0].mxu0
        %v3409 = vadd.f32 %v3088, %v3408
        %v3410 = vpop.f32.mrb[0].mxu0
        %3411 = vmatprep.mubr.f32.mxu0 %v3200
        %3412 = vmatmul.mubr.f32.gmra.mrb[0].mxu0 %v2675
        %v3413 = vpop.f32.mrb[0].mxu0
        %v3414 = vadd.f32 %v3093, %v3413
        %v3415 = vpop.f32.mrb[0].mxu0
        %3416 = vmatprep.mubr.f32.mxu0 %v3203
        %3417 = vmatmul.mubr.f32.gmra.mrb[0].mxu0 %v2677
        %v3418 = vpop.f32.mrb[0].mxu0
        %v3419 = vadd.f32 %v3098, %v3418
        %v3420 = vpop.f32.mrb[0].mxu0
        %3421 = vmatprep.mubr.f32.mxu0 %v3206
        %3422 = vmatmul.mubr.f32.gmra.mrb[0].mxu0 %v2679
        %v3423 = vpop.f32.mrb[0].mxu0
        %v3424 = vadd.f32 %v3103, %v3423
        %v3425 = vpop.f32.mrb[0].mxu0
        %3426 = vmatprep.mubr.f32.mxu0 %v3209
        %3427 = vmatmul.mubr.f32.gmra.mrb[0].mxu0 %v2681
        %v3428 = vpop.f32.mrb[0].mxu0
        %v3429 = vadd.f32 %v3108, %v3428
        %v3430 = vpop.f32.mrb[0].mxu0
        %3431 = vmatprep.mubr.f32.mxu0 %v3212
        %3432 = vmatmul.mubr.f32.gmra.mrb[0].mxu0 %v2683
        %v3433 = vpop.f32.mrb[0].mxu0
        %v3434 = vadd.f32 %v3113, %v3433
        %v3435 = vpop.f32.mrb[0].mxu0
        %3436 = vmatprep.mubr.f32.mxu0 %v3215
        %3437 = vmatmul.mubr.f32.gmra.mrb[0].mxu0 %v2685
        %v3438 = vpop.f32.mrb[0].mxu0
        %v3439 = vadd.f32 %v3118, %v3438
        %v3440 = vpop.f32.mrb[0].mxu0
        %3441 = vdwg.mxu0
        %v3442 = vld [vmem:[%s1692] sm:$0xff]
        %v3443 = vld [vmem:[%s1692 + $0x8] sm:$0xff]
        %v3444 = vld [vmem:[%s1692 + $0x10] sm:$0xff]
        %v3445 = vld [vmem:[%s1692 + $0x18] sm:$0xff]
        %v3446 = vld [vmem:[%s1692 + $0x20] sm:$0xff]
        %v3447 = vld [vmem:[%s1692 + $0x28] sm:$0xff]
        %v3448 = vld [vmem:[%s1692 + $0x30] sm:$0xff]
        %v3449 = vld [vmem:[%s1692 + $0x38] sm:$0xff]
        %v3450 = vld [vmem:[%s1692 + $0x40] sm:$0xff]
        %v3451 = vld [vmem:[%s1692 + $0x48] sm:$0xff]
        %v3452 = vld [vmem:[%s1692 + $0x50] sm:$0xff]
        %v3453 = vld [vmem:[%s1692 + $0x58] sm:$0xff]
        %v3454 = vld [vmem:[%s1692 + $0x60] sm:$0xff]
        %v3455 = vld [vmem:[%s1692 + $0x68] sm:$0xff]
        %v3456 = vld [vmem:[%s1692 + $0x70] sm:$0xff]
        %v3457 = vld [vmem:[%s1692 + $0x78] sm:$0xff]
        %v3458 = vld [vmem:[%s1692 + $0x80] sm:$0xff]
        %v3459 = vld [vmem:[%s1692 + $0x88] sm:$0xff]
        %v3460 = vld [vmem:[%s1692 + $0x90] sm:$0xff]
        %v3461 = vld [vmem:[%s1692 + $0x98] sm:$0xff]
        %v3462 = vld [vmem:[%s1692 + $0xa0] sm:$0xff]
        %v3463 = vld [vmem:[%s1692 + $0xa8] sm:$0xff]
        %v3464 = vld [vmem:[%s1692 + $0xb0] sm:$0xff]
        %v3465 = vld [vmem:[%s1692 + $0xb8] sm:$0xff]
        %v3466 = vld [vmem:[%s1692 + $0xc0] sm:$0xff]
        %v3467 = vld [vmem:[%s1692 + $0xc8] sm:$0xff]
        %v3468 = vld [vmem:[%s1692 + $0xd0] sm:$0xff]
        %v3469 = vld [vmem:[%s1692 + $0xd8] sm:$0xff]
        %v3470 = vld [vmem:[%s1692 + $0xe0] sm:$0xff]
        %v3471 = vld [vmem:[%s1692 + $0xe8] sm:$0xff]
        %v3472 = vld [vmem:[%s1692 + $0xf0] sm:$0xff]
        %v3473 = vld [vmem:[%s1692 + $0xf8] sm:$0xff]
        %v3474 = vld [vmem:[%s1692 + $0x100] sm:$0xff]
        %v3475 = vld [vmem:[%s1692 + $0x108] sm:$0xff]
        %v3476 = vld [vmem:[%s1692 + $0x110] sm:$0xff]
        %v3477 = vld [vmem:[%s1692 + $0x118] sm:$0xff]
        %v3478 = vld [vmem:[%s1692 + $0x120] sm:$0xff]
        %v3479 = vld [vmem:[%s1692 + $0x128] sm:$0xff]
        %v3480 = vld [vmem:[%s1692 + $0x130] sm:$0xff]
        %v3481 = vld [vmem:[%s1692 + $0x138] sm:$0xff]
        %v3482 = vld [vmem:[%s1692 + $0x140] sm:$0xff]
        %v3483 = vld [vmem:[%s1692 + $0x148] sm:$0xff]
        %v3484 = vld [vmem:[%s1692 + $0x150] sm:$0xff]
        %v3485 = vld [vmem:[%s1692 + $0x158] sm:$0xff]
        %v3486 = vld [vmem:[%s1692 + $0x160] sm:$0xff]
        %v3487 = vld [vmem:[%s1692 + $0x168] sm:$0xff]
        %v3488 = vld [vmem:[%s1692 + $0x170] sm:$0xff]
        %v3489 = vld [vmem:[%s1692 + $0x178] sm:$0xff]
        %v3490 = vld [vmem:[%s1692 + $0x180] sm:$0xff]
        %v3491 = vld [vmem:[%s1692 + $0x188] sm:$0xff]
        %v3492 = vld [vmem:[%s1692 + $0x190] sm:$0xff]
        %v3493 = vld [vmem:[%s1692 + $0x198] sm:$0xff]
        %v3494 = vld [vmem:[%s1692 + $0x1a0] sm:$0xff]
        %v3495 = vld [vmem:[%s1692 + $0x1a8] sm:$0xff]
        %v3496 = vld [vmem:[%s1692 + $0x1b0] sm:$0xff]
        %v3497 = vld [vmem:[%s1692 + $0x1b8] sm:$0xff]
        %v3498 = vld [vmem:[%s1692 + $0x1c0] sm:$0xff]
        %v3499 = vld [vmem:[%s1692 + $0x1c8] sm:$0xff]
        %v3500 = vld [vmem:[%s1692 + $0x1d0] sm:$0xff]
        %v3501 = vld [vmem:[%s1692 + $0x1d8] sm:$0xff]
        %v3502 = vld [vmem:[%s1692 + $0x1e0] sm:$0xff]
        %v3503 = vld [vmem:[%s1692 + $0x1e8] sm:$0xff]
        %v3504 = vld [vmem:[%s1692 + $0x1f0] sm:$0xff]
        %v3505 = vld [vmem:[%s1692 + $0x1f8] sm:$0xff]
        %s3506 = scalar_lea.vmem %s4, 384
        %v3507 = vld [vmem:[%s3506] sm:$0xff]
        %v3508 = vld [vmem:[%s3506 + $0x8] sm:$0xff]
        %v3509 = vld [vmem:[%s3506 + $0x10] sm:$0xff]
        %v3510 = vld [vmem:[%s3506 + $0x18] sm:$0xff]
        %v3511 = vld [vmem:[%s3506 + $0x20] sm:$0xff]
        %v3512 = vld [vmem:[%s3506 + $0x28] sm:$0xff]
        %v3513 = vld [vmem:[%s3506 + $0x30] sm:$0xff]
        %v3514 = vld [vmem:[%s3506 + $0x38] sm:$0xff]
        %v3515 = vld [vmem:[%s3506 + $0x40] sm:$0xff]
        %v3516 = vld [vmem:[%s3506 + $0x48] sm:$0xff]
        %v3517 = vld [vmem:[%s3506 + $0x50] sm:$0xff]
        %v3518 = vld [vmem:[%s3506 + $0x58] sm:$0xff]
        %v3519 = vld [vmem:[%s3506 + $0x60] sm:$0xff]
        %v3520 = vld [vmem:[%s3506 + $0x68] sm:$0xff]
        %v3521 = vld [vmem:[%s3506 + $0x70] sm:$0xff]
        %v3522 = vld [vmem:[%s3506 + $0x78] sm:$0xff]
        %v3523 = vld [vmem:[%s3506 + $0x80] sm:$0xff]
        %v3524 = vld [vmem:[%s3506 + $0x88] sm:$0xff]
        %v3525 = vld [vmem:[%s3506 + $0x90] sm:$0xff]
        %v3526 = vld [vmem:[%s3506 + $0x98] sm:$0xff]
        %v3527 = vld [vmem:[%s3506 + $0xa0] sm:$0xff]
        %v3528 = vld [vmem:[%s3506 + $0xa8] sm:$0xff]
        %v3529 = vld [vmem:[%s3506 + $0xb0] sm:$0xff]
        %v3530 = vld [vmem:[%s3506 + $0xb8] sm:$0xff]
        %v3532 = vsel %vm373, %v3443, 0
        %v3535 = vsel %vm373, %v3445, 0
        %v3538 = vsel %vm373, %v3447, 0
        %v3541 = vsel %vm373, %v3449, 0
        %v3544 = vsel %vm373, %v3451, 0
        %v3547 = vsel %vm373, %v3453, 0
        %v3550 = vsel %vm373, %v3455, 0
        %v3553 = vsel %vm373, %v3457, 0
        %v3556 = vsel %vm373, %v3459, 0
        %v3559 = vsel %vm373, %v3461, 0
        %v3562 = vsel %vm373, %v3463, 0
        %v3565 = vsel %vm373, %v3465, 0
        %v3568 = vsel %vm373, %v3467, 0
        %v3571 = vsel %vm373, %v3469, 0
        %v3574 = vsel %vm373, %v3471, 0
        %v3577 = vsel %vm373, %v3473, 0
        %v3580 = vsel %vm373, %v3475, 0
        %v3583 = vsel %vm373, %v3477, 0
        %v3586 = vsel %vm373, %v3479, 0
        %v3589 = vsel %vm373, %v3481, 0
        %v3592 = vsel %vm373, %v3483, 0
        %v3595 = vsel %vm373, %v3485, 0
        %v3598 = vsel %vm373, %v3487, 0
        %v3601 = vsel %vm373, %v3489, 0
        %v3604 = vsel %vm373, %v3491, 0
        %v3607 = vsel %vm373, %v3493, 0
        %v3610 = vsel %vm373, %v3495, 0
        %v3613 = vsel %vm373, %v3497, 0
        %v3616 = vsel %vm373, %v3499, 0
        %v3619 = vsel %vm373, %v3501, 0
        %v3622 = vsel %vm373, %v3503, 0
        %v3625 = vsel %vm373, %v3505, 0
        %3627 = vmatprep.subr.mxu0 0.0
        %3628 = vmatpush1.msra.mxu0 %v3507
        %3629 = vmatprep.subr.mxu0 0.0
        %3630 = vmatpush1.msra.mxu0 %v3508
        %3631 = vmatprep.subr.mxu0 0.0
        %3632 = vmatpush1.msra.mxu0 %v3509
        %3633 = vmatprep.subr.mxu0 0.0
        %3634 = vmatpush1.msra.mxu0 %v3510
        %3635 = vmatprep.subr.mxu0 0.0
        %3636 = vmatpush1.msra.mxu0 %v3511
        %3637 = vmatprep.subr.mxu0 0.0
        %3638 = vmatpush1.msra.mxu0 %v3512
        %3639 = vmatprep.subr.mxu0 0.0
        %3640 = vmatpush1.msra.mxu0 %v3513
        %3641 = vmatprep.subr.mxu0 0.0
        %3642 = vmatpush1.msra.mxu0 %v3514
        %3643 = vmatprep.subr.mxu0 0.0
        %3644 = vmatpush1.msra.mxu0 %v3515
        %3645 = vmatprep.subr.mxu0 0.0
        %3646 = vmatpush1.msra.mxu0 %v3516
        %3647 = vmatprep.subr.mxu0 0.0
        %3648 = vmatpush1.msra.mxu0 %v3517
        %3649 = vmatprep.subr.mxu0 0.0
        %3650 = vmatpush1.msra.mxu0 %v3518
        %3651 = vmatprep.subr.mxu0 0.0
        %3652 = vmatpush1.msra.mxu0 %v3519
        %3653 = vmatprep.subr.mxu0 0.0
        %3654 = vmatpush1.msra.mxu0 %v3520
        %3655 = vmatprep.subr.mxu0 0.0
        %3656 = vmatpush1.msra.mxu0 %v3521
        %3657 = vmatprep.subr.mxu0 0.0
        %3658 = vmatpush1.msra.mxu0 %v3522
        %3659 = vmatprep.subr.mxu0 0.0
        %3660 = vmatpush1.msra.mxu0 %v3523
        %3661 = vmatprep.subr.mxu0 0.0
        %3662 = vmatpush1.msra.mxu0 %v3524
        %3663 = vmatprep.subr.mxu0 0.0
        %3664 = vmatpush1.msra.mxu0 %v3525
        %3665 = vmatprep.subr.mxu0 0.0
        %3666 = vmatpush1.msra.mxu0 %v3526
        %3667 = vmatprep.subr.mxu0 0.0
        %3668 = vmatpush1.msra.mxu0 %v3527
        %3669 = vmatprep.subr.mxu0 0.0
        %3670 = vmatpush1.msra.mxu0 %v3528
        %3671 = vmatprep.subr.mxu0 0.0
        %3672 = vmatpush1.msra.mxu0 %v3529
        %3673 = vmatprep.subr.mxu0 0.0
        %3674 = vmatpush1.msra.mxu0 %v3530
        %3675 = vmatprep.subr.mxu0 0.0
        %3676 = vmatpush1.msra.mxu0 0.0
        %3677 = vmatprep.subr.mxu0 0.0
        %3678 = vmatpush1.msra.mxu0 0.0
        %3679 = vmatprep.subr.mxu0 0.0
        %3680 = vmatpush1.msra.mxu0 0.0
        %3681 = vmatprep.subr.mxu0 0.0
        %3682 = vmatpush1.msra.mxu0 0.0
        %3683 = vmatprep.subr.mxu0 0.0
        %3684 = vmatpush1.msra.mxu0 0.0
        %3685 = vmatprep.subr.mxu0 0.0
        %3686 = vmatpush1.msra.mxu0 0.0
        %3687 = vmatprep.subr.mxu0 0.0
        %3688 = vmatpush1.msra.mxu0 0.0
        %3689 = vmatprep.subr.mxu0 0.0
        %3690 = vmatpush1.msra.mxu0 0.0
        %3691 = vmatprep.mubr.f32.mxu0 %v3532
        %3692 = vmatmul.mubr.f32.gmra.mrb[0].mxu0 %v3442
        %v3693 = vpop.f32.mrb[0].mxu0
        %v3694 = vadd.f32 0.0, %v3693
        %v3695 = vpop.f32.mrb[0].mxu0
        %3696 = vmatprep.mubr.f32.mxu0 %v3535
        %3697 = vmatmul.mubr.f32.gmra.mrb[0].mxu0 %v3444
        %v3698 = vpop.f32.mrb[0].mxu0
        %v3699 = vadd.f32 0.0, %v3698
        %v3700 = vpop.f32.mrb[0].mxu0
        %3701 = vmatprep.mubr.f32.mxu0 %v3538
        %3702 = vmatmul.mubr.f32.gmra.mrb[0].mxu0 %v3446
        %v3703 = vpop.f32.mrb[0].mxu0
        %v3704 = vadd.f32 0.0, %v3703
        %v3705 = vpop.f32.mrb[0].mxu0
        %3706 = vmatprep.mubr.f32.mxu0 %v3541
        %3707 = vmatmul.mubr.f32.gmra.mrb[0].mxu0 %v3448
        %v3708 = vpop.f32.mrb[0].mxu0
        %v3709 = vadd.f32 0.0, %v3708
        %v3710 = vpop.f32.mrb[0].mxu0
        %3711 = vmatprep.mubr.f32.mxu0 %v3544
        %3712 = vmatmul.mubr.f32.gmra.mrb[0].mxu0 %v3450
        %v3713 = vpop.f32.mrb[0].mxu0
        %v3714 = vadd.f32 0.0, %v3713
        %v3715 = vpop.f32.mrb[0].mxu0
        %3716 = vmatprep.mubr.f32.mxu0 %v3547
        %3717 = vmatmul.mubr.f32.gmra.mrb[0].mxu0 %v3452
        %v3718 = vpop.f32.mrb[0].mxu0
        %v3719 = vadd.f32 0.0, %v3718
        %v3720 = vpop.f32.mrb[0].mxu0
        %3721 = vmatprep.mubr.f32.mxu0 %v3550
        %3722 = vmatmul.mubr.f32.gmra.mrb[0].mxu0 %v3454
        %v3723 = vpop.f32.mrb[0].mxu0
        %v3724 = vadd.f32 0.0, %v3723
        %v3725 = vpop.f32.mrb[0].mxu0
        %3726 = vmatprep.mubr.f32.mxu0 %v3553
        %3727 = vmatmul.mubr.f32.gmra.mrb[0].mxu0 %v3456
        %v3728 = vpop.f32.mrb[0].mxu0
        %v3729 = vadd.f32 0.0, %v3728
        %v3730 = vpop.f32.mrb[0].mxu0
        %3731 = vmatprep.mubr.f32.mxu0 %v3556
        %3732 = vmatmul.mubr.f32.gmra.mrb[0].mxu0 %v3458
        %v3733 = vpop.f32.mrb[0].mxu0
        %v3734 = vadd.f32 0.0, %v3733
        %v3735 = vpop.f32.mrb[0].mxu0
        %3736 = vmatprep.mubr.f32.mxu0 %v3559
        %3737 = vmatmul.mubr.f32.gmra.mrb[0].mxu0 %v3460
        %v3738 = vpop.f32.mrb[0].mxu0
        %v3739 = vadd.f32 0.0, %v3738
        %v3740 = vpop.f32.mrb[0].mxu0
        %3741 = vmatprep.mubr.f32.mxu0 %v3562
        %3742 = vmatmul.mubr.f32.gmra.mrb[0].mxu0 %v3462
        %v3743 = vpop.f32.mrb[0].mxu0
        %v3744 = vadd.f32 0.0, %v3743
        %v3745 = vpop.f32.mrb[0].mxu0
        %3746 = vmatprep.mubr.f32.mxu0 %v3565
        %3747 = vmatmul.mubr.f32.gmra.mrb[0].mxu0 %v3464
        %v3748 = vpop.f32.mrb[0].mxu0
        %v3749 = vadd.f32 0.0, %v3748
        %v3750 = vpop.f32.mrb[0].mxu0
        %3751 = vmatprep.mubr.f32.mxu0 %v3568
        %3752 = vmatmul.mubr.f32.gmra.mrb[0].mxu0 %v3466
        %v3753 = vpop.f32.mrb[0].mxu0
        %v3754 = vadd.f32 0.0, %v3753
        %v3755 = vpop.f32.mrb[0].mxu0
        %3756 = vmatprep.mubr.f32.mxu0 %v3571
        %3757 = vmatmul.mubr.f32.gmra.mrb[0].mxu0 %v3468
        %v3758 = vpop.f32.mrb[0].mxu0
        %v3759 = vadd.f32 0.0, %v3758
        %v3760 = vpop.f32.mrb[0].mxu0
        %3761 = vmatprep.mubr.f32.mxu0 %v3574
        %3762 = vmatmul.mubr.f32.gmra.mrb[0].mxu0 %v3470
        %v3763 = vpop.f32.mrb[0].mxu0
        %v3764 = vadd.f32 0.0, %v3763
        %v3765 = vpop.f32.mrb[0].mxu0
        %3766 = vmatprep.mubr.f32.mxu0 %v3577
        %3767 = vmatmul.mubr.f32.gmra.mrb[0].mxu0 %v3472
        %v3768 = vpop.f32.mrb[0].mxu0
        %v3769 = vadd.f32 0.0, %v3768
        %v3770 = vpop.f32.mrb[0].mxu0
        %3771 = vmatprep.mubr.f32.mxu0 %v3580
        %3772 = vmatmul.mubr.f32.gmra.mrb[0].mxu0 %v3474
        %v3773 = vpop.f32.mrb[0].mxu0
        %v3774 = vadd.f32 0.0, %v3773
        %v3775 = vpop.f32.mrb[0].mxu0
        %3776 = vmatprep.mubr.f32.mxu0 %v3583
        %3777 = vmatmul.mubr.f32.gmra.mrb[0].mxu0 %v3476
        %v3778 = vpop.f32.mrb[0].mxu0
        %v3779 = vadd.f32 0.0, %v3778
        %v3780 = vpop.f32.mrb[0].mxu0
        %3781 = vmatprep.mubr.f32.mxu0 %v3586
        %3782 = vmatmul.mubr.f32.gmra.mrb[0].mxu0 %v3478
        %v3783 = vpop.f32.mrb[0].mxu0
        %v3784 = vadd.f32 0.0, %v3783
        %v3785 = vpop.f32.mrb[0].mxu0
        %3786 = vmatprep.mubr.f32.mxu0 %v3589
        %3787 = vmatmul.mubr.f32.gmra.mrb[0].mxu0 %v3480
        %v3788 = vpop.f32.mrb[0].mxu0
        %v3789 = vadd.f32 0.0, %v3788
        %v3790 = vpop.f32.mrb[0].mxu0
        %3791 = vmatprep.mubr.f32.mxu0 %v3592
        %3792 = vmatmul.mubr.f32.gmra.mrb[0].mxu0 %v3482
        %v3793 = vpop.f32.mrb[0].mxu0
        %v3794 = vadd.f32 0.0, %v3793
        %v3795 = vpop.f32.mrb[0].mxu0
        %3796 = vmatprep.mubr.f32.mxu0 %v3595
        %3797 = vmatmul.mubr.f32.gmra.mrb[0].mxu0 %v3484
        %v3798 = vpop.f32.mrb[0].mxu0
        %v3799 = vadd.f32 0.0, %v3798
        %v3800 = vpop.f32.mrb[0].mxu0
        %3801 = vmatprep.mubr.f32.mxu0 %v3598
        %3802 = vmatmul.mubr.f32.gmra.mrb[0].mxu0 %v3486
        %v3803 = vpop.f32.mrb[0].mxu0
        %v3804 = vadd.f32 0.0, %v3803
        %v3805 = vpop.f32.mrb[0].mxu0
        %3806 = vmatprep.mubr.f32.mxu0 %v3601
        %3807 = vmatmul.mubr.f32.gmra.mrb[0].mxu0 %v3488
        %v3808 = vpop.f32.mrb[0].mxu0
        %v3809 = vadd.f32 0.0, %v3808
        %v3810 = vpop.f32.mrb[0].mxu0
        %3811 = vmatprep.mubr.f32.mxu0 %v3604
        %3812 = vmatmul.mubr.f32.gmra.mrb[0].mxu0 %v3490
        %v3813 = vpop.f32.mrb[0].mxu0
        %v3814 = vadd.f32 0.0, %v3813
        %v3815 = vpop.f32.mrb[0].mxu0
        %3816 = vmatprep.mubr.f32.mxu0 %v3607
        %3817 = vmatmul.mubr.f32.gmra.mrb[0].mxu0 %v3492
        %v3818 = vpop.f32.mrb[0].mxu0
        %v3819 = vadd.f32 0.0, %v3818
        %v3820 = vpop.f32.mrb[0].mxu0
        %3821 = vmatprep.mubr.f32.mxu0 %v3610
        %3822 = vmatmul.mubr.f32.gmra.mrb[0].mxu0 %v3494
        %v3823 = vpop.f32.mrb[0].mxu0
        %v3824 = vadd.f32 0.0, %v3823
        %v3825 = vpop.f32.mrb[0].mxu0
        %3826 = vmatprep.mubr.f32.mxu0 %v3613
        %3827 = vmatmul.mubr.f32.gmra.mrb[0].mxu0 %v3496
        %v3828 = vpop.f32.mrb[0].mxu0
        %v3829 = vadd.f32 0.0, %v3828
        %v3830 = vpop.f32.mrb[0].mxu0
        %3831 = vmatprep.mubr.f32.mxu0 %v3616
        %3832 = vmatmul.mubr.f32.gmra.mrb[0].mxu0 %v3498
        %v3833 = vpop.f32.mrb[0].mxu0
        %v3834 = vadd.f32 0.0, %v3833
        %v3835 = vpop.f32.mrb[0].mxu0
        %3836 = vmatprep.mubr.f32.mxu0 %v3619
        %3837 = vmatmul.mubr.f32.gmra.mrb[0].mxu0 %v3500
        %v3838 = vpop.f32.mrb[0].mxu0
        %v3839 = vadd.f32 0.0, %v3838
        %v3840 = vpop.f32.mrb[0].mxu0
        %3841 = vmatprep.mubr.f32.mxu0 %v3622
        %3842 = vmatmul.mubr.f32.gmra.mrb[0].mxu0 %v3502
        %v3843 = vpop.f32.mrb[0].mxu0
        %v3844 = vadd.f32 0.0, %v3843
        %v3845 = vpop.f32.mrb[0].mxu0
        %3846 = vmatprep.mubr.f32.mxu0 %v3625
        %3847 = vmatmul.mubr.f32.gmra.mrb[0].mxu0 %v3504
        %v3848 = vpop.f32.mrb[0].mxu0
        %v3849 = vadd.f32 0.0, %v3848
        %v3850 = vpop.f32.mrb[0].mxu0
        %3851 = vdwg.mxu0
        %v3852 = vadd.f32 %v3284, %v3694
        %v3853 = vadd.f32 %v3289, %v3699
        %v3854 = vadd.f32 %v3294, %v3704
        %v3855 = vadd.f32 %v3299, %v3709
        %v3856 = vadd.f32 %v3304, %v3714
        %v3857 = vadd.f32 %v3309, %v3719
        %v3858 = vadd.f32 %v3314, %v3724
        %v3859 = vadd.f32 %v3319, %v3729
        %v3860 = vadd.f32 %v3324, %v3734
        %v3861 = vadd.f32 %v3329, %v3739
        %v3862 = vadd.f32 %v3334, %v3744
        %v3863 = vadd.f32 %v3339, %v3749
        %v3864 = vadd.f32 %v3344, %v3754
        %v3865 = vadd.f32 %v3349, %v3759
        %v3866 = vadd.f32 %v3354, %v3764
        %v3867 = vadd.f32 %v3359, %v3769
        %v3868 = vadd.f32 %v3364, %v3774
        %v3869 = vadd.f32 %v3369, %v3779
        %v3870 = vadd.f32 %v3374, %v3784
        %v3871 = vadd.f32 %v3379, %v3789
        %v3872 = vadd.f32 %v3384, %v3794
        %v3873 = vadd.f32 %v3389, %v3799
        %v3874 = vadd.f32 %v3394, %v3804
        %v3875 = vadd.f32 %v3399, %v3809
        %v3876 = vadd.f32 %v3404, %v3814
        %v3877 = vadd.f32 %v3409, %v3819
        %v3878 = vadd.f32 %v3414, %v3824
        %v3879 = vadd.f32 %v3419, %v3829
        %v3880 = vadd.f32 %v3424, %v3834
        %v3881 = vadd.f32 %v3429, %v3839
        %v3882 = vadd.f32 %v3434, %v3844
        %v3883 = vadd.f32 %v3439, %v3849
        %v3884 = vld [vmem:[%s5] sm:$0x1]
        %v3886 = vlaneseq
        %v3887 = vshrl.u32 %v3886, 7
        %v3888 = vsub.s32 0, %v3887
        %v3889 = vrot.slane %v3884, %v3888
        %v3891 = vadd.f32 %v3852, %v3889
        %v3892 = vadd.f32 %v3853, %v3889
        %v3893 = vadd.f32 %v3854, %v3889
        %v3894 = vadd.f32 %v3855, %v3889
        %v3895 = vadd.f32 %v3856, %v3889
        %v3896 = vadd.f32 %v3857, %v3889
        %v3897 = vadd.f32 %v3858, %v3889
        %v3898 = vadd.f32 %v3859, %v3889
        %v3899 = vadd.f32 %v3860, %v3889
        %v3900 = vadd.f32 %v3861, %v3889
        %v3901 = vadd.f32 %v3862, %v3889
        %v3902 = vadd.f32 %v3863, %v3889
        %v3903 = vadd.f32 %v3864, %v3889
        %v3904 = vadd.f32 %v3865, %v3889
        %v3905 = vadd.f32 %v3866, %v3889
        %v3906 = vadd.f32 %v3867, %v3889
        %v3907 = vadd.f32 %v3868, %v3889
        %v3908 = vadd.f32 %v3869, %v3889
        %v3909 = vadd.f32 %v3870, %v3889
        %v3910 = vadd.f32 %v3871, %v3889
        %v3911 = vadd.f32 %v3872, %v3889
        %v3912 = vadd.f32 %v3873, %v3889
        %v3913 = vadd.f32 %v3874, %v3889
        %v3914 = vadd.f32 %v3875, %v3889
        %v3915 = vadd.f32 %v3876, %v3889
        %v3916 = vadd.f32 %v3877, %v3889
        %v3917 = vadd.f32 %v3878, %v3889
        %v3918 = vadd.f32 %v3879, %v3889
        %v3919 = vadd.f32 %v3880, %v3889
        %v3920 = vadd.f32 %v3881, %v3889
        %v3921 = vadd.f32 %v3882, %v3889
        %v3922 = vadd.f32 %v3883, %v3889
        %v3923 = vstv %s417
        %v3924 = vmul.f32 %v3891, %v3923
        %v3925 = vmul.f32 %v3892, %v3923
        %v3926 = vmul.f32 %v3893, %v3923
        %v3927 = vmul.f32 %v3894, %v3923
        %v3928 = vmul.f32 %v3895, %v3923
        %v3929 = vmul.f32 %v3896, %v3923
        %v3930 = vmul.f32 %v3897, %v3923
        %v3931 = vmul.f32 %v3898, %v3923
        %v3932 = vmul.f32 %v3899, %v3923
        %v3933 = vmul.f32 %v3900, %v3923
        %v3934 = vmul.f32 %v3901, %v3923
        %v3935 = vmul.f32 %v3902, %v3923
        %v3936 = vmul.f32 %v3903, %v3923
        %v3937 = vmul.f32 %v3904, %v3923
        %v3938 = vmul.f32 %v3905, %v3923
        %v3939 = vmul.f32 %v3906, %v3923
        %v3940 = vmul.f32 %v3907, %v3923
        %v3941 = vmul.f32 %v3908, %v3923
        %v3942 = vmul.f32 %v3909, %v3923
        %v3943 = vmul.f32 %v3910, %v3923
        %v3944 = vmul.f32 %v3911, %v3923
        %v3945 = vmul.f32 %v3912, %v3923
        %v3946 = vmul.f32 %v3913, %v3923
        %v3947 = vmul.f32 %v3914, %v3923
        %v3948 = vmul.f32 %v3915, %v3923
        %v3949 = vmul.f32 %v3916, %v3923
        %v3950 = vmul.f32 %v3917, %v3923
        %v3951 = vmul.f32 %v3918, %v3923
        %v3952 = vmul.f32 %v3919, %v3923
        %v3953 = vmul.f32 %v3920, %v3923
        %v3954 = vmul.f32 %v3921, %v3923
        %v3955 = vmul.f32 %v3922, %v3923
        %v3956 = vadd.f32 %v3924, %v420
        %v3957 = vadd.f32 %v3925, %v421
        %v3958 = vadd.f32 %v3926, %v422
        %v3959 = vadd.f32 %v3927, %v423
        %v3960 = vadd.f32 %v3928, %v424
        %v3961 = vadd.f32 %v3929, %v425
        %v3962 = vadd.f32 %v3930, %v426
        %v3963 = vadd.f32 %v3931, %v427
        %v3964 = vadd.f32 %v3932, %v428
        %v3965 = vadd.f32 %v3933, %v429
        %v3966 = vadd.f32 %v3934, %v430
        %v3967 = vadd.f32 %v3935, %v431
        %v3968 = vadd.f32 %v3936, %v432
        %v3969 = vadd.f32 %v3937, %v433
        %v3970 = vadd.f32 %v3938, %v434
        %v3971 = vadd.f32 %v3939, %v435
        %v3972 = vadd.f32 %v3940, %v436
        %v3973 = vadd.f32 %v3941, %v437
        %v3974 = vadd.f32 %v3942, %v438
        %v3975 = vadd.f32 %v3943, %v439
        %v3976 = vadd.f32 %v3944, %v440
        %v3977 = vadd.f32 %v3945, %v441
        %v3978 = vadd.f32 %v3946, %v442
        %v3979 = vadd.f32 %v3947, %v443
        %v3980 = vadd.f32 %v3948, %v444
        %v3981 = vadd.f32 %v3949, %v445
        %v3982 = vadd.f32 %v3950, %v446
        %v3983 = vadd.f32 %v3951, %v447
        %v3984 = vadd.f32 %v3952, %v448
        %v3985 = vadd.f32 %v3953, %v449
        %v3986 = vadd.f32 %v3954, %v450
        %v3987 = vadd.f32 %v3955, %v451
        %v3988 = vmax.f32 %v3956, 0.0
        %v3989 = vmax.f32 %v3957, 0.0
        %v3990 = vmax.f32 %v3958, 0.0
        %v3991 = vmax.f32 %v3959, 0.0
        %v3992 = vmax.f32 %v3960, 0.0
        %v3993 = vmax.f32 %v3961, 0.0
        %v3994 = vmax.f32 %v3962, 0.0
        %v3995 = vmax.f32 %v3963, 0.0
        %v3996 = vmax.f32 %v3964, 0.0
        %v3997 = vmax.f32 %v3965, 0.0
        %v3998 = vmax.f32 %v3966, 0.0
        %v3999 = vmax.f32 %v3967, 0.0
        %v4000 = vmax.f32 %v3968, 0.0
        %v4001 = vmax.f32 %v3969, 0.0
        %v4002 = vmax.f32 %v3970, 0.0
        %v4003 = vmax.f32 %v3971, 0.0
        %v4004 = vmax.f32 %v3972, 0.0
        %v4005 = vmax.f32 %v3973, 0.0
        %v4006 = vmax.f32 %v3974, 0.0
        %v4007 = vmax.f32 %v3975, 0.0
        %v4008 = vmax.f32 %v3976, 0.0
        %v4009 = vmax.f32 %v3977, 0.0
        %v4010 = vmax.f32 %v3978, 0.0
        %v4011 = vmax.f32 %v3979, 0.0
        %v4012 = vmax.f32 %v3980, 0.0
        %v4013 = vmax.f32 %v3981, 0.0
        %v4014 = vmax.f32 %v3982, 0.0
        %v4015 = vmax.f32 %v3983, 0.0
        %v4016 = vmax.f32 %v3984, 0.0
        %v4017 = vmax.f32 %v3985, 0.0
        %v4018 = vmax.f32 %v3986, 0.0
        %v4019 = vmax.f32 %v3987, 0.0
        %4052 = vrot.lane.b32.xlu0 %v3988, 64
        %v4053 = vpop.permute.xlu0 %4052
        %4054 = vrot.lane.b32.xlu0 %v3989, 64
        %v4055 = vpop.permute.xlu0 %4054
        %4056 = vrot.lane.b32.xlu0 %v3990, 64
        %v4057 = vpop.permute.xlu0 %4056
        %4058 = vrot.lane.b32.xlu0 %v3991, 64
        %v4059 = vpop.permute.xlu0 %4058
        %4060 = vrot.lane.b32.xlu0 %v3992, 64
        %v4061 = vpop.permute.xlu0 %4060
        %4062 = vrot.lane.b32.xlu0 %v3993, 64
        %v4063 = vpop.permute.xlu0 %4062
        %4064 = vrot.lane.b32.xlu0 %v3994, 64
        %v4065 = vpop.permute.xlu0 %4064
        %4066 = vrot.lane.b32.xlu0 %v3995, 64
        %v4067 = vpop.permute.xlu0 %4066
        %4068 = vrot.lane.b32.xlu0 %v3996, 64
        %v4069 = vpop.permute.xlu0 %4068
        %4070 = vrot.lane.b32.xlu0 %v3997, 64
        %v4071 = vpop.permute.xlu0 %4070
        %4072 = vrot.lane.b32.xlu0 %v3998, 64
        %v4073 = vpop.permute.xlu0 %4072
        %4074 = vrot.lane.b32.xlu0 %v3999, 64
        %v4075 = vpop.permute.xlu0 %4074
        %4076 = vrot.lane.b32.xlu0 %v4000, 64
        %v4077 = vpop.permute.xlu0 %4076
        %4078 = vrot.lane.b32.xlu0 %v4001, 64
        %v4079 = vpop.permute.xlu0 %4078
        %4080 = vrot.lane.b32.xlu0 %v4002, 64
        %v4081 = vpop.permute.xlu0 %4080
        %4082 = vrot.lane.b32.xlu0 %v4003, 64
        %v4083 = vpop.permute.xlu0 %4082
        %4084 = vrot.lane.b32.xlu0 %v4004, 64
        %v4085 = vpop.permute.xlu0 %4084
        %4086 = vrot.lane.b32.xlu0 %v4005, 64
        %v4087 = vpop.permute.xlu0 %4086
        %4088 = vrot.lane.b32.xlu0 %v4006, 64
        %v4089 = vpop.permute.xlu0 %4088
        %4090 = vrot.lane.b32.xlu0 %v4007, 64
        %v4091 = vpop.permute.xlu0 %4090
        %4092 = vrot.lane.b32.xlu0 %v4008, 64
        %v4093 = vpop.permute.xlu0 %4092
        %4094 = vrot.lane.b32.xlu0 %v4009, 64
        %v4095 = vpop.permute.xlu0 %4094
        %4096 = vrot.lane.b32.xlu0 %v4010, 64
        %v4097 = vpop.permute.xlu0 %4096
        %4098 = vrot.lane.b32.xlu0 %v4011, 64
        %v4099 = vpop.permute.xlu0 %4098
        %4100 = vrot.lane.b32.xlu0 %v4012, 64
        %v4101 = vpop.permute.xlu0 %4100
        %4102 = vrot.lane.b32.xlu0 %v4013, 64
        %v4103 = vpop.permute.xlu0 %4102
        %4104 = vrot.lane.b32.xlu0 %v4014, 64
        %v4105 = vpop.permute.xlu0 %4104
        %4106 = vrot.lane.b32.xlu0 %v4015, 64
        %v4107 = vpop.permute.xlu0 %4106
        %4108 = vrot.lane.b32.xlu0 %v4016, 64
        %v4109 = vpop.permute.xlu0 %4108
        %4110 = vrot.lane.b32.xlu0 %v4017, 64
        %v4111 = vpop.permute.xlu0 %4110
        %4112 = vrot.lane.b32.xlu0 %v4018, 64
        %v4113 = vpop.permute.xlu0 %4112
        %4114 = vrot.lane.b32.xlu0 %v4019, 64
        %v4115 = vpop.permute.xlu0 %4114
        %4148 = vst.msk [vmem:[%s382] sm:$0xff] %vm612, %v4053
        %4149 = vst.msk [vmem:[%s382 + $0x10] sm:$0xff] %vm612, %v4055
        %4150 = vst.msk [vmem:[%s382 + $0x20] sm:$0xff] %vm612, %v4057
        %4151 = vst.msk [vmem:[%s382 + $0x30] sm:$0xff] %vm612, %v4059
        %4152 = vst.msk [vmem:[%s382 + $0x40] sm:$0xff] %vm612, %v4061
        %4153 = vst.msk [vmem:[%s382 + $0x50] sm:$0xff] %vm612, %v4063
        %4154 = vst.msk [vmem:[%s382 + $0x60] sm:$0xff] %vm612, %v4065
        %4155 = vst.msk [vmem:[%s382 + $0x70] sm:$0xff] %vm612, %v4067
        %4156 = vst.msk [vmem:[%s382 + $0x80] sm:$0xff] %vm612, %v4069
        %4157 = vst.msk [vmem:[%s382 + $0x90] sm:$0xff] %vm612, %v4071
        %4158 = vst.msk [vmem:[%s382 + $0xa0] sm:$0xff] %vm612, %v4073
        %4159 = vst.msk [vmem:[%s382 + $0xb0] sm:$0xff] %vm612, %v4075
        %4160 = vst.msk [vmem:[%s382 + $0xc0] sm:$0xff] %vm612, %v4077
        %4161 = vst.msk [vmem:[%s382 + $0xd0] sm:$0xff] %vm612, %v4079
        %4162 = vst.msk [vmem:[%s382 + $0xe0] sm:$0xff] %vm612, %v4081
        %4163 = vst.msk [vmem:[%s382 + $0xf0] sm:$0xff] %vm612, %v4083
        %4164 = vst.msk [vmem:[%s382 + $0x100] sm:$0xff] %vm612, %v4085
        %4165 = vst.msk [vmem:[%s382 + $0x110] sm:$0xff] %vm612, %v4087
        %4166 = vst.msk [vmem:[%s382 + $0x120] sm:$0xff] %vm612, %v4089
        %4167 = vst.msk [vmem:[%s382 + $0x130] sm:$0xff] %vm612, %v4091
        %4168 = vst.msk [vmem:[%s382 + $0x140] sm:$0xff] %vm612, %v4093
        %4169 = vst.msk [vmem:[%s382 + $0x150] sm:$0xff] %vm612, %v4095
        %4170 = vst.msk [vmem:[%s382 + $0x160] sm:$0xff] %vm612, %v4097
        %4171 = vst.msk [vmem:[%s382 + $0x170] sm:$0xff] %vm612, %v4099
        %4172 = vst.msk [vmem:[%s382 + $0x180] sm:$0xff] %vm612, %v4101
        %4173 = vst.msk [vmem:[%s382 + $0x190] sm:$0xff] %vm612, %v4103
        %4174 = vst.msk [vmem:[%s382 + $0x1a0] sm:$0xff] %vm612, %v4105
        %4175 = vst.msk [vmem:[%s382 + $0x1b0] sm:$0xff] %vm612, %v4107
        %4176 = vst.msk [vmem:[%s382 + $0x1c0] sm:$0xff] %vm612, %v4109
        %4177 = vst.msk [vmem:[%s382 + $0x1d0] sm:$0xff] %vm612, %v4111
        %4178 = vst.msk [vmem:[%s382 + $0x1e0] sm:$0xff] %vm612, %v4113
        %4179 = vst.msk [vmem:[%s382 + $0x1f0] sm:$0xff] %vm612, %v4115
        %v4180 = vrot.slane %v3988, 7
        %v4181 = vrot.slane %v3989, 7
        %v4182 = vsel %vm645, %v4180, %v4181
        %v4183 = vrot.slane %v3990, 7
        %v4184 = vrot.slane %v3991, 7
        %v4185 = vsel %vm645, %v4183, %v4184
        %v4186 = vrot.slane %v3992, 7
        %v4187 = vrot.slane %v3993, 7
        %v4188 = vsel %vm645, %v4186, %v4187
        %v4189 = vrot.slane %v3994, 7
        %v4190 = vrot.slane %v3995, 7
        %v4191 = vsel %vm645, %v4189, %v4190
        %v4192 = vrot.slane %v3996, 7
        %v4193 = vrot.slane %v3997, 7
        %v4194 = vsel %vm645, %v4192, %v4193
        %v4195 = vrot.slane %v3998, 7
        %v4196 = vrot.slane %v3999, 7
        %v4197 = vsel %vm645, %v4195, %v4196
        %v4198 = vrot.slane %v4000, 7
        %v4199 = vrot.slane %v4001, 7
        %v4200 = vsel %vm645, %v4198, %v4199
        %v4201 = vrot.slane %v4002, 7
        %v4202 = vrot.slane %v4003, 7
        %v4203 = vsel %vm645, %v4201, %v4202
        %v4204 = vrot.slane %v4004, 7
        %v4205 = vrot.slane %v4005, 7
        %v4206 = vsel %vm645, %v4204, %v4205
        %v4207 = vrot.slane %v4006, 7
        %v4208 = vrot.slane %v4007, 7
        %v4209 = vsel %vm645, %v4207, %v4208
        %v4210 = vrot.slane %v4008, 7
        %v4211 = vrot.slane %v4009, 7
        %v4212 = vsel %vm645, %v4210, %v4211
        %v4213 = vrot.slane %v4010, 7
        %v4214 = vrot.slane %v4011, 7
        %v4215 = vsel %vm645, %v4213, %v4214
        %v4216 = vrot.slane %v4012, 7
        %v4217 = vrot.slane %v4013, 7
        %v4218 = vsel %vm645, %v4216, %v4217
        %v4219 = vrot.slane %v4014, 7
        %v4220 = vrot.slane %v4015, 7
        %v4221 = vsel %vm645, %v4219, %v4220
        %v4222 = vrot.slane %v4016, 7
        %v4223 = vrot.slane %v4017, 7
        %v4224 = vsel %vm645, %v4222, %v4223
        %v4225 = vrot.slane %v4018, 7
        %v4226 = vrot.slane %v4019, 7
        %v4227 = vsel %vm645, %v4225, %v4226
        %4260 = vst.msk [vmem:[%s382] sm:$0xfe] %vm726, %v4180
        %4261 = vst.msk [vmem:[%s382 + $0x10] sm:$0xff] %vm373, %v4182
        %4262 = vst.msk [vmem:[%s382 + $0x20] sm:$0xfe] %vm726, %v4183
        %4263 = vst.msk [vmem:[%s382 + $0x30] sm:$0xff] %vm373, %v4185
        %4264 = vst.msk [vmem:[%s382 + $0x40] sm:$0xfe] %vm726, %v4186
        %4265 = vst.msk [vmem:[%s382 + $0x50] sm:$0xff] %vm373, %v4188
        %4266 = vst.msk [vmem:[%s382 + $0x60] sm:$0xfe] %vm726, %v4189
        %4267 = vst.msk [vmem:[%s382 + $0x70] sm:$0xff] %vm373, %v4191
        %4268 = vst.msk [vmem:[%s382 + $0x80] sm:$0xfe] %vm726, %v4192
        %4269 = vst.msk [vmem:[%s382 + $0x90] sm:$0xff] %vm373, %v4194
        %4270 = vst.msk [vmem:[%s382 + $0xa0] sm:$0xfe] %vm726, %v4195
        %4271 = vst.msk [vmem:[%s382 + $0xb0] sm:$0xff] %vm373, %v4197
        %4272 = vst.msk [vmem:[%s382 + $0xc0] sm:$0xfe] %vm726, %v4198
        %4273 = vst.msk [vmem:[%s382 + $0xd0] sm:$0xff] %vm373, %v4200
        %4274 = vst.msk [vmem:[%s382 + $0xe0] sm:$0xfe] %vm726, %v4201
        %4275 = vst.msk [vmem:[%s382 + $0xf0] sm:$0xff] %vm373, %v4203
        %4276 = vst.msk [vmem:[%s382 + $0x100] sm:$0xfe] %vm726, %v4204
        %4277 = vst.msk [vmem:[%s382 + $0x110] sm:$0xff] %vm373, %v4206
        %4278 = vst.msk [vmem:[%s382 + $0x120] sm:$0xfe] %vm726, %v4207
        %4279 = vst.msk [vmem:[%s382 + $0x130] sm:$0xff] %vm373, %v4209
        %4280 = vst.msk [vmem:[%s382 + $0x140] sm:$0xfe] %vm726, %v4210
        %4281 = vst.msk [vmem:[%s382 + $0x150] sm:$0xff] %vm373, %v4212
        %4282 = vst.msk [vmem:[%s382 + $0x160] sm:$0xfe] %vm726, %v4213
        %4283 = vst.msk [vmem:[%s382 + $0x170] sm:$0xff] %vm373, %v4215
        %4284 = vst.msk [vmem:[%s382 + $0x180] sm:$0xfe] %vm726, %v4216
        %4285 = vst.msk [vmem:[%s382 + $0x190] sm:$0xff] %vm373, %v4218
        %4286 = vst.msk [vmem:[%s382 + $0x1a0] sm:$0xfe] %vm726, %v4219
        %4287 = vst.msk [vmem:[%s382 + $0x1b0] sm:$0xff] %vm373, %v4221
        %4288 = vst.msk [vmem:[%s382 + $0x1c0] sm:$0xfe] %vm726, %v4222
        %4289 = vst.msk [vmem:[%s382 + $0x1d0] sm:$0xff] %vm373, %v4224
        %4290 = vst.msk [vmem:[%s382 + $0x1e0] sm:$0xfe] %vm726, %v4225
        %4291 = vst.msk [vmem:[%s382 + $0x1f0] sm:$0xff] %vm373, %v4227
        %v4292 = vrot.slane %v3988, 1
        %v4293 = vrot.slane %v3989, 1
        %v4294 = vsel %vm759, %v4292, %v4293
        %v4295 = vrot.slane %v3990, 1
        %v4296 = vrot.slane %v3991, 1
        %v4297 = vsel %vm759, %v4295, %v4296
        %v4298 = vrot.slane %v3992, 1
        %v4299 = vrot.slane %v3993, 1
        %v4300 = vsel %vm759, %v4298, %v4299
        %v4301 = vrot.slane %v3994, 1
        %v4302 = vrot.slane %v3995, 1
        %v4303 = vsel %vm759, %v4301, %v4302
        %v4304 = vrot.slane %v3996, 1
        %v4305 = vrot.slane %v3997, 1
        %v4306 = vsel %vm759, %v4304, %v4305
        %v4307 = vrot.slane %v3998, 1
        %v4308 = vrot.slane %v3999, 1
        %v4309 = vsel %vm759, %v4307, %v4308
        %v4310 = vrot.slane %v4000, 1
        %v4311 = vrot.slane %v4001, 1
        %v4312 = vsel %vm759, %v4310, %v4311
        %v4313 = vrot.slane %v4002, 1
        %v4314 = vrot.slane %v4003, 1
        %v4315 = vsel %vm759, %v4313, %v4314
        %v4316 = vrot.slane %v4004, 1
        %v4317 = vrot.slane %v4005, 1
        %v4318 = vsel %vm759, %v4316, %v4317
        %v4319 = vrot.slane %v4006, 1
        %v4320 = vrot.slane %v4007, 1
        %v4321 = vsel %vm759, %v4319, %v4320
        %v4322 = vrot.slane %v4008, 1
        %v4323 = vrot.slane %v4009, 1
        %v4324 = vsel %vm759, %v4322, %v4323
        %v4325 = vrot.slane %v4010, 1
        %v4326 = vrot.slane %v4011, 1
        %v4327 = vsel %vm759, %v4325, %v4326
        %v4328 = vrot.slane %v4012, 1
        %v4329 = vrot.slane %v4013, 1
        %v4330 = vsel %vm759, %v4328, %v4329
        %v4331 = vrot.slane %v4014, 1
        %v4332 = vrot.slane %v4015, 1
        %v4333 = vsel %vm759, %v4331, %v4332
        %v4334 = vrot.slane %v4016, 1
        %v4335 = vrot.slane %v4017, 1
        %v4336 = vsel %vm759, %v4334, %v4335
        %v4337 = vrot.slane %v4018, 1
        %v4338 = vrot.slane %v4019, 1
        %v4339 = vsel %vm759, %v4337, %v4338
        %4372 = vst.msk [vmem:[%s382 + $0x8] sm:$0xff] %vm373, %v4294
        %4373 = vst.msk [vmem:[%s382 + $0x18] sm:$0x7f] %vm841, %v4293
        %4374 = vst.msk [vmem:[%s382 + $0x28] sm:$0xff] %vm373, %v4297
        %4375 = vst.msk [vmem:[%s382 + $0x38] sm:$0x7f] %vm841, %v4296
        %4376 = vst.msk [vmem:[%s382 + $0x48] sm:$0xff] %vm373, %v4300
        %4377 = vst.msk [vmem:[%s382 + $0x58] sm:$0x7f] %vm841, %v4299
        %4378 = vst.msk [vmem:[%s382 + $0x68] sm:$0xff] %vm373, %v4303
        %4379 = vst.msk [vmem:[%s382 + $0x78] sm:$0x7f] %vm841, %v4302
        %4380 = vst.msk [vmem:[%s382 + $0x88] sm:$0xff] %vm373, %v4306
        %4381 = vst.msk [vmem:[%s382 + $0x98] sm:$0x7f] %vm841, %v4305
        %4382 = vst.msk [vmem:[%s382 + $0xa8] sm:$0xff] %vm373, %v4309
        %4383 = vst.msk [vmem:[%s382 + $0xb8] sm:$0x7f] %vm841, %v4308
        %4384 = vst.msk [vmem:[%s382 + $0xc8] sm:$0xff] %vm373, %v4312
        %4385 = vst.msk [vmem:[%s382 + $0xd8] sm:$0x7f] %vm841, %v4311
        %4386 = vst.msk [vmem:[%s382 + $0xe8] sm:$0xff] %vm373, %v4315
        %4387 = vst.msk [vmem:[%s382 + $0xf8] sm:$0x7f] %vm841, %v4314
        %4388 = vst.msk [vmem:[%s382 + $0x108] sm:$0xff] %vm373, %v4318
        %4389 = vst.msk [vmem:[%s382 + $0x118] sm:$0x7f] %vm841, %v4317
        %4390 = vst.msk [vmem:[%s382 + $0x128] sm:$0xff] %vm373, %v4321
        %4391 = vst.msk [vmem:[%s382 + $0x138] sm:$0x7f] %vm841, %v4320
        %4392 = vst.msk [vmem:[%s382 + $0x148] sm:$0xff] %vm373, %v4324
        %4393 = vst.msk [vmem:[%s382 + $0x158] sm:$0x7f] %vm841, %v4323
        %4394 = vst.msk [vmem:[%s382 + $0x168] sm:$0xff] %vm373, %v4327
        %4395 = vst.msk [vmem:[%s382 + $0x178] sm:$0x7f] %vm841, %v4326
        %4396 = vst.msk [vmem:[%s382 + $0x188] sm:$0xff] %vm373, %v4330
        %4397 = vst.msk [vmem:[%s382 + $0x198] sm:$0x7f] %vm841, %v4329
        %4398 = vst.msk [vmem:[%s382 + $0x1a8] sm:$0xff] %vm373, %v4333
        %4399 = vst.msk [vmem:[%s382 + $0x1b8] sm:$0x7f] %vm841, %v4332
        %4400 = vst.msk [vmem:[%s382 + $0x1c8] sm:$0xff] %vm373, %v4336
        %4401 = vst.msk [vmem:[%s382 + $0x1d8] sm:$0x7f] %vm841, %v4335
        %4402 = vst.msk [vmem:[%s382 + $0x1e8] sm:$0xff] %vm373, %v4339
        %4403 = vst.msk [vmem:[%s382 + $0x1f8] sm:$0x7f] %vm841, %v4338
        %v4404 = vld [vmem:[#allocation2] sm:$0xff]
        %v4405 = vld [vmem:[#allocation2 + $0x8] sm:$0xff]
        %v4406 = vld [vmem:[#allocation2 + $0x10] sm:$0xff]
        %v4407 = vld [vmem:[#allocation2 + $0x18] sm:$0xff]
        %v4408 = vld [vmem:[#allocation2 + $0x20] sm:$0xff]
        %v4409 = vld [vmem:[#allocation2 + $0x28] sm:$0xff]
        %v4410 = vld [vmem:[#allocation2 + $0x30] sm:$0xff]
        %v4411 = vld [vmem:[#allocation2 + $0x38] sm:$0xff]
        %v4412 = vld [vmem:[#allocation2 + $0x40] sm:$0xff]
        %v4413 = vld [vmem:[#allocation2 + $0x48] sm:$0xff]
        %v4414 = vld [vmem:[#allocation2 + $0x50] sm:$0xff]
        %v4415 = vld [vmem:[#allocation2 + $0x58] sm:$0xff]
        %v4416 = vld [vmem:[#allocation2 + $0x60] sm:$0xff]
        %v4417 = vld [vmem:[#allocation2 + $0x68] sm:$0xff]
        %v4418 = vld [vmem:[#allocation2 + $0x70] sm:$0xff]
        %v4419 = vld [vmem:[#allocation2 + $0x78] sm:$0xff]
        %v4420 = vld [vmem:[#allocation2 + $0x80] sm:$0xff]
        %v4421 = vld [vmem:[#allocation2 + $0x88] sm:$0xff]
        %v4422 = vld [vmem:[#allocation2 + $0x90] sm:$0xff]
        %v4423 = vld [vmem:[#allocation2 + $0x98] sm:$0xff]
        %v4424 = vld [vmem:[#allocation2 + $0xa0] sm:$0xff]
        %v4425 = vld [vmem:[#allocation2 + $0xa8] sm:$0xff]
        %v4426 = vld [vmem:[#allocation2 + $0xb0] sm:$0xff]
        %v4427 = vld [vmem:[#allocation2 + $0xb8] sm:$0xff]
        %v4428 = vld [vmem:[#allocation2 + $0xc0] sm:$0xff]
        %v4429 = vld [vmem:[#allocation2 + $0xc8] sm:$0xff]
        %v4430 = vld [vmem:[#allocation2 + $0xd0] sm:$0xff]
        %v4431 = vld [vmem:[#allocation2 + $0xd8] sm:$0xff]
        %v4432 = vld [vmem:[#allocation2 + $0xe0] sm:$0xff]
        %v4433 = vld [vmem:[#allocation2 + $0xe8] sm:$0xff]
        %v4434 = vld [vmem:[#allocation2 + $0xf0] sm:$0xff]
        %v4435 = vld [vmem:[#allocation2 + $0xf8] sm:$0xff]
        %v4436 = vld [vmem:[#allocation2 + $0x100] sm:$0xff]
        %v4437 = vld [vmem:[#allocation2 + $0x108] sm:$0xff]
        %v4438 = vld [vmem:[#allocation2 + $0x110] sm:$0xff]
        %v4439 = vld [vmem:[#allocation2 + $0x118] sm:$0xff]
        %v4440 = vld [vmem:[#allocation2 + $0x120] sm:$0xff]
        %v4441 = vld [vmem:[#allocation2 + $0x128] sm:$0xff]
        %v4442 = vld [vmem:[#allocation2 + $0x130] sm:$0xff]
        %v4443 = vld [vmem:[#allocation2 + $0x138] sm:$0xff]
        %v4444 = vld [vmem:[#allocation2 + $0x140] sm:$0xff]
        %v4445 = vld [vmem:[#allocation2 + $0x148] sm:$0xff]
        %v4446 = vld [vmem:[#allocation2 + $0x150] sm:$0xff]
        %v4447 = vld [vmem:[#allocation2 + $0x158] sm:$0xff]
        %v4448 = vld [vmem:[#allocation2 + $0x160] sm:$0xff]
        %v4449 = vld [vmem:[#allocation2 + $0x168] sm:$0xff]
        %v4450 = vld [vmem:[#allocation2 + $0x170] sm:$0xff]
        %v4451 = vld [vmem:[#allocation2 + $0x178] sm:$0xff]
        %v4452 = vld [vmem:[#allocation2 + $0x180] sm:$0xff]
        %v4453 = vld [vmem:[#allocation2 + $0x188] sm:$0xff]
        %v4454 = vld [vmem:[#allocation2 + $0x190] sm:$0xff]
        %v4455 = vld [vmem:[#allocation2 + $0x198] sm:$0xff]
        %v4456 = vld [vmem:[#allocation2 + $0x1a0] sm:$0xff]
        %v4457 = vld [vmem:[#allocation2 + $0x1a8] sm:$0xff]
        %v4458 = vld [vmem:[#allocation2 + $0x1b0] sm:$0xff]
        %v4459 = vld [vmem:[#allocation2 + $0x1b8] sm:$0xff]
        %v4460 = vld [vmem:[#allocation2 + $0x1c0] sm:$0xff]
        %v4461 = vld [vmem:[#allocation2 + $0x1c8] sm:$0xff]
        %v4462 = vld [vmem:[#allocation2 + $0x1d0] sm:$0xff]
        %v4463 = vld [vmem:[#allocation2 + $0x1d8] sm:$0xff]
        %v4464 = vld [vmem:[#allocation2 + $0x1e0] sm:$0xff]
        %v4465 = vld [vmem:[#allocation2 + $0x1e8] sm:$0xff]
        %v4466 = vld [vmem:[#allocation2 + $0x1f0] sm:$0xff]
        %v4467 = vld [vmem:[#allocation2 + $0x1f8] sm:$0xff]
        %v4468 = vld [vmem:[%s6] sm:$0xff]
        %v4469 = vld [vmem:[%s6 + $0x8] sm:$0xff]
        %v4470 = vld [vmem:[%s6 + $0x10] sm:$0xff]
        %v4471 = vld [vmem:[%s6 + $0x18] sm:$0xff]
        %v4472 = vld [vmem:[%s6 + $0x20] sm:$0xff]
        %v4473 = vld [vmem:[%s6 + $0x28] sm:$0xff]
        %v4474 = vld [vmem:[%s6 + $0x30] sm:$0xff]
        %v4475 = vld [vmem:[%s6 + $0x38] sm:$0xff]
        %v4476 = vld [vmem:[%s6 + $0x40] sm:$0xff]
        %v4477 = vld [vmem:[%s6 + $0x48] sm:$0xff]
        %v4478 = vld [vmem:[%s6 + $0x50] sm:$0xff]
        %v4479 = vld [vmem:[%s6 + $0x58] sm:$0xff]
        %v4480 = vld [vmem:[%s6 + $0x60] sm:$0xff]
        %v4481 = vld [vmem:[%s6 + $0x68] sm:$0xff]
        %v4482 = vld [vmem:[%s6 + $0x70] sm:$0xff]
        %v4483 = vld [vmem:[%s6 + $0x78] sm:$0xff]
        %v4484 = vld [vmem:[%s6 + $0x80] sm:$0xff]
        %v4485 = vld [vmem:[%s6 + $0x88] sm:$0xff]
        %v4486 = vld [vmem:[%s6 + $0x90] sm:$0xff]
        %v4487 = vld [vmem:[%s6 + $0x98] sm:$0xff]
        %v4488 = vld [vmem:[%s6 + $0xa0] sm:$0xff]
        %v4489 = vld [vmem:[%s6 + $0xa8] sm:$0xff]
        %v4490 = vld [vmem:[%s6 + $0xb0] sm:$0xff]
        %v4491 = vld [vmem:[%s6 + $0xb8] sm:$0xff]
        %v4492 = vld [vmem:[%s382] sm:$0xff]
        %v4493 = vld [vmem:[%s382 + $0x8] sm:$0xff]
        %v4494 = vld [vmem:[%s382 + $0x10] sm:$0xff]
        %v4495 = vld [vmem:[%s382 + $0x18] sm:$0xff]
        %v4496 = vld [vmem:[%s382 + $0x20] sm:$0xff]
        %v4497 = vld [vmem:[%s382 + $0x28] sm:$0xff]
        %v4498 = vld [vmem:[%s382 + $0x30] sm:$0xff]
        %v4499 = vld [vmem:[%s382 + $0x38] sm:$0xff]
        %v4500 = vld [vmem:[%s382 + $0x40] sm:$0xff]
        %v4501 = vld [vmem:[%s382 + $0x48] sm:$0xff]
        %v4502 = vld [vmem:[%s382 + $0x50] sm:$0xff]
        %v4503 = vld [vmem:[%s382 + $0x58] sm:$0xff]
        %v4504 = vld [vmem:[%s382 + $0x60] sm:$0xff]
        %v4505 = vld [vmem:[%s382 + $0x68] sm:$0xff]
        %v4506 = vld [vmem:[%s382 + $0x70] sm:$0xff]
        %v4507 = vld [vmem:[%s382 + $0x78] sm:$0xff]
        %v4508 = vld [vmem:[%s382 + $0x80] sm:$0xff]
        %v4509 = vld [vmem:[%s382 + $0x88] sm:$0xff]
        %v4510 = vld [vmem:[%s382 + $0x90] sm:$0xff]
        %v4511 = vld [vmem:[%s382 + $0x98] sm:$0xff]
        %v4512 = vld [vmem:[%s382 + $0xa0] sm:$0xff]
        %v4513 = vld [vmem:[%s382 + $0xa8] sm:$0xff]
        %v4514 = vld [vmem:[%s382 + $0xb0] sm:$0xff]
        %v4515 = vld [vmem:[%s382 + $0xb8] sm:$0xff]
        %v4516 = vld [vmem:[%s382 + $0xc0] sm:$0xff]
        %v4517 = vld [vmem:[%s382 + $0xc8] sm:$0xff]
        %v4518 = vld [vmem:[%s382 + $0xd0] sm:$0xff]
        %v4519 = vld [vmem:[%s382 + $0xd8] sm:$0xff]
        %v4520 = vld [vmem:[%s382 + $0xe0] sm:$0xff]
        %v4521 = vld [vmem:[%s382 + $0xe8] sm:$0xff]
        %v4522 = vld [vmem:[%s382 + $0xf0] sm:$0xff]
        %v4523 = vld [vmem:[%s382 + $0xf8] sm:$0xff]
        %v4524 = vld [vmem:[%s382 + $0x100] sm:$0xff]
        %v4525 = vld [vmem:[%s382 + $0x108] sm:$0xff]
        %v4526 = vld [vmem:[%s382 + $0x110] sm:$0xff]
        %v4527 = vld [vmem:[%s382 + $0x118] sm:$0xff]
        %v4528 = vld [vmem:[%s382 + $0x120] sm:$0xff]
        %v4529 = vld [vmem:[%s382 + $0x128] sm:$0xff]
        %v4530 = vld [vmem:[%s382 + $0x130] sm:$0xff]
        %v4531 = vld [vmem:[%s382 + $0x138] sm:$0xff]
        %v4532 = vld [vmem:[%s382 + $0x140] sm:$0xff]
        %v4533 = vld [vmem:[%s382 + $0x148] sm:$0xff]
        %v4534 = vld [vmem:[%s382 + $0x150] sm:$0xff]
        %v4535 = vld [vmem:[%s382 + $0x158] sm:$0xff]
        %v4536 = vld [vmem:[%s382 + $0x160] sm:$0xff]
        %v4537 = vld [vmem:[%s382 + $0x168] sm:$0xff]
        %v4538 = vld [vmem:[%s382 + $0x170] sm:$0xff]
        %v4539 = vld [vmem:[%s382 + $0x178] sm:$0xff]
        %v4540 = vld [vmem:[%s382 + $0x180] sm:$0xff]
        %v4541 = vld [vmem:[%s382 + $0x188] sm:$0xff]
        %v4542 = vld [vmem:[%s382 + $0x190] sm:$0xff]
        %v4543 = vld [vmem:[%s382 + $0x198] sm:$0xff]
        %v4544 = vld [vmem:[%s382 + $0x1a0] sm:$0xff]
        %v4545 = vld [vmem:[%s382 + $0x1a8] sm:$0xff]
        %v4546 = vld [vmem:[%s382 + $0x1b0] sm:$0xff]
        %v4547 = vld [vmem:[%s382 + $0x1b8] sm:$0xff]
        %v4548 = vld [vmem:[%s382 + $0x1c0] sm:$0xff]
        %v4549 = vld [vmem:[%s382 + $0x1c8] sm:$0xff]
        %v4550 = vld [vmem:[%s382 + $0x1d0] sm:$0xff]
        %v4551 = vld [vmem:[%s382 + $0x1d8] sm:$0xff]
        %v4552 = vld [vmem:[%s382 + $0x1e0] sm:$0xff]
        %v4553 = vld [vmem:[%s382 + $0x1e8] sm:$0xff]
        %v4554 = vld [vmem:[%s382 + $0x1f0] sm:$0xff]
        %v4555 = vld [vmem:[%s382 + $0x1f8] sm:$0xff]
        %s4556 = scalar_lea.vmem %s6, 192
        %v4557 = vld [vmem:[%s4556] sm:$0xff]
        %v4558 = vld [vmem:[%s4556 + $0x8] sm:$0xff]
        %v4559 = vld [vmem:[%s4556 + $0x10] sm:$0xff]
        %v4560 = vld [vmem:[%s4556 + $0x18] sm:$0xff]
        %v4561 = vld [vmem:[%s4556 + $0x20] sm:$0xff]
        %v4562 = vld [vmem:[%s4556 + $0x28] sm:$0xff]
        %v4563 = vld [vmem:[%s4556 + $0x30] sm:$0xff]
        %v4564 = vld [vmem:[%s4556 + $0x38] sm:$0xff]
        %v4565 = vld [vmem:[%s4556 + $0x40] sm:$0xff]
        %v4566 = vld [vmem:[%s4556 + $0x48] sm:$0xff]
        %v4567 = vld [vmem:[%s4556 + $0x50] sm:$0xff]
        %v4568 = vld [vmem:[%s4556 + $0x58] sm:$0xff]
        %v4569 = vld [vmem:[%s4556 + $0x60] sm:$0xff]
        %v4570 = vld [vmem:[%s4556 + $0x68] sm:$0xff]
        %v4571 = vld [vmem:[%s4556 + $0x70] sm:$0xff]
        %v4572 = vld [vmem:[%s4556 + $0x78] sm:$0xff]
        %v4573 = vld [vmem:[%s4556 + $0x80] sm:$0xff]
        %v4574 = vld [vmem:[%s4556 + $0x88] sm:$0xff]
        %v4575 = vld [vmem:[%s4556 + $0x90] sm:$0xff]
        %v4576 = vld [vmem:[%s4556 + $0x98] sm:$0xff]
        %v4577 = vld [vmem:[%s4556 + $0xa0] sm:$0xff]
        %v4578 = vld [vmem:[%s4556 + $0xa8] sm:$0xff]
        %v4579 = vld [vmem:[%s4556 + $0xb0] sm:$0xff]
        %v4580 = vld [vmem:[%s4556 + $0xb8] sm:$0xff]
        %v4582 = vsel %vm373, %v4493, 0
        %v4585 = vsel %vm373, %v4495, 0
        %v4588 = vsel %vm373, %v4497, 0
        %v4591 = vsel %vm373, %v4499, 0
        %v4594 = vsel %vm373, %v4501, 0
        %v4597 = vsel %vm373, %v4503, 0
        %v4600 = vsel %vm373, %v4505, 0
        %v4603 = vsel %vm373, %v4507, 0
        %v4606 = vsel %vm373, %v4509, 0
        %v4609 = vsel %vm373, %v4511, 0
        %v4612 = vsel %vm373, %v4513, 0
        %v4615 = vsel %vm373, %v4515, 0
        %v4618 = vsel %vm373, %v4517, 0
        %v4621 = vsel %vm373, %v4519, 0
        %v4624 = vsel %vm373, %v4521, 0
        %v4627 = vsel %vm373, %v4523, 0
        %v4630 = vsel %vm373, %v4525, 0
        %v4633 = vsel %vm373, %v4527, 0
        %v4636 = vsel %vm373, %v4529, 0
        %v4639 = vsel %vm373, %v4531, 0
        %v4642 = vsel %vm373, %v4533, 0
        %v4645 = vsel %vm373, %v4535, 0
        %v4648 = vsel %vm373, %v4537, 0
        %v4651 = vsel %vm373, %v4539, 0
        %v4654 = vsel %vm373, %v4541, 0
        %v4657 = vsel %vm373, %v4543, 0
        %v4660 = vsel %vm373, %v4545, 0
        %v4663 = vsel %vm373, %v4547, 0
        %v4666 = vsel %vm373, %v4549, 0
        %v4669 = vsel %vm373, %v4551, 0
        %v4672 = vsel %vm373, %v4553, 0
        %v4675 = vsel %vm373, %v4555, 0
        %4677 = vmatprep.subr.mxu0 0.0
        %4678 = vmatpush1.msra.mxu0 %v4557
        %4679 = vmatprep.subr.mxu0 0.0
        %4680 = vmatpush1.msra.mxu0 %v4558
        %4681 = vmatprep.subr.mxu0 0.0
        %4682 = vmatpush1.msra.mxu0 %v4559
        %4683 = vmatprep.subr.mxu0 0.0
        %4684 = vmatpush1.msra.mxu0 %v4560
        %4685 = vmatprep.subr.mxu0 0.0
        %4686 = vmatpush1.msra.mxu0 %v4561
        %4687 = vmatprep.subr.mxu0 0.0
        %4688 = vmatpush1.msra.mxu0 %v4562
        %4689 = vmatprep.subr.mxu0 0.0
        %4690 = vmatpush1.msra.mxu0 %v4563
        %4691 = vmatprep.subr.mxu0 0.0
        %4692 = vmatpush1.msra.mxu0 %v4564
        %4693 = vmatprep.subr.mxu0 0.0
        %4694 = vmatpush1.msra.mxu0 %v4565
        %4695 = vmatprep.subr.mxu0 0.0
        %4696 = vmatpush1.msra.mxu0 %v4566
        %4697 = vmatprep.subr.mxu0 0.0
        %4698 = vmatpush1.msra.mxu0 %v4567
        %4699 = vmatprep.subr.mxu0 0.0
        %4700 = vmatpush1.msra.mxu0 %v4568
        %4701 = vmatprep.subr.mxu0 0.0
        %4702 = vmatpush1.msra.mxu0 %v4569
        %4703 = vmatprep.subr.mxu0 0.0
        %4704 = vmatpush1.msra.mxu0 %v4570
        %4705 = vmatprep.subr.mxu0 0.0
        %4706 = vmatpush1.msra.mxu0 %v4571
        %4707 = vmatprep.subr.mxu0 0.0
        %4708 = vmatpush1.msra.mxu0 %v4572
        %4709 = vmatprep.subr.mxu0 0.0
        %4710 = vmatpush1.msra.mxu0 %v4573
        %4711 = vmatprep.subr.mxu0 0.0
        %4712 = vmatpush1.msra.mxu0 %v4574
        %4713 = vmatprep.subr.mxu0 0.0
        %4714 = vmatpush1.msra.mxu0 %v4575
        %4715 = vmatprep.subr.mxu0 0.0
        %4716 = vmatpush1.msra.mxu0 %v4576
        %4717 = vmatprep.subr.mxu0 0.0
        %4718 = vmatpush1.msra.mxu0 %v4577
        %4719 = vmatprep.subr.mxu0 0.0
        %4720 = vmatpush1.msra.mxu0 %v4578
        %4721 = vmatprep.subr.mxu0 0.0
        %4722 = vmatpush1.msra.mxu0 %v4579
        %4723 = vmatprep.subr.mxu0 0.0
        %4724 = vmatpush1.msra.mxu0 %v4580
        %4725 = vmatprep.subr.mxu0 0.0
        %4726 = vmatpush1.msra.mxu0 0.0
        %4727 = vmatprep.subr.mxu0 0.0
        %4728 = vmatpush1.msra.mxu0 0.0
        %4729 = vmatprep.subr.mxu0 0.0
        %4730 = vmatpush1.msra.mxu0 0.0
        %4731 = vmatprep.subr.mxu0 0.0
        %4732 = vmatpush1.msra.mxu0 0.0
        %4733 = vmatprep.subr.mxu0 0.0
        %4734 = vmatpush1.msra.mxu0 0.0
        %4735 = vmatprep.subr.mxu0 0.0
        %4736 = vmatpush1.msra.mxu0 0.0
        %4737 = vmatprep.subr.mxu0 0.0
        %4738 = vmatpush1.msra.mxu0 0.0
        %4739 = vmatprep.subr.mxu0 0.0
        %4740 = vmatpush1.msra.mxu0 0.0
        %4741 = vmatprep.mubr.f32.mxu0 %v4582
        %4742 = vmatmul.mubr.f32.gmra.mrb[0].mxu0 %v4492
        %v4743 = vpop.f32.mrb[0].mxu0
        %v4744 = vadd.f32 0.0, %v4743
        %v4745 = vpop.f32.mrb[0].mxu0
        %4746 = vmatprep.mubr.f32.mxu0 %v4585
        %4747 = vmatmul.mubr.f32.gmra.mrb[0].mxu0 %v4494
        %v4748 = vpop.f32.mrb[0].mxu0
        %v4749 = vadd.f32 0.0, %v4748
        %v4750 = vpop.f32.mrb[0].mxu0
        %4751 = vmatprep.mubr.f32.mxu0 %v4588
        %4752 = vmatmul.mubr.f32.gmra.mrb[0].mxu0 %v4496
        %v4753 = vpop.f32.mrb[0].mxu0
        %v4754 = vadd.f32 0.0, %v4753
        %v4755 = vpop.f32.mrb[0].mxu0
        %4756 = vmatprep.mubr.f32.mxu0 %v4591
        %4757 = vmatmul.mubr.f32.gmra.mrb[0].mxu0 %v4498
        %v4758 = vpop.f32.mrb[0].mxu0
        %v4759 = vadd.f32 0.0, %v4758
        %v4760 = vpop.f32.mrb[0].mxu0
        %4761 = vmatprep.mubr.f32.mxu0 %v4594
        %4762 = vmatmul.mubr.f32.gmra.mrb[0].mxu0 %v4500
        %v4763 = vpop.f32.mrb[0].mxu0
        %v4764 = vadd.f32 0.0, %v4763
        %v4765 = vpop.f32.mrb[0].mxu0
        %4766 = vmatprep.mubr.f32.mxu0 %v4597
        %4767 = vmatmul.mubr.f32.gmra.mrb[0].mxu0 %v4502
        %v4768 = vpop.f32.mrb[0].mxu0
        %v4769 = vadd.f32 0.0, %v4768
        %v4770 = vpop.f32.mrb[0].mxu0
        %4771 = vmatprep.mubr.f32.mxu0 %v4600
        %4772 = vmatmul.mubr.f32.gmra.mrb[0].mxu0 %v4504
        %v4773 = vpop.f32.mrb[0].mxu0
        %v4774 = vadd.f32 0.0, %v4773
        %v4775 = vpop.f32.mrb[0].mxu0
        %4776 = vmatprep.mubr.f32.mxu0 %v4603
        %4777 = vmatmul.mubr.f32.gmra.mrb[0].mxu0 %v4506
        %v4778 = vpop.f32.mrb[0].mxu0
        %v4779 = vadd.f32 0.0, %v4778
        %v4780 = vpop.f32.mrb[0].mxu0
        %4781 = vmatprep.mubr.f32.mxu0 %v4606
        %4782 = vmatmul.mubr.f32.gmra.mrb[0].mxu0 %v4508
        %v4783 = vpop.f32.mrb[0].mxu0
        %v4784 = vadd.f32 0.0, %v4783
        %v4785 = vpop.f32.mrb[0].mxu0
        %4786 = vmatprep.mubr.f32.mxu0 %v4609
        %4787 = vmatmul.mubr.f32.gmra.mrb[0].mxu0 %v4510
        %v4788 = vpop.f32.mrb[0].mxu0
        %v4789 = vadd.f32 0.0, %v4788
        %v4790 = vpop.f32.mrb[0].mxu0
        %4791 = vmatprep.mubr.f32.mxu0 %v4612
        %4792 = vmatmul.mubr.f32.gmra.mrb[0].mxu0 %v4512
        %v4793 = vpop.f32.mrb[0].mxu0
        %v4794 = vadd.f32 0.0, %v4793
        %v4795 = vpop.f32.mrb[0].mxu0
        %4796 = vmatprep.mubr.f32.mxu0 %v4615
        %4797 = vmatmul.mubr.f32.gmra.mrb[0].mxu0 %v4514
        %v4798 = vpop.f32.mrb[0].mxu0
        %v4799 = vadd.f32 0.0, %v4798
        %v4800 = vpop.f32.mrb[0].mxu0
        %4801 = vmatprep.mubr.f32.mxu0 %v4618
        %4802 = vmatmul.mubr.f32.gmra.mrb[0].mxu0 %v4516
        %v4803 = vpop.f32.mrb[0].mxu0
        %v4804 = vadd.f32 0.0, %v4803
        %v4805 = vpop.f32.mrb[0].mxu0
        %4806 = vmatprep.mubr.f32.mxu0 %v4621
        %4807 = vmatmul.mubr.f32.gmra.mrb[0].mxu0 %v4518
        %v4808 = vpop.f32.mrb[0].mxu0
        %v4809 = vadd.f32 0.0, %v4808
        %v4810 = vpop.f32.mrb[0].mxu0
        %4811 = vmatprep.mubr.f32.mxu0 %v4624
        %4812 = vmatmul.mubr.f32.gmra.mrb[0].mxu0 %v4520
        %v4813 = vpop.f32.mrb[0].mxu0
        %v4814 = vadd.f32 0.0, %v4813
        %v4815 = vpop.f32.mrb[0].mxu0
        %4816 = vmatprep.mubr.f32.mxu0 %v4627
        %4817 = vmatmul.mubr.f32.gmra.mrb[0].mxu0 %v4522
        %v4818 = vpop.f32.mrb[0].mxu0
        %v4819 = vadd.f32 0.0, %v4818
        %v4820 = vpop.f32.mrb[0].mxu0
        %4821 = vmatprep.mubr.f32.mxu0 %v4630
        %4822 = vmatmul.mubr.f32.gmra.mrb[0].mxu0 %v4524
        %v4823 = vpop.f32.mrb[0].mxu0
        %v4824 = vadd.f32 0.0, %v4823
        %v4825 = vpop.f32.mrb[0].mxu0
        %4826 = vmatprep.mubr.f32.mxu0 %v4633
        %4827 = vmatmul.mubr.f32.gmra.mrb[0].mxu0 %v4526
        %v4828 = vpop.f32.mrb[0].mxu0
        %v4829 = vadd.f32 0.0, %v4828
        %v4830 = vpop.f32.mrb[0].mxu0
        %4831 = vmatprep.mubr.f32.mxu0 %v4636
        %4832 = vmatmul.mubr.f32.gmra.mrb[0].mxu0 %v4528
        %v4833 = vpop.f32.mrb[0].mxu0
        %v4834 = vadd.f32 0.0, %v4833
        %v4835 = vpop.f32.mrb[0].mxu0
        %4836 = vmatprep.mubr.f32.mxu0 %v4639
        %4837 = vmatmul.mubr.f32.gmra.mrb[0].mxu0 %v4530
        %v4838 = vpop.f32.mrb[0].mxu0
        %v4839 = vadd.f32 0.0, %v4838
        %v4840 = vpop.f32.mrb[0].mxu0
        %4841 = vmatprep.mubr.f32.mxu0 %v4642
        %4842 = vmatmul.mubr.f32.gmra.mrb[0].mxu0 %v4532
        %v4843 = vpop.f32.mrb[0].mxu0
        %v4844 = vadd.f32 0.0, %v4843
        %v4845 = vpop.f32.mrb[0].mxu0
        %4846 = vmatprep.mubr.f32.mxu0 %v4645
        %4847 = vmatmul.mubr.f32.gmra.mrb[0].mxu0 %v4534
        %v4848 = vpop.f32.mrb[0].mxu0
        %v4849 = vadd.f32 0.0, %v4848
        %v4850 = vpop.f32.mrb[0].mxu0
        %4851 = vmatprep.mubr.f32.mxu0 %v4648
        %4852 = vmatmul.mubr.f32.gmra.mrb[0].mxu0 %v4536
        %v4853 = vpop.f32.mrb[0].mxu0
        %v4854 = vadd.f32 0.0, %v4853
        %v4855 = vpop.f32.mrb[0].mxu0
        %4856 = vmatprep.mubr.f32.mxu0 %v4651
        %4857 = vmatmul.mubr.f32.gmra.mrb[0].mxu0 %v4538
        %v4858 = vpop.f32.mrb[0].mxu0
        %v4859 = vadd.f32 0.0, %v4858
        %v4860 = vpop.f32.mrb[0].mxu0
        %4861 = vmatprep.mubr.f32.mxu0 %v4654
        %4862 = vmatmul.mubr.f32.gmra.mrb[0].mxu0 %v4540
        %v4863 = vpop.f32.mrb[0].mxu0
        %v4864 = vadd.f32 0.0, %v4863
        %v4865 = vpop.f32.mrb[0].mxu0
        %4866 = vmatprep.mubr.f32.mxu0 %v4657
        %4867 = vmatmul.mubr.f32.gmra.mrb[0].mxu0 %v4542
        %v4868 = vpop.f32.mrb[0].mxu0
        %v4869 = vadd.f32 0.0, %v4868
        %v4870 = vpop.f32.mrb[0].mxu0
        %4871 = vmatprep.mubr.f32.mxu0 %v4660
        %4872 = vmatmul.mubr.f32.gmra.mrb[0].mxu0 %v4544
        %v4873 = vpop.f32.mrb[0].mxu0
        %v4874 = vadd.f32 0.0, %v4873
        %v4875 = vpop.f32.mrb[0].mxu0
        %4876 = vmatprep.mubr.f32.mxu0 %v4663
        %4877 = vmatmul.mubr.f32.gmra.mrb[0].mxu0 %v4546
        %v4878 = vpop.f32.mrb[0].mxu0
        %v4879 = vadd.f32 0.0, %v4878
        %v4880 = vpop.f32.mrb[0].mxu0
        %4881 = vmatprep.mubr.f32.mxu0 %v4666
        %4882 = vmatmul.mubr.f32.gmra.mrb[0].mxu0 %v4548
        %v4883 = vpop.f32.mrb[0].mxu0
        %v4884 = vadd.f32 0.0, %v4883
        %v4885 = vpop.f32.mrb[0].mxu0
        %4886 = vmatprep.mubr.f32.mxu0 %v4669
        %4887 = vmatmul.mubr.f32.gmra.mrb[0].mxu0 %v4550
        %v4888 = vpop.f32.mrb[0].mxu0
        %v4889 = vadd.f32 0.0, %v4888
        %v4890 = vpop.f32.mrb[0].mxu0
        %4891 = vmatprep.mubr.f32.mxu0 %v4672
        %4892 = vmatmul.mubr.f32.gmra.mrb[0].mxu0 %v4552
        %v4893 = vpop.f32.mrb[0].mxu0
        %v4894 = vadd.f32 0.0, %v4893
        %v4895 = vpop.f32.mrb[0].mxu0
        %4896 = vmatprep.mubr.f32.mxu0 %v4675
        %4897 = vmatmul.mubr.f32.gmra.mrb[0].mxu0 %v4554
        %v4898 = vpop.f32.mrb[0].mxu0
        %v4899 = vadd.f32 0.0, %v4898
        %v4900 = vpop.f32.mrb[0].mxu0
        %4901 = vdwg.mxu0
        %v4903 = vsel %vm373, %v4405, 0
        %v4906 = vsel %vm373, %v4407, 0
        %v4909 = vsel %vm373, %v4409, 0
        %v4912 = vsel %vm373, %v4411, 0
        %v4915 = vsel %vm373, %v4413, 0
        %v4918 = vsel %vm373, %v4415, 0
        %v4921 = vsel %vm373, %v4417, 0
        %v4924 = vsel %vm373, %v4419, 0
        %v4927 = vsel %vm373, %v4421, 0
        %v4930 = vsel %vm373, %v4423, 0
        %v4933 = vsel %vm373, %v4425, 0
        %v4936 = vsel %vm373, %v4427, 0
        %v4939 = vsel %vm373, %v4429, 0
        %v4942 = vsel %vm373, %v4431, 0
        %v4945 = vsel %vm373, %v4433, 0
        %v4948 = vsel %vm373, %v4435, 0
        %v4951 = vsel %vm373, %v4437, 0
        %v4954 = vsel %vm373, %v4439, 0
        %v4957 = vsel %vm373, %v4441, 0
        %v4960 = vsel %vm373, %v4443, 0
        %v4963 = vsel %vm373, %v4445, 0
        %v4966 = vsel %vm373, %v4447, 0
        %v4969 = vsel %vm373, %v4449, 0
        %v4972 = vsel %vm373, %v4451, 0
        %v4975 = vsel %vm373, %v4453, 0
        %v4978 = vsel %vm373, %v4455, 0
        %v4981 = vsel %vm373, %v4457, 0
        %v4984 = vsel %vm373, %v4459, 0
        %v4987 = vsel %vm373, %v4461, 0
        %v4990 = vsel %vm373, %v4463, 0
        %v4993 = vsel %vm373, %v4465, 0
        %v4996 = vsel %vm373, %v4467, 0
        %4998 = vmatprep.subr.mxu0 0.0
        %4999 = vmatpush1.msra.mxu0 %v4468
        %5000 = vmatprep.subr.mxu0 0.0
        %5001 = vmatpush1.msra.mxu0 %v4469
        %5002 = vmatprep.subr.mxu0 0.0
        %5003 = vmatpush1.msra.mxu0 %v4470
        %5004 = vmatprep.subr.mxu0 0.0
        %5005 = vmatpush1.msra.mxu0 %v4471
        %5006 = vmatprep.subr.mxu0 0.0
        %5007 = vmatpush1.msra.mxu0 %v4472
        %5008 = vmatprep.subr.mxu0 0.0
        %5009 = vmatpush1.msra.mxu0 %v4473
        %5010 = vmatprep.subr.mxu0 0.0
        %5011 = vmatpush1.msra.mxu0 %v4474
        %5012 = vmatprep.subr.mxu0 0.0
        %5013 = vmatpush1.msra.mxu0 %v4475
        %5014 = vmatprep.subr.mxu0 0.0
        %5015 = vmatpush1.msra.mxu0 %v4476
        %5016 = vmatprep.subr.mxu0 0.0
        %5017 = vmatpush1.msra.mxu0 %v4477
        %5018 = vmatprep.subr.mxu0 0.0
        %5019 = vmatpush1.msra.mxu0 %v4478
        %5020 = vmatprep.subr.mxu0 0.0
        %5021 = vmatpush1.msra.mxu0 %v4479
        %5022 = vmatprep.subr.mxu0 0.0
        %5023 = vmatpush1.msra.mxu0 %v4480
        %5024 = vmatprep.subr.mxu0 0.0
        %5025 = vmatpush1.msra.mxu0 %v4481
        %5026 = vmatprep.subr.mxu0 0.0
        %5027 = vmatpush1.msra.mxu0 %v4482
        %5028 = vmatprep.subr.mxu0 0.0
        %5029 = vmatpush1.msra.mxu0 %v4483
        %5030 = vmatprep.subr.mxu0 0.0
        %5031 = vmatpush1.msra.mxu0 %v4484
        %5032 = vmatprep.subr.mxu0 0.0
        %5033 = vmatpush1.msra.mxu0 %v4485
        %5034 = vmatprep.subr.mxu0 0.0
        %5035 = vmatpush1.msra.mxu0 %v4486
        %5036 = vmatprep.subr.mxu0 0.0
        %5037 = vmatpush1.msra.mxu0 %v4487
        %5038 = vmatprep.subr.mxu0 0.0
        %5039 = vmatpush1.msra.mxu0 %v4488
        %5040 = vmatprep.subr.mxu0 0.0
        %5041 = vmatpush1.msra.mxu0 %v4489
        %5042 = vmatprep.subr.mxu0 0.0
        %5043 = vmatpush1.msra.mxu0 %v4490
        %5044 = vmatprep.subr.mxu0 0.0
        %5045 = vmatpush1.msra.mxu0 %v4491
        %5046 = vmatprep.subr.mxu0 0.0
        %5047 = vmatpush1.msra.mxu0 0.0
        %5048 = vmatprep.subr.mxu0 0.0
        %5049 = vmatpush1.msra.mxu0 0.0
        %5050 = vmatprep.subr.mxu0 0.0
        %5051 = vmatpush1.msra.mxu0 0.0
        %5052 = vmatprep.subr.mxu0 0.0
        %5053 = vmatpush1.msra.mxu0 0.0
        %5054 = vmatprep.subr.mxu0 0.0
        %5055 = vmatpush1.msra.mxu0 0.0
        %5056 = vmatprep.subr.mxu0 0.0
        %5057 = vmatpush1.msra.mxu0 0.0
        %5058 = vmatprep.subr.mxu0 0.0
        %5059 = vmatpush1.msra.mxu0 0.0
        %5060 = vmatprep.subr.mxu0 0.0
        %5061 = vmatpush1.msra.mxu0 0.0
        %5062 = vmatprep.mubr.f32.mxu0 %v4903
        %5063 = vmatmul.mubr.f32.gmra.mrb[0].mxu0 %v4404
        %v5064 = vpop.f32.mrb[0].mxu0
        %v5065 = vadd.f32 %v4744, %v5064
        %v5066 = vpop.f32.mrb[0].mxu0
        %5067 = vmatprep.mubr.f32.mxu0 %v4906
        %5068 = vmatmul.mubr.f32.gmra.mrb[0].mxu0 %v4406
        %v5069 = vpop.f32.mrb[0].mxu0
        %v5070 = vadd.f32 %v4749, %v5069
        %v5071 = vpop.f32.mrb[0].mxu0
        %5072 = vmatprep.mubr.f32.mxu0 %v4909
        %5073 = vmatmul.mubr.f32.gmra.mrb[0].mxu0 %v4408
        %v5074 = vpop.f32.mrb[0].mxu0
        %v5075 = vadd.f32 %v4754, %v5074
        %v5076 = vpop.f32.mrb[0].mxu0
        %5077 = vmatprep.mubr.f32.mxu0 %v4912
        %5078 = vmatmul.mubr.f32.gmra.mrb[0].mxu0 %v4410
        %v5079 = vpop.f32.mrb[0].mxu0
        %v5080 = vadd.f32 %v4759, %v5079
        %v5081 = vpop.f32.mrb[0].mxu0
        %5082 = vmatprep.mubr.f32.mxu0 %v4915
        %5083 = vmatmul.mubr.f32.gmra.mrb[0].mxu0 %v4412
        %v5084 = vpop.f32.mrb[0].mxu0
        %v5085 = vadd.f32 %v4764, %v5084
        %v5086 = vpop.f32.mrb[0].mxu0
        %5087 = vmatprep.mubr.f32.mxu0 %v4918
        %5088 = vmatmul.mubr.f32.gmra.mrb[0].mxu0 %v4414
        %v5089 = vpop.f32.mrb[0].mxu0
        %v5090 = vadd.f32 %v4769, %v5089
        %v5091 = vpop.f32.mrb[0].mxu0
        %5092 = vmatprep.mubr.f32.mxu0 %v4921
        %5093 = vmatmul.mubr.f32.gmra.mrb[0].mxu0 %v4416
        %v5094 = vpop.f32.mrb[0].mxu0
        %v5095 = vadd.f32 %v4774, %v5094
        %v5096 = vpop.f32.mrb[0].mxu0
        %5097 = vmatprep.mubr.f32.mxu0 %v4924
        %5098 = vmatmul.mubr.f32.gmra.mrb[0].mxu0 %v4418
        %v5099 = vpop.f32.mrb[0].mxu0
        %v5100 = vadd.f32 %v4779, %v5099
        %v5101 = vpop.f32.mrb[0].mxu0
        %5102 = vmatprep.mubr.f32.mxu0 %v4927
        %5103 = vmatmul.mubr.f32.gmra.mrb[0].mxu0 %v4420
        %v5104 = vpop.f32.mrb[0].mxu0
        %v5105 = vadd.f32 %v4784, %v5104
        %v5106 = vpop.f32.mrb[0].mxu0
        %5107 = vmatprep.mubr.f32.mxu0 %v4930
        %5108 = vmatmul.mubr.f32.gmra.mrb[0].mxu0 %v4422
        %v5109 = vpop.f32.mrb[0].mxu0
        %v5110 = vadd.f32 %v4789, %v5109
        %v5111 = vpop.f32.mrb[0].mxu0
        %5112 = vmatprep.mubr.f32.mxu0 %v4933
        %5113 = vmatmul.mubr.f32.gmra.mrb[0].mxu0 %v4424
        %v5114 = vpop.f32.mrb[0].mxu0
        %v5115 = vadd.f32 %v4794, %v5114
        %v5116 = vpop.f32.mrb[0].mxu0
        %5117 = vmatprep.mubr.f32.mxu0 %v4936
        %5118 = vmatmul.mubr.f32.gmra.mrb[0].mxu0 %v4426
        %v5119 = vpop.f32.mrb[0].mxu0
        %v5120 = vadd.f32 %v4799, %v5119
        %v5121 = vpop.f32.mrb[0].mxu0
        %5122 = vmatprep.mubr.f32.mxu0 %v4939
        %5123 = vmatmul.mubr.f32.gmra.mrb[0].mxu0 %v4428
        %v5124 = vpop.f32.mrb[0].mxu0
        %v5125 = vadd.f32 %v4804, %v5124
        %v5126 = vpop.f32.mrb[0].mxu0
        %5127 = vmatprep.mubr.f32.mxu0 %v4942
        %5128 = vmatmul.mubr.f32.gmra.mrb[0].mxu0 %v4430
        %v5129 = vpop.f32.mrb[0].mxu0
        %v5130 = vadd.f32 %v4809, %v5129
        %v5131 = vpop.f32.mrb[0].mxu0
        %5132 = vmatprep.mubr.f32.mxu0 %v4945
        %5133 = vmatmul.mubr.f32.gmra.mrb[0].mxu0 %v4432
        %v5134 = vpop.f32.mrb[0].mxu0
        %v5135 = vadd.f32 %v4814, %v5134
        %v5136 = vpop.f32.mrb[0].mxu0
        %5137 = vmatprep.mubr.f32.mxu0 %v4948
        %5138 = vmatmul.mubr.f32.gmra.mrb[0].mxu0 %v4434
        %v5139 = vpop.f32.mrb[0].mxu0
        %v5140 = vadd.f32 %v4819, %v5139
        %v5141 = vpop.f32.mrb[0].mxu0
        %5142 = vmatprep.mubr.f32.mxu0 %v4951
        %5143 = vmatmul.mubr.f32.gmra.mrb[0].mxu0 %v4436
        %v5144 = vpop.f32.mrb[0].mxu0
        %v5145 = vadd.f32 %v4824, %v5144
        %v5146 = vpop.f32.mrb[0].mxu0
        %5147 = vmatprep.mubr.f32.mxu0 %v4954
        %5148 = vmatmul.mubr.f32.gmra.mrb[0].mxu0 %v4438
        %v5149 = vpop.f32.mrb[0].mxu0
        %v5150 = vadd.f32 %v4829, %v5149
        %v5151 = vpop.f32.mrb[0].mxu0
        %5152 = vmatprep.mubr.f32.mxu0 %v4957
        %5153 = vmatmul.mubr.f32.gmra.mrb[0].mxu0 %v4440
        %v5154 = vpop.f32.mrb[0].mxu0
        %v5155 = vadd.f32 %v4834, %v5154
        %v5156 = vpop.f32.mrb[0].mxu0
        %5157 = vmatprep.mubr.f32.mxu0 %v4960
        %5158 = vmatmul.mubr.f32.gmra.mrb[0].mxu0 %v4442
        %v5159 = vpop.f32.mrb[0].mxu0
        %v5160 = vadd.f32 %v4839, %v5159
        %v5161 = vpop.f32.mrb[0].mxu0
        %5162 = vmatprep.mubr.f32.mxu0 %v4963
        %5163 = vmatmul.mubr.f32.gmra.mrb[0].mxu0 %v4444
        %v5164 = vpop.f32.mrb[0].mxu0
        %v5165 = vadd.f32 %v4844, %v5164
        %v5166 = vpop.f32.mrb[0].mxu0
        %5167 = vmatprep.mubr.f32.mxu0 %v4966
        %5168 = vmatmul.mubr.f32.gmra.mrb[0].mxu0 %v4446
        %v5169 = vpop.f32.mrb[0].mxu0
        %v5170 = vadd.f32 %v4849, %v5169
        %v5171 = vpop.f32.mrb[0].mxu0
        %5172 = vmatprep.mubr.f32.mxu0 %v4969
        %5173 = vmatmul.mubr.f32.gmra.mrb[0].mxu0 %v4448
        %v5174 = vpop.f32.mrb[0].mxu0
        %v5175 = vadd.f32 %v4854, %v5174
        %v5176 = vpop.f32.mrb[0].mxu0
        %5177 = vmatprep.mubr.f32.mxu0 %v4972
        %5178 = vmatmul.mubr.f32.gmra.mrb[0].mxu0 %v4450
        %v5179 = vpop.f32.mrb[0].mxu0
        %v5180 = vadd.f32 %v4859, %v5179
        %v5181 = vpop.f32.mrb[0].mxu0
        %5182 = vmatprep.mubr.f32.mxu0 %v4975
        %5183 = vmatmul.mubr.f32.gmra.mrb[0].mxu0 %v4452
        %v5184 = vpop.f32.mrb[0].mxu0
        %v5185 = vadd.f32 %v4864, %v5184
        %v5186 = vpop.f32.mrb[0].mxu0
        %5187 = vmatprep.mubr.f32.mxu0 %v4978
        %5188 = vmatmul.mubr.f32.gmra.mrb[0].mxu0 %v4454
        %v5189 = vpop.f32.mrb[0].mxu0
        %v5190 = vadd.f32 %v4869, %v5189
        %v5191 = vpop.f32.mrb[0].mxu0
        %5192 = vmatprep.mubr.f32.mxu0 %v4981
        %5193 = vmatmul.mubr.f32.gmra.mrb[0].mxu0 %v4456
        %v5194 = vpop.f32.mrb[0].mxu0
        %v5195 = vadd.f32 %v4874, %v5194
        %v5196 = vpop.f32.mrb[0].mxu0
        %5197 = vmatprep.mubr.f32.mxu0 %v4984
        %5198 = vmatmul.mubr.f32.gmra.mrb[0].mxu0 %v4458
        %v5199 = vpop.f32.mrb[0].mxu0
        %v5200 = vadd.f32 %v4879, %v5199
        %v5201 = vpop.f32.mrb[0].mxu0
        %5202 = vmatprep.mubr.f32.mxu0 %v4987
        %5203 = vmatmul.mubr.f32.gmra.mrb[0].mxu0 %v4460
        %v5204 = vpop.f32.mrb[0].mxu0
        %v5205 = vadd.f32 %v4884, %v5204
        %v5206 = vpop.f32.mrb[0].mxu0
        %5207 = vmatprep.mubr.f32.mxu0 %v4990
        %5208 = vmatmul.mubr.f32.gmra.mrb[0].mxu0 %v4462
        %v5209 = vpop.f32.mrb[0].mxu0
        %v5210 = vadd.f32 %v4889, %v5209
        %v5211 = vpop.f32.mrb[0].mxu0
        %5212 = vmatprep.mubr.f32.mxu0 %v4993
        %5213 = vmatmul.mubr.f32.gmra.mrb[0].mxu0 %v4464
        %v5214 = vpop.f32.mrb[0].mxu0
        %v5215 = vadd.f32 %v4894, %v5214
        %v5216 = vpop.f32.mrb[0].mxu0
        %5217 = vmatprep.mubr.f32.mxu0 %v4996
        %5218 = vmatmul.mubr.f32.gmra.mrb[0].mxu0 %v4466
        %v5219 = vpop.f32.mrb[0].mxu0
        %v5220 = vadd.f32 %v4899, %v5219
        %v5221 = vpop.f32.mrb[0].mxu0
        %5222 = vdwg.mxu0
        %v5223 = vld [vmem:[%s1692] sm:$0xff]
        %v5224 = vld [vmem:[%s1692 + $0x8] sm:$0xff]
        %v5225 = vld [vmem:[%s1692 + $0x10] sm:$0xff]
        %v5226 = vld [vmem:[%s1692 + $0x18] sm:$0xff]
        %v5227 = vld [vmem:[%s1692 + $0x20] sm:$0xff]
        %v5228 = vld [vmem:[%s1692 + $0x28] sm:$0xff]
        %v5229 = vld [vmem:[%s1692 + $0x30] sm:$0xff]
        %v5230 = vld [vmem:[%s1692 + $0x38] sm:$0xff]
        %v5231 = vld [vmem:[%s1692 + $0x40] sm:$0xff]
        %v5232 = vld [vmem:[%s1692 + $0x48] sm:$0xff]
        %v5233 = vld [vmem:[%s1692 + $0x50] sm:$0xff]
        %v5234 = vld [vmem:[%s1692 + $0x58] sm:$0xff]
        %v5235 = vld [vmem:[%s1692 + $0x60] sm:$0xff]
        %v5236 = vld [vmem:[%s1692 + $0x68] sm:$0xff]
        %v5237 = vld [vmem:[%s1692 + $0x70] sm:$0xff]
        %v5238 = vld [vmem:[%s1692 + $0x78] sm:$0xff]
        %v5239 = vld [vmem:[%s1692 + $0x80] sm:$0xff]
        %v5240 = vld [vmem:[%s1692 + $0x88] sm:$0xff]
        %v5241 = vld [vmem:[%s1692 + $0x90] sm:$0xff]
        %v5242 = vld [vmem:[%s1692 + $0x98] sm:$0xff]
        %v5243 = vld [vmem:[%s1692 + $0xa0] sm:$0xff]
        %v5244 = vld [vmem:[%s1692 + $0xa8] sm:$0xff]
        %v5245 = vld [vmem:[%s1692 + $0xb0] sm:$0xff]
        %v5246 = vld [vmem:[%s1692 + $0xb8] sm:$0xff]
        %v5247 = vld [vmem:[%s1692 + $0xc0] sm:$0xff]
        %v5248 = vld [vmem:[%s1692 + $0xc8] sm:$0xff]
        %v5249 = vld [vmem:[%s1692 + $0xd0] sm:$0xff]
        %v5250 = vld [vmem:[%s1692 + $0xd8] sm:$0xff]
        %v5251 = vld [vmem:[%s1692 + $0xe0] sm:$0xff]
        %v5252 = vld [vmem:[%s1692 + $0xe8] sm:$0xff]
        %v5253 = vld [vmem:[%s1692 + $0xf0] sm:$0xff]
        %v5254 = vld [vmem:[%s1692 + $0xf8] sm:$0xff]
        %v5255 = vld [vmem:[%s1692 + $0x100] sm:$0xff]
        %v5256 = vld [vmem:[%s1692 + $0x108] sm:$0xff]
        %v5257 = vld [vmem:[%s1692 + $0x110] sm:$0xff]
        %v5258 = vld [vmem:[%s1692 + $0x118] sm:$0xff]
        %v5259 = vld [vmem:[%s1692 + $0x120] sm:$0xff]
        %v5260 = vld [vmem:[%s1692 + $0x128] sm:$0xff]
        %v5261 = vld [vmem:[%s1692 + $0x130] sm:$0xff]
        %v5262 = vld [vmem:[%s1692 + $0x138] sm:$0xff]
        %v5263 = vld [vmem:[%s1692 + $0x140] sm:$0xff]
        %v5264 = vld [vmem:[%s1692 + $0x148] sm:$0xff]
        %v5265 = vld [vmem:[%s1692 + $0x150] sm:$0xff]
        %v5266 = vld [vmem:[%s1692 + $0x158] sm:$0xff]
        %v5267 = vld [vmem:[%s1692 + $0x160] sm:$0xff]
        %v5268 = vld [vmem:[%s1692 + $0x168] sm:$0xff]
        %v5269 = vld [vmem:[%s1692 + $0x170] sm:$0xff]
        %v5270 = vld [vmem:[%s1692 + $0x178] sm:$0xff]
        %v5271 = vld [vmem:[%s1692 + $0x180] sm:$0xff]
        %v5272 = vld [vmem:[%s1692 + $0x188] sm:$0xff]
        %v5273 = vld [vmem:[%s1692 + $0x190] sm:$0xff]
        %v5274 = vld [vmem:[%s1692 + $0x198] sm:$0xff]
        %v5275 = vld [vmem:[%s1692 + $0x1a0] sm:$0xff]
        %v5276 = vld [vmem:[%s1692 + $0x1a8] sm:$0xff]
        %v5277 = vld [vmem:[%s1692 + $0x1b0] sm:$0xff]
        %v5278 = vld [vmem:[%s1692 + $0x1b8] sm:$0xff]
        %v5279 = vld [vmem:[%s1692 + $0x1c0] sm:$0xff]
        %v5280 = vld [vmem:[%s1692 + $0x1c8] sm:$0xff]
        %v5281 = vld [vmem:[%s1692 + $0x1d0] sm:$0xff]
        %v5282 = vld [vmem:[%s1692 + $0x1d8] sm:$0xff]
        %v5283 = vld [vmem:[%s1692 + $0x1e0] sm:$0xff]
        %v5284 = vld [vmem:[%s1692 + $0x1e8] sm:$0xff]
        %v5285 = vld [vmem:[%s1692 + $0x1f0] sm:$0xff]
        %v5286 = vld [vmem:[%s1692 + $0x1f8] sm:$0xff]
        %s5287 = scalar_lea.vmem %s6, 384
        %v5288 = vld [vmem:[%s5287] sm:$0xff]
        %v5289 = vld [vmem:[%s5287 + $0x8] sm:$0xff]
        %v5290 = vld [vmem:[%s5287 + $0x10] sm:$0xff]
        %v5291 = vld [vmem:[%s5287 + $0x18] sm:$0xff]
        %v5292 = vld [vmem:[%s5287 + $0x20] sm:$0xff]
        %v5293 = vld [vmem:[%s5287 + $0x28] sm:$0xff]
        %v5294 = vld [vmem:[%s5287 + $0x30] sm:$0xff]
        %v5295 = vld [vmem:[%s5287 + $0x38] sm:$0xff]
        %v5296 = vld [vmem:[%s5287 + $0x40] sm:$0xff]
        %v5297 = vld [vmem:[%s5287 + $0x48] sm:$0xff]
        %v5298 = vld [vmem:[%s5287 + $0x50] sm:$0xff]
        %v5299 = vld [vmem:[%s5287 + $0x58] sm:$0xff]
        %v5300 = vld [vmem:[%s5287 + $0x60] sm:$0xff]
        %v5301 = vld [vmem:[%s5287 + $0x68] sm:$0xff]
        %v5302 = vld [vmem:[%s5287 + $0x70] sm:$0xff]
        %v5303 = vld [vmem:[%s5287 + $0x78] sm:$0xff]
        %v5304 = vld [vmem:[%s5287 + $0x80] sm:$0xff]
        %v5305 = vld [vmem:[%s5287 + $0x88] sm:$0xff]
        %v5306 = vld [vmem:[%s5287 + $0x90] sm:$0xff]
        %v5307 = vld [vmem:[%s5287 + $0x98] sm:$0xff]
        %v5308 = vld [vmem:[%s5287 + $0xa0] sm:$0xff]
        %v5309 = vld [vmem:[%s5287 + $0xa8] sm:$0xff]
        %v5310 = vld [vmem:[%s5287 + $0xb0] sm:$0xff]
        %v5311 = vld [vmem:[%s5287 + $0xb8] sm:$0xff]
        %v5313 = vsel %vm373, %v5224, 0
        %v5316 = vsel %vm373, %v5226, 0
        %v5319 = vsel %vm373, %v5228, 0
        %v5322 = vsel %vm373, %v5230, 0
        %v5325 = vsel %vm373, %v5232, 0
        %v5328 = vsel %vm373, %v5234, 0
        %v5331 = vsel %vm373, %v5236, 0
        %v5334 = vsel %vm373, %v5238, 0
        %v5337 = vsel %vm373, %v5240, 0
        %v5340 = vsel %vm373, %v5242, 0
        %v5343 = vsel %vm373, %v5244, 0
        %v5346 = vsel %vm373, %v5246, 0
        %v5349 = vsel %vm373, %v5248, 0
        %v5352 = vsel %vm373, %v5250, 0
        %v5355 = vsel %vm373, %v5252, 0
        %v5358 = vsel %vm373, %v5254, 0
        %v5361 = vsel %vm373, %v5256, 0
        %v5364 = vsel %vm373, %v5258, 0
        %v5367 = vsel %vm373, %v5260, 0
        %v5370 = vsel %vm373, %v5262, 0
        %v5373 = vsel %vm373, %v5264, 0
        %v5376 = vsel %vm373, %v5266, 0
        %v5379 = vsel %vm373, %v5268, 0
        %v5382 = vsel %vm373, %v5270, 0
        %v5385 = vsel %vm373, %v5272, 0
        %v5388 = vsel %vm373, %v5274, 0
        %v5391 = vsel %vm373, %v5276, 0
        %v5394 = vsel %vm373, %v5278, 0
        %v5397 = vsel %vm373, %v5280, 0
        %v5400 = vsel %vm373, %v5282, 0
        %v5403 = vsel %vm373, %v5284, 0
        %v5406 = vsel %vm373, %v5286, 0
        %5408 = vmatprep.subr.mxu0 0.0
        %5409 = vmatpush1.msra.mxu0 %v5288
        %5410 = vmatprep.subr.mxu0 0.0
        %5411 = vmatpush1.msra.mxu0 %v5289
        %5412 = vmatprep.subr.mxu0 0.0
        %5413 = vmatpush1.msra.mxu0 %v5290
        %5414 = vmatprep.subr.mxu0 0.0
        %5415 = vmatpush1.msra.mxu0 %v5291
        %5416 = vmatprep.subr.mxu0 0.0
        %5417 = vmatpush1.msra.mxu0 %v5292
        %5418 = vmatprep.subr.mxu0 0.0
        %5419 = vmatpush1.msra.mxu0 %v5293
        %5420 = vmatprep.subr.mxu0 0.0
        %5421 = vmatpush1.msra.mxu0 %v5294
        %5422 = vmatprep.subr.mxu0 0.0
        %5423 = vmatpush1.msra.mxu0 %v5295
        %5424 = vmatprep.subr.mxu0 0.0
        %5425 = vmatpush1.msra.mxu0 %v5296
        %5426 = vmatprep.subr.mxu0 0.0
        %5427 = vmatpush1.msra.mxu0 %v5297
        %5428 = vmatprep.subr.mxu0 0.0
        %5429 = vmatpush1.msra.mxu0 %v5298
        %5430 = vmatprep.subr.mxu0 0.0
        %5431 = vmatpush1.msra.mxu0 %v5299
        %5432 = vmatprep.subr.mxu0 0.0
        %5433 = vmatpush1.msra.mxu0 %v5300
        %5434 = vmatprep.subr.mxu0 0.0
        %5435 = vmatpush1.msra.mxu0 %v5301
        %5436 = vmatprep.subr.mxu0 0.0
        %5437 = vmatpush1.msra.mxu0 %v5302
        %5438 = vmatprep.subr.mxu0 0.0
        %5439 = vmatpush1.msra.mxu0 %v5303
        %5440 = vmatprep.subr.mxu0 0.0
        %5441 = vmatpush1.msra.mxu0 %v5304
        %5442 = vmatprep.subr.mxu0 0.0
        %5443 = vmatpush1.msra.mxu0 %v5305
        %5444 = vmatprep.subr.mxu0 0.0
        %5445 = vmatpush1.msra.mxu0 %v5306
        %5446 = vmatprep.subr.mxu0 0.0
        %5447 = vmatpush1.msra.mxu0 %v5307
        %5448 = vmatprep.subr.mxu0 0.0
        %5449 = vmatpush1.msra.mxu0 %v5308
        %5450 = vmatprep.subr.mxu0 0.0
        %5451 = vmatpush1.msra.mxu0 %v5309
        %5452 = vmatprep.subr.mxu0 0.0
        %5453 = vmatpush1.msra.mxu0 %v5310
        %5454 = vmatprep.subr.mxu0 0.0
        %5455 = vmatpush1.msra.mxu0 %v5311
        %5456 = vmatprep.subr.mxu0 0.0
        %5457 = vmatpush1.msra.mxu0 0.0
        %5458 = vmatprep.subr.mxu0 0.0
        %5459 = vmatpush1.msra.mxu0 0.0
        %5460 = vmatprep.subr.mxu0 0.0
        %5461 = vmatpush1.msra.mxu0 0.0
        %5462 = vmatprep.subr.mxu0 0.0
        %5463 = vmatpush1.msra.mxu0 0.0
        %5464 = vmatprep.subr.mxu0 0.0
        %5465 = vmatpush1.msra.mxu0 0.0
        %5466 = vmatprep.subr.mxu0 0.0
        %5467 = vmatpush1.msra.mxu0 0.0
        %5468 = vmatprep.subr.mxu0 0.0
        %5469 = vmatpush1.msra.mxu0 0.0
        %5470 = vmatprep.subr.mxu0 0.0
        %5471 = vmatpush1.msra.mxu0 0.0
        %5472 = vmatprep.mubr.f32.mxu0 %v5313
        %5473 = vmatmul.mubr.f32.gmra.mrb[0].mxu0 %v5223
        %v5474 = vpop.f32.mrb[0].mxu0
        %v5475 = vadd.f32 0.0, %v5474
        %v5476 = vpop.f32.mrb[0].mxu0
        %5477 = vmatprep.mubr.f32.mxu0 %v5316
        %5478 = vmatmul.mubr.f32.gmra.mrb[0].mxu0 %v5225
        %v5479 = vpop.f32.mrb[0].mxu0
        %v5480 = vadd.f32 0.0, %v5479
        %v5481 = vpop.f32.mrb[0].mxu0
        %5482 = vmatprep.mubr.f32.mxu0 %v5319
        %5483 = vmatmul.mubr.f32.gmra.mrb[0].mxu0 %v5227
        %v5484 = vpop.f32.mrb[0].mxu0
        %v5485 = vadd.f32 0.0, %v5484
        %v5486 = vpop.f32.mrb[0].mxu0
        %5487 = vmatprep.mubr.f32.mxu0 %v5322
        %5488 = vmatmul.mubr.f32.gmra.mrb[0].mxu0 %v5229
        %v5489 = vpop.f32.mrb[0].mxu0
        %v5490 = vadd.f32 0.0, %v5489
        %v5491 = vpop.f32.mrb[0].mxu0
        %5492 = vmatprep.mubr.f32.mxu0 %v5325
        %5493 = vmatmul.mubr.f32.gmra.mrb[0].mxu0 %v5231
        %v5494 = vpop.f32.mrb[0].mxu0
        %v5495 = vadd.f32 0.0, %v5494
        %v5496 = vpop.f32.mrb[0].mxu0
        %5497 = vmatprep.mubr.f32.mxu0 %v5328
        %5498 = vmatmul.mubr.f32.gmra.mrb[0].mxu0 %v5233
        %v5499 = vpop.f32.mrb[0].mxu0
        %v5500 = vadd.f32 0.0, %v5499
        %v5501 = vpop.f32.mrb[0].mxu0
        %5502 = vmatprep.mubr.f32.mxu0 %v5331
        %5503 = vmatmul.mubr.f32.gmra.mrb[0].mxu0 %v5235
        %v5504 = vpop.f32.mrb[0].mxu0
        %v5505 = vadd.f32 0.0, %v5504
        %v5506 = vpop.f32.mrb[0].mxu0
        %5507 = vmatprep.mubr.f32.mxu0 %v5334
        %5508 = vmatmul.mubr.f32.gmra.mrb[0].mxu0 %v5237
        %v5509 = vpop.f32.mrb[0].mxu0
        %v5510 = vadd.f32 0.0, %v5509
        %v5511 = vpop.f32.mrb[0].mxu0
        %5512 = vmatprep.mubr.f32.mxu0 %v5337
        %5513 = vmatmul.mubr.f32.gmra.mrb[0].mxu0 %v5239
        %v5514 = vpop.f32.mrb[0].mxu0
        %v5515 = vadd.f32 0.0, %v5514
        %v5516 = vpop.f32.mrb[0].mxu0
        %5517 = vmatprep.mubr.f32.mxu0 %v5340
        %5518 = vmatmul.mubr.f32.gmra.mrb[0].mxu0 %v5241
        %v5519 = vpop.f32.mrb[0].mxu0
        %v5520 = vadd.f32 0.0, %v5519
        %v5521 = vpop.f32.mrb[0].mxu0
        %5522 = vmatprep.mubr.f32.mxu0 %v5343
        %5523 = vmatmul.mubr.f32.gmra.mrb[0].mxu0 %v5243
        %v5524 = vpop.f32.mrb[0].mxu0
        %v5525 = vadd.f32 0.0, %v5524
        %v5526 = vpop.f32.mrb[0].mxu0
        %5527 = vmatprep.mubr.f32.mxu0 %v5346
        %5528 = vmatmul.mubr.f32.gmra.mrb[0].mxu0 %v5245
        %v5529 = vpop.f32.mrb[0].mxu0
        %v5530 = vadd.f32 0.0, %v5529
        %v5531 = vpop.f32.mrb[0].mxu0
        %5532 = vmatprep.mubr.f32.mxu0 %v5349
        %5533 = vmatmul.mubr.f32.gmra.mrb[0].mxu0 %v5247
        %v5534 = vpop.f32.mrb[0].mxu0
        %v5535 = vadd.f32 0.0, %v5534
        %v5536 = vpop.f32.mrb[0].mxu0
        %5537 = vmatprep.mubr.f32.mxu0 %v5352
        %5538 = vmatmul.mubr.f32.gmra.mrb[0].mxu0 %v5249
        %v5539 = vpop.f32.mrb[0].mxu0
        %v5540 = vadd.f32 0.0, %v5539
        %v5541 = vpop.f32.mrb[0].mxu0
        %5542 = vmatprep.mubr.f32.mxu0 %v5355
        %5543 = vmatmul.mubr.f32.gmra.mrb[0].mxu0 %v5251
        %v5544 = vpop.f32.mrb[0].mxu0
        %v5545 = vadd.f32 0.0, %v5544
        %v5546 = vpop.f32.mrb[0].mxu0
        %5547 = vmatprep.mubr.f32.mxu0 %v5358
        %5548 = vmatmul.mubr.f32.gmra.mrb[0].mxu0 %v5253
        %v5549 = vpop.f32.mrb[0].mxu0
        %v5550 = vadd.f32 0.0, %v5549
        %v5551 = vpop.f32.mrb[0].mxu0
        %5552 = vmatprep.mubr.f32.mxu0 %v5361
        %5553 = vmatmul.mubr.f32.gmra.mrb[0].mxu0 %v5255
        %v5554 = vpop.f32.mrb[0].mxu0
        %v5555 = vadd.f32 0.0, %v5554
        %v5556 = vpop.f32.mrb[0].mxu0
        %5557 = vmatprep.mubr.f32.mxu0 %v5364
        %5558 = vmatmul.mubr.f32.gmra.mrb[0].mxu0 %v5257
        %v5559 = vpop.f32.mrb[0].mxu0
        %v5560 = vadd.f32 0.0, %v5559
        %v5561 = vpop.f32.mrb[0].mxu0
        %5562 = vmatprep.mubr.f32.mxu0 %v5367
        %5563 = vmatmul.mubr.f32.gmra.mrb[0].mxu0 %v5259
        %v5564 = vpop.f32.mrb[0].mxu0
        %v5565 = vadd.f32 0.0, %v5564
        %v5566 = vpop.f32.mrb[0].mxu0
        %5567 = vmatprep.mubr.f32.mxu0 %v5370
        %5568 = vmatmul.mubr.f32.gmra.mrb[0].mxu0 %v5261
        %v5569 = vpop.f32.mrb[0].mxu0
        %v5570 = vadd.f32 0.0, %v5569
        %v5571 = vpop.f32.mrb[0].mxu0
        %5572 = vmatprep.mubr.f32.mxu0 %v5373
        %5573 = vmatmul.mubr.f32.gmra.mrb[0].mxu0 %v5263
        %v5574 = vpop.f32.mrb[0].mxu0
        %v5575 = vadd.f32 0.0, %v5574
        %v5576 = vpop.f32.mrb[0].mxu0
        %5577 = vmatprep.mubr.f32.mxu0 %v5376
        %5578 = vmatmul.mubr.f32.gmra.mrb[0].mxu0 %v5265
        %v5579 = vpop.f32.mrb[0].mxu0
        %v5580 = vadd.f32 0.0, %v5579
        %v5581 = vpop.f32.mrb[0].mxu0
        %5582 = vmatprep.mubr.f32.mxu0 %v5379
        %5583 = vmatmul.mubr.f32.gmra.mrb[0].mxu0 %v5267
        %v5584 = vpop.f32.mrb[0].mxu0
        %v5585 = vadd.f32 0.0, %v5584
        %v5586 = vpop.f32.mrb[0].mxu0
        %5587 = vmatprep.mubr.f32.mxu0 %v5382
        %5588 = vmatmul.mubr.f32.gmra.mrb[0].mxu0 %v5269
        %v5589 = vpop.f32.mrb[0].mxu0
        %v5590 = vadd.f32 0.0, %v5589
        %v5591 = vpop.f32.mrb[0].mxu0
        %5592 = vmatprep.mubr.f32.mxu0 %v5385
        %5593 = vmatmul.mubr.f32.gmra.mrb[0].mxu0 %v5271
        %v5594 = vpop.f32.mrb[0].mxu0
        %v5595 = vadd.f32 0.0, %v5594
        %v5596 = vpop.f32.mrb[0].mxu0
        %5597 = vmatprep.mubr.f32.mxu0 %v5388
        %5598 = vmatmul.mubr.f32.gmra.mrb[0].mxu0 %v5273
        %v5599 = vpop.f32.mrb[0].mxu0
        %v5600 = vadd.f32 0.0, %v5599
        %v5601 = vpop.f32.mrb[0].mxu0
        %5602 = vmatprep.mubr.f32.mxu0 %v5391
        %5603 = vmatmul.mubr.f32.gmra.mrb[0].mxu0 %v5275
        %v5604 = vpop.f32.mrb[0].mxu0
        %v5605 = vadd.f32 0.0, %v5604
        %v5606 = vpop.f32.mrb[0].mxu0
        %5607 = vmatprep.mubr.f32.mxu0 %v5394
        %5608 = vmatmul.mubr.f32.gmra.mrb[0].mxu0 %v5277
        %v5609 = vpop.f32.mrb[0].mxu0
        %v5610 = vadd.f32 0.0, %v5609
        %v5611 = vpop.f32.mrb[0].mxu0
        %5612 = vmatprep.mubr.f32.mxu0 %v5397
        %5613 = vmatmul.mubr.f32.gmra.mrb[0].mxu0 %v5279
        %v5614 = vpop.f32.mrb[0].mxu0
        %v5615 = vadd.f32 0.0, %v5614
        %v5616 = vpop.f32.mrb[0].mxu0
        %5617 = vmatprep.mubr.f32.mxu0 %v5400
        %5618 = vmatmul.mubr.f32.gmra.mrb[0].mxu0 %v5281
        %v5619 = vpop.f32.mrb[0].mxu0
        %v5620 = vadd.f32 0.0, %v5619
        %v5621 = vpop.f32.mrb[0].mxu0
        %5622 = vmatprep.mubr.f32.mxu0 %v5403
        %5623 = vmatmul.mubr.f32.gmra.mrb[0].mxu0 %v5283
        %v5624 = vpop.f32.mrb[0].mxu0
        %v5625 = vadd.f32 0.0, %v5624
        %v5626 = vpop.f32.mrb[0].mxu0
        %5627 = vmatprep.mubr.f32.mxu0 %v5406
        %5628 = vmatmul.mubr.f32.gmra.mrb[0].mxu0 %v5285
        %v5629 = vpop.f32.mrb[0].mxu0
        %v5630 = vadd.f32 0.0, %v5629
        %v5631 = vpop.f32.mrb[0].mxu0
        %5632 = vdwg.mxu0
        %v5633 = vadd.f32 %v5065, %v5475
        %v5634 = vadd.f32 %v5070, %v5480
        %v5635 = vadd.f32 %v5075, %v5485
        %v5636 = vadd.f32 %v5080, %v5490
        %v5637 = vadd.f32 %v5085, %v5495
        %v5638 = vadd.f32 %v5090, %v5500
        %v5639 = vadd.f32 %v5095, %v5505
        %v5640 = vadd.f32 %v5100, %v5510
        %v5641 = vadd.f32 %v5105, %v5515
        %v5642 = vadd.f32 %v5110, %v5520
        %v5643 = vadd.f32 %v5115, %v5525
        %v5644 = vadd.f32 %v5120, %v5530
        %v5645 = vadd.f32 %v5125, %v5535
        %v5646 = vadd.f32 %v5130, %v5540
        %v5647 = vadd.f32 %v5135, %v5545
        %v5648 = vadd.f32 %v5140, %v5550
        %v5649 = vadd.f32 %v5145, %v5555
        %v5650 = vadd.f32 %v5150, %v5560
        %v5651 = vadd.f32 %v5155, %v5565
        %v5652 = vadd.f32 %v5160, %v5570
        %v5653 = vadd.f32 %v5165, %v5575
        %v5654 = vadd.f32 %v5170, %v5580
        %v5655 = vadd.f32 %v5175, %v5585
        %v5656 = vadd.f32 %v5180, %v5590
        %v5657 = vadd.f32 %v5185, %v5595
        %v5658 = vadd.f32 %v5190, %v5600
        %v5659 = vadd.f32 %v5195, %v5605
        %v5660 = vadd.f32 %v5200, %v5610
        %v5661 = vadd.f32 %v5205, %v5615
        %v5662 = vadd.f32 %v5210, %v5620
        %v5663 = vadd.f32 %v5215, %v5625
        %v5664 = vadd.f32 %v5220, %v5630
        %v5665 = vld [vmem:[%s7] sm:$0x1]
        %v5667 = vlaneseq
        %v5668 = vshrl.u32 %v5667, 7
        %v5669 = vsub.s32 0, %v5668
        %v5670 = vrot.slane %v5665, %v5669
        %v5672 = vadd.f32 %v5633, %v5670
        %v5673 = vadd.f32 %v5634, %v5670
        %v5674 = vadd.f32 %v5635, %v5670
        %v5675 = vadd.f32 %v5636, %v5670
        %v5676 = vadd.f32 %v5637, %v5670
        %v5677 = vadd.f32 %v5638, %v5670
        %v5678 = vadd.f32 %v5639, %v5670
        %v5679 = vadd.f32 %v5640, %v5670
        %v5680 = vadd.f32 %v5641, %v5670
        %v5681 = vadd.f32 %v5642, %v5670
        %v5682 = vadd.f32 %v5643, %v5670
        %v5683 = vadd.f32 %v5644, %v5670
        %v5684 = vadd.f32 %v5645, %v5670
        %v5685 = vadd.f32 %v5646, %v5670
        %v5686 = vadd.f32 %v5647, %v5670
        %v5687 = vadd.f32 %v5648, %v5670
        %v5688 = vadd.f32 %v5649, %v5670
        %v5689 = vadd.f32 %v5650, %v5670
        %v5690 = vadd.f32 %v5651, %v5670
        %v5691 = vadd.f32 %v5652, %v5670
        %v5692 = vadd.f32 %v5653, %v5670
        %v5693 = vadd.f32 %v5654, %v5670
        %v5694 = vadd.f32 %v5655, %v5670
        %v5695 = vadd.f32 %v5656, %v5670
        %v5696 = vadd.f32 %v5657, %v5670
        %v5697 = vadd.f32 %v5658, %v5670
        %v5698 = vadd.f32 %v5659, %v5670
        %v5699 = vadd.f32 %v5660, %v5670
        %v5700 = vadd.f32 %v5661, %v5670
        %v5701 = vadd.f32 %v5662, %v5670
        %v5702 = vadd.f32 %v5663, %v5670
        %v5703 = vadd.f32 %v5664, %v5670
        %v5704 = vstv %s418
        %v5705 = vmul.f32 %v5672, %v5704
        %v5706 = vmul.f32 %v5673, %v5704
        %v5707 = vmul.f32 %v5674, %v5704
        %v5708 = vmul.f32 %v5675, %v5704
        %v5709 = vmul.f32 %v5676, %v5704
        %v5710 = vmul.f32 %v5677, %v5704
        %v5711 = vmul.f32 %v5678, %v5704
        %v5712 = vmul.f32 %v5679, %v5704
        %v5713 = vmul.f32 %v5680, %v5704
        %v5714 = vmul.f32 %v5681, %v5704
        %v5715 = vmul.f32 %v5682, %v5704
        %v5716 = vmul.f32 %v5683, %v5704
        %v5717 = vmul.f32 %v5684, %v5704
        %v5718 = vmul.f32 %v5685, %v5704
        %v5719 = vmul.f32 %v5686, %v5704
        %v5720 = vmul.f32 %v5687, %v5704
        %v5721 = vmul.f32 %v5688, %v5704
        %v5722 = vmul.f32 %v5689, %v5704
        %v5723 = vmul.f32 %v5690, %v5704
        %v5724 = vmul.f32 %v5691, %v5704
        %v5725 = vmul.f32 %v5692, %v5704
        %v5726 = vmul.f32 %v5693, %v5704
        %v5727 = vmul.f32 %v5694, %v5704
        %v5728 = vmul.f32 %v5695, %v5704
        %v5729 = vmul.f32 %v5696, %v5704
        %v5730 = vmul.f32 %v5697, %v5704
        %v5731 = vmul.f32 %v5698, %v5704
        %v5732 = vmul.f32 %v5699, %v5704
        %v5733 = vmul.f32 %v5700, %v5704
        %v5734 = vmul.f32 %v5701, %v5704
        %v5735 = vmul.f32 %v5702, %v5704
        %v5736 = vmul.f32 %v5703, %v5704
        %v5737 = vadd.f32 %v5705, %v2175
        %v5738 = vadd.f32 %v5706, %v2176
        %v5739 = vadd.f32 %v5707, %v2177
        %v5740 = vadd.f32 %v5708, %v2178
        %v5741 = vadd.f32 %v5709, %v2179
        %v5742 = vadd.f32 %v5710, %v2180
        %v5743 = vadd.f32 %v5711, %v2181
        %v5744 = vadd.f32 %v5712, %v2182
        %v5745 = vadd.f32 %v5713, %v2183
        %v5746 = vadd.f32 %v5714, %v2184
        %v5747 = vadd.f32 %v5715, %v2185
        %v5748 = vadd.f32 %v5716, %v2186
        %v5749 = vadd.f32 %v5717, %v2187
        %v5750 = vadd.f32 %v5718, %v2188
        %v5751 = vadd.f32 %v5719, %v2189
        %v5752 = vadd.f32 %v5720, %v2190
        %v5753 = vadd.f32 %v5721, %v2191
        %v5754 = vadd.f32 %v5722, %v2192
        %v5755 = vadd.f32 %v5723, %v2193
        %v5756 = vadd.f32 %v5724, %v2194
        %v5757 = vadd.f32 %v5725, %v2195
        %v5758 = vadd.f32 %v5726, %v2196
        %v5759 = vadd.f32 %v5727, %v2197
        %v5760 = vadd.f32 %v5728, %v2198
        %v5761 = vadd.f32 %v5729, %v2199
        %v5762 = vadd.f32 %v5730, %v2200
        %v5763 = vadd.f32 %v5731, %v2201
        %v5764 = vadd.f32 %v5732, %v2202
        %v5765 = vadd.f32 %v5733, %v2203
        %v5766 = vadd.f32 %v5734, %v2204
        %v5767 = vadd.f32 %v5735, %v2205
        %v5768 = vadd.f32 %v5736, %v2206
        %v5769 = vmax.f32 %v5737, 0.0
        %v5770 = vmax.f32 %v5738, 0.0
        %v5771 = vmax.f32 %v5739, 0.0
        %v5772 = vmax.f32 %v5740, 0.0
        %v5773 = vmax.f32 %v5741, 0.0
        %v5774 = vmax.f32 %v5742, 0.0
        %v5775 = vmax.f32 %v5743, 0.0
        %v5776 = vmax.f32 %v5744, 0.0
        %v5777 = vmax.f32 %v5745, 0.0
        %v5778 = vmax.f32 %v5746, 0.0
        %v5779 = vmax.f32 %v5747, 0.0
        %v5780 = vmax.f32 %v5748, 0.0
        %v5781 = vmax.f32 %v5749, 0.0
        %v5782 = vmax.f32 %v5750, 0.0
        %v5783 = vmax.f32 %v5751, 0.0
        %v5784 = vmax.f32 %v5752, 0.0
        %v5785 = vmax.f32 %v5753, 0.0
        %v5786 = vmax.f32 %v5754, 0.0
        %v5787 = vmax.f32 %v5755, 0.0
        %v5788 = vmax.f32 %v5756, 0.0
        %v5789 = vmax.f32 %v5757, 0.0
        %v5790 = vmax.f32 %v5758, 0.0
        %v5791 = vmax.f32 %v5759, 0.0
        %v5792 = vmax.f32 %v5760, 0.0
        %v5793 = vmax.f32 %v5761, 0.0
        %v5794 = vmax.f32 %v5762, 0.0
        %v5795 = vmax.f32 %v5763, 0.0
        %v5796 = vmax.f32 %v5764, 0.0
        %v5797 = vmax.f32 %v5765, 0.0
        %v5798 = vmax.f32 %v5766, 0.0
        %v5799 = vmax.f32 %v5767, 0.0
        %v5800 = vmax.f32 %v5768, 0.0
        %5833 = vrot.lane.b32.xlu0 %v5769, 64
        %v5834 = vpop.permute.xlu0 %5833
        %5835 = vrot.lane.b32.xlu0 %v5770, 64
        %v5836 = vpop.permute.xlu0 %5835
        %5837 = vrot.lane.b32.xlu0 %v5771, 64
        %v5838 = vpop.permute.xlu0 %5837
        %5839 = vrot.lane.b32.xlu0 %v5772, 64
        %v5840 = vpop.permute.xlu0 %5839
        %5841 = vrot.lane.b32.xlu0 %v5773, 64
        %v5842 = vpop.permute.xlu0 %5841
        %5843 = vrot.lane.b32.xlu0 %v5774, 64
        %v5844 = vpop.permute.xlu0 %5843
        %5845 = vrot.lane.b32.xlu0 %v5775, 64
        %v5846 = vpop.permute.xlu0 %5845
        %5847 = vrot.lane.b32.xlu0 %v5776, 64
        %v5848 = vpop.permute.xlu0 %5847
        %5849 = vrot.lane.b32.xlu0 %v5777, 64
        %v5850 = vpop.permute.xlu0 %5849
        %5851 = vrot.lane.b32.xlu0 %v5778, 64
        %v5852 = vpop.permute.xlu0 %5851
        %5853 = vrot.lane.b32.xlu0 %v5779, 64
        %v5854 = vpop.permute.xlu0 %5853
        %5855 = vrot.lane.b32.xlu0 %v5780, 64
        %v5856 = vpop.permute.xlu0 %5855
        %5857 = vrot.lane.b32.xlu0 %v5781, 64
        %v5858 = vpop.permute.xlu0 %5857
        %5859 = vrot.lane.b32.xlu0 %v5782, 64
        %v5860 = vpop.permute.xlu0 %5859
        %5861 = vrot.lane.b32.xlu0 %v5783, 64
        %v5862 = vpop.permute.xlu0 %5861
        %5863 = vrot.lane.b32.xlu0 %v5784, 64
        %v5864 = vpop.permute.xlu0 %5863
        %5865 = vrot.lane.b32.xlu0 %v5785, 64
        %v5866 = vpop.permute.xlu0 %5865
        %5867 = vrot.lane.b32.xlu0 %v5786, 64
        %v5868 = vpop.permute.xlu0 %5867
        %5869 = vrot.lane.b32.xlu0 %v5787, 64
        %v5870 = vpop.permute.xlu0 %5869
        %5871 = vrot.lane.b32.xlu0 %v5788, 64
        %v5872 = vpop.permute.xlu0 %5871
        %5873 = vrot.lane.b32.xlu0 %v5789, 64
        %v5874 = vpop.permute.xlu0 %5873
        %5875 = vrot.lane.b32.xlu0 %v5790, 64
        %v5876 = vpop.permute.xlu0 %5875
        %5877 = vrot.lane.b32.xlu0 %v5791, 64
        %v5878 = vpop.permute.xlu0 %5877
        %5879 = vrot.lane.b32.xlu0 %v5792, 64
        %v5880 = vpop.permute.xlu0 %5879
        %5881 = vrot.lane.b32.xlu0 %v5793, 64
        %v5882 = vpop.permute.xlu0 %5881
        %5883 = vrot.lane.b32.xlu0 %v5794, 64
        %v5884 = vpop.permute.xlu0 %5883
        %5885 = vrot.lane.b32.xlu0 %v5795, 64
        %v5886 = vpop.permute.xlu0 %5885
        %5887 = vrot.lane.b32.xlu0 %v5796, 64
        %v5888 = vpop.permute.xlu0 %5887
        %5889 = vrot.lane.b32.xlu0 %v5797, 64
        %v5890 = vpop.permute.xlu0 %5889
        %5891 = vrot.lane.b32.xlu0 %v5798, 64
        %v5892 = vpop.permute.xlu0 %5891
        %5893 = vrot.lane.b32.xlu0 %v5799, 64
        %v5894 = vpop.permute.xlu0 %5893
        %5895 = vrot.lane.b32.xlu0 %v5800, 64
        %v5896 = vpop.permute.xlu0 %5895
        %5929 = vst.msk [vmem:[%s382] sm:$0xff] %vm612, %v5834
        %5930 = vst.msk [vmem:[%s382 + $0x10] sm:$0xff] %vm612, %v5836
        %5931 = vst.msk [vmem:[%s382 + $0x20] sm:$0xff] %vm612, %v5838
        %5932 = vst.msk [vmem:[%s382 + $0x30] sm:$0xff] %vm612, %v5840
        %5933 = vst.msk [vmem:[%s382 + $0x40] sm:$0xff] %vm612, %v5842
        %5934 = vst.msk [vmem:[%s382 + $0x50] sm:$0xff] %vm612, %v5844
        %5935 = vst.msk [vmem:[%s382 + $0x60] sm:$0xff] %vm612, %v5846
        %5936 = vst.msk [vmem:[%s382 + $0x70] sm:$0xff] %vm612, %v5848
        %5937 = vst.msk [vmem:[%s382 + $0x80] sm:$0xff] %vm612, %v5850
        %5938 = vst.msk [vmem:[%s382 + $0x90] sm:$0xff] %vm612, %v5852
        %5939 = vst.msk [vmem:[%s382 + $0xa0] sm:$0xff] %vm612, %v5854
        %5940 = vst.msk [vmem:[%s382 + $0xb0] sm:$0xff] %vm612, %v5856
        %5941 = vst.msk [vmem:[%s382 + $0xc0] sm:$0xff] %vm612, %v5858
        %5942 = vst.msk [vmem:[%s382 + $0xd0] sm:$0xff] %vm612, %v5860
        %5943 = vst.msk [vmem:[%s382 + $0xe0] sm:$0xff] %vm612, %v5862
        %5944 = vst.msk [vmem:[%s382 + $0xf0] sm:$0xff] %vm612, %v5864
        %5945 = vst.msk [vmem:[%s382 + $0x100] sm:$0xff] %vm612, %v5866
        %5946 = vst.msk [vmem:[%s382 + $0x110] sm:$0xff] %vm612, %v5868
        %5947 = vst.msk [vmem:[%s382 + $0x120] sm:$0xff] %vm612, %v5870
        %5948 = vst.msk [vmem:[%s382 + $0x130] sm:$0xff] %vm612, %v5872
        %5949 = vst.msk [vmem:[%s382 + $0x140] sm:$0xff] %vm612, %v5874
        %5950 = vst.msk [vmem:[%s382 + $0x150] sm:$0xff] %vm612, %v5876
        %5951 = vst.msk [vmem:[%s382 + $0x160] sm:$0xff] %vm612, %v5878
        %5952 = vst.msk [vmem:[%s382 + $0x170] sm:$0xff] %vm612, %v5880
        %5953 = vst.msk [vmem:[%s382 + $0x180] sm:$0xff] %vm612, %v5882
        %5954 = vst.msk [vmem:[%s382 + $0x190] sm:$0xff] %vm612, %v5884
        %5955 = vst.msk [vmem:[%s382 + $0x1a0] sm:$0xff] %vm612, %v5886
        %5956 = vst.msk [vmem:[%s382 + $0x1b0] sm:$0xff] %vm612, %v5888
        %5957 = vst.msk [vmem:[%s382 + $0x1c0] sm:$0xff] %vm612, %v5890
        %5958 = vst.msk [vmem:[%s382 + $0x1d0] sm:$0xff] %vm612, %v5892
        %5959 = vst.msk [vmem:[%s382 + $0x1e0] sm:$0xff] %vm612, %v5894
        %5960 = vst.msk [vmem:[%s382 + $0x1f0] sm:$0xff] %vm612, %v5896
        %v5961 = vrot.slane %v5769, 7
        %v5962 = vrot.slane %v5770, 7
        %v5963 = vsel %vm645, %v5961, %v5962
        %v5964 = vrot.slane %v5771, 7
        %v5965 = vrot.slane %v5772, 7
        %v5966 = vsel %vm645, %v5964, %v5965
        %v5967 = vrot.slane %v5773, 7
        %v5968 = vrot.slane %v5774, 7
        %v5969 = vsel %vm645, %v5967, %v5968
        %v5970 = vrot.slane %v5775, 7
        %v5971 = vrot.slane %v5776, 7
        %v5972 = vsel %vm645, %v5970, %v5971
        %v5973 = vrot.slane %v5777, 7
        %v5974 = vrot.slane %v5778, 7
        %v5975 = vsel %vm645, %v5973, %v5974
        %v5976 = vrot.slane %v5779, 7
        %v5977 = vrot.slane %v5780, 7
        %v5978 = vsel %vm645, %v5976, %v5977
        %v5979 = vrot.slane %v5781, 7
        %v5980 = vrot.slane %v5782, 7
        %v5981 = vsel %vm645, %v5979, %v5980
        %v5982 = vrot.slane %v5783, 7
        %v5983 = vrot.slane %v5784, 7
        %v5984 = vsel %vm645, %v5982, %v5983
        %v5985 = vrot.slane %v5785, 7
        %v5986 = vrot.slane %v5786, 7
        %v5987 = vsel %vm645, %v5985, %v5986
        %v5988 = vrot.slane %v5787, 7
        %v5989 = vrot.slane %v5788, 7
        %v5990 = vsel %vm645, %v5988, %v5989
        %v5991 = vrot.slane %v5789, 7
        %v5992 = vrot.slane %v5790, 7
        %v5993 = vsel %vm645, %v5991, %v5992
        %v5994 = vrot.slane %v5791, 7
        %v5995 = vrot.slane %v5792, 7
        %v5996 = vsel %vm645, %v5994, %v5995
        %v5997 = vrot.slane %v5793, 7
        %v5998 = vrot.slane %v5794, 7
        %v5999 = vsel %vm645, %v5997, %v5998
        %v6000 = vrot.slane %v5795, 7
        %v6001 = vrot.slane %v5796, 7
        %v6002 = vsel %vm645, %v6000, %v6001
        %v6003 = vrot.slane %v5797, 7
        %v6004 = vrot.slane %v5798, 7
        %v6005 = vsel %vm645, %v6003, %v6004
        %v6006 = vrot.slane %v5799, 7
        %v6007 = vrot.slane %v5800, 7
        %v6008 = vsel %vm645, %v6006, %v6007
        %6041 = vst.msk [vmem:[%s382] sm:$0xfe] %vm726, %v5961
        %6042 = vst.msk [vmem:[%s382 + $0x10] sm:$0xff] %vm373, %v5963
        %6043 = vst.msk [vmem:[%s382 + $0x20] sm:$0xfe] %vm726, %v5964
        %6044 = vst.msk [vmem:[%s382 + $0x30] sm:$0xff] %vm373, %v5966
        %6045 = vst.msk [vmem:[%s382 + $0x40] sm:$0xfe] %vm726, %v5967
        %6046 = vst.msk [vmem:[%s382 + $0x50] sm:$0xff] %vm373, %v5969
        %6047 = vst.msk [vmem:[%s382 + $0x60] sm:$0xfe] %vm726, %v5970
        %6048 = vst.msk [vmem:[%s382 + $0x70] sm:$0xff] %vm373, %v5972
        %6049 = vst.msk [vmem:[%s382 + $0x80] sm:$0xfe] %vm726, %v5973
        %6050 = vst.msk [vmem:[%s382 + $0x90] sm:$0xff] %vm373, %v5975
        %6051 = vst.msk [vmem:[%s382 + $0xa0] sm:$0xfe] %vm726, %v5976
        %6052 = vst.msk [vmem:[%s382 + $0xb0] sm:$0xff] %vm373, %v5978
        %6053 = vst.msk [vmem:[%s382 + $0xc0] sm:$0xfe] %vm726, %v5979
        %6054 = vst.msk [vmem:[%s382 + $0xd0] sm:$0xff] %vm373, %v5981
        %6055 = vst.msk [vmem:[%s382 + $0xe0] sm:$0xfe] %vm726, %v5982
        %6056 = vst.msk [vmem:[%s382 + $0xf0] sm:$0xff] %vm373, %v5984
        %6057 = vst.msk [vmem:[%s382 + $0x100] sm:$0xfe] %vm726, %v5985
        %6058 = vst.msk [vmem:[%s382 + $0x110] sm:$0xff] %vm373, %v5987
        %6059 = vst.msk [vmem:[%s382 + $0x120] sm:$0xfe] %vm726, %v5988
        %6060 = vst.msk [vmem:[%s382 + $0x130] sm:$0xff] %vm373, %v5990
        %6061 = vst.msk [vmem:[%s382 + $0x140] sm:$0xfe] %vm726, %v5991
        %6062 = vst.msk [vmem:[%s382 + $0x150] sm:$0xff] %vm373, %v5993
        %6063 = vst.msk [vmem:[%s382 + $0x160] sm:$0xfe] %vm726, %v5994
        %6064 = vst.msk [vmem:[%s382 + $0x170] sm:$0xff] %vm373, %v5996
        %6065 = vst.msk [vmem:[%s382 + $0x180] sm:$0xfe] %vm726, %v5997
        %6066 = vst.msk [vmem:[%s382 + $0x190] sm:$0xff] %vm373, %v5999
        %6067 = vst.msk [vmem:[%s382 + $0x1a0] sm:$0xfe] %vm726, %v6000
        %6068 = vst.msk [vmem:[%s382 + $0x1b0] sm:$0xff] %vm373, %v6002
        %6069 = vst.msk [vmem:[%s382 + $0x1c0] sm:$0xfe] %vm726, %v6003
        %6070 = vst.msk [vmem:[%s382 + $0x1d0] sm:$0xff] %vm373, %v6005
        %6071 = vst.msk [vmem:[%s382 + $0x1e0] sm:$0xfe] %vm726, %v6006
        %6072 = vst.msk [vmem:[%s382 + $0x1f0] sm:$0xff] %vm373, %v6008
        %v6073 = vrot.slane %v5769, 1
        %v6074 = vrot.slane %v5770, 1
        %v6075 = vsel %vm759, %v6073, %v6074
        %v6076 = vrot.slane %v5771, 1
        %v6077 = vrot.slane %v5772, 1
        %v6078 = vsel %vm759, %v6076, %v6077
        %v6079 = vrot.slane %v5773, 1
        %v6080 = vrot.slane %v5774, 1
        %v6081 = vsel %vm759, %v6079, %v6080
        %v6082 = vrot.slane %v5775, 1
        %v6083 = vrot.slane %v5776, 1
        %v6084 = vsel %vm759, %v6082, %v6083
        %v6085 = vrot.slane %v5777, 1
        %v6086 = vrot.slane %v5778, 1
        %v6087 = vsel %vm759, %v6085, %v6086
        %v6088 = vrot.slane %v5779, 1
        %v6089 = vrot.slane %v5780, 1
        %v6090 = vsel %vm759, %v6088, %v6089
        %v6091 = vrot.slane %v5781, 1
        %v6092 = vrot.slane %v5782, 1
        %v6093 = vsel %vm759, %v6091, %v6092
        %v6094 = vrot.slane %v5783, 1
        %v6095 = vrot.slane %v5784, 1
        %v6096 = vsel %vm759, %v6094, %v6095
        %v6097 = vrot.slane %v5785, 1
        %v6098 = vrot.slane %v5786, 1
        %v6099 = vsel %vm759, %v6097, %v6098
        %v6100 = vrot.slane %v5787, 1
        %v6101 = vrot.slane %v5788, 1
        %v6102 = vsel %vm759, %v6100, %v6101
        %v6103 = vrot.slane %v5789, 1
        %v6104 = vrot.slane %v5790, 1
        %v6105 = vsel %vm759, %v6103, %v6104
        %v6106 = vrot.slane %v5791, 1
        %v6107 = vrot.slane %v5792, 1
        %v6108 = vsel %vm759, %v6106, %v6107
        %v6109 = vrot.slane %v5793, 1
        %v6110 = vrot.slane %v5794, 1
        %v6111 = vsel %vm759, %v6109, %v6110
        %v6112 = vrot.slane %v5795, 1
        %v6113 = vrot.slane %v5796, 1
        %v6114 = vsel %vm759, %v6112, %v6113
        %v6115 = vrot.slane %v5797, 1
        %v6116 = vrot.slane %v5798, 1
        %v6117 = vsel %vm759, %v6115, %v6116
        %v6118 = vrot.slane %v5799, 1
        %v6119 = vrot.slane %v5800, 1
        %v6120 = vsel %vm759, %v6118, %v6119
        %6153 = vst.msk [vmem:[%s382 + $0x8] sm:$0xff] %vm373, %v6075
        %6154 = vst.msk [vmem:[%s382 + $0x18] sm:$0x7f] %vm841, %v6074
        %6155 = vst.msk [vmem:[%s382 + $0x28] sm:$0xff] %vm373, %v6078
        %6156 = vst.msk [vmem:[%s382 + $0x38] sm:$0x7f] %vm841, %v6077
        %6157 = vst.msk [vmem:[%s382 + $0x48] sm:$0xff] %vm373, %v6081
        %6158 = vst.msk [vmem:[%s382 + $0x58] sm:$0x7f] %vm841, %v6080
        %6159 = vst.msk [vmem:[%s382 + $0x68] sm:$0xff] %vm373, %v6084
        %6160 = vst.msk [vmem:[%s382 + $0x78] sm:$0x7f] %vm841, %v6083
        %6161 = vst.msk [vmem:[%s382 + $0x88] sm:$0xff] %vm373, %v6087
        %6162 = vst.msk [vmem:[%s382 + $0x98] sm:$0x7f] %vm841, %v6086
        %6163 = vst.msk [vmem:[%s382 + $0xa8] sm:$0xff] %vm373, %v6090
        %6164 = vst.msk [vmem:[%s382 + $0xb8] sm:$0x7f] %vm841, %v6089
        %6165 = vst.msk [vmem:[%s382 + $0xc8] sm:$0xff] %vm373, %v6093
        %6166 = vst.msk [vmem:[%s382 + $0xd8] sm:$0x7f] %vm841, %v6092
        %6167 = vst.msk [vmem:[%s382 + $0xe8] sm:$0xff] %vm373, %v6096
        %6168 = vst.msk [vmem:[%s382 + $0xf8] sm:$0x7f] %vm841, %v6095
        %6169 = vst.msk [vmem:[%s382 + $0x108] sm:$0xff] %vm373, %v6099
        %6170 = vst.msk [vmem:[%s382 + $0x118] sm:$0x7f] %vm841, %v6098
        %6171 = vst.msk [vmem:[%s382 + $0x128] sm:$0xff] %vm373, %v6102
        %6172 = vst.msk [vmem:[%s382 + $0x138] sm:$0x7f] %vm841, %v6101
        %6173 = vst.msk [vmem:[%s382 + $0x148] sm:$0xff] %vm373, %v6105
        %6174 = vst.msk [vmem:[%s382 + $0x158] sm:$0x7f] %vm841, %v6104
        %6175 = vst.msk [vmem:[%s382 + $0x168] sm:$0xff] %vm373, %v6108
        %6176 = vst.msk [vmem:[%s382 + $0x178] sm:$0x7f] %vm841, %v6107
        %6177 = vst.msk [vmem:[%s382 + $0x188] sm:$0xff] %vm373, %v6111
        %6178 = vst.msk [vmem:[%s382 + $0x198] sm:$0x7f] %vm841, %v6110
        %6179 = vst.msk [vmem:[%s382 + $0x1a8] sm:$0xff] %vm373, %v6114
        %6180 = vst.msk [vmem:[%s382 + $0x1b8] sm:$0x7f] %vm841, %v6113
        %6181 = vst.msk [vmem:[%s382 + $0x1c8] sm:$0xff] %vm373, %v6117
        %6182 = vst.msk [vmem:[%s382 + $0x1d8] sm:$0x7f] %vm841, %v6116
        %6183 = vst.msk [vmem:[%s382 + $0x1e8] sm:$0xff] %vm373, %v6120
        %6184 = vst.msk [vmem:[%s382 + $0x1f8] sm:$0x7f] %vm841, %v6119
        %v6185 = vld [vmem:[#allocation2] sm:$0xff]
        %v6186 = vld [vmem:[#allocation2 + $0x8] sm:$0xff]
        %v6187 = vld [vmem:[#allocation2 + $0x10] sm:$0xff]
        %v6188 = vld [vmem:[#allocation2 + $0x18] sm:$0xff]
        %v6189 = vld [vmem:[#allocation2 + $0x20] sm:$0xff]
        %v6190 = vld [vmem:[#allocation2 + $0x28] sm:$0xff]
        %v6191 = vld [vmem:[#allocation2 + $0x30] sm:$0xff]
        %v6192 = vld [vmem:[#allocation2 + $0x38] sm:$0xff]
        %v6193 = vld [vmem:[#allocation2 + $0x40] sm:$0xff]
        %v6194 = vld [vmem:[#allocation2 + $0x48] sm:$0xff]
        %v6195 = vld [vmem:[#allocation2 + $0x50] sm:$0xff]
        %v6196 = vld [vmem:[#allocation2 + $0x58] sm:$0xff]
        %v6197 = vld [vmem:[#allocation2 + $0x60] sm:$0xff]
        %v6198 = vld [vmem:[#allocation2 + $0x68] sm:$0xff]
        %v6199 = vld [vmem:[#allocation2 + $0x70] sm:$0xff]
        %v6200 = vld [vmem:[#allocation2 + $0x78] sm:$0xff]
        %v6201 = vld [vmem:[#allocation2 + $0x80] sm:$0xff]
        %v6202 = vld [vmem:[#allocation2 + $0x88] sm:$0xff]
        %v6203 = vld [vmem:[#allocation2 + $0x90] sm:$0xff]
        %v6204 = vld [vmem:[#allocation2 + $0x98] sm:$0xff]
        %v6205 = vld [vmem:[#allocation2 + $0xa0] sm:$0xff]
        %v6206 = vld [vmem:[#allocation2 + $0xa8] sm:$0xff]
        %v6207 = vld [vmem:[#allocation2 + $0xb0] sm:$0xff]
        %v6208 = vld [vmem:[#allocation2 + $0xb8] sm:$0xff]
        %v6209 = vld [vmem:[#allocation2 + $0xc0] sm:$0xff]
        %v6210 = vld [vmem:[#allocation2 + $0xc8] sm:$0xff]
        %v6211 = vld [vmem:[#allocation2 + $0xd0] sm:$0xff]
        %v6212 = vld [vmem:[#allocation2 + $0xd8] sm:$0xff]
        %v6213 = vld [vmem:[#allocation2 + $0xe0] sm:$0xff]
        %v6214 = vld [vmem:[#allocation2 + $0xe8] sm:$0xff]
        %v6215 = vld [vmem:[#allocation2 + $0xf0] sm:$0xff]
        %v6216 = vld [vmem:[#allocation2 + $0xf8] sm:$0xff]
        %v6217 = vld [vmem:[#allocation2 + $0x100] sm:$0xff]
        %v6218 = vld [vmem:[#allocation2 + $0x108] sm:$0xff]
        %v6219 = vld [vmem:[#allocation2 + $0x110] sm:$0xff]
        %v6220 = vld [vmem:[#allocation2 + $0x118] sm:$0xff]
        %v6221 = vld [vmem:[#allocation2 + $0x120] sm:$0xff]
        %v6222 = vld [vmem:[#allocation2 + $0x128] sm:$0xff]
        %v6223 = vld [vmem:[#allocation2 + $0x130] sm:$0xff]
        %v6224 = vld [vmem:[#allocation2 + $0x138] sm:$0xff]
        %v6225 = vld [vmem:[#allocation2 + $0x140] sm:$0xff]
        %v6226 = vld [vmem:[#allocation2 + $0x148] sm:$0xff]
        %v6227 = vld [vmem:[#allocation2 + $0x150] sm:$0xff]
        %v6228 = vld [vmem:[#allocation2 + $0x158] sm:$0xff]
        %v6229 = vld [vmem:[#allocation2 + $0x160] sm:$0xff]
        %v6230 = vld [vmem:[#allocation2 + $0x168] sm:$0xff]
        %v6231 = vld [vmem:[#allocation2 + $0x170] sm:$0xff]
        %v6232 = vld [vmem:[#allocation2 + $0x178] sm:$0xff]
        %v6233 = vld [vmem:[#allocation2 + $0x180] sm:$0xff]
        %v6234 = vld [vmem:[#allocation2 + $0x188] sm:$0xff]
        %v6235 = vld [vmem:[#allocation2 + $0x190] sm:$0xff]
        %v6236 = vld [vmem:[#allocation2 + $0x198] sm:$0xff]
        %v6237 = vld [vmem:[#allocation2 + $0x1a0] sm:$0xff]
        %v6238 = vld [vmem:[#allocation2 + $0x1a8] sm:$0xff]
        %v6239 = vld [vmem:[#allocation2 + $0x1b0] sm:$0xff]
        %v6240 = vld [vmem:[#allocation2 + $0x1b8] sm:$0xff]
        %v6241 = vld [vmem:[#allocation2 + $0x1c0] sm:$0xff]
        %v6242 = vld [vmem:[#allocation2 + $0x1c8] sm:$0xff]
        %v6243 = vld [vmem:[#allocation2 + $0x1d0] sm:$0xff]
        %v6244 = vld [vmem:[#allocation2 + $0x1d8] sm:$0xff]
        %v6245 = vld [vmem:[#allocation2 + $0x1e0] sm:$0xff]
        %v6246 = vld [vmem:[#allocation2 + $0x1e8] sm:$0xff]
        %v6247 = vld [vmem:[#allocation2 + $0x1f0] sm:$0xff]
        %v6248 = vld [vmem:[#allocation2 + $0x1f8] sm:$0xff]
        %v6249 = vld [vmem:[%s8] sm:$0xff]
        %v6250 = vld [vmem:[%s8 + $0x8] sm:$0xff]
        %v6251 = vld [vmem:[%s8 + $0x10] sm:$0xff]
        %v6252 = vld [vmem:[%s8 + $0x18] sm:$0xff]
        %v6253 = vld [vmem:[%s8 + $0x20] sm:$0xff]
        %v6254 = vld [vmem:[%s8 + $0x28] sm:$0xff]
        %v6255 = vld [vmem:[%s8 + $0x30] sm:$0xff]
        %v6256 = vld [vmem:[%s8 + $0x38] sm:$0xff]
        %v6257 = vld [vmem:[%s8 + $0x40] sm:$0xff]
        %v6258 = vld [vmem:[%s8 + $0x48] sm:$0xff]
        %v6259 = vld [vmem:[%s8 + $0x50] sm:$0xff]
        %v6260 = vld [vmem:[%s8 + $0x58] sm:$0xff]
        %v6261 = vld [vmem:[%s8 + $0x60] sm:$0xff]
        %v6262 = vld [vmem:[%s8 + $0x68] sm:$0xff]
        %v6263 = vld [vmem:[%s8 + $0x70] sm:$0xff]
        %v6264 = vld [vmem:[%s8 + $0x78] sm:$0xff]
        %v6265 = vld [vmem:[%s8 + $0x80] sm:$0xff]
        %v6266 = vld [vmem:[%s8 + $0x88] sm:$0xff]
        %v6267 = vld [vmem:[%s8 + $0x90] sm:$0xff]
        %v6268 = vld [vmem:[%s8 + $0x98] sm:$0xff]
        %v6269 = vld [vmem:[%s8 + $0xa0] sm:$0xff]
        %v6270 = vld [vmem:[%s8 + $0xa8] sm:$0xff]
        %v6271 = vld [vmem:[%s8 + $0xb0] sm:$0xff]
        %v6272 = vld [vmem:[%s8 + $0xb8] sm:$0xff]
        %v6273 = vld [vmem:[%s382] sm:$0xff]
        %v6274 = vld [vmem:[%s382 + $0x8] sm:$0xff]
        %v6275 = vld [vmem:[%s382 + $0x10] sm:$0xff]
        %v6276 = vld [vmem:[%s382 + $0x18] sm:$0xff]
        %v6277 = vld [vmem:[%s382 + $0x20] sm:$0xff]
        %v6278 = vld [vmem:[%s382 + $0x28] sm:$0xff]
        %v6279 = vld [vmem:[%s382 + $0x30] sm:$0xff]
        %v6280 = vld [vmem:[%s382 + $0x38] sm:$0xff]
        %v6281 = vld [vmem:[%s382 + $0x40] sm:$0xff]
        %v6282 = vld [vmem:[%s382 + $0x48] sm:$0xff]
        %v6283 = vld [vmem:[%s382 + $0x50] sm:$0xff]
        %v6284 = vld [vmem:[%s382 + $0x58] sm:$0xff]
        %v6285 = vld [vmem:[%s382 + $0x60] sm:$0xff]
        %v6286 = vld [vmem:[%s382 + $0x68] sm:$0xff]
        %v6287 = vld [vmem:[%s382 + $0x70] sm:$0xff]
        %v6288 = vld [vmem:[%s382 + $0x78] sm:$0xff]
        %v6289 = vld [vmem:[%s382 + $0x80] sm:$0xff]
        %v6290 = vld [vmem:[%s382 + $0x88] sm:$0xff]
        %v6291 = vld [vmem:[%s382 + $0x90] sm:$0xff]
        %v6292 = vld [vmem:[%s382 + $0x98] sm:$0xff]
        %v6293 = vld [vmem:[%s382 + $0xa0] sm:$0xff]
        %v6294 = vld [vmem:[%s382 + $0xa8] sm:$0xff]
        %v6295 = vld [vmem:[%s382 + $0xb0] sm:$0xff]
        %v6296 = vld [vmem:[%s382 + $0xb8] sm:$0xff]
        %v6297 = vld [vmem:[%s382 + $0xc0] sm:$0xff]
        %v6298 = vld [vmem:[%s382 + $0xc8] sm:$0xff]
        %v6299 = vld [vmem:[%s382 + $0xd0] sm:$0xff]
        %v6300 = vld [vmem:[%s382 + $0xd8] sm:$0xff]
        %v6301 = vld [vmem:[%s382 + $0xe0] sm:$0xff]
        %v6302 = vld [vmem:[%s382 + $0xe8] sm:$0xff]
        %v6303 = vld [vmem:[%s382 + $0xf0] sm:$0xff]
        %v6304 = vld [vmem:[%s382 + $0xf8] sm:$0xff]
        %v6305 = vld [vmem:[%s382 + $0x100] sm:$0xff]
        %v6306 = vld [vmem:[%s382 + $0x108] sm:$0xff]
        %v6307 = vld [vmem:[%s382 + $0x110] sm:$0xff]
        %v6308 = vld [vmem:[%s382 + $0x118] sm:$0xff]
        %v6309 = vld [vmem:[%s382 + $0x120] sm:$0xff]
        %v6310 = vld [vmem:[%s382 + $0x128] sm:$0xff]
        %v6311 = vld [vmem:[%s382 + $0x130] sm:$0xff]
        %v6312 = vld [vmem:[%s382 + $0x138] sm:$0xff]
        %v6313 = vld [vmem:[%s382 + $0x140] sm:$0xff]
        %v6314 = vld [vmem:[%s382 + $0x148] sm:$0xff]
        %v6315 = vld [vmem:[%s382 + $0x150] sm:$0xff]
        %v6316 = vld [vmem:[%s382 + $0x158] sm:$0xff]
        %v6317 = vld [vmem:[%s382 + $0x160] sm:$0xff]
        %v6318 = vld [vmem:[%s382 + $0x168] sm:$0xff]
        %v6319 = vld [vmem:[%s382 + $0x170] sm:$0xff]
        %v6320 = vld [vmem:[%s382 + $0x178] sm:$0xff]
        %v6321 = vld [vmem:[%s382 + $0x180] sm:$0xff]
        %v6322 = vld [vmem:[%s382 + $0x188] sm:$0xff]
        %v6323 = vld [vmem:[%s382 + $0x190] sm:$0xff]
        %v6324 = vld [vmem:[%s382 + $0x198] sm:$0xff]
        %v6325 = vld [vmem:[%s382 + $0x1a0] sm:$0xff]
        %v6326 = vld [vmem:[%s382 + $0x1a8] sm:$0xff]
        %v6327 = vld [vmem:[%s382 + $0x1b0] sm:$0xff]
        %v6328 = vld [vmem:[%s382 + $0x1b8] sm:$0xff]
        %v6329 = vld [vmem:[%s382 + $0x1c0] sm:$0xff]
        %v6330 = vld [vmem:[%s382 + $0x1c8] sm:$0xff]
        %v6331 = vld [vmem:[%s382 + $0x1d0] sm:$0xff]
        %v6332 = vld [vmem:[%s382 + $0x1d8] sm:$0xff]
        %v6333 = vld [vmem:[%s382 + $0x1e0] sm:$0xff]
        %v6334 = vld [vmem:[%s382 + $0x1e8] sm:$0xff]
        %v6335 = vld [vmem:[%s382 + $0x1f0] sm:$0xff]
        %v6336 = vld [vmem:[%s382 + $0x1f8] sm:$0xff]
        %s6337 = scalar_lea.vmem %s8, 192
        %v6338 = vld [vmem:[%s6337] sm:$0xff]
        %v6339 = vld [vmem:[%s6337 + $0x8] sm:$0xff]
        %v6340 = vld [vmem:[%s6337 + $0x10] sm:$0xff]
        %v6341 = vld [vmem:[%s6337 + $0x18] sm:$0xff]
        %v6342 = vld [vmem:[%s6337 + $0x20] sm:$0xff]
        %v6343 = vld [vmem:[%s6337 + $0x28] sm:$0xff]
        %v6344 = vld [vmem:[%s6337 + $0x30] sm:$0xff]
        %v6345 = vld [vmem:[%s6337 + $0x38] sm:$0xff]
        %v6346 = vld [vmem:[%s6337 + $0x40] sm:$0xff]
        %v6347 = vld [vmem:[%s6337 + $0x48] sm:$0xff]
        %v6348 = vld [vmem:[%s6337 + $0x50] sm:$0xff]
        %v6349 = vld [vmem:[%s6337 + $0x58] sm:$0xff]
        %v6350 = vld [vmem:[%s6337 + $0x60] sm:$0xff]
        %v6351 = vld [vmem:[%s6337 + $0x68] sm:$0xff]
        %v6352 = vld [vmem:[%s6337 + $0x70] sm:$0xff]
        %v6353 = vld [vmem:[%s6337 + $0x78] sm:$0xff]
        %v6354 = vld [vmem:[%s6337 + $0x80] sm:$0xff]
        %v6355 = vld [vmem:[%s6337 + $0x88] sm:$0xff]
        %v6356 = vld [vmem:[%s6337 + $0x90] sm:$0xff]
        %v6357 = vld [vmem:[%s6337 + $0x98] sm:$0xff]
        %v6358 = vld [vmem:[%s6337 + $0xa0] sm:$0xff]
        %v6359 = vld [vmem:[%s6337 + $0xa8] sm:$0xff]
        %v6360 = vld [vmem:[%s6337 + $0xb0] sm:$0xff]
        %v6361 = vld [vmem:[%s6337 + $0xb8] sm:$0xff]
        %v6363 = vsel %vm373, %v6274, 0
        %v6366 = vsel %vm373, %v6276, 0
        %v6369 = vsel %vm373, %v6278, 0
        %v6372 = vsel %vm373, %v6280, 0
        %v6375 = vsel %vm373, %v6282, 0
        %v6378 = vsel %vm373, %v6284, 0
        %v6381 = vsel %vm373, %v6286, 0
        %v6384 = vsel %vm373, %v6288, 0
        %v6387 = vsel %vm373, %v6290, 0
        %v6390 = vsel %vm373, %v6292, 0
        %v6393 = vsel %vm373, %v6294, 0
        %v6396 = vsel %vm373, %v6296, 0
        %v6399 = vsel %vm373, %v6298, 0
        %v6402 = vsel %vm373, %v6300, 0
        %v6405 = vsel %vm373, %v6302, 0
        %v6408 = vsel %vm373, %v6304, 0
        %v6411 = vsel %vm373, %v6306, 0
        %v6414 = vsel %vm373, %v6308, 0
        %v6417 = vsel %vm373, %v6310, 0
        %v6420 = vsel %vm373, %v6312, 0
        %v6423 = vsel %vm373, %v6314, 0
        %v6426 = vsel %vm373, %v6316, 0
        %v6429 = vsel %vm373, %v6318, 0
        %v6432 = vsel %vm373, %v6320, 0
        %v6435 = vsel %vm373, %v6322, 0
        %v6438 = vsel %vm373, %v6324, 0
        %v6441 = vsel %vm373, %v6326, 0
        %v6444 = vsel %vm373, %v6328, 0
        %v6447 = vsel %vm373, %v6330, 0
        %v6450 = vsel %vm373, %v6332, 0
        %v6453 = vsel %vm373, %v6334, 0
        %v6456 = vsel %vm373, %v6336, 0
        %6458 = vmatprep.subr.mxu0 0.0
        %6459 = vmatpush1.msra.mxu0 %v6338
        %6460 = vmatprep.subr.mxu0 0.0
        %6461 = vmatpush1.msra.mxu0 %v6339
        %6462 = vmatprep.subr.mxu0 0.0
        %6463 = vmatpush1.msra.mxu0 %v6340
        %6464 = vmatprep.subr.mxu0 0.0
        %6465 = vmatpush1.msra.mxu0 %v6341
        %6466 = vmatprep.subr.mxu0 0.0
        %6467 = vmatpush1.msra.mxu0 %v6342
        %6468 = vmatprep.subr.mxu0 0.0
        %6469 = vmatpush1.msra.mxu0 %v6343
        %6470 = vmatprep.subr.mxu0 0.0
        %6471 = vmatpush1.msra.mxu0 %v6344
        %6472 = vmatprep.subr.mxu0 0.0
        %6473 = vmatpush1.msra.mxu0 %v6345
        %6474 = vmatprep.subr.mxu0 0.0
        %6475 = vmatpush1.msra.mxu0 %v6346
        %6476 = vmatprep.subr.mxu0 0.0
        %6477 = vmatpush1.msra.mxu0 %v6347
        %6478 = vmatprep.subr.mxu0 0.0
        %6479 = vmatpush1.msra.mxu0 %v6348
        %6480 = vmatprep.subr.mxu0 0.0
        %6481 = vmatpush1.msra.mxu0 %v6349
        %6482 = vmatprep.subr.mxu0 0.0
        %6483 = vmatpush1.msra.mxu0 %v6350
        %6484 = vmatprep.subr.mxu0 0.0
        %6485 = vmatpush1.msra.mxu0 %v6351
        %6486 = vmatprep.subr.mxu0 0.0
        %6487 = vmatpush1.msra.mxu0 %v6352
        %6488 = vmatprep.subr.mxu0 0.0
        %6489 = vmatpush1.msra.mxu0 %v6353
        %6490 = vmatprep.subr.mxu0 0.0
        %6491 = vmatpush1.msra.mxu0 %v6354
        %6492 = vmatprep.subr.mxu0 0.0
        %6493 = vmatpush1.msra.mxu0 %v6355
        %6494 = vmatprep.subr.mxu0 0.0
        %6495 = vmatpush1.msra.mxu0 %v6356
        %6496 = vmatprep.subr.mxu0 0.0
        %6497 = vmatpush1.msra.mxu0 %v6357
        %6498 = vmatprep.subr.mxu0 0.0
        %6499 = vmatpush1.msra.mxu0 %v6358
        %6500 = vmatprep.subr.mxu0 0.0
        %6501 = vmatpush1.msra.mxu0 %v6359
        %6502 = vmatprep.subr.mxu0 0.0
        %6503 = vmatpush1.msra.mxu0 %v6360
        %6504 = vmatprep.subr.mxu0 0.0
        %6505 = vmatpush1.msra.mxu0 %v6361
        %6506 = vmatprep.subr.mxu0 0.0
        %6507 = vmatpush1.msra.mxu0 0.0
        %6508 = vmatprep.subr.mxu0 0.0
        %6509 = vmatpush1.msra.mxu0 0.0
        %6510 = vmatprep.subr.mxu0 0.0
        %6511 = vmatpush1.msra.mxu0 0.0
        %6512 = vmatprep.subr.mxu0 0.0
        %6513 = vmatpush1.msra.mxu0 0.0
        %6514 = vmatprep.subr.mxu0 0.0
        %6515 = vmatpush1.msra.mxu0 0.0
        %6516 = vmatprep.subr.mxu0 0.0
        %6517 = vmatpush1.msra.mxu0 0.0
        %6518 = vmatprep.subr.mxu0 0.0
        %6519 = vmatpush1.msra.mxu0 0.0
        %6520 = vmatprep.subr.mxu0 0.0
        %6521 = vmatpush1.msra.mxu0 0.0
        %6522 = vmatprep.mubr.f32.mxu0 %v6363
        %6523 = vmatmul.mubr.f32.gmra.mrb[0].mxu0 %v6273
        %v6524 = vpop.f32.mrb[0].mxu0
        %v6525 = vadd.f32 0.0, %v6524
        %v6526 = vpop.f32.mrb[0].mxu0
        %6527 = vmatprep.mubr.f32.mxu0 %v6366
        %6528 = vmatmul.mubr.f32.gmra.mrb[0].mxu0 %v6275
        %v6529 = vpop.f32.mrb[0].mxu0
        %v6530 = vadd.f32 0.0, %v6529
        %v6531 = vpop.f32.mrb[0].mxu0
        %6532 = vmatprep.mubr.f32.mxu0 %v6369
        %6533 = vmatmul.mubr.f32.gmra.mrb[0].mxu0 %v6277
        %v6534 = vpop.f32.mrb[0].mxu0
        %v6535 = vadd.f32 0.0, %v6534
        %v6536 = vpop.f32.mrb[0].mxu0
        %6537 = vmatprep.mubr.f32.mxu0 %v6372
        %6538 = vmatmul.mubr.f32.gmra.mrb[0].mxu0 %v6279
        %v6539 = vpop.f32.mrb[0].mxu0
        %v6540 = vadd.f32 0.0, %v6539
        %v6541 = vpop.f32.mrb[0].mxu0
        %6542 = vmatprep.mubr.f32.mxu0 %v6375
        %6543 = vmatmul.mubr.f32.gmra.mrb[0].mxu0 %v6281
        %v6544 = vpop.f32.mrb[0].mxu0
        %v6545 = vadd.f32 0.0, %v6544
        %v6546 = vpop.f32.mrb[0].mxu0
        %6547 = vmatprep.mubr.f32.mxu0 %v6378
        %6548 = vmatmul.mubr.f32.gmra.mrb[0].mxu0 %v6283
        %v6549 = vpop.f32.mrb[0].mxu0
        %v6550 = vadd.f32 0.0, %v6549
        %v6551 = vpop.f32.mrb[0].mxu0
        %6552 = vmatprep.mubr.f32.mxu0 %v6381
        %6553 = vmatmul.mubr.f32.gmra.mrb[0].mxu0 %v6285
        %v6554 = vpop.f32.mrb[0].mxu0
        %v6555 = vadd.f32 0.0, %v6554
        %v6556 = vpop.f32.mrb[0].mxu0
        %6557 = vmatprep.mubr.f32.mxu0 %v6384
        %6558 = vmatmul.mubr.f32.gmra.mrb[0].mxu0 %v6287
        %v6559 = vpop.f32.mrb[0].mxu0
        %v6560 = vadd.f32 0.0, %v6559
        %v6561 = vpop.f32.mrb[0].mxu0
        %6562 = vmatprep.mubr.f32.mxu0 %v6387
        %6563 = vmatmul.mubr.f32.gmra.mrb[0].mxu0 %v6289
        %v6564 = vpop.f32.mrb[0].mxu0
        %v6565 = vadd.f32 0.0, %v6564
        %v6566 = vpop.f32.mrb[0].mxu0
        %6567 = vmatprep.mubr.f32.mxu0 %v6390
        %6568 = vmatmul.mubr.f32.gmra.mrb[0].mxu0 %v6291
        %v6569 = vpop.f32.mrb[0].mxu0
        %v6570 = vadd.f32 0.0, %v6569
        %v6571 = vpop.f32.mrb[0].mxu0
        %6572 = vmatprep.mubr.f32.mxu0 %v6393
        %6573 = vmatmul.mubr.f32.gmra.mrb[0].mxu0 %v6293
        %v6574 = vpop.f32.mrb[0].mxu0
        %v6575 = vadd.f32 0.0, %v6574
        %v6576 = vpop.f32.mrb[0].mxu0
        %6577 = vmatprep.mubr.f32.mxu0 %v6396
        %6578 = vmatmul.mubr.f32.gmra.mrb[0].mxu0 %v6295
        %v6579 = vpop.f32.mrb[0].mxu0
        %v6580 = vadd.f32 0.0, %v6579
        %v6581 = vpop.f32.mrb[0].mxu0
        %6582 = vmatprep.mubr.f32.mxu0 %v6399
        %6583 = vmatmul.mubr.f32.gmra.mrb[0].mxu0 %v6297
        %v6584 = vpop.f32.mrb[0].mxu0
        %v6585 = vadd.f32 0.0, %v6584
        %v6586 = vpop.f32.mrb[0].mxu0
        %6587 = vmatprep.mubr.f32.mxu0 %v6402
        %6588 = vmatmul.mubr.f32.gmra.mrb[0].mxu0 %v6299
        %v6589 = vpop.f32.mrb[0].mxu0
        %v6590 = vadd.f32 0.0, %v6589
        %v6591 = vpop.f32.mrb[0].mxu0
        %6592 = vmatprep.mubr.f32.mxu0 %v6405
        %6593 = vmatmul.mubr.f32.gmra.mrb[0].mxu0 %v6301
        %v6594 = vpop.f32.mrb[0].mxu0
        %v6595 = vadd.f32 0.0, %v6594
        %v6596 = vpop.f32.mrb[0].mxu0
        %6597 = vmatprep.mubr.f32.mxu0 %v6408
        %6598 = vmatmul.mubr.f32.gmra.mrb[0].mxu0 %v6303
        %v6599 = vpop.f32.mrb[0].mxu0
        %v6600 = vadd.f32 0.0, %v6599
        %v6601 = vpop.f32.mrb[0].mxu0
        %6602 = vmatprep.mubr.f32.mxu0 %v6411
        %6603 = vmatmul.mubr.f32.gmra.mrb[0].mxu0 %v6305
        %v6604 = vpop.f32.mrb[0].mxu0
        %v6605 = vadd.f32 0.0, %v6604
        %v6606 = vpop.f32.mrb[0].mxu0
        %6607 = vmatprep.mubr.f32.mxu0 %v6414
        %6608 = vmatmul.mubr.f32.gmra.mrb[0].mxu0 %v6307
        %v6609 = vpop.f32.mrb[0].mxu0
        %v6610 = vadd.f32 0.0, %v6609
        %v6611 = vpop.f32.mrb[0].mxu0
        %6612 = vmatprep.mubr.f32.mxu0 %v6417
        %6613 = vmatmul.mubr.f32.gmra.mrb[0].mxu0 %v6309
        %v6614 = vpop.f32.mrb[0].mxu0
        %v6615 = vadd.f32 0.0, %v6614
        %v6616 = vpop.f32.mrb[0].mxu0
        %6617 = vmatprep.mubr.f32.mxu0 %v6420
        %6618 = vmatmul.mubr.f32.gmra.mrb[0].mxu0 %v6311
        %v6619 = vpop.f32.mrb[0].mxu0
        %v6620 = vadd.f32 0.0, %v6619
        %v6621 = vpop.f32.mrb[0].mxu0
        %6622 = vmatprep.mubr.f32.mxu0 %v6423
        %6623 = vmatmul.mubr.f32.gmra.mrb[0].mxu0 %v6313
        %v6624 = vpop.f32.mrb[0].mxu0
        %v6625 = vadd.f32 0.0, %v6624
        %v6626 = vpop.f32.mrb[0].mxu0
        %6627 = vmatprep.mubr.f32.mxu0 %v6426
        %6628 = vmatmul.mubr.f32.gmra.mrb[0].mxu0 %v6315
        %v6629 = vpop.f32.mrb[0].mxu0
        %v6630 = vadd.f32 0.0, %v6629
        %v6631 = vpop.f32.mrb[0].mxu0
        %6632 = vmatprep.mubr.f32.mxu0 %v6429
        %6633 = vmatmul.mubr.f32.gmra.mrb[0].mxu0 %v6317
        %v6634 = vpop.f32.mrb[0].mxu0
        %v6635 = vadd.f32 0.0, %v6634
        %v6636 = vpop.f32.mrb[0].mxu0
        %6637 = vmatprep.mubr.f32.mxu0 %v6432
        %6638 = vmatmul.mubr.f32.gmra.mrb[0].mxu0 %v6319
        %v6639 = vpop.f32.mrb[0].mxu0
        %v6640 = vadd.f32 0.0, %v6639
        %v6641 = vpop.f32.mrb[0].mxu0
        %6642 = vmatprep.mubr.f32.mxu0 %v6435
        %6643 = vmatmul.mubr.f32.gmra.mrb[0].mxu0 %v6321
        %v6644 = vpop.f32.mrb[0].mxu0
        %v6645 = vadd.f32 0.0, %v6644
        %v6646 = vpop.f32.mrb[0].mxu0
        %6647 = vmatprep.mubr.f32.mxu0 %v6438
        %6648 = vmatmul.mubr.f32.gmra.mrb[0].mxu0 %v6323
        %v6649 = vpop.f32.mrb[0].mxu0
        %v6650 = vadd.f32 0.0, %v6649
        %v6651 = vpop.f32.mrb[0].mxu0
        %6652 = vmatprep.mubr.f32.mxu0 %v6441
        %6653 = vmatmul.mubr.f32.gmra.mrb[0].mxu0 %v6325
        %v6654 = vpop.f32.mrb[0].mxu0
        %v6655 = vadd.f32 0.0, %v6654
        %v6656 = vpop.f32.mrb[0].mxu0
        %6657 = vmatprep.mubr.f32.mxu0 %v6444
        %6658 = vmatmul.mubr.f32.gmra.mrb[0].mxu0 %v6327
        %v6659 = vpop.f32.mrb[0].mxu0
        %v6660 = vadd.f32 0.0, %v6659
        %v6661 = vpop.f32.mrb[0].mxu0
        %6662 = vmatprep.mubr.f32.mxu0 %v6447
        %6663 = vmatmul.mubr.f32.gmra.mrb[0].mxu0 %v6329
        %v6664 = vpop.f32.mrb[0].mxu0
        %v6665 = vadd.f32 0.0, %v6664
        %v6666 = vpop.f32.mrb[0].mxu0
        %6667 = vmatprep.mubr.f32.mxu0 %v6450
        %6668 = vmatmul.mubr.f32.gmra.mrb[0].mxu0 %v6331
        %v6669 = vpop.f32.mrb[0].mxu0
        %v6670 = vadd.f32 0.0, %v6669
        %v6671 = vpop.f32.mrb[0].mxu0
        %6672 = vmatprep.mubr.f32.mxu0 %v6453
        %6673 = vmatmul.mubr.f32.gmra.mrb[0].mxu0 %v6333
        %v6674 = vpop.f32.mrb[0].mxu0
        %v6675 = vadd.f32 0.0, %v6674
        %v6676 = vpop.f32.mrb[0].mxu0
        %6677 = vmatprep.mubr.f32.mxu0 %v6456
        %6678 = vmatmul.mubr.f32.gmra.mrb[0].mxu0 %v6335
        %v6679 = vpop.f32.mrb[0].mxu0
        %v6680 = vadd.f32 0.0, %v6679
        %v6681 = vpop.f32.mrb[0].mxu0
        %6682 = vdwg.mxu0
        %v6684 = vsel %vm373, %v6186, 0
        %v6687 = vsel %vm373, %v6188, 0
        %v6690 = vsel %vm373, %v6190, 0
        %v6693 = vsel %vm373, %v6192, 0
        %v6696 = vsel %vm373, %v6194, 0
        %v6699 = vsel %vm373, %v6196, 0
        %v6702 = vsel %vm373, %v6198, 0
        %v6705 = vsel %vm373, %v6200, 0
        %v6708 = vsel %vm373, %v6202, 0
        %v6711 = vsel %vm373, %v6204, 0
        %v6714 = vsel %vm373, %v6206, 0
        %v6717 = vsel %vm373, %v6208, 0
        %v6720 = vsel %vm373, %v6210, 0
        %v6723 = vsel %vm373, %v6212, 0
        %v6726 = vsel %vm373, %v6214, 0
        %v6729 = vsel %vm373, %v6216, 0
        %v6732 = vsel %vm373, %v6218, 0
        %v6735 = vsel %vm373, %v6220, 0
        %v6738 = vsel %vm373, %v6222, 0
        %v6741 = vsel %vm373, %v6224, 0
        %v6744 = vsel %vm373, %v6226, 0
        %v6747 = vsel %vm373, %v6228, 0
        %v6750 = vsel %vm373, %v6230, 0
        %v6753 = vsel %vm373, %v6232, 0
        %v6756 = vsel %vm373, %v6234, 0
        %v6759 = vsel %vm373, %v6236, 0
        %v6762 = vsel %vm373, %v6238, 0
        %v6765 = vsel %vm373, %v6240, 0
        %v6768 = vsel %vm373, %v6242, 0
        %v6771 = vsel %vm373, %v6244, 0
        %v6774 = vsel %vm373, %v6246, 0
        %v6777 = vsel %vm373, %v6248, 0
        %6779 = vmatprep.subr.mxu0 0.0
        %6780 = vmatpush1.msra.mxu0 %v6249
        %6781 = vmatprep.subr.mxu0 0.0
        %6782 = vmatpush1.msra.mxu0 %v6250
        %6783 = vmatprep.subr.mxu0 0.0
        %6784 = vmatpush1.msra.mxu0 %v6251
        %6785 = vmatprep.subr.mxu0 0.0
        %6786 = vmatpush1.msra.mxu0 %v6252
        %6787 = vmatprep.subr.mxu0 0.0
        %6788 = vmatpush1.msra.mxu0 %v6253
        %6789 = vmatprep.subr.mxu0 0.0
        %6790 = vmatpush1.msra.mxu0 %v6254
        %6791 = vmatprep.subr.mxu0 0.0
        %6792 = vmatpush1.msra.mxu0 %v6255
        %6793 = vmatprep.subr.mxu0 0.0
        %6794 = vmatpush1.msra.mxu0 %v6256
        %6795 = vmatprep.subr.mxu0 0.0
        %6796 = vmatpush1.msra.mxu0 %v6257
        %6797 = vmatprep.subr.mxu0 0.0
        %6798 = vmatpush1.msra.mxu0 %v6258
        %6799 = vmatprep.subr.mxu0 0.0
        %6800 = vmatpush1.msra.mxu0 %v6259
        %6801 = vmatprep.subr.mxu0 0.0
        %6802 = vmatpush1.msra.mxu0 %v6260
        %6803 = vmatprep.subr.mxu0 0.0
        %6804 = vmatpush1.msra.mxu0 %v6261
        %6805 = vmatprep.subr.mxu0 0.0
        %6806 = vmatpush1.msra.mxu0 %v6262
        %6807 = vmatprep.subr.mxu0 0.0
        %6808 = vmatpush1.msra.mxu0 %v6263
        %6809 = vmatprep.subr.mxu0 0.0
        %6810 = vmatpush1.msra.mxu0 %v6264
        %6811 = vmatprep.subr.mxu0 0.0
        %6812 = vmatpush1.msra.mxu0 %v6265
        %6813 = vmatprep.subr.mxu0 0.0
        %6814 = vmatpush1.msra.mxu0 %v6266
        %6815 = vmatprep.subr.mxu0 0.0
        %6816 = vmatpush1.msra.mxu0 %v6267
        %6817 = vmatprep.subr.mxu0 0.0
        %6818 = vmatpush1.msra.mxu0 %v6268
        %6819 = vmatprep.subr.mxu0 0.0
        %6820 = vmatpush1.msra.mxu0 %v6269
        %6821 = vmatprep.subr.mxu0 0.0
        %6822 = vmatpush1.msra.mxu0 %v6270
        %6823 = vmatprep.subr.mxu0 0.0
        %6824 = vmatpush1.msra.mxu0 %v6271
        %6825 = vmatprep.subr.mxu0 0.0
        %6826 = vmatpush1.msra.mxu0 %v6272
        %6827 = vmatprep.subr.mxu0 0.0
        %6828 = vmatpush1.msra.mxu0 0.0
        %6829 = vmatprep.subr.mxu0 0.0
        %6830 = vmatpush1.msra.mxu0 0.0
        %6831 = vmatprep.subr.mxu0 0.0
        %6832 = vmatpush1.msra.mxu0 0.0
        %6833 = vmatprep.subr.mxu0 0.0
        %6834 = vmatpush1.msra.mxu0 0.0
        %6835 = vmatprep.subr.mxu0 0.0
        %6836 = vmatpush1.msra.mxu0 0.0
        %6837 = vmatprep.subr.mxu0 0.0
        %6838 = vmatpush1.msra.mxu0 0.0
        %6839 = vmatprep.subr.mxu0 0.0
        %6840 = vmatpush1.msra.mxu0 0.0
        %6841 = vmatprep.subr.mxu0 0.0
        %6842 = vmatpush1.msra.mxu0 0.0
        %6843 = vmatprep.mubr.f32.mxu0 %v6684
        %6844 = vmatmul.mubr.f32.gmra.mrb[0].mxu0 %v6185
        %v6845 = vpop.f32.mrb[0].mxu0
        %v6846 = vadd.f32 %v6525, %v6845
        %v6847 = vpop.f32.mrb[0].mxu0
        %6848 = vmatprep.mubr.f32.mxu0 %v6687
        %6849 = vmatmul.mubr.f32.gmra.mrb[0].mxu0 %v6187
        %v6850 = vpop.f32.mrb[0].mxu0
        %v6851 = vadd.f32 %v6530, %v6850
        %v6852 = vpop.f32.mrb[0].mxu0
        %6853 = vmatprep.mubr.f32.mxu0 %v6690
        %6854 = vmatmul.mubr.f32.gmra.mrb[0].mxu0 %v6189
        %v6855 = vpop.f32.mrb[0].mxu0
        %v6856 = vadd.f32 %v6535, %v6855
        %v6857 = vpop.f32.mrb[0].mxu0
        %6858 = vmatprep.mubr.f32.mxu0 %v6693
        %6859 = vmatmul.mubr.f32.gmra.mrb[0].mxu0 %v6191
        %v6860 = vpop.f32.mrb[0].mxu0
        %v6861 = vadd.f32 %v6540, %v6860
        %v6862 = vpop.f32.mrb[0].mxu0
        %6863 = vmatprep.mubr.f32.mxu0 %v6696
        %6864 = vmatmul.mubr.f32.gmra.mrb[0].mxu0 %v6193
        %v6865 = vpop.f32.mrb[0].mxu0
        %v6866 = vadd.f32 %v6545, %v6865
        %v6867 = vpop.f32.mrb[0].mxu0
        %6868 = vmatprep.mubr.f32.mxu0 %v6699
        %6869 = vmatmul.mubr.f32.gmra.mrb[0].mxu0 %v6195
        %v6870 = vpop.f32.mrb[0].mxu0
        %v6871 = vadd.f32 %v6550, %v6870
        %v6872 = vpop.f32.mrb[0].mxu0
        %6873 = vmatprep.mubr.f32.mxu0 %v6702
        %6874 = vmatmul.mubr.f32.gmra.mrb[0].mxu0 %v6197
        %v6875 = vpop.f32.mrb[0].mxu0
        %v6876 = vadd.f32 %v6555, %v6875
        %v6877 = vpop.f32.mrb[0].mxu0
        %6878 = vmatprep.mubr.f32.mxu0 %v6705
        %6879 = vmatmul.mubr.f32.gmra.mrb[0].mxu0 %v6199
        %v6880 = vpop.f32.mrb[0].mxu0
        %v6881 = vadd.f32 %v6560, %v6880
        %v6882 = vpop.f32.mrb[0].mxu0
        %6883 = vmatprep.mubr.f32.mxu0 %v6708
        %6884 = vmatmul.mubr.f32.gmra.mrb[0].mxu0 %v6201
        %v6885 = vpop.f32.mrb[0].mxu0
        %v6886 = vadd.f32 %v6565, %v6885
        %v6887 = vpop.f32.mrb[0].mxu0
        %6888 = vmatprep.mubr.f32.mxu0 %v6711
        %6889 = vmatmul.mubr.f32.gmra.mrb[0].mxu0 %v6203
        %v6890 = vpop.f32.mrb[0].mxu0
        %v6891 = vadd.f32 %v6570, %v6890
        %v6892 = vpop.f32.mrb[0].mxu0
        %6893 = vmatprep.mubr.f32.mxu0 %v6714
        %6894 = vmatmul.mubr.f32.gmra.mrb[0].mxu0 %v6205
        %v6895 = vpop.f32.mrb[0].mxu0
        %v6896 = vadd.f32 %v6575, %v6895
        %v6897 = vpop.f32.mrb[0].mxu0
        %6898 = vmatprep.mubr.f32.mxu0 %v6717
        %6899 = vmatmul.mubr.f32.gmra.mrb[0].mxu0 %v6207
        %v6900 = vpop.f32.mrb[0].mxu0
        %v6901 = vadd.f32 %v6580, %v6900
        %v6902 = vpop.f32.mrb[0].mxu0
        %6903 = vmatprep.mubr.f32.mxu0 %v6720
        %6904 = vmatmul.mubr.f32.gmra.mrb[0].mxu0 %v6209
        %v6905 = vpop.f32.mrb[0].mxu0
        %v6906 = vadd.f32 %v6585, %v6905
        %v6907 = vpop.f32.mrb[0].mxu0
        %6908 = vmatprep.mubr.f32.mxu0 %v6723
        %6909 = vmatmul.mubr.f32.gmra.mrb[0].mxu0 %v6211
        %v6910 = vpop.f32.mrb[0].mxu0
        %v6911 = vadd.f32 %v6590, %v6910
        %v6912 = vpop.f32.mrb[0].mxu0
        %6913 = vmatprep.mubr.f32.mxu0 %v6726
        %6914 = vmatmul.mubr.f32.gmra.mrb[0].mxu0 %v6213
        %v6915 = vpop.f32.mrb[0].mxu0
        %v6916 = vadd.f32 %v6595, %v6915
        %v6917 = vpop.f32.mrb[0].mxu0
        %6918 = vmatprep.mubr.f32.mxu0 %v6729
        %6919 = vmatmul.mubr.f32.gmra.mrb[0].mxu0 %v6215
        %v6920 = vpop.f32.mrb[0].mxu0
        %v6921 = vadd.f32 %v6600, %v6920
        %v6922 = vpop.f32.mrb[0].mxu0
        %6923 = vmatprep.mubr.f32.mxu0 %v6732
        %6924 = vmatmul.mubr.f32.gmra.mrb[0].mxu0 %v6217
        %v6925 = vpop.f32.mrb[0].mxu0
        %v6926 = vadd.f32 %v6605, %v6925
        %v6927 = vpop.f32.mrb[0].mxu0
        %6928 = vmatprep.mubr.f32.mxu0 %v6735
        %6929 = vmatmul.mubr.f32.gmra.mrb[0].mxu0 %v6219
        %v6930 = vpop.f32.mrb[0].mxu0
        %v6931 = vadd.f32 %v6610, %v6930
        %v6932 = vpop.f32.mrb[0].mxu0
        %6933 = vmatprep.mubr.f32.mxu0 %v6738
        %6934 = vmatmul.mubr.f32.gmra.mrb[0].mxu0 %v6221
        %v6935 = vpop.f32.mrb[0].mxu0
        %v6936 = vadd.f32 %v6615, %v6935
        %v6937 = vpop.f32.mrb[0].mxu0
        %6938 = vmatprep.mubr.f32.mxu0 %v6741
        %6939 = vmatmul.mubr.f32.gmra.mrb[0].mxu0 %v6223
        %v6940 = vpop.f32.mrb[0].mxu0
        %v6941 = vadd.f32 %v6620, %v6940
        %v6942 = vpop.f32.mrb[0].mxu0
        %6943 = vmatprep.mubr.f32.mxu0 %v6744
        %6944 = vmatmul.mubr.f32.gmra.mrb[0].mxu0 %v6225
        %v6945 = vpop.f32.mrb[0].mxu0
        %v6946 = vadd.f32 %v6625, %v6945
        %v6947 = vpop.f32.mrb[0].mxu0
        %6948 = vmatprep.mubr.f32.mxu0 %v6747
        %6949 = vmatmul.mubr.f32.gmra.mrb[0].mxu0 %v6227
        %v6950 = vpop.f32.mrb[0].mxu0
        %v6951 = vadd.f32 %v6630, %v6950
        %v6952 = vpop.f32.mrb[0].mxu0
        %6953 = vmatprep.mubr.f32.mxu0 %v6750
        %6954 = vmatmul.mubr.f32.gmra.mrb[0].mxu0 %v6229
        %v6955 = vpop.f32.mrb[0].mxu0
        %v6956 = vadd.f32 %v6635, %v6955
        %v6957 = vpop.f32.mrb[0].mxu0
        %6958 = vmatprep.mubr.f32.mxu0 %v6753
        %6959 = vmatmul.mubr.f32.gmra.mrb[0].mxu0 %v6231
        %v6960 = vpop.f32.mrb[0].mxu0
        %v6961 = vadd.f32 %v6640, %v6960
        %v6962 = vpop.f32.mrb[0].mxu0
        %6963 = vmatprep.mubr.f32.mxu0 %v6756
        %6964 = vmatmul.mubr.f32.gmra.mrb[0].mxu0 %v6233
        %v6965 = vpop.f32.mrb[0].mxu0
        %v6966 = vadd.f32 %v6645, %v6965
        %v6967 = vpop.f32.mrb[0].mxu0
        %6968 = vmatprep.mubr.f32.mxu0 %v6759
        %6969 = vmatmul.mubr.f32.gmra.mrb[0].mxu0 %v6235
        %v6970 = vpop.f32.mrb[0].mxu0
        %v6971 = vadd.f32 %v6650, %v6970
        %v6972 = vpop.f32.mrb[0].mxu0
        %6973 = vmatprep.mubr.f32.mxu0 %v6762
        %6974 = vmatmul.mubr.f32.gmra.mrb[0].mxu0 %v6237
        %v6975 = vpop.f32.mrb[0].mxu0
        %v6976 = vadd.f32 %v6655, %v6975
        %v6977 = vpop.f32.mrb[0].mxu0
        %6978 = vmatprep.mubr.f32.mxu0 %v6765
        %6979 = vmatmul.mubr.f32.gmra.mrb[0].mxu0 %v6239
        %v6980 = vpop.f32.mrb[0].mxu0
        %v6981 = vadd.f32 %v6660, %v6980
        %v6982 = vpop.f32.mrb[0].mxu0
        %6983 = vmatprep.mubr.f32.mxu0 %v6768
        %6984 = vmatmul.mubr.f32.gmra.mrb[0].mxu0 %v6241
        %v6985 = vpop.f32.mrb[0].mxu0
        %v6986 = vadd.f32 %v6665, %v6985
        %v6987 = vpop.f32.mrb[0].mxu0
        %6988 = vmatprep.mubr.f32.mxu0 %v6771
        %6989 = vmatmul.mubr.f32.gmra.mrb[0].mxu0 %v6243
        %v6990 = vpop.f32.mrb[0].mxu0
        %v6991 = vadd.f32 %v6670, %v6990
        %v6992 = vpop.f32.mrb[0].mxu0
        %6993 = vmatprep.mubr.f32.mxu0 %v6774
        %6994 = vmatmul.mubr.f32.gmra.mrb[0].mxu0 %v6245
        %v6995 = vpop.f32.mrb[0].mxu0
        %v6996 = vadd.f32 %v6675, %v6995
        %v6997 = vpop.f32.mrb[0].mxu0
        %6998 = vmatprep.mubr.f32.mxu0 %v6777
        %6999 = vmatmul.mubr.f32.gmra.mrb[0].mxu0 %v6247
        %v7000 = vpop.f32.mrb[0].mxu0
        %v7001 = vadd.f32 %v6680, %v7000
        %v7002 = vpop.f32.mrb[0].mxu0
        %7003 = vdwg.mxu0
        %v7004 = vld [vmem:[%s1692] sm:$0xff]
        %v7005 = vld [vmem:[%s1692 + $0x8] sm:$0xff]
        %v7006 = vld [vmem:[%s1692 + $0x10] sm:$0xff]
        %v7007 = vld [vmem:[%s1692 + $0x18] sm:$0xff]
        %v7008 = vld [vmem:[%s1692 + $0x20] sm:$0xff]
        %v7009 = vld [vmem:[%s1692 + $0x28] sm:$0xff]
        %v7010 = vld [vmem:[%s1692 + $0x30] sm:$0xff]
        %v7011 = vld [vmem:[%s1692 + $0x38] sm:$0xff]
        %v7012 = vld [vmem:[%s1692 + $0x40] sm:$0xff]
        %v7013 = vld [vmem:[%s1692 + $0x48] sm:$0xff]
        %v7014 = vld [vmem:[%s1692 + $0x50] sm:$0xff]
        %v7015 = vld [vmem:[%s1692 + $0x58] sm:$0xff]
        %v7016 = vld [vmem:[%s1692 + $0x60] sm:$0xff]
        %v7017 = vld [vmem:[%s1692 + $0x68] sm:$0xff]
        %v7018 = vld [vmem:[%s1692 + $0x70] sm:$0xff]
        %v7019 = vld [vmem:[%s1692 + $0x78] sm:$0xff]
        %v7020 = vld [vmem:[%s1692 + $0x80] sm:$0xff]
        %v7021 = vld [vmem:[%s1692 + $0x88] sm:$0xff]
        %v7022 = vld [vmem:[%s1692 + $0x90] sm:$0xff]
        %v7023 = vld [vmem:[%s1692 + $0x98] sm:$0xff]
        %v7024 = vld [vmem:[%s1692 + $0xa0] sm:$0xff]
        %v7025 = vld [vmem:[%s1692 + $0xa8] sm:$0xff]
        %v7026 = vld [vmem:[%s1692 + $0xb0] sm:$0xff]
        %v7027 = vld [vmem:[%s1692 + $0xb8] sm:$0xff]
        %v7028 = vld [vmem:[%s1692 + $0xc0] sm:$0xff]
        %v7029 = vld [vmem:[%s1692 + $0xc8] sm:$0xff]
        %v7030 = vld [vmem:[%s1692 + $0xd0] sm:$0xff]
        %v7031 = vld [vmem:[%s1692 + $0xd8] sm:$0xff]
        %v7032 = vld [vmem:[%s1692 + $0xe0] sm:$0xff]
        %v7033 = vld [vmem:[%s1692 + $0xe8] sm:$0xff]
        %v7034 = vld [vmem:[%s1692 + $0xf0] sm:$0xff]
        %v7035 = vld [vmem:[%s1692 + $0xf8] sm:$0xff]
        %v7036 = vld [vmem:[%s1692 + $0x100] sm:$0xff]
        %v7037 = vld [vmem:[%s1692 + $0x108] sm:$0xff]
        %v7038 = vld [vmem:[%s1692 + $0x110] sm:$0xff]
        %v7039 = vld [vmem:[%s1692 + $0x118] sm:$0xff]
        %v7040 = vld [vmem:[%s1692 + $0x120] sm:$0xff]
        %v7041 = vld [vmem:[%s1692 + $0x128] sm:$0xff]
        %v7042 = vld [vmem:[%s1692 + $0x130] sm:$0xff]
        %v7043 = vld [vmem:[%s1692 + $0x138] sm:$0xff]
        %v7044 = vld [vmem:[%s1692 + $0x140] sm:$0xff]
        %v7045 = vld [vmem:[%s1692 + $0x148] sm:$0xff]
        %v7046 = vld [vmem:[%s1692 + $0x150] sm:$0xff]
        %v7047 = vld [vmem:[%s1692 + $0x158] sm:$0xff]
        %v7048 = vld [vmem:[%s1692 + $0x160] sm:$0xff]
        %v7049 = vld [vmem:[%s1692 + $0x168] sm:$0xff]
        %v7050 = vld [vmem:[%s1692 + $0x170] sm:$0xff]
        %v7051 = vld [vmem:[%s1692 + $0x178] sm:$0xff]
        %v7052 = vld [vmem:[%s1692 + $0x180] sm:$0xff]
        %v7053 = vld [vmem:[%s1692 + $0x188] sm:$0xff]
        %v7054 = vld [vmem:[%s1692 + $0x190] sm:$0xff]
        %v7055 = vld [vmem:[%s1692 + $0x198] sm:$0xff]
        %v7056 = vld [vmem:[%s1692 + $0x1a0] sm:$0xff]
        %v7057 = vld [vmem:[%s1692 + $0x1a8] sm:$0xff]
        %v7058 = vld [vmem:[%s1692 + $0x1b0] sm:$0xff]
        %v7059 = vld [vmem:[%s1692 + $0x1b8] sm:$0xff]
        %v7060 = vld [vmem:[%s1692 + $0x1c0] sm:$0xff]
        %v7061 = vld [vmem:[%s1692 + $0x1c8] sm:$0xff]
        %v7062 = vld [vmem:[%s1692 + $0x1d0] sm:$0xff]
        %v7063 = vld [vmem:[%s1692 + $0x1d8] sm:$0xff]
        %v7064 = vld [vmem:[%s1692 + $0x1e0] sm:$0xff]
        %v7065 = vld [vmem:[%s1692 + $0x1e8] sm:$0xff]
        %v7066 = vld [vmem:[%s1692 + $0x1f0] sm:$0xff]
        %v7067 = vld [vmem:[%s1692 + $0x1f8] sm:$0xff]
        %s7068 = scalar_lea.vmem %s8, 384
        %v7069 = vld [vmem:[%s7068] sm:$0xff]
        %v7070 = vld [vmem:[%s7068 + $0x8] sm:$0xff]
        %v7071 = vld [vmem:[%s7068 + $0x10] sm:$0xff]
        %v7072 = vld [vmem:[%s7068 + $0x18] sm:$0xff]
        %v7073 = vld [vmem:[%s7068 + $0x20] sm:$0xff]
        %v7074 = vld [vmem:[%s7068 + $0x28] sm:$0xff]
        %v7075 = vld [vmem:[%s7068 + $0x30] sm:$0xff]
        %v7076 = vld [vmem:[%s7068 + $0x38] sm:$0xff]
        %v7077 = vld [vmem:[%s7068 + $0x40] sm:$0xff]
        %v7078 = vld [vmem:[%s7068 + $0x48] sm:$0xff]
        %v7079 = vld [vmem:[%s7068 + $0x50] sm:$0xff]
        %v7080 = vld [vmem:[%s7068 + $0x58] sm:$0xff]
        %v7081 = vld [vmem:[%s7068 + $0x60] sm:$0xff]
        %v7082 = vld [vmem:[%s7068 + $0x68] sm:$0xff]
        %v7083 = vld [vmem:[%s7068 + $0x70] sm:$0xff]
        %v7084 = vld [vmem:[%s7068 + $0x78] sm:$0xff]
        %v7085 = vld [vmem:[%s7068 + $0x80] sm:$0xff]
        %v7086 = vld [vmem:[%s7068 + $0x88] sm:$0xff]
        %v7087 = vld [vmem:[%s7068 + $0x90] sm:$0xff]
        %v7088 = vld [vmem:[%s7068 + $0x98] sm:$0xff]
        %v7089 = vld [vmem:[%s7068 + $0xa0] sm:$0xff]
        %v7090 = vld [vmem:[%s7068 + $0xa8] sm:$0xff]
        %v7091 = vld [vmem:[%s7068 + $0xb0] sm:$0xff]
        %v7092 = vld [vmem:[%s7068 + $0xb8] sm:$0xff]
        %v7094 = vsel %vm373, %v7005, 0
        %v7097 = vsel %vm373, %v7007, 0
        %v7100 = vsel %vm373, %v7009, 0
        %v7103 = vsel %vm373, %v7011, 0
        %v7106 = vsel %vm373, %v7013, 0
        %v7109 = vsel %vm373, %v7015, 0
        %v7112 = vsel %vm373, %v7017, 0
        %v7115 = vsel %vm373, %v7019, 0
        %v7118 = vsel %vm373, %v7021, 0
        %v7121 = vsel %vm373, %v7023, 0
        %v7124 = vsel %vm373, %v7025, 0
        %v7127 = vsel %vm373, %v7027, 0
        %v7130 = vsel %vm373, %v7029, 0
        %v7133 = vsel %vm373, %v7031, 0
        %v7136 = vsel %vm373, %v7033, 0
        %v7139 = vsel %vm373, %v7035, 0
        %v7142 = vsel %vm373, %v7037, 0
        %v7145 = vsel %vm373, %v7039, 0
        %v7148 = vsel %vm373, %v7041, 0
        %v7151 = vsel %vm373, %v7043, 0
        %v7154 = vsel %vm373, %v7045, 0
        %v7157 = vsel %vm373, %v7047, 0
        %v7160 = vsel %vm373, %v7049, 0
        %v7163 = vsel %vm373, %v7051, 0
        %v7166 = vsel %vm373, %v7053, 0
        %v7169 = vsel %vm373, %v7055, 0
        %v7172 = vsel %vm373, %v7057, 0
        %v7175 = vsel %vm373, %v7059, 0
        %v7178 = vsel %vm373, %v7061, 0
        %v7181 = vsel %vm373, %v7063, 0
        %v7184 = vsel %vm373, %v7065, 0
        %v7187 = vsel %vm373, %v7067, 0
        %7189 = vmatprep.subr.mxu0 0.0
        %7190 = vmatpush1.msra.mxu0 %v7069
        %7191 = vmatprep.subr.mxu0 0.0
        %7192 = vmatpush1.msra.mxu0 %v7070
        %7193 = vmatprep.subr.mxu0 0.0
        %7194 = vmatpush1.msra.mxu0 %v7071
        %7195 = vmatprep.subr.mxu0 0.0
        %7196 = vmatpush1.msra.mxu0 %v7072
        %7197 = vmatprep.subr.mxu0 0.0
        %7198 = vmatpush1.msra.mxu0 %v7073
        %7199 = vmatprep.subr.mxu0 0.0
        %7200 = vmatpush1.msra.mxu0 %v7074
        %7201 = vmatprep.subr.mxu0 0.0
        %7202 = vmatpush1.msra.mxu0 %v7075
        %7203 = vmatprep.subr.mxu0 0.0
        %7204 = vmatpush1.msra.mxu0 %v7076
        %7205 = vmatprep.subr.mxu0 0.0
        %7206 = vmatpush1.msra.mxu0 %v7077
        %7207 = vmatprep.subr.mxu0 0.0
        %7208 = vmatpush1.msra.mxu0 %v7078
        %7209 = vmatprep.subr.mxu0 0.0
        %7210 = vmatpush1.msra.mxu0 %v7079
        %7211 = vmatprep.subr.mxu0 0.0
        %7212 = vmatpush1.msra.mxu0 %v7080
        %7213 = vmatprep.subr.mxu0 0.0
        %7214 = vmatpush1.msra.mxu0 %v7081
        %7215 = vmatprep.subr.mxu0 0.0
        %7216 = vmatpush1.msra.mxu0 %v7082
        %7217 = vmatprep.subr.mxu0 0.0
        %7218 = vmatpush1.msra.mxu0 %v7083
        %7219 = vmatprep.subr.mxu0 0.0
        %7220 = vmatpush1.msra.mxu0 %v7084
        %7221 = vmatprep.subr.mxu0 0.0
        %7222 = vmatpush1.msra.mxu0 %v7085
        %7223 = vmatprep.subr.mxu0 0.0
        %7224 = vmatpush1.msra.mxu0 %v7086
        %7225 = vmatprep.subr.mxu0 0.0
        %7226 = vmatpush1.msra.mxu0 %v7087
        %7227 = vmatprep.subr.mxu0 0.0
        %7228 = vmatpush1.msra.mxu0 %v7088
        %7229 = vmatprep.subr.mxu0 0.0
        %7230 = vmatpush1.msra.mxu0 %v7089
        %7231 = vmatprep.subr.mxu0 0.0
        %7232 = vmatpush1.msra.mxu0 %v7090
        %7233 = vmatprep.subr.mxu0 0.0
        %7234 = vmatpush1.msra.mxu0 %v7091
        %7235 = vmatprep.subr.mxu0 0.0
        %7236 = vmatpush1.msra.mxu0 %v7092
        %7237 = vmatprep.subr.mxu0 0.0
        %7238 = vmatpush1.msra.mxu0 0.0
        %7239 = vmatprep.subr.mxu0 0.0
        %7240 = vmatpush1.msra.mxu0 0.0
        %7241 = vmatprep.subr.mxu0 0.0
        %7242 = vmatpush1.msra.mxu0 0.0
        %7243 = vmatprep.subr.mxu0 0.0
        %7244 = vmatpush1.msra.mxu0 0.0
        %7245 = vmatprep.subr.mxu0 0.0
        %7246 = vmatpush1.msra.mxu0 0.0
        %7247 = vmatprep.subr.mxu0 0.0
        %7248 = vmatpush1.msra.mxu0 0.0
        %7249 = vmatprep.subr.mxu0 0.0
        %7250 = vmatpush1.msra.mxu0 0.0
        %7251 = vmatprep.subr.mxu0 0.0
        %7252 = vmatpush1.msra.mxu0 0.0
        %7253 = vmatprep.mubr.f32.mxu0 %v7094
        %7254 = vmatmul.mubr.f32.gmra.mrb[0].mxu0 %v7004
        %v7255 = vpop.f32.mrb[0].mxu0
        %v7256 = vadd.f32 0.0, %v7255
        %v7257 = vpop.f32.mrb[0].mxu0
        %7258 = vmatprep.mubr.f32.mxu0 %v7097
        %7259 = vmatmul.mubr.f32.gmra.mrb[0].mxu0 %v7006
        %v7260 = vpop.f32.mrb[0].mxu0
        %v7261 = vadd.f32 0.0, %v7260
        %v7262 = vpop.f32.mrb[0].mxu0
        %7263 = vmatprep.mubr.f32.mxu0 %v7100
        %7264 = vmatmul.mubr.f32.gmra.mrb[0].mxu0 %v7008
        %v7265 = vpop.f32.mrb[0].mxu0
        %v7266 = vadd.f32 0.0, %v7265
        %v7267 = vpop.f32.mrb[0].mxu0
        %7268 = vmatprep.mubr.f32.mxu0 %v7103
        %7269 = vmatmul.mubr.f32.gmra.mrb[0].mxu0 %v7010
        %v7270 = vpop.f32.mrb[0].mxu0
        %v7271 = vadd.f32 0.0, %v7270
        %v7272 = vpop.f32.mrb[0].mxu0
        %7273 = vmatprep.mubr.f32.mxu0 %v7106
        %7274 = vmatmul.mubr.f32.gmra.mrb[0].mxu0 %v7012
        %v7275 = vpop.f32.mrb[0].mxu0
        %v7276 = vadd.f32 0.0, %v7275
        %v7277 = vpop.f32.mrb[0].mxu0
        %7278 = vmatprep.mubr.f32.mxu0 %v7109
        %7279 = vmatmul.mubr.f32.gmra.mrb[0].mxu0 %v7014
        %v7280 = vpop.f32.mrb[0].mxu0
        %v7281 = vadd.f32 0.0, %v7280
        %v7282 = vpop.f32.mrb[0].mxu0
        %7283 = vmatprep.mubr.f32.mxu0 %v7112
        %7284 = vmatmul.mubr.f32.gmra.mrb[0].mxu0 %v7016
        %v7285 = vpop.f32.mrb[0].mxu0
        %v7286 = vadd.f32 0.0, %v7285
        %v7287 = vpop.f32.mrb[0].mxu0
        %7288 = vmatprep.mubr.f32.mxu0 %v7115
        %7289 = vmatmul.mubr.f32.gmra.mrb[0].mxu0 %v7018
        %v7290 = vpop.f32.mrb[0].mxu0
        %v7291 = vadd.f32 0.0, %v7290
        %v7292 = vpop.f32.mrb[0].mxu0
        %7293 = vmatprep.mubr.f32.mxu0 %v7118
        %7294 = vmatmul.mubr.f32.gmra.mrb[0].mxu0 %v7020
        %v7295 = vpop.f32.mrb[0].mxu0
        %v7296 = vadd.f32 0.0, %v7295
        %v7297 = vpop.f32.mrb[0].mxu0
        %7298 = vmatprep.mubr.f32.mxu0 %v7121
        %7299 = vmatmul.mubr.f32.gmra.mrb[0].mxu0 %v7022
        %v7300 = vpop.f32.mrb[0].mxu0
        %v7301 = vadd.f32 0.0, %v7300
        %v7302 = vpop.f32.mrb[0].mxu0
        %7303 = vmatprep.mubr.f32.mxu0 %v7124
        %7304 = vmatmul.mubr.f32.gmra.mrb[0].mxu0 %v7024
        %v7305 = vpop.f32.mrb[0].mxu0
        %v7306 = vadd.f32 0.0, %v7305
        %v7307 = vpop.f32.mrb[0].mxu0
        %7308 = vmatprep.mubr.f32.mxu0 %v7127
        %7309 = vmatmul.mubr.f32.gmra.mrb[0].mxu0 %v7026
        %v7310 = vpop.f32.mrb[0].mxu0
        %v7311 = vadd.f32 0.0, %v7310
        %v7312 = vpop.f32.mrb[0].mxu0
        %7313 = vmatprep.mubr.f32.mxu0 %v7130
        %7314 = vmatmul.mubr.f32.gmra.mrb[0].mxu0 %v7028
        %v7315 = vpop.f32.mrb[0].mxu0
        %v7316 = vadd.f32 0.0, %v7315
        %v7317 = vpop.f32.mrb[0].mxu0
        %7318 = vmatprep.mubr.f32.mxu0 %v7133
        %7319 = vmatmul.mubr.f32.gmra.mrb[0].mxu0 %v7030
        %v7320 = vpop.f32.mrb[0].mxu0
        %v7321 = vadd.f32 0.0, %v7320
        %v7322 = vpop.f32.mrb[0].mxu0
        %7323 = vmatprep.mubr.f32.mxu0 %v7136
        %7324 = vmatmul.mubr.f32.gmra.mrb[0].mxu0 %v7032
        %v7325 = vpop.f32.mrb[0].mxu0
        %v7326 = vadd.f32 0.0, %v7325
        %v7327 = vpop.f32.mrb[0].mxu0
        %7328 = vmatprep.mubr.f32.mxu0 %v7139
        %7329 = vmatmul.mubr.f32.gmra.mrb[0].mxu0 %v7034
        %v7330 = vpop.f32.mrb[0].mxu0
        %v7331 = vadd.f32 0.0, %v7330
        %v7332 = vpop.f32.mrb[0].mxu0
        %7333 = vmatprep.mubr.f32.mxu0 %v7142
        %7334 = vmatmul.mubr.f32.gmra.mrb[0].mxu0 %v7036
        %v7335 = vpop.f32.mrb[0].mxu0
        %v7336 = vadd.f32 0.0, %v7335
        %v7337 = vpop.f32.mrb[0].mxu0
        %7338 = vmatprep.mubr.f32.mxu0 %v7145
        %7339 = vmatmul.mubr.f32.gmra.mrb[0].mxu0 %v7038
        %v7340 = vpop.f32.mrb[0].mxu0
        %v7341 = vadd.f32 0.0, %v7340
        %v7342 = vpop.f32.mrb[0].mxu0
        %7343 = vmatprep.mubr.f32.mxu0 %v7148
        %7344 = vmatmul.mubr.f32.gmra.mrb[0].mxu0 %v7040
        %v7345 = vpop.f32.mrb[0].mxu0
        %v7346 = vadd.f32 0.0, %v7345
        %v7347 = vpop.f32.mrb[0].mxu0
        %7348 = vmatprep.mubr.f32.mxu0 %v7151
        %7349 = vmatmul.mubr.f32.gmra.mrb[0].mxu0 %v7042
        %v7350 = vpop.f32.mrb[0].mxu0
        %v7351 = vadd.f32 0.0, %v7350
        %v7352 = vpop.f32.mrb[0].mxu0
        %7353 = vmatprep.mubr.f32.mxu0 %v7154
        %7354 = vmatmul.mubr.f32.gmra.mrb[0].mxu0 %v7044
        %v7355 = vpop.f32.mrb[0].mxu0
        %v7356 = vadd.f32 0.0, %v7355
        %v7357 = vpop.f32.mrb[0].mxu0
        %7358 = vmatprep.mubr.f32.mxu0 %v7157
        %7359 = vmatmul.mubr.f32.gmra.mrb[0].mxu0 %v7046
        %v7360 = vpop.f32.mrb[0].mxu0
        %v7361 = vadd.f32 0.0, %v7360
        %v7362 = vpop.f32.mrb[0].mxu0
        %7363 = vmatprep.mubr.f32.mxu0 %v7160
        %7364 = vmatmul.mubr.f32.gmra.mrb[0].mxu0 %v7048
        %v7365 = vpop.f32.mrb[0].mxu0
        %v7366 = vadd.f32 0.0, %v7365
        %v7367 = vpop.f32.mrb[0].mxu0
        %7368 = vmatprep.mubr.f32.mxu0 %v7163
        %7369 = vmatmul.mubr.f32.gmra.mrb[0].mxu0 %v7050
        %v7370 = vpop.f32.mrb[0].mxu0
        %v7371 = vadd.f32 0.0, %v7370
        %v7372 = vpop.f32.mrb[0].mxu0
        %7373 = vmatprep.mubr.f32.mxu0 %v7166
        %7374 = vmatmul.mubr.f32.gmra.mrb[0].mxu0 %v7052
        %v7375 = vpop.f32.mrb[0].mxu0
        %v7376 = vadd.f32 0.0, %v7375
        %v7377 = vpop.f32.mrb[0].mxu0
        %7378 = vmatprep.mubr.f32.mxu0 %v7169
        %7379 = vmatmul.mubr.f32.gmra.mrb[0].mxu0 %v7054
        %v7380 = vpop.f32.mrb[0].mxu0
        %v7381 = vadd.f32 0.0, %v7380
        %v7382 = vpop.f32.mrb[0].mxu0
        %7383 = vmatprep.mubr.f32.mxu0 %v7172
        %7384 = vmatmul.mubr.f32.gmra.mrb[0].mxu0 %v7056
        %v7385 = vpop.f32.mrb[0].mxu0
        %v7386 = vadd.f32 0.0, %v7385
        %v7387 = vpop.f32.mrb[0].mxu0
        %7388 = vmatprep.mubr.f32.mxu0 %v7175
        %7389 = vmatmul.mubr.f32.gmra.mrb[0].mxu0 %v7058
        %v7390 = vpop.f32.mrb[0].mxu0
        %v7391 = vadd.f32 0.0, %v7390
        %v7392 = vpop.f32.mrb[0].mxu0
        %7393 = vmatprep.mubr.f32.mxu0 %v7178
        %7394 = vmatmul.mubr.f32.gmra.mrb[0].mxu0 %v7060
        %v7395 = vpop.f32.mrb[0].mxu0
        %v7396 = vadd.f32 0.0, %v7395
        %v7397 = vpop.f32.mrb[0].mxu0
        %7398 = vmatprep.mubr.f32.mxu0 %v7181
        %7399 = vmatmul.mubr.f32.gmra.mrb[0].mxu0 %v7062
        %v7400 = vpop.f32.mrb[0].mxu0
        %v7401 = vadd.f32 0.0, %v7400
        %v7402 = vpop.f32.mrb[0].mxu0
        %7403 = vmatprep.mubr.f32.mxu0 %v7184
        %7404 = vmatmul.mubr.f32.gmra.mrb[0].mxu0 %v7064
        %v7405 = vpop.f32.mrb[0].mxu0
        %v7406 = vadd.f32 0.0, %v7405
        %v7407 = vpop.f32.mrb[0].mxu0
        %7408 = vmatprep.mubr.f32.mxu0 %v7187
        %7409 = vmatmul.mubr.f32.gmra.mrb[0].mxu0 %v7066
        %v7410 = vpop.f32.mrb[0].mxu0
        %v7411 = vadd.f32 0.0, %v7410
        %v7412 = vpop.f32.mrb[0].mxu0
        %7413 = vdwg.mxu0
        %v7414 = vadd.f32 %v6846, %v7256
        %v7415 = vadd.f32 %v6851, %v7261
        %v7416 = vadd.f32 %v6856, %v7266
        %v7417 = vadd.f32 %v6861, %v7271
        %v7418 = vadd.f32 %v6866, %v7276
        %v7419 = vadd.f32 %v6871, %v7281
        %v7420 = vadd.f32 %v6876, %v7286
        %v7421 = vadd.f32 %v6881, %v7291
        %v7422 = vadd.f32 %v6886, %v7296
        %v7423 = vadd.f32 %v6891, %v7301
        %v7424 = vadd.f32 %v6896, %v7306
        %v7425 = vadd.f32 %v6901, %v7311
        %v7426 = vadd.f32 %v6906, %v7316
        %v7427 = vadd.f32 %v6911, %v7321
        %v7428 = vadd.f32 %v6916, %v7326
        %v7429 = vadd.f32 %v6921, %v7331
        %v7430 = vadd.f32 %v6926, %v7336
        %v7431 = vadd.f32 %v6931, %v7341
        %v7432 = vadd.f32 %v6936, %v7346
        %v7433 = vadd.f32 %v6941, %v7351
        %v7434 = vadd.f32 %v6946, %v7356
        %v7435 = vadd.f32 %v6951, %v7361
        %v7436 = vadd.f32 %v6956, %v7366
        %v7437 = vadd.f32 %v6961, %v7371
        %v7438 = vadd.f32 %v6966, %v7376
        %v7439 = vadd.f32 %v6971, %v7381
        %v7440 = vadd.f32 %v6976, %v7386
        %v7441 = vadd.f32 %v6981, %v7391
        %v7442 = vadd.f32 %v6986, %v7396
        %v7443 = vadd.f32 %v6991, %v7401
        %v7444 = vadd.f32 %v6996, %v7406
        %v7445 = vadd.f32 %v7001, %v7411
        %v7446 = vld [vmem:[%s9] sm:$0x1]
        %v7448 = vlaneseq
        %v7449 = vshrl.u32 %v7448, 7
        %v7450 = vsub.s32 0, %v7449
        %v7451 = vrot.slane %v7446, %v7450
        %v7453 = vadd.f32 %v7414, %v7451
        %v7454 = vadd.f32 %v7415, %v7451
        %v7455 = vadd.f32 %v7416, %v7451
        %v7456 = vadd.f32 %v7417, %v7451
        %v7457 = vadd.f32 %v7418, %v7451
        %v7458 = vadd.f32 %v7419, %v7451
        %v7459 = vadd.f32 %v7420, %v7451
        %v7460 = vadd.f32 %v7421, %v7451
        %v7461 = vadd.f32 %v7422, %v7451
        %v7462 = vadd.f32 %v7423, %v7451
        %v7463 = vadd.f32 %v7424, %v7451
        %v7464 = vadd.f32 %v7425, %v7451
        %v7465 = vadd.f32 %v7426, %v7451
        %v7466 = vadd.f32 %v7427, %v7451
        %v7467 = vadd.f32 %v7428, %v7451
        %v7468 = vadd.f32 %v7429, %v7451
        %v7469 = vadd.f32 %v7430, %v7451
        %v7470 = vadd.f32 %v7431, %v7451
        %v7471 = vadd.f32 %v7432, %v7451
        %v7472 = vadd.f32 %v7433, %v7451
        %v7473 = vadd.f32 %v7434, %v7451
        %v7474 = vadd.f32 %v7435, %v7451
        %v7475 = vadd.f32 %v7436, %v7451
        %v7476 = vadd.f32 %v7437, %v7451
        %v7477 = vadd.f32 %v7438, %v7451
        %v7478 = vadd.f32 %v7439, %v7451
        %v7479 = vadd.f32 %v7440, %v7451
        %v7480 = vadd.f32 %v7441, %v7451
        %v7481 = vadd.f32 %v7442, %v7451
        %v7482 = vadd.f32 %v7443, %v7451
        %v7483 = vadd.f32 %v7444, %v7451
        %v7484 = vadd.f32 %v7445, %v7451
        %v7485 = vstv %s419
        %v7486 = vmul.f32 %v7453, %v7485
        %v7487 = vmul.f32 %v7454, %v7485
        %v7488 = vmul.f32 %v7455, %v7485
        %v7489 = vmul.f32 %v7456, %v7485
        %v7490 = vmul.f32 %v7457, %v7485
        %v7491 = vmul.f32 %v7458, %v7485
        %v7492 = vmul.f32 %v7459, %v7485
        %v7493 = vmul.f32 %v7460, %v7485
        %v7494 = vmul.f32 %v7461, %v7485
        %v7495 = vmul.f32 %v7462, %v7485
        %v7496 = vmul.f32 %v7463, %v7485
        %v7497 = vmul.f32 %v7464, %v7485
        %v7498 = vmul.f32 %v7465, %v7485
        %v7499 = vmul.f32 %v7466, %v7485
        %v7500 = vmul.f32 %v7467, %v7485
        %v7501 = vmul.f32 %v7468, %v7485
        %v7502 = vmul.f32 %v7469, %v7485
        %v7503 = vmul.f32 %v7470, %v7485
        %v7504 = vmul.f32 %v7471, %v7485
        %v7505 = vmul.f32 %v7472, %v7485
        %v7506 = vmul.f32 %v7473, %v7485
        %v7507 = vmul.f32 %v7474, %v7485
        %v7508 = vmul.f32 %v7475, %v7485
        %v7509 = vmul.f32 %v7476, %v7485
        %v7510 = vmul.f32 %v7477, %v7485
        %v7511 = vmul.f32 %v7478, %v7485
        %v7512 = vmul.f32 %v7479, %v7485
        %v7513 = vmul.f32 %v7480, %v7485
        %v7514 = vmul.f32 %v7481, %v7485
        %v7515 = vmul.f32 %v7482, %v7485
        %v7516 = vmul.f32 %v7483, %v7485
        %v7517 = vmul.f32 %v7484, %v7485
        %v7518 = vadd.f32 %v7486, %v3956
        %v7519 = vadd.f32 %v7487, %v3957
        %v7520 = vadd.f32 %v7488, %v3958
        %v7521 = vadd.f32 %v7489, %v3959
        %v7522 = vadd.f32 %v7490, %v3960
        %v7523 = vadd.f32 %v7491, %v3961
        %v7524 = vadd.f32 %v7492, %v3962
        %v7525 = vadd.f32 %v7493, %v3963
        %v7526 = vadd.f32 %v7494, %v3964
        %v7527 = vadd.f32 %v7495, %v3965
        %v7528 = vadd.f32 %v7496, %v3966
        %v7529 = vadd.f32 %v7497, %v3967
        %v7530 = vadd.f32 %v7498, %v3968
        %v7531 = vadd.f32 %v7499, %v3969
        %v7532 = vadd.f32 %v7500, %v3970
        %v7533 = vadd.f32 %v7501, %v3971
        %v7534 = vadd.f32 %v7502, %v3972
        %v7535 = vadd.f32 %v7503, %v3973
        %v7536 = vadd.f32 %v7504, %v3974
        %v7537 = vadd.f32 %v7505, %v3975
        %v7538 = vadd.f32 %v7506, %v3976
        %v7539 = vadd.f32 %v7507, %v3977
        %v7540 = vadd.f32 %v7508, %v3978
        %v7541 = vadd.f32 %v7509, %v3979
        %v7542 = vadd.f32 %v7510, %v3980
        %v7543 = vadd.f32 %v7511, %v3981
        %v7544 = vadd.f32 %v7512, %v3982
        %v7545 = vadd.f32 %v7513, %v3983
        %v7546 = vadd.f32 %v7514, %v3984
        %v7547 = vadd.f32 %v7515, %v3985
        %v7548 = vadd.f32 %v7516, %v3986
        %v7549 = vadd.f32 %v7517, %v3987
        %7550 = vst.msk [vmem:[%s366] sm:$0xff] %vm373, %v7518
        %7551 = vst.msk [vmem:[%s366 + $0x8] sm:$0xff] %vm373, %v7519
        %7552 = vst.msk [vmem:[%s366 + $0x10] sm:$0xff] %vm373, %v7520
        %7553 = vst.msk [vmem:[%s366 + $0x18] sm:$0xff] %vm373, %v7521
        %7554 = vst.msk [vmem:[%s366 + $0x20] sm:$0xff] %vm373, %v7522
        %7555 = vst.msk [vmem:[%s366 + $0x28] sm:$0xff] %vm373, %v7523
        %7556 = vst.msk [vmem:[%s366 + $0x30] sm:$0xff] %vm373, %v7524
        %7557 = vst.msk [vmem:[%s366 + $0x38] sm:$0xff] %vm373, %v7525
        %7558 = vst.msk [vmem:[%s366 + $0x40] sm:$0xff] %vm373, %v7526
        %7559 = vst.msk [vmem:[%s366 + $0x48] sm:$0xff] %vm373, %v7527
        %7560 = vst.msk [vmem:[%s366 + $0x50] sm:$0xff] %vm373, %v7528
        %7561 = vst.msk [vmem:[%s366 + $0x58] sm:$0xff] %vm373, %v7529
        %7562 = vst.msk [vmem:[%s366 + $0x60] sm:$0xff] %vm373, %v7530
        %7563 = vst.msk [vmem:[%s366 + $0x68] sm:$0xff] %vm373, %v7531
        %7564 = vst.msk [vmem:[%s366 + $0x70] sm:$0xff] %vm373, %v7532
        %7565 = vst.msk [vmem:[%s366 + $0x78] sm:$0xff] %vm373, %v7533
        %7566 = vst.msk [vmem:[%s366 + $0x80] sm:$0xff] %vm373, %v7534
        %7567 = vst.msk [vmem:[%s366 + $0x88] sm:$0xff] %vm373, %v7535
        %7568 = vst.msk [vmem:[%s366 + $0x90] sm:$0xff] %vm373, %v7536
        %7569 = vst.msk [vmem:[%s366 + $0x98] sm:$0xff] %vm373, %v7537
        %7570 = vst.msk [vmem:[%s366 + $0xa0] sm:$0xff] %vm373, %v7538
        %7571 = vst.msk [vmem:[%s366 + $0xa8] sm:$0xff] %vm373, %v7539
        %7572 = vst.msk [vmem:[%s366 + $0xb0] sm:$0xff] %vm373, %v7540
        %7573 = vst.msk [vmem:[%s366 + $0xb8] sm:$0xff] %vm373, %v7541
        %7574 = vst.msk [vmem:[%s366 + $0xc0] sm:$0xff] %vm373, %v7542
        %7575 = vst.msk [vmem:[%s366 + $0xc8] sm:$0xff] %vm373, %v7543
        %7576 = vst.msk [vmem:[%s366 + $0xd0] sm:$0xff] %vm373, %v7544
        %7577 = vst.msk [vmem:[%s366 + $0xd8] sm:$0xff] %vm373, %v7545
        %7578 = vst.msk [vmem:[%s366 + $0xe0] sm:$0xff] %vm373, %v7546
        %7579 = vst.msk [vmem:[%s366 + $0xe8] sm:$0xff] %vm373, %v7547
        %7580 = vst.msk [vmem:[%s366 + $0xf0] sm:$0xff] %vm373, %v7548
        %7581 = vst.msk [vmem:[%s366 + $0xf8] sm:$0xff] %vm373, %v7549
        %s7582 = sand.u32 %s248, 1
        %s7583 = scalar_lea.sflag [#allocation4], %s7582
        %s7584 = sand.u32 %s248, 1
        %s7585 = smul.addr %s7584, 256
        %s7586 = scalar_lea.vmem [#allocation6], %s7585
        // Predicated region
        $region65: #{tpu_custom_call.1} parent=59 // pred_check
          %p7587 = pneg %p258
        $region66: #{tpu_custom_call.1} parent=59 // pred_check_branch
          %7589 = sbr.rel (%p7587) target = $region68
        $region67: #{tpu_custom_call.1} parent=59 // pred_region
          %s7591 = ssub.s32 4096, 4096
          %7592 = vsyncadd %s7583, %s7591
          %s7593 = smul.addr %s25, 32
          %s7594 = smul.addr %s7593, 128
          %s7595 = scalar_lea.hbm %s10, %s7594
          %s7596 = sshll.u32 %s7586, 4
          %s7597 = int_to_ptr.vmem [resolvable:$true] %s7596
          %7602 = dma.vmem_to_hbm [thread:$0]  %s7597, 4096, %s7595, %s7583, 128, 128, 8
        $region68: #{tpu_custom_call.1} parent=59 // pred_fallthru
          _
      $region60: #{tpu_custom_call.1} parent=5 // pred_fallthru
        _
      %p7603 = scmp.le.s32.totalorder 2, %s20
      // Predicated region
      $region69: #{tpu_custom_call.1} parent=5 // pred_check
        %p7604 = pneg %p7603
      $region70: #{tpu_custom_call.1} parent=5 // pred_check_branch
        %7606 = sbr.rel (%p7604) target = $region72
      $region71: #{tpu_custom_call.1} parent=5 // pred_region
        %s7607 = ssub.s32 %s20, 2
        // Predicated region
        $region73: #{tpu_custom_call.1} parent=71 // pred_check
          %p7608 = pneg %p264
        $region74: #{tpu_custom_call.1} parent=71 // pred_check_branch
          %7610 = sbr.rel (%p7608) target = $region76
        $region75: #{tpu_custom_call.1} parent=71 // pred_region
          %s7611 = sand.u32 %s249, 1
          %s7612 = scalar_lea.sflag [#allocation4], %s7611
          %s7613 = sand.u32 %s249, 1
          %s7614 = smul.addr %s7613, 256
          %s7615 = scalar_lea.vmem [#allocation6], %s7614
          %7616 = dma.done %s7612, 4096
        $region76: #{tpu_custom_call.1} parent=71 // pred_fallthru
          _
      $region72: #{tpu_custom_call.1} parent=5 // pred_fallthru
        _
    $region6: #{tpu_custom_call.1} parent=1 // loop_footer
      %s24 = sadd.s32 1, %s20
    $region7: #{tpu_custom_call.1} parent=1 // loop_footer_branch
      %19 = sbr.rel target = $region3
    $region8: #{tpu_custom_call.1} parent=1 // loop_exit
      _
    %7617 = vsyncpa [#allocation4], 1
    %s7618 = scalar_lea.sflag [#allocation4], 1
    %7619 = vsyncpa %s7618, 1
    %7620 = vsyncpa [#allocation5], 1
    %s7621 = scalar_lea.sflag [#allocation5], 1
    %7622 = vsyncpa %s7621, 1

</llo_original>
